<compile_context>
chip_gen: v7x
topology: tpu7x:2x2x1
jax: 0.10.0
libtpu: 0.0.40
codegen_flags: <defaults>
</compile_context>

<pallas_src>
import functools

import numpy as np
import jax
import jax.numpy as jnp
from jax.experimental import pallas as pl
from jax.experimental.pallas import tpu as pltpu


# Row indices of the stacked (9, out_c) per-channel affine/PReLU table.
_BIAS1, _ALPHA1, _BIAS3, _ALPHA3, _BIAS_S1, _ALPHA_S1, _BIAS_S2, _BIAS_F, _ALPHA_F = range(9)


# ---------------------------------------------------------------------------
# Fused Pallas kernel: one batch item per grid step, everything VMEM-resident
# ---------------------------------------------------------------------------

def _gfu_kernel(y_ref, x_ref, r_ref, w1_ref, w2_ref, w3_ref, ws1_ref, ws2_ref,
                wf_ref, aff_ref, o_ref, pad_a, pad_h, slab, *, H, W):
    S = H * W
    f32 = jnp.float32
    bf16 = jnp.bfloat16
    C = w1_ref.shape[1]

    def aff(i):                                   # (1, C) f32 per-channel vector
        return aff_ref[i:i + 1, :]

    def zero_halo(pad):
        # Perimeter-only zeroing; interior is fully overwritten before every conv use.
        c = pad.shape[-1]
        pad[0:1, :, :] = jnp.zeros((1, W + 2, c), pad.dtype)
        pad[H + 1:H + 2, :, :] = jnp.zeros((1, W + 2, c), pad.dtype)
        pad[:, 0:1, :] = jnp.zeros((H + 2, 1, c), pad.dtype)
        pad[:, W + 1:W + 2, :] = jnp.zeros((H + 2, 1, c), pad.dtype)

    zero_halo(pad_a)
    zero_halo(pad_h)

    def fill(pad, val_flat, c0, c1):
        # Write the interior of a zero-halo (H+2, W+2, .) bf16 image (cast once here).
        pad[1:1 + H, 1:1 + W, c0:c1] = (
            val_flat.reshape(H, W, c1 - c0).astype(pad.dtype))

    def conv3x3(pad, w_ref, c0, c1):
        # 3x3 same-conv as ONE im2col matmul: taps stacked along K into a bf16 slab.
        padded = pad[...]
        c = c1 - c0
        t = 0
        for dy in range(3):
            for dx in range(3):
                slab[:, t * c:(t + 1) * c] = (
                    padded[dy:dy + H, dx:dx + W, c0:c1].reshape(S, c))
                t += 1
        return jnp.dot(slab[:, :9 * c], w_ref[...], preferred_element_type=f32)

    # --- y branch: bilinear upsample (matmul with R) -> conv2 (1x1) -> ReLU
    up = jnp.dot(r_ref[...], y_ref[0], preferred_element_type=f32)        # (S, in_c)
    y_feat = jnp.maximum(
        jnp.dot(up.astype(bf16), w2_ref[...], preferred_element_type=f32), 0.0)

    # --- x branch: conv1 (1x1, BN scale pre-folded into w1) -> +bias -> PReLU
    xz = jnp.dot(x_ref[0], w1_ref[...], preferred_element_type=f32) + aff(_BIAS1)
    x_feat = jnp.where(xz > 0, xz, aff(_ALPHA1) * xz)

    # --- fuse = PReLU(BN(conv3(y_feat + x_feat)))   (add fused, 3x3 conv, K=9C dot)
    fill(pad_a, y_feat + x_feat, 0, C)
    fz = conv3x3(pad_a, w3_ref, 0, C) + aff(_BIAS3)
    fuse = jnp.where(fz > 0, fz, aff(_ALPHA3) * fz)

    # --- channel chunk stays VMEM-resident
    s1_in = fuse[:, :C // 2]
    s2_in = fuse[:, C // 2:]

    # --- s1 = PReLU(BN(conv3x3(s1_in)))   (K = 9*C/2 dot)
    fill(pad_h, s1_in, 0, C // 2)
    s1z = conv3x3(pad_h, ws1_ref, 0, C // 2) + aff(_BIAS_S1)
    s1 = jnp.where(s1z > 0, s1z, aff(_ALPHA_S1) * s1z)

    # --- s2 = sigmoid(SyncBN(conv1x1(s2_in)))   (reciprocal on the EUP slot)
    s2z = jnp.dot(s2_in.astype(bf16), ws2_ref[...],
                  preferred_element_type=f32) + aff(_BIAS_S2)
    s2 = pl.reciprocal(1.0 + jnp.exp(-s2z), approx=True)

    # --- out = PReLU(BN(conv3x3(cat([ml1, ml2]))))
    #     concat avoided: ml1 -> channels [0:C), ml2 -> [C:2C) of the same padded
    #     buffer; a single K = 9*2C im2col dot replaces two convs + add.
    fill(pad_a, s1 * y_feat, 0, C)                      # ml1
    fill(pad_a, s2 * x_feat, C, 2 * C)                  # ml2
    oz = conv3x3(pad_a, wf_ref, 0, 2 * C) + aff(_BIAS_F)
    res = jnp.where(oz > 0, oz, aff(_ALPHA_F) * oz)     # (S, C) f32

    # lane-dense output: (C, S) so the writeback uses full 128-lane stores
    o_ref[0] = res.T.astype(o_ref.dtype)


# ---------------------------------------------------------------------------
# Glue: parameters, bilinear matrix, module forward
# ---------------------------------------------------------------------------

def global_feature_upsample(x_gui, y_high, params, R):
    """x_gui: NCHW (B, low_c, H, W); y_high: NCHW (B, in_c, h2, w2) -> (B, out_c, H, W)."""
    B, low_c, H, W = x_gui.shape
    _, in_c, h2, w2 = y_high.shape
    C = params["w1"].shape[1]
    S, S2 = H * W, h2 * w2
    bf16 = jnp.bfloat16

    # channels-last, flattened spatial, bf16 matmul operands (f32 accum in-kernel)
    x = jnp.transpose(x_gui, (0, 2, 3, 1)).reshape(B, S, low_c).astype(bf16)
    y = jnp.transpose(y_high, (0, 2, 3, 1)).reshape(B, S2, in_c).astype(bf16)

    # fold BN scale into conv weights; biases / PReLU slopes go into one table.
    # 3x3 weights are reshaped tap-major to (9*c_in, C) to match the im2col slab.
    w1 = (params["w1"] * params["bn1_scale"][None, :]).astype(bf16)
    w2 = params["w2"].astype(bf16)
    w3 = (params["w3"] * params["bn3_scale"][None, None, :]).reshape(9 * C, C).astype(bf16)
    ws1 = (params["ws1"] * params["bns1_scale"][None, None, :]
           ).reshape(9 * (C // 2), C).astype(bf16)
    ws2 = (params["ws2"] * params["bns2_scale"][None, :]).astype(bf16)
    wf = (params["wf"] * params["bnf_scale"][None, None, :]
          ).reshape(9 * 2 * C, C).astype(bf16)          # per-tap [ml1 | ml2] channels
    rb = R.astype(bf16)

    affine = jnp.stack([
        params["bn1_bias"], params["alpha1"],
        params["bn3_bias"], params["alpha3"],
        params["bns1_bias"], params["alphas1"],
        params["bns2_bias"],
        params["bnf_bias"], params["alphaf"],
    ], axis=0).astype(jnp.float32)          # (9, C)

    out = pl.pallas_call(
        functools.partial(_gfu_kernel, H=H, W=W),
        out_shape=jax.ShapeDtypeStruct((B, C, S), jnp.float32),
        grid=(B,),
        in_specs=[
            pl.BlockSpec((1, S2, in_c), lambda b: (b, 0, 0)),    # y (low-res)
            pl.BlockSpec((1, S, low_c), lambda b: (b, 0, 0)),    # x_gui
            pl.BlockSpec((S, S2), lambda b: (0, 0)),             # bilinear matrix R
            pl.BlockSpec((low_c, C), lambda b: (0, 0)),          # w1 (scale folded)
            pl.BlockSpec((in_c, C), lambda b: (0, 0)),           # w2
            pl.BlockSpec((9 * C, C), lambda b: (0, 0)),          # w3   (im2col K-major)
            pl.BlockSpec((9 * (C // 2), C), lambda b: (0, 0)),   # ws1  (im2col K-major)
            pl.BlockSpec((C // 2, C), lambda b: (0, 0)),         # ws2
            pl.BlockSpec((9 * 2 * C, C), lambda b: (0, 0)),      # wf   (ml1|ml2 merged)
            pl.BlockSpec((9, C), lambda b: (0, 0)),              # bias/alpha table
        ],
        out_specs=pl.BlockSpec((1, C, S), lambda b: (b, 0, 0)),  # lane-dense (C, H*W)
        scratch_shapes=[
            pltpu.VMEM((H + 2, W + 2, 2 * C), jnp.bfloat16),     # fuse_in / [ml1|ml2]
            pltpu.VMEM((H + 2, W + 2, C // 2), jnp.bfloat16),    # s1_in (padded)
            pltpu.VMEM((S, 9 * 2 * C), jnp.bfloat16),            # im2col slab
        ],
        compiler_params=pltpu.CompilerParams(
            dimension_semantics=("parallel",)),                  # v7x: one image per TC
    )(y, x, rb, w1, w2, w3, ws1, ws2, wf, affine)

    return out.reshape(B, C, H, W)                               # already NCHW


def bilinear_matrix_1d(out_size, in_size):
    """align_corners=True bilinear interpolation matrix (out_size, in_size)."""
    R = np.zeros((out_size, in_size), dtype=np.float32)
    for i in range(out_size):
        src = 0.0 if out_size == 1 else i * (in_size - 1) / (out_size - 1)
        i0 = min(max(int(np.floor(src)), 0), in_size - 1)
        i1 = min(i0 + 1, in_size - 1)
        f = src - i0
        R[i, i0] += 1.0 - f
        R[i, i1] += f
    return R


def fold_bn(gamma, beta, mean, var, eps=1e-5):
    scale = gamma / jnp.sqrt(var + eps)
    bias = beta - mean * scale
    return scale, bias


def init_params(key, low_c, in_c, out_c):
    ks = iter(jax.random.split(key, 40))

    def nrm(shape, s=0.1):
        return jax.random.normal(next(ks), shape, dtype=jnp.float32) * s

    def bn(c):
        gamma = 1.0 + nrm((c,), 0.1)
        beta = nrm((c,), 0.1)
        mean = nrm((c,), 0.1)
        var = 1.0 + jax.random.uniform(next(ks), (c,), dtype=jnp.float32) * 0.5
        return fold_bn(gamma, beta, mean, var)

    def prelu(c):
        return 0.25 + nrm((c,), 0.05)

    p = {}
    p["w1"] = nrm((low_c, out_c))                 # conv1 1x1  low -> out
    p["bn1_scale"], p["bn1_bias"] = bn(out_c)
    p["alpha1"] = prelu(out_c)
    p["w2"] = nrm((in_c, out_c))                  # conv2 1x1  in -> out (ReLU)
    p["w3"] = nrm((9, out_c, out_c))              # conv3 3x3  out -> out
    p["bn3_scale"], p["bn3_bias"] = bn(out_c)
    p["alpha3"] = prelu(out_c)
    p["ws1"] = nrm((9, out_c // 2, out_c))        # s1 3x3  out//2 -> out
    p["bns1_scale"], p["bns1_bias"] = bn(out_c)
    p["alphas1"] = prelu(out_c)
    p["ws2"] = nrm((out_c // 2, out_c))           # s2 1x1  out//2 -> out (BN + sigmoid)
    p["bns2_scale"], p["bns2_bias"] = bn(out_c)
    p["wf"] = nrm((9, 2 * out_c, out_c))          # fuse 3x3  2*out -> out
    p["bnf_scale"], p["bnf_bias"] = bn(out_c)
    p["alphaf"] = prelu(out_c)
    return p


# ---------------------------------------------------------------------------
# Pure-JAX reference (for a correctness check)
# ---------------------------------------------------------------------------

def _conv3x3_ref(x, w9):
    B, H, W, _ = x.shape
    xp = jnp.pad(x, ((0, 0), (1, 1), (1, 1), (0, 0)))
    out = 0.0
    for dy in range(3):
        for dx in range(3):
            out = out + jnp.einsum("bhwc,cd->bhwd",
                                   xp[:, dy:dy + H, dx:dx + W, :], w9[dy * 3 + dx],
                                   precision=jax.lax.Precision.HIGHEST)
    return out


def reference_forward(x_gui, y_high, p, R):
    P = jax.lax.Precision.HIGHEST
    B, low_c, H, W = x_gui.shape
    _, in_c, h2, w2 = y_high.shape
    out_c = p["w1"].shape[1]
    x = jnp.transpose(x_gui, (0, 2, 3, 1)).astype(jnp.float32)
    y = jnp.transpose(y_high, (0, 2, 3, 1)).astype(jnp.float32)

    y_flat = y.reshape(B, h2 * w2, in_c)
    y_up = jnp.einsum("pk,bkc->bpc", R, y_flat, precision=P)
    y_feat = jnp.maximum(jnp.einsum("bpc,cd->bpd", y_up, p["w2"], precision=P), 0.0)
    y_feat = y_feat.reshape(B, H, W, out_c)

    x_feat = jnp.einsum("bhwc,cd->bhwd", x, p["w1"], precision=P)
    x_feat = x_feat * p["bn1_scale"] + p["bn1_bias"]
    x_feat = jnp.where(x_feat > 0, x_feat, p["alpha1"] * x_feat)

    fuse = _conv3x3_ref(y_feat + x_feat, p["w3"])
    fuse = fuse * p["bn3_scale"] + p["bn3_bias"]
    fuse = jnp.where(fuse > 0, fuse, p["alpha3"] * fuse)

    s1_in = fuse[..., : out_c // 2]
    s2_in = fuse[..., out_c // 2:]

    s1 = _conv3x3_ref(s1_in, p["ws1"])
    s1 = s1 * p["bns1_scale"] + p["bns1_bias"]
    s1 = jnp.where(s1 > 0, s1, p["alphas1"] * s1)

    s2 = jnp.einsum("bhwc,cd->bhwd", s2_in, p["ws2"], precision=P)
    s2 = s2 * p["bns2_scale"] + p["bns2_bias"]
    s2 = 1.0 / (1.0 + jnp.exp(-s2))

    ml1 = s1 * y_feat
    ml2 = s2 * x_feat
    cat = jnp.concatenate([ml1, ml2], axis=-1)
    out = _conv3x3_ref(cat, p["wf"])
    out = out * p["bnf_scale"] + p["bnf_bias"]
    out = jnp.where(out > 0, out, p["alphaf"] * out)
    return jnp.transpose(out, (0, 3, 1, 2))


# ---------------------------------------------------------------------------

if __name__ == "__main__":
    B, low_c, in_c, out_c = 2, 8, 12, 16
    H, W, h2, w2 = 16, 16, 8, 8

    key = jax.random.PRNGKey(0)
    kx, ky, kp = jax.random.split(key, 3)
    x_gui = jax.random.normal(kx, (B, low_c, H, W), dtype=jnp.float32)
    y_high = jax.random.normal(ky, (B, in_c, h2, w2), dtype=jnp.float32)
    params = init_params(kp, low_c, in_c, out_c)

    # align_corners=True bilinear upsample as a single (H*W, h2*w2) matrix.
    R = jnp.asarray(np.kron(bilinear_matrix_1d(H, h2), bilinear_matrix_1d(W, w2)))

    fwd = jax.jit(global_feature_upsample)
    out = jax.block_until_ready(fwd(x_gui, y_high, params, R))

    ref = jax.block_until_ready(reference_forward(x_gui, y_high, params, R))
    assert out.shape == (B, out_c, H, W), out.shape
    np.testing.assert_allclose(np.asarray(out), np.asarray(ref), rtol=5e-2, atol=5e-2)

    print("KERNEL_OK")
</pallas_src>

<mosaic_0001>
module attributes {stable_mosaic.version = 11 : i64} {
  func.func @_gfu_kernel(%arg0: i32, %arg1: memref<1x64x12xbf16, #tpu.memory_space<vmem>>, %arg2: memref<1x256x8xbf16, #tpu.memory_space<vmem>>, %arg3: memref<256x64xbf16, #tpu.memory_space<vmem>>, %arg4: memref<8x16xbf16, #tpu.memory_space<vmem>>, %arg5: memref<12x16xbf16, #tpu.memory_space<vmem>>, %arg6: memref<144x16xbf16, #tpu.memory_space<vmem>>, %arg7: memref<72x16xbf16, #tpu.memory_space<vmem>>, %arg8: memref<8x16xbf16, #tpu.memory_space<vmem>>, %arg9: memref<288x16xbf16, #tpu.memory_space<vmem>>, %arg10: memref<9x16xf32, #tpu.memory_space<vmem>>, %arg11: memref<1x16x256xf32, #tpu.memory_space<vmem>>, %arg12: memref<18x18x32xbf16, #tpu.memory_space<vmem>>, %arg13: memref<18x18x8xbf16, #tpu.memory_space<vmem>>, %arg14: memref<256x288xbf16, #tpu.memory_space<vmem>>) attributes {dimension_semantics = [#tpu.dimension_semantics<parallel>], iteration_bounds = array<i64: 2>, scalar_prefetch = 0 : i64, scratch_operands = 3 : i64, tpu.core_type = #tpu.core_type<tc>, window_params = [{transform_indices = @transform_0, window_bounds = array<i64: 1, 64, 12>}, {transform_indices = @transform_1, window_bounds = array<i64: 1, 256, 8>}, {pipeline_mode = #tpu.pipeline_mode<synchronous>, transform_indices = @transform_2, window_bounds = array<i64: 256, 64>}, {pipeline_mode = #tpu.pipeline_mode<synchronous>, transform_indices = @transform_3, window_bounds = array<i64: 8, 16>}, {pipeline_mode = #tpu.pipeline_mode<synchronous>, transform_indices = @transform_4, window_bounds = array<i64: 12, 16>}, {pipeline_mode = #tpu.pipeline_mode<synchronous>, transform_indices = @transform_5, window_bounds = array<i64: 144, 16>}, {pipeline_mode = #tpu.pipeline_mode<synchronous>, transform_indices = @transform_6, window_bounds = array<i64: 72, 16>}, {pipeline_mode = #tpu.pipeline_mode<synchronous>, transform_indices = @transform_7, window_bounds = array<i64: 8, 16>}, {pipeline_mode = #tpu.pipeline_mode<synchronous>, transform_indices = @transform_8, window_bounds = array<i64: 288, 16>}, {pipeline_mode = #tpu.pipeline_mode<synchronous>, transform_indices = @transform_9, window_bounds = array<i64: 9, 16>}, {transform_indices = @transform_10, window_bounds = array<i64: 1, 16, 256>}]} {
    %cst = arith.constant 0.000000e+00 : bf16
    %0 = vector.broadcast %cst : bf16 to vector<1x18x32xbf16>
    %c0 = arith.constant 0 : index
    %c0_0 = arith.constant 0 : index
    %c0_1 = arith.constant 0 : index
    %1 = vector.load %arg12[%c0, %c0_0, %c0_1] : memref<18x18x32xbf16, #tpu.memory_space<vmem>>, vector<1x18x32xbf16>
    tpu.vector_store %arg12[%c0, %c0_0, %c0_1], %0 {strides = array<i32>} : memref<18x18x32xbf16, #tpu.memory_space<vmem>>, vector<1x18x32xbf16>,
    %cst_2 = arith.constant 0.000000e+00 : bf16
    %2 = vector.broadcast %cst_2 : bf16 to vector<1x18x32xbf16>
    %c17 = arith.constant 17 : index
    %c0_3 = arith.constant 0 : index
    %c0_4 = arith.constant 0 : index
    %3 = vector.load %arg12[%c17, %c0_3, %c0_4] : memref<18x18x32xbf16, #tpu.memory_space<vmem>>, vector<1x18x32xbf16>
    tpu.vector_store %arg12[%c17, %c0_3, %c0_4], %2 {strides = array<i32>} : memref<18x18x32xbf16, #tpu.memory_space<vmem>>, vector<1x18x32xbf16>,
    %cst_5 = arith.constant 0.000000e+00 : bf16
    %4 = vector.broadcast %cst_5 : bf16 to vector<18x1x32xbf16>
    %c0_6 = arith.constant 0 : index
    %c0_7 = arith.constant 0 : index
    %c0_8 = arith.constant 0 : index
    %5 = vector.load %arg12[%c0_6, %c0_7, %c0_8] : memref<18x18x32xbf16, #tpu.memory_space<vmem>>, vector<18x1x32xbf16>
    tpu.vector_store %arg12[%c0_6, %c0_7, %c0_8], %4 {strides = array<i32>} : memref<18x18x32xbf16, #tpu.memory_space<vmem>>, vector<18x1x32xbf16>,
    %cst_9 = arith.constant 0.000000e+00 : bf16
    %6 = vector.broadcast %cst_9 : bf16 to vector<18x1x32xbf16>
    %c0_10 = arith.constant 0 : index
    %c17_11 = arith.constant 17 : index
    %c0_12 = arith.constant 0 : index
    %7 = vector.load %arg12[%c0_10, %c17_11, %c0_12] : memref<18x18x32xbf16, #tpu.memory_space<vmem>>, vector<18x1x32xbf16>
    tpu.vector_store %arg12[%c0_10, %c17_11, %c0_12], %6 {strides = array<i32>} : memref<18x18x32xbf16, #tpu.memory_space<vmem>>, vector<18x1x32xbf16>,
    %cst_13 = arith.constant 0.000000e+00 : bf16
    %8 = vector.broadcast %cst_13 : bf16 to vector<1x18x8xbf16>
    %c0_14 = arith.constant 0 : index
    %c0_15 = arith.constant 0 : index
    %c0_16 = arith.constant 0 : index
    %9 = vector.load %arg13[%c0_14, %c0_15, %c0_16] : memref<18x18x8xbf16, #tpu.memory_space<vmem>>, vector<1x18x8xbf16>
    tpu.vector_store %arg13[%c0_14, %c0_15, %c0_16], %8 {strides = array<i32>} : memref<18x18x8xbf16, #tpu.memory_space<vmem>>, vector<1x18x8xbf16>,
    %cst_17 = arith.constant 0.000000e+00 : bf16
    %10 = vector.broadcast %cst_17 : bf16 to vector<1x18x8xbf16>
    %c17_18 = arith.constant 17 : index
    %c0_19 = arith.constant 0 : index
    %c0_20 = arith.constant 0 : index
    %11 = vector.load %arg13[%c17_18, %c0_19, %c0_20] : memref<18x18x8xbf16, #tpu.memory_space<vmem>>, vector<1x18x8xbf16>
    tpu.vector_store %arg13[%c17_18, %c0_19, %c0_20], %10 {strides = array<i32>} : memref<18x18x8xbf16, #tpu.memory_space<vmem>>, vector<1x18x8xbf16>,
    %cst_21 = arith.constant 0.000000e+00 : bf16
    %12 = vector.broadcast %cst_21 : bf16 to vector<18x1x8xbf16>
    %c0_22 = arith.constant 0 : index
    %c0_23 = arith.constant 0 : index
    %c0_24 = arith.constant 0 : index
    %13 = vector.load %arg13[%c0_22, %c0_23, %c0_24] : memref<18x18x8xbf16, #tpu.memory_space<vmem>>, vector<18x1x8xbf16>
    tpu.vector_store %arg13[%c0_22, %c0_23, %c0_24], %12 {strides = array<i32>} : memref<18x18x8xbf16, #tpu.memory_space<vmem>>, vector<18x1x8xbf16>,
    %cst_25 = arith.constant 0.000000e+00 : bf16
    %14 = vector.broadcast %cst_25 : bf16 to vector<18x1x8xbf16>
    %c0_26 = arith.constant 0 : index
    %c17_27 = arith.constant 17 : index
    %c0_28 = arith.constant 0 : index
    %15 = vector.load %arg13[%c0_26, %c17_27, %c0_28] : memref<18x18x8xbf16, #tpu.memory_space<vmem>>, vector<18x1x8xbf16>
    tpu.vector_store %arg13[%c0_26, %c17_27, %c0_28], %14 {strides = array<i32>} : memref<18x18x8xbf16, #tpu.memory_space<vmem>>, vector<18x1x8xbf16>,
    %c0_29 = arith.constant 0 : index
    %c0_30 = arith.constant 0 : index
    %16 = vector.load %arg3[%c0_29, %c0_30] : memref<256x64xbf16, #tpu.memory_space<vmem>>, vector<256x64xbf16>
    %c0_31 = arith.constant 0 : index
    %c0_32 = arith.constant 0 : index
    %c0_33 = arith.constant 0 : index
    %17 = vector.load %arg1[%c0_31, %c0_32, %c0_33] : memref<1x64x12xbf16, #tpu.memory_space<vmem>>, vector<1x64x12xbf16>
    %18 = vector.shape_cast %17 : vector<1x64x12xbf16> to vector<64x12xbf16>
    %cst_34 = arith.constant dense<0.000000e+00> : vector<256x12xf32>
    %19 = tpu.matmul %16, %18, %cst_34 {dimension_numbers = #tpu.dot_dimension_numbers<[1], [0], [0], [1], [0, 0, 1, 1], [], []>} : vector<256x64xbf16>, vector<64x12xbf16>, vector<256x12xf32> -> vector<256x12xf32>
    %20 = arith.truncf %19 : vector<256x12xf32> to vector<256x12xbf16>
    %c0_35 = arith.constant 0 : index
    %c0_36 = arith.constant 0 : index
    %21 = vector.load %arg5[%c0_35, %c0_36] : memref<12x16xbf16, #tpu.memory_space<vmem>>, vector<12x16xbf16>
    %cst_37 = arith.constant dense<0.000000e+00> : vector<256x16xf32>
    %22 = tpu.matmul %20, %21, %cst_37 {dimension_numbers = #tpu.dot_dimension_numbers<[1], [0], [0], [1], [0, 0, 1, 1], [], []>} : vector<256x12xbf16>, vector<12x16xbf16>, vector<256x16xf32> -> vector<256x16xf32>
    %cst_38 = arith.constant 0.000000e+00 : f32
    %23 = vector.broadcast %cst_38 : f32 to vector<256x16xf32>
    %24 = arith.maximumf %22, %23 : vector<256x16xf32>
    %c0_39 = arith.constant 0 : index
    %c0_40 = arith.constant 0 : index
    %c0_41 = arith.constant 0 : index
    %25 = vector.load %arg2[%c0_39, %c0_40, %c0_41] : memref<1x256x8xbf16, #tpu.memory_space<vmem>>, vector<1x256x8xbf16>
    %26 = vector.shape_cast %25 : vector<1x256x8xbf16> to vector<256x8xbf16>
    %c0_42 = arith.constant 0 : index
    %c0_43 = arith.constant 0 : index
    %27 = vector.load %arg4[%c0_42, %c0_43] : memref<8x16xbf16, #tpu.memory_space<vmem>>, vector<8x16xbf16>
    %cst_44 = arith.constant dense<0.000000e+00> : vector<256x16xf32>
    %28 = tpu.matmul %26, %27, %cst_44 {dimension_numbers = #tpu.dot_dimension_numbers<[1], [0], [0], [1], [0, 0, 1, 1], [], []>} : vector<256x8xbf16>, vector<8x16xbf16>, vector<256x16xf32> -> vector<256x16xf32>
    %c0_45 = arith.constant 0 : index
    %c0_46 = arith.constant 0 : index
    %29 = vector.load %arg10[%c0_45, %c0_46] : memref<9x16xf32, #tpu.memory_space<vmem>>, vector<1x16xf32>
    %30 = vector.broadcast %29 : vector<1x16xf32> to vector<256x16xf32>
    %31 = arith.addf %28, %30 : vector<256x16xf32>
    %cst_47 = arith.constant 0.000000e+00 : f32
    %32 = vector.broadcast %cst_47 : f32 to vector<256x16xf32>
    %33 = arith.cmpf ogt, %31, %32 : vector<256x16xf32>
    %c1 = arith.constant 1 : index
    %c0_48 = arith.constant 0 : index
    %34 = vector.load %arg10[%c1, %c0_48] : memref<9x16xf32, #tpu.memory_space<vmem>>, vector<1x16xf32>
    %35 = vector.broadcast %34 : vector<1x16xf32> to vector<256x16xf32>
    %36 = arith.mulf %35, %31 : vector<256x16xf32>
    %37 = arith.select %33, %31, %36 : vector<256x16xi1>, vector<256x16xf32>
    %38 = arith.addf %24, %37 : vector<256x16xf32>
    %39 = vector.shape_cast %38 : vector<256x16xf32> to vector<16x16x16xf32>
    %40 = arith.truncf %39 : vector<16x16x16xf32> to vector<16x16x16xbf16>
    %c1_49 = arith.constant 1 : index
    %c1_50 = arith.constant 1 : index
    %c0_51 = arith.constant 0 : index
    %41 = vector.load %arg12[%c1_49, %c1_50, %c0_51] : memref<18x18x32xbf16, #tpu.memory_space<vmem>>, vector<16x16x16xbf16>
    tpu.vector_store %arg12[%c1_49, %c1_50, %c0_51], %40 {strides = array<i32>} : memref<18x18x32xbf16, #tpu.memory_space<vmem>>, vector<16x16x16xbf16>,
    %c0_52 = arith.constant 0 : index
    %c0_53 = arith.constant 0 : index
    %c0_54 = arith.constant 0 : index
    %42 = vector.load %arg12[%c0_52, %c0_53, %c0_54] : memref<18x18x32xbf16, #tpu.memory_space<vmem>>, vector<18x18x32xbf16>
    %43 = vector.extract_strided_slice %42 {offsets = [0, 0, 0], sizes = [16, 16, 16], strides = [1, 1, 1]} : vector<18x18x32xbf16> to vector<16x16x16xbf16>
    %44 = vector.shape_cast %43 : vector<16x16x16xbf16> to vector<256x16xbf16>
    %c0_55 = arith.constant 0 : index
    %c0_56 = arith.constant 0 : index
    %45 = vector.load %arg14[%c0_55, %c0_56] : memref<256x288xbf16, #tpu.memory_space<vmem>>, vector<256x16xbf16>
    tpu.vector_store %arg14[%c0_55, %c0_56], %44 {strides = array<i32>} : memref<256x288xbf16, #tpu.memory_space<vmem>>, vector<256x16xbf16>,
    %46 = vector.extract_strided_slice %42 {offsets = [0, 1, 0], sizes = [16, 16, 16], strides = [1, 1, 1]} : vector<18x18x32xbf16> to vector<16x16x16xbf16>
    %47 = vector.shape_cast %46 : vector<16x16x16xbf16> to vector<256x16xbf16>
    %c0_57 = arith.constant 0 : index
    %c16 = arith.constant 16 : index
    %48 = vector.load %arg14[%c0_57, %c16] : memref<256x288xbf16, #tpu.memory_space<vmem>>, vector<256x16xbf16>
    tpu.vector_store %arg14[%c0_57, %c16], %47 {strides = array<i32>} : memref<256x288xbf16, #tpu.memory_space<vmem>>, vector<256x16xbf16>,
    %49 = vector.extract_strided_slice %42 {offsets = [0, 2, 0], sizes = [16, 16, 16], strides = [1, 1, 1]} : vector<18x18x32xbf16> to vector<16x16x16xbf16>
    %50 = vector.shape_cast %49 : vector<16x16x16xbf16> to vector<256x16xbf16>
    %c0_58 = arith.constant 0 : index
    %c32 = arith.constant 32 : index
    %51 = vector.load %arg14[%c0_58, %c32] : memref<256x288xbf16, #tpu.memory_space<vmem>>, vector<256x16xbf16>
    tpu.vector_store %arg14[%c0_58, %c32], %50 {strides = array<i32>} : memref<256x288xbf16, #tpu.memory_space<vmem>>, vector<256x16xbf16>,
    %52 = vector.extract_strided_slice %42 {offsets = [1, 0, 0], sizes = [16, 16, 16], strides = [1, 1, 1]} : vector<18x18x32xbf16> to vector<16x16x16xbf16>
    %53 = vector.shape_cast %52 : vector<16x16x16xbf16> to vector<256x16xbf16>
    %c0_59 = arith.constant 0 : index
    %c48 = arith.constant 48 : index
    %54 = vector.load %arg14[%c0_59, %c48] : memref<256x288xbf16, #tpu.memory_space<vmem>>, vector<256x16xbf16>
    tpu.vector_store %arg14[%c0_59, %c48], %53 {strides = array<i32>} : memref<256x288xbf16, #tpu.memory_space<vmem>>, vector<256x16xbf16>,
    %55 = vector.extract_strided_slice %42 {offsets = [1, 1, 0], sizes = [16, 16, 16], strides = [1, 1, 1]} : vector<18x18x32xbf16> to vector<16x16x16xbf16>
    %56 = vector.shape_cast %55 : vector<16x16x16xbf16> to vector<256x16xbf16>
    %c0_60 = arith.constant 0 : index
    %c64 = arith.constant 64 : index
    %57 = vector.load %arg14[%c0_60, %c64] : memref<256x288xbf16, #tpu.memory_space<vmem>>, vector<256x16xbf16>
    tpu.vector_store %arg14[%c0_60, %c64], %56 {strides = array<i32>} : memref<256x288xbf16, #tpu.memory_space<vmem>>, vector<256x16xbf16>,
    %58 = vector.extract_strided_slice %42 {offsets = [1, 2, 0], sizes = [16, 16, 16], strides = [1, 1, 1]} : vector<18x18x32xbf16> to vector<16x16x16xbf16>
    %59 = vector.shape_cast %58 : vector<16x16x16xbf16> to vector<256x16xbf16>
    %c0_61 = arith.constant 0 : index
    %c80 = arith.constant 80 : index
    %60 = vector.load %arg14[%c0_61, %c80] : memref<256x288xbf16, #tpu.memory_space<vmem>>, vector<256x16xbf16>
    tpu.vector_store %arg14[%c0_61, %c80], %59 {strides = array<i32>} : memref<256x288xbf16, #tpu.memory_space<vmem>>, vector<256x16xbf16>,
    %61 = vector.extract_strided_slice %42 {offsets = [2, 0, 0], sizes = [16, 16, 16], strides = [1, 1, 1]} : vector<18x18x32xbf16> to vector<16x16x16xbf16>
    %62 = vector.shape_cast %61 : vector<16x16x16xbf16> to vector<256x16xbf16>
    %c0_62 = arith.constant 0 : index
    %c96 = arith.constant 96 : index
    %63 = vector.load %arg14[%c0_62, %c96] : memref<256x288xbf16, #tpu.memory_space<vmem>>, vector<256x16xbf16>
    tpu.vector_store %arg14[%c0_62, %c96], %62 {strides = array<i32>} : memref<256x288xbf16, #tpu.memory_space<vmem>>, vector<256x16xbf16>,
    %64 = vector.extract_strided_slice %42 {offsets = [2, 1, 0], sizes = [16, 16, 16], strides = [1, 1, 1]} : vector<18x18x32xbf16> to vector<16x16x16xbf16>
    %65 = vector.shape_cast %64 : vector<16x16x16xbf16> to vector<256x16xbf16>
    %c0_63 = arith.constant 0 : index
    %c112 = arith.constant 112 : index
    %66 = vector.load %arg14[%c0_63, %c112] : memref<256x288xbf16, #tpu.memory_space<vmem>>, vector<256x16xbf16>
    tpu.vector_store %arg14[%c0_63, %c112], %65 {strides = array<i32>} : memref<256x288xbf16, #tpu.memory_space<vmem>>, vector<256x16xbf16>,
    %67 = vector.extract_strided_slice %42 {offsets = [2, 2, 0], sizes = [16, 16, 16], strides = [1, 1, 1]} : vector<18x18x32xbf16> to vector<16x16x16xbf16>
    %68 = vector.shape_cast %67 : vector<16x16x16xbf16> to vector<256x16xbf16>
    %c0_64 = arith.constant 0 : index
    %c128 = arith.constant 128 : index
    %69 = vector.load %arg14[%c0_64, %c128] : memref<256x288xbf16, #tpu.memory_space<vmem>>, vector<256x16xbf16>
    tpu.vector_store %arg14[%c0_64, %c128], %68 {strides = array<i32>} : memref<256x288xbf16, #tpu.memory_space<vmem>>, vector<256x16xbf16>,
    %c0_65 = arith.constant 0 : index
    %c0_66 = arith.constant 0 : index
    %70 = vector.load %arg14[%c0_65, %c0_66] : memref<256x288xbf16, #tpu.memory_space<vmem>>, vector<256x144xbf16>
    %c0_67 = arith.constant 0 : index
    %c0_68 = arith.constant 0 : index
    %71 = vector.load %arg6[%c0_67, %c0_68] : memref<144x16xbf16, #tpu.memory_space<vmem>>, vector<144x16xbf16>
    %cst_69 = arith.constant dense<0.000000e+00> : vector<256x16xf32>
    %72 = tpu.matmul %70, %71, %cst_69 {dimension_numbers = #tpu.dot_dimension_numbers<[1], [0], [0], [1], [0, 0, 1, 1], [], []>} : vector<256x144xbf16>, vector<144x16xbf16>, vector<256x16xf32> -> vector<256x16xf32>
    %c2 = arith.constant 2 : index
    %c0_70 = arith.constant 0 : index
    %73 = vector.load %arg10[%c2, %c0_70] : memref<9x16xf32, #tpu.memory_space<vmem>>, vector<1x16xf32>
    %74 = vector.broadcast %73 : vector<1x16xf32> to vector<256x16xf32>
    %75 = arith.addf %72, %74 : vector<256x16xf32>
    %cst_71 = arith.constant 0.000000e+00 : f32
    %76 = vector.broadcast %cst_71 : f32 to vector<256x16xf32>
    %77 = arith.cmpf ogt, %75, %76 : vector<256x16xf32>
    %c3 = arith.constant 3 : index
    %c0_72 = arith.constant 0 : index
    %78 = vector.load %arg10[%c3, %c0_72] : memref<9x16xf32, #tpu.memory_space<vmem>>, vector<1x16xf32>
    %79 = vector.broadcast %78 : vector<1x16xf32> to vector<256x16xf32>
    %80 = arith.mulf %79, %75 : vector<256x16xf32>
    %81 = arith.select %77, %75, %80 : vector<256x16xi1>, vector<256x16xf32>
    %82 = vector.extract_strided_slice %81 {offsets = [0, 0], sizes = [256, 8], strides = [1, 1]} : vector<256x16xf32> to vector<256x8xf32>
    %83 = vector.extract_strided_slice %81 {offsets = [0, 8], sizes = [256, 8], strides = [1, 1]} : vector<256x16xf32> to vector<256x8xf32>
    %84 = vector.shape_cast %82 : vector<256x8xf32> to vector<16x16x8xf32>
    %85 = arith.truncf %84 : vector<16x16x8xf32> to vector<16x16x8xbf16>
    %c1_73 = arith.constant 1 : index
    %c1_74 = arith.constant 1 : index
    %c0_75 = arith.constant 0 : index
    %86 = vector.load %arg13[%c1_73, %c1_74, %c0_75] : memref<18x18x8xbf16, #tpu.memory_space<vmem>>, vector<16x16x8xbf16>
    tpu.vector_store %arg13[%c1_73, %c1_74, %c0_75], %85 {strides = array<i32>} : memref<18x18x8xbf16, #tpu.memory_space<vmem>>, vector<16x16x8xbf16>,
    %c0_76 = arith.constant 0 : index
    %c0_77 = arith.constant 0 : index
    %c0_78 = arith.constant 0 : index
    %87 = vector.load %arg13[%c0_76, %c0_77, %c0_78] : memref<18x18x8xbf16, #tpu.memory_space<vmem>>, vector<18x18x8xbf16>
    %88 = vector.extract_strided_slice %87 {offsets = [0, 0, 0], sizes = [16, 16, 8], strides = [1, 1, 1]} : vector<18x18x8xbf16> to vector<16x16x8xbf16>
    %89 = vector.shape_cast %88 : vector<16x16x8xbf16> to vector<256x8xbf16>
    %c0_79 = arith.constant 0 : index
    %c0_80 = arith.constant 0 : index
    %90 = vector.load %arg14[%c0_79, %c0_80] : memref<256x288xbf16, #tpu.memory_space<vmem>>, vector<256x8xbf16>
    tpu.vector_store %arg14[%c0_79, %c0_80], %89 {strides = array<i32>} : memref<256x288xbf16, #tpu.memory_space<vmem>>, vector<256x8xbf16>,
    %91 = vector.extract_strided_slice %87 {offsets = [0, 1, 0], sizes = [16, 16, 8], strides = [1, 1, 1]} : vector<18x18x8xbf16> to vector<16x16x8xbf16>
    %92 = vector.shape_cast %91 : vector<16x16x8xbf16> to vector<256x8xbf16>
    %c0_81 = arith.constant 0 : index
    %c8 = arith.constant 8 : index
    %93 = vector.load %arg14[%c0_81, %c8] : memref<256x288xbf16, #tpu.memory_space<vmem>>, vector<256x8xbf16>
    tpu.vector_store %arg14[%c0_81, %c8], %92 {strides = array<i32>} : memref<256x288xbf16, #tpu.memory_space<vmem>>, vector<256x8xbf16>,
    %94 = vector.extract_strided_slice %87 {offsets = [0, 2, 0], sizes = [16, 16, 8], strides = [1, 1, 1]} : vector<18x18x8xbf16> to vector<16x16x8xbf16>
    %95 = vector.shape_cast %94 : vector<16x16x8xbf16> to vector<256x8xbf16>
    %c0_82 = arith.constant 0 : index
    %c16_83 = arith.constant 16 : index
    %96 = vector.load %arg14[%c0_82, %c16_83] : memref<256x288xbf16, #tpu.memory_space<vmem>>, vector<256x8xbf16>
    tpu.vector_store %arg14[%c0_82, %c16_83], %95 {strides = array<i32>} : memref<256x288xbf16, #tpu.memory_space<vmem>>, vector<256x8xbf16>,
    %97 = vector.extract_strided_slice %87 {offsets = [1, 0, 0], sizes = [16, 16, 8], strides = [1, 1, 1]} : vector<18x18x8xbf16> to vector<16x16x8xbf16>
    %98 = vector.shape_cast %97 : vector<16x16x8xbf16> to vector<256x8xbf16>
    %c0_84 = arith.constant 0 : index
    %c24 = arith.constant 24 : index
    %99 = vector.load %arg14[%c0_84, %c24] : memref<256x288xbf16, #tpu.memory_space<vmem>>, vector<256x8xbf16>
    tpu.vector_store %arg14[%c0_84, %c24], %98 {strides = array<i32>} : memref<256x288xbf16, #tpu.memory_space<vmem>>, vector<256x8xbf16>,
    %100 = vector.extract_strided_slice %87 {offsets = [1, 1, 0], sizes = [16, 16, 8], strides = [1, 1, 1]} : vector<18x18x8xbf16> to vector<16x16x8xbf16>
    %101 = vector.shape_cast %100 : vector<16x16x8xbf16> to vector<256x8xbf16>
    %c0_85 = arith.constant 0 : index
    %c32_86 = arith.constant 32 : index
    %102 = vector.load %arg14[%c0_85, %c32_86] : memref<256x288xbf16, #tpu.memory_space<vmem>>, vector<256x8xbf16>
    tpu.vector_store %arg14[%c0_85, %c32_86], %101 {strides = array<i32>} : memref<256x288xbf16, #tpu.memory_space<vmem>>, vector<256x8xbf16>,
    %103 = vector.extract_strided_slice %87 {offsets = [1, 2, 0], sizes = [16, 16, 8], strides = [1, 1, 1]} : vector<18x18x8xbf16> to vector<16x16x8xbf16>
    %104 = vector.shape_cast %103 : vector<16x16x8xbf16> to vector<256x8xbf16>
    %c0_87 = arith.constant 0 : index
    %c40 = arith.constant 40 : index
    %105 = vector.load %arg14[%c0_87, %c40] : memref<256x288xbf16, #tpu.memory_space<vmem>>, vector<256x8xbf16>
    tpu.vector_store %arg14[%c0_87, %c40], %104 {strides = array<i32>} : memref<256x288xbf16, #tpu.memory_space<vmem>>, vector<256x8xbf16>,
    %106 = vector.extract_strided_slice %87 {offsets = [2, 0, 0], sizes = [16, 16, 8], strides = [1, 1, 1]} : vector<18x18x8xbf16> to vector<16x16x8xbf16>
    %107 = vector.shape_cast %106 : vector<16x16x8xbf16> to vector<256x8xbf16>
    %c0_88 = arith.constant 0 : index
    %c48_89 = arith.constant 48 : index
    %108 = vector.load %arg14[%c0_88, %c48_89] : memref<256x288xbf16, #tpu.memory_space<vmem>>, vector<256x8xbf16>
    tpu.vector_store %arg14[%c0_88, %c48_89], %107 {strides = array<i32>} : memref<256x288xbf16, #tpu.memory_space<vmem>>, vector<256x8xbf16>,
    %109 = vector.extract_strided_slice %87 {offsets = [2, 1, 0], sizes = [16, 16, 8], strides = [1, 1, 1]} : vector<18x18x8xbf16> to vector<16x16x8xbf16>
    %110 = vector.shape_cast %109 : vector<16x16x8xbf16> to vector<256x8xbf16>
    %c0_90 = arith.constant 0 : index
    %c56 = arith.constant 56 : index
    %111 = vector.load %arg14[%c0_90, %c56] : memref<256x288xbf16, #tpu.memory_space<vmem>>, vector<256x8xbf16>
    tpu.vector_store %arg14[%c0_90, %c56], %110 {strides = array<i32>} : memref<256x288xbf16, #tpu.memory_space<vmem>>, vector<256x8xbf16>,
    %112 = vector.extract_strided_slice %87 {offsets = [2, 2, 0], sizes = [16, 16, 8], strides = [1, 1, 1]} : vector<18x18x8xbf16> to vector<16x16x8xbf16>
    %113 = vector.shape_cast %112 : vector<16x16x8xbf16> to vector<256x8xbf16>
    %c0_91 = arith.constant 0 : index
    %c64_92 = arith.constant 64 : index
    %114 = vector.load %arg14[%c0_91, %c64_92] : memref<256x288xbf16, #tpu.memory_space<vmem>>, vector<256x8xbf16>
    tpu.vector_store %arg14[%c0_91, %c64_92], %113 {strides = array<i32>} : memref<256x288xbf16, #tpu.memory_space<vmem>>, vector<256x8xbf16>,
    %c0_93 = arith.constant 0 : index
    %c0_94 = arith.constant 0 : index
    %115 = vector.load %arg14[%c0_93, %c0_94] : memref<256x288xbf16, #tpu.memory_space<vmem>>, vector<256x72xbf16>
    %c0_95 = arith.constant 0 : index
    %c0_96 = arith.constant 0 : index
    %116 = vector.load %arg7[%c0_95, %c0_96] : memref<72x16xbf16, #tpu.memory_space<vmem>>, vector<72x16xbf16>
    %cst_97 = arith.constant dense<0.000000e+00> : vector<256x16xf32>
    %117 = tpu.matmul %115, %116, %cst_97 {dimension_numbers = #tpu.dot_dimension_numbers<[1], [0], [0], [1], [0, 0, 1, 1], [], []>} : vector<256x72xbf16>, vector<72x16xbf16>, vector<256x16xf32> -> vector<256x16xf32>
    %c4 = arith.constant 4 : index
    %c0_98 = arith.constant 0 : index
    %118 = vector.load %arg10[%c4, %c0_98] : memref<9x16xf32, #tpu.memory_space<vmem>>, vector<1x16xf32>
    %119 = vector.broadcast %118 : vector<1x16xf32> to vector<256x16xf32>
    %120 = arith.addf %117, %119 : vector<256x16xf32>
    %cst_99 = arith.constant 0.000000e+00 : f32
    %121 = vector.broadcast %cst_99 : f32 to vector<256x16xf32>
    %122 = arith.cmpf ogt, %120, %121 : vector<256x16xf32>
    %c5 = arith.constant 5 : index
    %c0_100 = arith.constant 0 : index
    %123 = vector.load %arg10[%c5, %c0_100] : memref<9x16xf32, #tpu.memory_space<vmem>>, vector<1x16xf32>
    %124 = vector.broadcast %123 : vector<1x16xf32> to vector<256x16xf32>
    %125 = arith.mulf %124, %120 : vector<256x16xf32>
    %126 = arith.select %122, %120, %125 : vector<256x16xi1>, vector<256x16xf32>
    %127 = arith.truncf %83 : vector<256x8xf32> to vector<256x8xbf16>
    %c0_101 = arith.constant 0 : index
    %c0_102 = arith.constant 0 : index
    %128 = vector.load %arg8[%c0_101, %c0_102] : memref<8x16xbf16, #tpu.memory_space<vmem>>, vector<8x16xbf16>
    %cst_103 = arith.constant dense<0.000000e+00> : vector<256x16xf32>
    %129 = tpu.matmul %127, %128, %cst_103 {dimension_numbers = #tpu.dot_dimension_numbers<[1], [0], [0], [1], [0, 0, 1, 1], [], []>} : vector<256x8xbf16>, vector<8x16xbf16>, vector<256x16xf32> -> vector<256x16xf32>
    %c6 = arith.constant 6 : index
    %c0_104 = arith.constant 0 : index
    %130 = vector.load %arg10[%c6, %c0_104] : memref<9x16xf32, #tpu.memory_space<vmem>>, vector<1x16xf32>
    %131 = vector.broadcast %130 : vector<1x16xf32> to vector<256x16xf32>
    %132 = arith.addf %129, %131 : vector<256x16xf32>
    %cst_105 = arith.constant 0.000000e+00 : f32
    %133 = vector.broadcast %cst_105 : f32 to vector<256x16xf32>
    %134 = arith.subf %133, %132 : vector<256x16xf32>
    %135 = math.exp %134 : vector<256x16xf32>
    %cst_106 = arith.constant 1.000000e+00 : f32
    %136 = vector.broadcast %cst_106 : f32 to vector<256x16xf32>
    %137 = arith.addf %136, %135 : vector<256x16xf32>
    %138 = tpu.reciprocal %137 {approx = true} : vector<256x16xf32> -> vector<256x16xf32>
    %139 = arith.mulf %126, %24 : vector<256x16xf32>
    %140 = vector.shape_cast %139 : vector<256x16xf32> to vector<16x16x16xf32>
    %141 = arith.truncf %140 : vector<16x16x16xf32> to vector<16x16x16xbf16>
    %c1_107 = arith.constant 1 : index
    %c1_108 = arith.constant 1 : index
    %c0_109 = arith.constant 0 : index
    %142 = vector.load %arg12[%c1_107, %c1_108, %c0_109] : memref<18x18x32xbf16, #tpu.memory_space<vmem>>, vector<16x16x16xbf16>
    tpu.vector_store %arg12[%c1_107, %c1_108, %c0_109], %141 {strides = array<i32>} : memref<18x18x32xbf16, #tpu.memory_space<vmem>>, vector<16x16x16xbf16>,
    %143 = arith.mulf %138, %37 : vector<256x16xf32>
    %144 = vector.shape_cast %143 : vector<256x16xf32> to vector<16x16x16xf32>
    %145 = arith.truncf %144 : vector<16x16x16xf32> to vector<16x16x16xbf16>
    %c1_110 = arith.constant 1 : index
    %c1_111 = arith.constant 1 : index
    %c16_112 = arith.constant 16 : index
    %146 = vector.load %arg12[%c1_110, %c1_111, %c16_112] : memref<18x18x32xbf16, #tpu.memory_space<vmem>>, vector<16x16x16xbf16>
    tpu.vector_store %arg12[%c1_110, %c1_111, %c16_112], %145 {strides = array<i32>} : memref<18x18x32xbf16, #tpu.memory_space<vmem>>, vector<16x16x16xbf16>,
    %c0_113 = arith.constant 0 : index
    %c0_114 = arith.constant 0 : index
    %c0_115 = arith.constant 0 : index
    %147 = vector.load %arg12[%c0_113, %c0_114, %c0_115] : memref<18x18x32xbf16, #tpu.memory_space<vmem>>, vector<18x18x32xbf16>
    %148 = vector.extract_strided_slice %147 {offsets = [0, 0, 0], sizes = [16, 16, 32], strides = [1, 1, 1]} : vector<18x18x32xbf16> to vector<16x16x32xbf16>
    %149 = vector.shape_cast %148 : vector<16x16x32xbf16> to vector<256x32xbf16>
    %c0_116 = arith.constant 0 : index
    %c0_117 = arith.constant 0 : index
    %150 = vector.load %arg14[%c0_116, %c0_117] : memref<256x288xbf16, #tpu.memory_space<vmem>>, vector<256x32xbf16>
    tpu.vector_store %arg14[%c0_116, %c0_117], %149 {strides = array<i32>} : memref<256x288xbf16, #tpu.memory_space<vmem>>, vector<256x32xbf16>,
    %151 = vector.extract_strided_slice %147 {offsets = [0, 1, 0], sizes = [16, 16, 32], strides = [1, 1, 1]} : vector<18x18x32xbf16> to vector<16x16x32xbf16>
    %152 = vector.shape_cast %151 : vector<16x16x32xbf16> to vector<256x32xbf16>
    %c0_118 = arith.constant 0 : index
    %c32_119 = arith.constant 32 : index
    %153 = vector.load %arg14[%c0_118, %c32_119] : memref<256x288xbf16, #tpu.memory_space<vmem>>, vector<256x32xbf16>
    tpu.vector_store %arg14[%c0_118, %c32_119], %152 {strides = array<i32>} : memref<256x288xbf16, #tpu.memory_space<vmem>>, vector<256x32xbf16>,
    %154 = vector.extract_strided_slice %147 {offsets = [0, 2, 0], sizes = [16, 16, 32], strides = [1, 1, 1]} : vector<18x18x32xbf16> to vector<16x16x32xbf16>
    %155 = vector.shape_cast %154 : vector<16x16x32xbf16> to vector<256x32xbf16>
    %c0_120 = arith.constant 0 : index
    %c64_121 = arith.constant 64 : index
    %156 = vector.load %arg14[%c0_120, %c64_121] : memref<256x288xbf16, #tpu.memory_space<vmem>>, vector<256x32xbf16>
    tpu.vector_store %arg14[%c0_120, %c64_121], %155 {strides = array<i32>} : memref<256x288xbf16, #tpu.memory_space<vmem>>, vector<256x32xbf16>,
    %157 = vector.extract_strided_slice %147 {offsets = [1, 0, 0], sizes = [16, 16, 32], strides = [1, 1, 1]} : vector<18x18x32xbf16> to vector<16x16x32xbf16>
    %158 = vector.shape_cast %157 : vector<16x16x32xbf16> to vector<256x32xbf16>
    %c0_122 = arith.constant 0 : index
    %c96_123 = arith.constant 96 : index
    %159 = vector.load %arg14[%c0_122, %c96_123] : memref<256x288xbf16, #tpu.memory_space<vmem>>, vector<256x32xbf16>
    tpu.vector_store %arg14[%c0_122, %c96_123], %158 {strides = array<i32>} : memref<256x288xbf16, #tpu.memory_space<vmem>>, vector<256x32xbf16>,
    %160 = vector.extract_strided_slice %147 {offsets = [1, 1, 0], sizes = [16, 16, 32], strides = [1, 1, 1]} : vector<18x18x32xbf16> to vector<16x16x32xbf16>
    %161 = vector.shape_cast %160 : vector<16x16x32xbf16> to vector<256x32xbf16>
    %c0_124 = arith.constant 0 : index
    %c128_125 = arith.constant 128 : index
    %162 = vector.load %arg14[%c0_124, %c128_125] : memref<256x288xbf16, #tpu.memory_space<vmem>>, vector<256x32xbf16>
    tpu.vector_store %arg14[%c0_124, %c128_125], %161 {strides = array<i32>} : memref<256x288xbf16, #tpu.memory_space<vmem>>, vector<256x32xbf16>,
    %163 = vector.extract_strided_slice %147 {offsets = [1, 2, 0], sizes = [16, 16, 32], strides = [1, 1, 1]} : vector<18x18x32xbf16> to vector<16x16x32xbf16>
    %164 = vector.shape_cast %163 : vector<16x16x32xbf16> to vector<256x32xbf16>
    %c0_126 = arith.constant 0 : index
    %c160 = arith.constant 160 : index
    %165 = vector.load %arg14[%c0_126, %c160] : memref<256x288xbf16, #tpu.memory_space<vmem>>, vector<256x32xbf16>
    tpu.vector_store %arg14[%c0_126, %c160], %164 {strides = array<i32>} : memref<256x288xbf16, #tpu.memory_space<vmem>>, vector<256x32xbf16>,
    %166 = vector.extract_strided_slice %147 {offsets = [2, 0, 0], sizes = [16, 16, 32], strides = [1, 1, 1]} : vector<18x18x32xbf16> to vector<16x16x32xbf16>
    %167 = vector.shape_cast %166 : vector<16x16x32xbf16> to vector<256x32xbf16>
    %c0_127 = arith.constant 0 : index
    %c192 = arith.constant 192 : index
    %168 = vector.load %arg14[%c0_127, %c192] : memref<256x288xbf16, #tpu.memory_space<vmem>>, vector<256x32xbf16>
    tpu.vector_store %arg14[%c0_127, %c192], %167 {strides = array<i32>} : memref<256x288xbf16, #tpu.memory_space<vmem>>, vector<256x32xbf16>,
    %169 = vector.extract_strided_slice %147 {offsets = [2, 1, 0], sizes = [16, 16, 32], strides = [1, 1, 1]} : vector<18x18x32xbf16> to vector<16x16x32xbf16>
    %170 = vector.shape_cast %169 : vector<16x16x32xbf16> to vector<256x32xbf16>
    %c0_128 = arith.constant 0 : index
    %c224 = arith.constant 224 : index
    %171 = vector.load %arg14[%c0_128, %c224] : memref<256x288xbf16, #tpu.memory_space<vmem>>, vector<256x32xbf16>
    tpu.vector_store %arg14[%c0_128, %c224], %170 {strides = array<i32>} : memref<256x288xbf16, #tpu.memory_space<vmem>>, vector<256x32xbf16>,
    %172 = vector.extract_strided_slice %147 {offsets = [2, 2, 0], sizes = [16, 16, 32], strides = [1, 1, 1]} : vector<18x18x32xbf16> to vector<16x16x32xbf16>
    %173 = vector.shape_cast %172 : vector<16x16x32xbf16> to vector<256x32xbf16>
    %c0_129 = arith.constant 0 : index
    %c256 = arith.constant 256 : index
    %174 = vector.load %arg14[%c0_129, %c256] : memref<256x288xbf16, #tpu.memory_space<vmem>>, vector<256x32xbf16>
    tpu.vector_store %arg14[%c0_129, %c256], %173 {strides = array<i32>} : memref<256x288xbf16, #tpu.memory_space<vmem>>, vector<256x32xbf16>,
    %c0_130 = arith.constant 0 : index
    %c0_131 = arith.constant 0 : index
    %175 = vector.load %arg14[%c0_130, %c0_131] : memref<256x288xbf16, #tpu.memory_space<vmem>>, vector<256x288xbf16>
    %c0_132 = arith.constant 0 : index
    %c0_133 = arith.constant 0 : index
    %176 = vector.load %arg9[%c0_132, %c0_133] : memref<288x16xbf16, #tpu.memory_space<vmem>>, vector<288x16xbf16>
    %cst_134 = arith.constant dense<0.000000e+00> : vector<256x16xf32>
    %177 = tpu.matmul %175, %176, %cst_134 {dimension_numbers = #tpu.dot_dimension_numbers<[1], [0], [0], [1], [0, 0, 1, 1], [], []>} : vector<256x288xbf16>, vector<288x16xbf16>, vector<256x16xf32> -> vector<256x16xf32>
    %c7 = arith.constant 7 : index
    %c0_135 = arith.constant 0 : index
    %178 = vector.load %arg10[%c7, %c0_135] : memref<9x16xf32, #tpu.memory_space<vmem>>, vector<1x16xf32>
    %179 = vector.broadcast %178 : vector<1x16xf32> to vector<256x16xf32>
    %180 = arith.addf %177, %179 : vector<256x16xf32>
    %cst_136 = arith.constant 0.000000e+00 : f32
    %181 = vector.broadcast %cst_136 : f32 to vector<256x16xf32>
    %182 = arith.cmpf ogt, %180, %181 : vector<256x16xf32>
    %c8_137 = arith.constant 8 : index
    %c0_138 = arith.constant 0 : index
    %183 = vector.load %arg10[%c8_137, %c0_138] : memref<9x16xf32, #tpu.memory_space<vmem>>, vector<1x16xf32>
    %184 = vector.broadcast %183 : vector<1x16xf32> to vector<256x16xf32>
    %185 = arith.mulf %184, %180 : vector<256x16xf32>
    %186 = arith.select %182, %180, %185 : vector<256x16xi1>, vector<256x16xf32>
    %187 = tpu.transpose %186, [1, 0] : vector<256x16xf32> -> vector<16x256xf32>
    %c0_139 = arith.constant 0 : index
    %c0_140 = arith.constant 0 : index
    %c0_141 = arith.constant 0 : index
    %188 = vector.load %arg11[%c0_139, %c0_140, %c0_141] : memref<1x16x256xf32, #tpu.memory_space<vmem>>, vector<1x16x256xf32>
    %189 = vector.shape_cast %188 : vector<1x16x256xf32> to vector<16x256xf32>
    %190 = vector.shape_cast %187 : vector<16x256xf32> to vector<1x16x256xf32>
    tpu.vector_store %arg11[%c0_139, %c0_140, %c0_141], %190 {strides = array<i32>} : memref<1x16x256xf32, #tpu.memory_space<vmem>>, vector<1x16x256xf32>,
    return
  }
  func.func @transform_0(%arg0: i32) -> (i32, i32, i32) {
    %c0_i32 = arith.constant 0 : i32
    %c0_i32_0 = arith.constant 0 : i32
    %c0_i32_1 = arith.constant 0 : i32
    return %arg0, %c0_i32, %c0_i32_0 : i32, i32, i32
  }
  func.func @transform_1(%arg0: i32) -> (i32, i32, i32) {
    %c0_i32 = arith.constant 0 : i32
    %c0_i32_0 = arith.constant 0 : i32
    %c0_i32_1 = arith.constant 0 : i32
    return %arg0, %c0_i32, %c0_i32_0 : i32, i32, i32
  }
  func.func @transform_2(%arg0: i32) -> (i32, i32) {
    %c0_i32 = arith.constant 0 : i32
    %c0_i32_0 = arith.constant 0 : i32
    %c0_i32_1 = arith.constant 0 : i32
    return %c0_i32, %c0_i32_0 : i32, i32
  }
  func.func @transform_3(%arg0: i32) -> (i32, i32) {
    %c0_i32 = arith.constant 0 : i32
    %c0_i32_0 = arith.constant 0 : i32
    %c0_i32_1 = arith.constant 0 : i32
    return %c0_i32, %c0_i32_0 : i32, i32
  }
  func.func @transform_4(%arg0: i32) -> (i32, i32) {
    %c0_i32 = arith.constant 0 : i32
    %c0_i32_0 = arith.constant 0 : i32
    %c0_i32_1 = arith.constant 0 : i32
    return %c0_i32, %c0_i32_0 : i32, i32
  }
  func.func @transform_5(%arg0: i32) -> (i32, i32) {
    %c0_i32 = arith.constant 0 : i32
    %c0_i32_0 = arith.constant 0 : i32
    %c0_i32_1 = arith.constant 0 : i32
    return %c0_i32, %c0_i32_0 : i32, i32
  }
  func.func @transform_6(%arg0: i32) -> (i32, i32) {
    %c0_i32 = arith.constant 0 : i32
    %c0_i32_0 = arith.constant 0 : i32
    %c0_i32_1 = arith.constant 0 : i32
    return %c0_i32, %c0_i32_0 : i32, i32
  }
  func.func @transform_7(%arg0: i32) -> (i32, i32) {
    %c0_i32 = arith.constant 0 : i32
    %c0_i32_0 = arith.constant 0 : i32
    %c0_i32_1 = arith.constant 0 : i32
    return %c0_i32, %c0_i32_0 : i32, i32
  }
  func.func @transform_8(%arg0: i32) -> (i32, i32) {
    %c0_i32 = arith.constant 0 : i32
    %c0_i32_0 = arith.constant 0 : i32
    %c0_i32_1 = arith.constant 0 : i32
    return %c0_i32, %c0_i32_0 : i32, i32
  }
  func.func @transform_9(%arg0: i32) -> (i32, i32) {
    %c0_i32 = arith.constant 0 : i32
    %c0_i32_0 = arith.constant 0 : i32
    %c0_i32_1 = arith.constant 0 : i32
    return %c0_i32, %c0_i32_0 : i32, i32
  }
  func.func @transform_10(%arg0: i32) -> (i32, i32, i32) {
    %c0_i32 = arith.constant 0 : i32
    %c0_i32_0 = arith.constant 0 : i32
    %c0_i32_1 = arith.constant 0 : i32
    return %arg0, %c0_i32, %c0_i32_0 : i32, i32, i32
  }
}

</mosaic_0001>

<llo_original>
// kernel: global_feature_upsample.1
$region0: #{global_feature_upsample.1}
  #allocation0 [shape = 'u32[]', space=smem, size = 0x4, offset = 0x4, fixed_abs, tag = 'smem constant byte address 0x4 - core index']
  #allocation1 [shape = 'u32[144,128]{1,0:T(1,128)}', space=vmem, size = 0x12000, scoped, tag = 'internal scratch']
  #allocation2 [shape = 'bf16[18,18,32]{2,1,0:T(8,128)(2,1)}', space=vmem, size = 0x1b000, scoped, tag = 'scratch operand']
  #allocation3 [shape = 'bf16[18,18,8]{2,1,0:T(8,128)(2,1)}', space=vmem, size = 0x1b000, scoped, tag = 'scratch operand']
  #allocation4 [shape = 'bf16[256,288]{1,0:T(16,128)(2,1)}', space=vmem, size = 0x30000, scoped, tag = 'scratch operand']
  %s0 = inlined_call_operand.vmem [shape: bf16[2,64,12], index: 0, kind: input, shape index: {}]
  %s1 = inlined_call_operand.vmem [shape: bf16[2,256,8], index: 1, kind: input, shape index: {}]
  %s2 = inlined_call_operand.vmem [shape: bf16[256,64], index: 2, kind: input, shape index: {}]
  %s3 = inlined_call_operand.vmem [shape: bf16[8,16], index: 3, kind: input, shape index: {}]
  %s4 = inlined_call_operand.vmem [shape: bf16[12,16], index: 4, kind: input, shape index: {}]
  %s5 = inlined_call_operand.vmem [shape: bf16[144,16], index: 5, kind: input, shape index: {}]
  %s6 = inlined_call_operand.vmem [shape: bf16[72,16], index: 6, kind: input, shape index: {}]
  %s7 = inlined_call_operand.vmem [shape: bf16[8,16], index: 7, kind: input, shape index: {}]
  %s8 = inlined_call_operand.vmem [shape: bf16[288,16], index: 8, kind: input, shape index: {}]
  %s9 = inlined_call_operand.vmem [shape: f32[9,16], index: 9, kind: input, shape index: {}]
  %s10 = inlined_call_operand.vmem [shape: f32[2,16,256], index: 10, kind: output, shape index: {}]
  %s11 = sld [smem:[#allocation0]]
  $region73: #{global_feature_upsample.1} parent=0
    _
  %s13 = ssub.s32 1, %s11
  %s14 = scalar_select 0, %s13, %s11
  loop: start=0, step=1, limit=4
  $region2: #{global_feature_upsample.1} parent=0 // loop_pre_header
    _
  $region3: #{global_feature_upsample.1} parent=0 // loop_header
    %s16 = sphi 0, %s20
    %p17 = scmp.ge.s32.totalorder %s16, 4
    %s26 = sphi 0, %s28
    %s29 = sphi 0, %s26
    %s30 = sphi 0, %s29
    %s46 = sphi 0, %s30
    %s52 = sphi 0, %s54
    %s55 = sphi 0, %s52
    %s56 = sphi 0, %s55
    %s72 = sphi 0, %s56
    %s76 = sphi 0, %s76
    %s78 = sphi 0, %s76
    %s79 = sphi 0, %s78
    %s93 = sphi 0, %s79
    %s97 = sphi 0, %s97
    %s99 = sphi 0, %s97
    %s100 = sphi 0, %s99
    %s114 = sphi 0, %s100
    %s118 = sphi 0, %s118
    %s120 = sphi 0, %s118
    %s121 = sphi 0, %s120
    %s135 = sphi 0, %s121
    %s139 = sphi 0, %s139
    %s141 = sphi 0, %s139
    %s142 = sphi 0, %s141
    %s156 = sphi 0, %s142
    %s160 = sphi 0, %s160
    %s162 = sphi 0, %s160
    %s163 = sphi 0, %s162
    %s177 = sphi 0, %s163
    %s181 = sphi 0, %s181
    %s183 = sphi 0, %s181
    %s184 = sphi 0, %s183
    %s198 = sphi 0, %s184
    %s202 = sphi 0, %s202
    %s204 = sphi 0, %s202
    %s205 = sphi 0, %s204
    %s219 = sphi 0, %s205
    %s223 = sphi 0, %s223
    %s225 = sphi 0, %s223
    %s226 = sphi 0, %s225
    %s240 = sphi 0, %s226
    %s246 = sphi 0, %s248
    %s249 = sphi 0, %s246
    %s250 = sphi 0, %s249
    %s266 = sphi 0, %s250
  $region4: #{global_feature_upsample.1} parent=0 // loop_header_branch
    %19 = sbr.rel (%p17) target = $region8
  $region5: #{global_feature_upsample.1} parent=0 // loop_body
    %s21 = ssub.s32 %s16, 1
    %s22 = ssub.s32 %s16, 2
    %s23 = sadd.s32 %s16, 1
    %s24 = ssub.s32 %s16, %s23
    %p25 = scmp.eq.s32.totalorder %s24, 0
    %s27 = sadd.s32 %s26, 1
    %s28 = scalar_select %p25, %s26, %s27
    %p31 = pneg %p25
    %p32 = scmp.eq.s32.totalorder %s16, 1
    %p33 = por %p31, %p32
    %p34 = scmp.ne.s32.totalorder %s26, %s29
    %p35 = scmp.eq.s32.totalorder %s16, 0
    %p36 = por %p34, %p35
    %p37 = scmp.ne.s32.totalorder %s26, %s29
    %p38 = scmp.eq.s32.totalorder %s21, 1
    %p39 = por %p37, %p38
    %p40 = scmp.ne.s32.totalorder %s29, %s30
    %p41 = scmp.eq.s32.totalorder %s21, 0
    %p42 = por %p40, %p41
    %p43 = scmp.ne.s32.totalorder %s29, %s30
    %p44 = scmp.eq.s32.totalorder %s22, 1
    %p45 = por %p43, %p44
    %p47 = scmp.ne.s32.totalorder %s30, %s46
    %p48 = scmp.eq.s32.totalorder %s22, 0
    %p49 = por %p47, %p48
    %s50 = ssub.s32 %s16, %s23
    %p51 = scmp.eq.s32.totalorder %s50, 0
    %s53 = sadd.s32 %s52, 1
    %s54 = scalar_select %p51, %s52, %s53
    %p57 = pneg %p51
    %p58 = scmp.eq.s32.totalorder %s16, 1
    %p59 = por %p57, %p58
    %p60 = scmp.ne.s32.totalorder %s52, %s55
    %p61 = scmp.eq.s32.totalorder %s16, 0
    %p62 = por %p60, %p61
    %p63 = scmp.ne.s32.totalorder %s52, %s55
    %p64 = scmp.eq.s32.totalorder %s21, 1
    %p65 = por %p63, %p64
    %p66 = scmp.ne.s32.totalorder %s55, %s56
    %p67 = scmp.eq.s32.totalorder %s21, 0
    %p68 = por %p66, %p67
    %p69 = scmp.ne.s32.totalorder %s55, %s56
    %p70 = scmp.eq.s32.totalorder %s22, 1
    %p71 = por %p69, %p70
    %p73 = scmp.ne.s32.totalorder %s56, %s72
    %p74 = scmp.eq.s32.totalorder %s22, 0
    %p75 = por %p73, %p74
    %s77 = sadd.s32 %s76, 1
    %p80 = scmp.eq.s32.totalorder %s16, 1
    %p81 = scmp.ne.s32.totalorder %s76, %s78
    %p82 = scmp.eq.s32.totalorder %s16, 0
    %p83 = por %p81, %p82
    %p84 = scmp.ne.s32.totalorder %s76, %s78
    %p85 = scmp.eq.s32.totalorder %s21, 1
    %p86 = por %p84, %p85
    %p87 = scmp.ne.s32.totalorder %s78, %s79
    %p88 = scmp.eq.s32.totalorder %s21, 0
    %p89 = por %p87, %p88
    %p90 = scmp.ne.s32.totalorder %s78, %s79
    %p91 = scmp.eq.s32.totalorder %s22, 1
    %p92 = por %p90, %p91
    %p94 = scmp.ne.s32.totalorder %s79, %s93
    %p95 = scmp.eq.s32.totalorder %s22, 0
    %p96 = por %p94, %p95
    %s98 = sadd.s32 %s97, 1
    %p101 = scmp.eq.s32.totalorder %s16, 1
    %p102 = scmp.ne.s32.totalorder %s97, %s99
    %p103 = scmp.eq.s32.totalorder %s16, 0
    %p104 = por %p102, %p103
    %p105 = scmp.ne.s32.totalorder %s97, %s99
    %p106 = scmp.eq.s32.totalorder %s21, 1
    %p107 = por %p105, %p106
    %p108 = scmp.ne.s32.totalorder %s99, %s100
    %p109 = scmp.eq.s32.totalorder %s21, 0
    %p110 = por %p108, %p109
    %p111 = scmp.ne.s32.totalorder %s99, %s100
    %p112 = scmp.eq.s32.totalorder %s22, 1
    %p113 = por %p111, %p112
    %p115 = scmp.ne.s32.totalorder %s100, %s114
    %p116 = scmp.eq.s32.totalorder %s22, 0
    %p117 = por %p115, %p116
    %s119 = sadd.s32 %s118, 1
    %p122 = scmp.eq.s32.totalorder %s16, 1
    %p123 = scmp.ne.s32.totalorder %s118, %s120
    %p124 = scmp.eq.s32.totalorder %s16, 0
    %p125 = por %p123, %p124
    %p126 = scmp.ne.s32.totalorder %s118, %s120
    %p127 = scmp.eq.s32.totalorder %s21, 1
    %p128 = por %p126, %p127
    %p129 = scmp.ne.s32.totalorder %s120, %s121
    %p130 = scmp.eq.s32.totalorder %s21, 0
    %p131 = por %p129, %p130
    %p132 = scmp.ne.s32.totalorder %s120, %s121
    %p133 = scmp.eq.s32.totalorder %s22, 1
    %p134 = por %p132, %p133
    %p136 = scmp.ne.s32.totalorder %s121, %s135
    %p137 = scmp.eq.s32.totalorder %s22, 0
    %p138 = por %p136, %p137
    %s140 = sadd.s32 %s139, 1
    %p143 = scmp.eq.s32.totalorder %s16, 1
    %p144 = scmp.ne.s32.totalorder %s139, %s141
    %p145 = scmp.eq.s32.totalorder %s16, 0
    %p146 = por %p144, %p145
    %p147 = scmp.ne.s32.totalorder %s139, %s141
    %p148 = scmp.eq.s32.totalorder %s21, 1
    %p149 = por %p147, %p148
    %p150 = scmp.ne.s32.totalorder %s141, %s142
    %p151 = scmp.eq.s32.totalorder %s21, 0
    %p152 = por %p150, %p151
    %p153 = scmp.ne.s32.totalorder %s141, %s142
    %p154 = scmp.eq.s32.totalorder %s22, 1
    %p155 = por %p153, %p154
    %p157 = scmp.ne.s32.totalorder %s142, %s156
    %p158 = scmp.eq.s32.totalorder %s22, 0
    %p159 = por %p157, %p158
    %s161 = sadd.s32 %s160, 1
    %p164 = scmp.eq.s32.totalorder %s16, 1
    %p165 = scmp.ne.s32.totalorder %s160, %s162
    %p166 = scmp.eq.s32.totalorder %s16, 0
    %p167 = por %p165, %p166
    %p168 = scmp.ne.s32.totalorder %s160, %s162
    %p169 = scmp.eq.s32.totalorder %s21, 1
    %p170 = por %p168, %p169
    %p171 = scmp.ne.s32.totalorder %s162, %s163
    %p172 = scmp.eq.s32.totalorder %s21, 0
    %p173 = por %p171, %p172
    %p174 = scmp.ne.s32.totalorder %s162, %s163
    %p175 = scmp.eq.s32.totalorder %s22, 1
    %p176 = por %p174, %p175
    %p178 = scmp.ne.s32.totalorder %s163, %s177
    %p179 = scmp.eq.s32.totalorder %s22, 0
    %p180 = por %p178, %p179
    %s182 = sadd.s32 %s181, 1
    %p185 = scmp.eq.s32.totalorder %s16, 1
    %p186 = scmp.ne.s32.totalorder %s181, %s183
    %p187 = scmp.eq.s32.totalorder %s16, 0
    %p188 = por %p186, %p187
    %p189 = scmp.ne.s32.totalorder %s181, %s183
    %p190 = scmp.eq.s32.totalorder %s21, 1
    %p191 = por %p189, %p190
    %p192 = scmp.ne.s32.totalorder %s183, %s184
    %p193 = scmp.eq.s32.totalorder %s21, 0
    %p194 = por %p192, %p193
    %p195 = scmp.ne.s32.totalorder %s183, %s184
    %p196 = scmp.eq.s32.totalorder %s22, 1
    %p197 = por %p195, %p196
    %p199 = scmp.ne.s32.totalorder %s184, %s198
    %p200 = scmp.eq.s32.totalorder %s22, 0
    %p201 = por %p199, %p200
    %s203 = sadd.s32 %s202, 1
    %p206 = scmp.eq.s32.totalorder %s16, 1
    %p207 = scmp.ne.s32.totalorder %s202, %s204
    %p208 = scmp.eq.s32.totalorder %s16, 0
    %p209 = por %p207, %p208
    %p210 = scmp.ne.s32.totalorder %s202, %s204
    %p211 = scmp.eq.s32.totalorder %s21, 1
    %p212 = por %p210, %p211
    %p213 = scmp.ne.s32.totalorder %s204, %s205
    %p214 = scmp.eq.s32.totalorder %s21, 0
    %p215 = por %p213, %p214
    %p216 = scmp.ne.s32.totalorder %s204, %s205
    %p217 = scmp.eq.s32.totalorder %s22, 1
    %p218 = por %p216, %p217
    %p220 = scmp.ne.s32.totalorder %s205, %s219
    %p221 = scmp.eq.s32.totalorder %s22, 0
    %p222 = por %p220, %p221
    %s224 = sadd.s32 %s223, 1
    %p227 = scmp.eq.s32.totalorder %s16, 1
    %p228 = scmp.ne.s32.totalorder %s223, %s225
    %p229 = scmp.eq.s32.totalorder %s16, 0
    %p230 = por %p228, %p229
    %p231 = scmp.ne.s32.totalorder %s223, %s225
    %p232 = scmp.eq.s32.totalorder %s21, 1
    %p233 = por %p231, %p232
    %p234 = scmp.ne.s32.totalorder %s225, %s226
    %p235 = scmp.eq.s32.totalorder %s21, 0
    %p236 = por %p234, %p235
    %p237 = scmp.ne.s32.totalorder %s225, %s226
    %p238 = scmp.eq.s32.totalorder %s22, 1
    %p239 = por %p237, %p238
    %p241 = scmp.ne.s32.totalorder %s226, %s240
    %p242 = scmp.eq.s32.totalorder %s22, 0
    %p243 = por %p241, %p242
    %s244 = ssub.s32 %s16, %s23
    %p245 = scmp.eq.s32.totalorder %s244, 0
    %s247 = sadd.s32 %s246, 1
    %s248 = scalar_select %p245, %s246, %s247
    %p251 = pneg %p245
    %p252 = scmp.eq.s32.totalorder %s16, 1
    %p253 = por %p251, %p252
    %p254 = scmp.ne.s32.totalorder %s246, %s249
    %p255 = scmp.eq.s32.totalorder %s16, 0
    %p256 = por %p254, %p255
    %p257 = scmp.ne.s32.totalorder %s246, %s249
    %p258 = scmp.eq.s32.totalorder %s21, 1
    %p259 = por %p257, %p258
    %p260 = scmp.ne.s32.totalorder %s249, %s250
    %p261 = scmp.eq.s32.totalorder %s21, 0
    %p262 = por %p260, %p261
    %p263 = scmp.ne.s32.totalorder %s249, %s250
    %p264 = scmp.eq.s32.totalorder %s22, 1
    %p265 = por %p263, %p264
    %p267 = scmp.ne.s32.totalorder %s250, %s266
    %p268 = scmp.eq.s32.totalorder %s22, 0
    %p269 = por %p267, %p268
    %p270 = scmp.le.s32.totalorder 1, %s16
    %p271 = scmp.lt.s32.totalorder %s16, 3
    %p272 = pnand %p270, %p271
    %p273 = pneg %p272
    // Predicated region
    $region9: #{global_feature_upsample.1} parent=5 // pred_check
      _
    $region10: #{global_feature_upsample.1} parent=5 // pred_check_branch
      %275 = sbr.rel (%p272) target = $region12
    $region11: #{global_feature_upsample.1} parent=5 // pred_region
      %s276 = ssub.s32 %s16, 1
      // Predicated region
      $region13: #{global_feature_upsample.1} parent=11 // pred_check
        %p277 = pneg %p89
      $region14: #{global_feature_upsample.1} parent=11 // pred_check_branch
        %279 = sbr.rel (%p277) target = $region16
      $region15: #{global_feature_upsample.1} parent=11 // pred_region
        _
      $region16: #{global_feature_upsample.1} parent=11 // pred_fallthru
        _
      // Predicated region
      $region17: #{global_feature_upsample.1} parent=11 // pred_check
        %p280 = pneg %p110
      $region18: #{global_feature_upsample.1} parent=11 // pred_check_branch
        %282 = sbr.rel (%p280) target = $region20
      $region19: #{global_feature_upsample.1} parent=11 // pred_region
        _
      $region20: #{global_feature_upsample.1} parent=11 // pred_fallthru
        _
      // Predicated region
      $region21: #{global_feature_upsample.1} parent=11 // pred_check
        %p283 = pneg %p131
      $region22: #{global_feature_upsample.1} parent=11 // pred_check_branch
        %285 = sbr.rel (%p283) target = $region24
      $region23: #{global_feature_upsample.1} parent=11 // pred_region
        _
      $region24: #{global_feature_upsample.1} parent=11 // pred_fallthru
        _
      // Predicated region
      $region25: #{global_feature_upsample.1} parent=11 // pred_check
        %p286 = pneg %p152
      $region26: #{global_feature_upsample.1} parent=11 // pred_check_branch
        %288 = sbr.rel (%p286) target = $region28
      $region27: #{global_feature_upsample.1} parent=11 // pred_region
        _
      $region28: #{global_feature_upsample.1} parent=11 // pred_fallthru
        _
      // Predicated region
      $region29: #{global_feature_upsample.1} parent=11 // pred_check
        %p289 = pneg %p173
      $region30: #{global_feature_upsample.1} parent=11 // pred_check_branch
        %291 = sbr.rel (%p289) target = $region32
      $region31: #{global_feature_upsample.1} parent=11 // pred_region
        _
      $region32: #{global_feature_upsample.1} parent=11 // pred_fallthru
        _
      // Predicated region
      $region33: #{global_feature_upsample.1} parent=11 // pred_check
        %p292 = pneg %p194
      $region34: #{global_feature_upsample.1} parent=11 // pred_check_branch
        %294 = sbr.rel (%p292) target = $region36
      $region35: #{global_feature_upsample.1} parent=11 // pred_region
        _
      $region36: #{global_feature_upsample.1} parent=11 // pred_fallthru
        _
      // Predicated region
      $region37: #{global_feature_upsample.1} parent=11 // pred_check
        %p295 = pneg %p215
      $region38: #{global_feature_upsample.1} parent=11 // pred_check_branch
        %297 = sbr.rel (%p295) target = $region40
      $region39: #{global_feature_upsample.1} parent=11 // pred_region
        _
      $region40: #{global_feature_upsample.1} parent=11 // pred_fallthru
        _
      // Predicated region
      $region41: #{global_feature_upsample.1} parent=11 // pred_check
        %p298 = pneg %p236
      $region42: #{global_feature_upsample.1} parent=11 // pred_check_branch
        %300 = sbr.rel (%p298) target = $region44
      $region43: #{global_feature_upsample.1} parent=11 // pred_region
        _
      $region44: #{global_feature_upsample.1} parent=11 // pred_fallthru
        _
    $region12: #{global_feature_upsample.1} parent=5 // pred_fallthru
      _
    %p301 = scmp.lt.s32.totalorder %s16, 2
    // Predicated region
    $region45: #{global_feature_upsample.1} parent=5 // pred_check
      %p302 = pneg %p301
    $region46: #{global_feature_upsample.1} parent=5 // pred_check_branch
      %304 = sbr.rel (%p302) target = $region48
    $region47: #{global_feature_upsample.1} parent=5 // pred_region
      // Predicated region
      $region49: #{global_feature_upsample.1} parent=47 // pred_check
        %p305 = pneg %p36
      $region50: #{global_feature_upsample.1} parent=47 // pred_check_branch
        %307 = sbr.rel (%p305) target = $region52
      $region51: #{global_feature_upsample.1} parent=47 // pred_region
        %p308 = scmp.lt.s32.totalorder %s16, 1
        %s309 = scalar_select %p308, %s16, 1
        %s310 = smul.addr %s309, 8
        %s311 = smul.addr %s310, 4
        %s312 = scalar_lea.vmem %s0, %s311
      $region52: #{global_feature_upsample.1} parent=47 // pred_fallthru
        _
      // Predicated region
      $region53: #{global_feature_upsample.1} parent=47 // pred_check
        %p313 = pneg %p62
      $region54: #{global_feature_upsample.1} parent=47 // pred_check_branch
        %315 = sbr.rel (%p313) target = $region56
      $region55: #{global_feature_upsample.1} parent=47 // pred_region
        %p316 = scmp.lt.s32.totalorder %s16, 1
        %s317 = scalar_select %p316, %s16, 1
        %s318 = smul.addr %s317, 32
        %s319 = smul.addr %s318, 4
        %s320 = scalar_lea.vmem %s1, %s319
      $region56: #{global_feature_upsample.1} parent=47 // pred_fallthru
        _
    $region48: #{global_feature_upsample.1} parent=5 // pred_fallthru
      _
    %p321 = scmp.le.s32.totalorder 1, %s16
    %p322 = scmp.lt.s32.totalorder %s16, 3
    %p323 = pnand %p321, %p322
    %p324 = pneg %p323
    // Predicated region
    $region57: #{global_feature_upsample.1} parent=5 // pred_check
      _
    $region58: #{global_feature_upsample.1} parent=5 // pred_check_branch
      %326 = sbr.rel (%p323) target = $region60
    $region59: #{global_feature_upsample.1} parent=5 // pred_region
      %s327 = ssub.s32 %s16, 1
      %p328 = scmp.lt.s32.totalorder %s21, 1
      %s329 = scalar_select %p328, %s21, 1
      %s330 = smul.addr %s329, 8
      %s331 = smul.addr %s330, 4
      %s332 = scalar_lea.vmem %s0, %s331
      %p333 = pneg %p42
      %p334 = pneg %p39
      %p335 = scmp.lt.s32.totalorder %s21, 1
      %s336 = scalar_select %p335, %s21, 1
      %s337 = smul.addr %s336, 32
      %s338 = smul.addr %s337, 4
      %s339 = scalar_lea.vmem %s1, %s338
      %p340 = pneg %p68
      %p341 = pneg %p65
      %p342 = pneg %p89
      %p343 = pneg %p86
      %p344 = pneg %p110
      %p345 = pneg %p107
      %p346 = pneg %p131
      %p347 = pneg %p128
      %p348 = pneg %p152
      %p349 = pneg %p149
      %p350 = pneg %p173
      %p351 = pneg %p170
      %p352 = pneg %p194
      %p353 = pneg %p191
      %p354 = pneg %p215
      %p355 = pneg %p212
      %p356 = pneg %p236
      %p357 = pneg %p233
      %p358 = pneg %p262
      %p359 = pneg %p259
      %p360 = scmp.lt.s32.totalorder %s21, 1
      %s361 = scalar_select %p360, %s21, 1
      %s362 = smul.addr %s361, 4
      %s363 = smul.addr %s362, 8
      %s364 = scalar_lea.vmem %s10, %s363
      %p365 = scmp.lt.s32.totalorder %s21, 1
      %s366 = scalar_select %p365, %s21, 1
      %s367 = smul.addr %s366, 8
      %s368 = smul.addr %s367, 4
      %s369 = scalar_lea.vmem %s0, %s368
      %p370 = scmp.lt.s32.totalorder %s21, 1
      %s371 = scalar_select %p370, %s21, 1
      %s372 = smul.addr %s371, 32
      %s373 = smul.addr %s372, 4
      %s374 = scalar_lea.vmem %s1, %s373
      %p375 = scmp.lt.s32.totalorder %s21, 1
      %s376 = scalar_select %p375, %s21, 1
      %s377 = smul.addr %s376, 4
      %s378 = smul.addr %s377, 8
      %s379 = scalar_lea.vmem %s10, %s378
      %vm381 = vcmask 257024
      %382 = vst.msk [vmem:[#allocation2] sm:$0xf] %vm381, 0
      %383 = vst.msk [vmem:[#allocation2 + $0x4] sm:$0xf] %vm381, 0
      %vm384 = vcmask 253952
      %385 = vst.msk [vmem:[#allocation2 + $0x8] sm:$0x1] %vm384, 0
      %s386 = scalar_lea.vmem [#allocation2], 204
      %387 = vst.msk [vmem:[%s386] sm:$0xf] %vm381, 0
      %388 = vst.msk [vmem:[%s386 + $0x4] sm:$0xf] %vm381, 0
      %389 = vst.msk [vmem:[%s386 + $0x8] sm:$0x1] %vm384, 0
      %vm390 = vcmask 253952
      %vm391 = vsmask.f32 256
      %vm392 = vmand %vm390, %vm391
      %v393 = vld [vmem:[#allocation2] sm:$0x1]
      %v394 = vsel %vm392, 0, %v393
      %395 = vst [vmem:[#allocation2] sm:$0x1] %v394
      %v396 = vld [vmem:[#allocation2 + $0xc] sm:$0x1]
      %v397 = vsel %vm392, 0, %v396
      %398 = vst [vmem:[#allocation2 + $0xc] sm:$0x1] %v397
      %v399 = vld [vmem:[#allocation2 + $0x18] sm:$0x1]
      %v400 = vsel %vm392, 0, %v399
      %401 = vst [vmem:[#allocation2 + $0x18] sm:$0x1] %v400
      %v402 = vld [vmem:[#allocation2 + $0x24] sm:$0x1]
      %v403 = vsel %vm392, 0, %v402
      %404 = vst [vmem:[#allocation2 + $0x24] sm:$0x1] %v403
      %v405 = vld [vmem:[#allocation2 + $0x30] sm:$0x1]
      %v406 = vsel %vm392, 0, %v405
      %407 = vst [vmem:[#allocation2 + $0x30] sm:$0x1] %v406
      %v408 = vld [vmem:[#allocation2 + $0x3c] sm:$0x1]
      %v409 = vsel %vm392, 0, %v408
      %410 = vst [vmem:[#allocation2 + $0x3c] sm:$0x1] %v409
      %v411 = vld [vmem:[#allocation2 + $0x48] sm:$0x1]
      %v412 = vsel %vm392, 0, %v411
      %413 = vst [vmem:[#allocation2 + $0x48] sm:$0x1] %v412
      %v414 = vld [vmem:[#allocation2 + $0x54] sm:$0x1]
      %v415 = vsel %vm392, 0, %v414
      %416 = vst [vmem:[#allocation2 + $0x54] sm:$0x1] %v415
      %v417 = vld [vmem:[#allocation2 + $0x60] sm:$0x1]
      %v418 = vsel %vm392, 0, %v417
      %419 = vst [vmem:[#allocation2 + $0x60] sm:$0x1] %v418
      %v420 = vld [vmem:[#allocation2 + $0x6c] sm:$0x1]
      %v421 = vsel %vm392, 0, %v420
      %422 = vst [vmem:[#allocation2 + $0x6c] sm:$0x1] %v421
      %v423 = vld [vmem:[#allocation2 + $0x78] sm:$0x1]
      %v424 = vsel %vm392, 0, %v423
      %425 = vst [vmem:[#allocation2 + $0x78] sm:$0x1] %v424
      %v426 = vld [vmem:[#allocation2 + $0x84] sm:$0x1]
      %v427 = vsel %vm392, 0, %v426
      %428 = vst [vmem:[#allocation2 + $0x84] sm:$0x1] %v427
      %v429 = vld [vmem:[#allocation2 + $0x90] sm:$0x1]
      %v430 = vsel %vm392, 0, %v429
      %431 = vst [vmem:[#allocation2 + $0x90] sm:$0x1] %v430
      %v432 = vld [vmem:[#allocation2 + $0x9c] sm:$0x1]
      %v433 = vsel %vm392, 0, %v432
      %434 = vst [vmem:[#allocation2 + $0x9c] sm:$0x1] %v433
      %v435 = vld [vmem:[#allocation2 + $0xa8] sm:$0x1]
      %v436 = vsel %vm392, 0, %v435
      %437 = vst [vmem:[#allocation2 + $0xa8] sm:$0x1] %v436
      %v438 = vld [vmem:[#allocation2 + $0xb4] sm:$0x1]
      %v439 = vsel %vm392, 0, %v438
      %440 = vst [vmem:[#allocation2 + $0xb4] sm:$0x1] %v439
      %v441 = vld [vmem:[#allocation2 + $0xc0] sm:$0x1]
      %v442 = vsel %vm392, 0, %v441
      %443 = vst [vmem:[#allocation2 + $0xc0] sm:$0x1] %v442
      %v444 = vld [vmem:[#allocation2 + $0xcc] sm:$0x1]
      %v445 = vsel %vm392, 0, %v444
      %446 = vst [vmem:[#allocation2 + $0xcc] sm:$0x1] %v445
      %vm447 = vsmask.f32 7938
      %vm448 = vmand %vm390, %vm447
      %v449 = vld [vmem:[#allocation2 + $0x8] sm:$0x1]
      %v450 = vsel %vm448, 0, %v449
      %451 = vst [vmem:[#allocation2 + $0x8] sm:$0x1] %v450
      %v452 = vld [vmem:[#allocation2 + $0x14] sm:$0x1]
      %v453 = vsel %vm448, 0, %v452
      %454 = vst [vmem:[#allocation2 + $0x14] sm:$0x1] %v453
      %v455 = vld [vmem:[#allocation2 + $0x20] sm:$0x1]
      %v456 = vsel %vm448, 0, %v455
      %457 = vst [vmem:[#allocation2 + $0x20] sm:$0x1] %v456
      %v458 = vld [vmem:[#allocation2 + $0x2c] sm:$0x1]
      %v459 = vsel %vm448, 0, %v458
      %460 = vst [vmem:[#allocation2 + $0x2c] sm:$0x1] %v459
      %v461 = vld [vmem:[#allocation2 + $0x38] sm:$0x1]
      %v462 = vsel %vm448, 0, %v461
      %463 = vst [vmem:[#allocation2 + $0x38] sm:$0x1] %v462
      %v464 = vld [vmem:[#allocation2 + $0x44] sm:$0x1]
      %v465 = vsel %vm448, 0, %v464
      %466 = vst [vmem:[#allocation2 + $0x44] sm:$0x1] %v465
      %v467 = vld [vmem:[#allocation2 + $0x50] sm:$0x1]
      %v468 = vsel %vm448, 0, %v467
      %469 = vst [vmem:[#allocation2 + $0x50] sm:$0x1] %v468
      %v470 = vld [vmem:[#allocation2 + $0x5c] sm:$0x1]
      %v471 = vsel %vm448, 0, %v470
      %472 = vst [vmem:[#allocation2 + $0x5c] sm:$0x1] %v471
      %v473 = vld [vmem:[#allocation2 + $0x68] sm:$0x1]
      %v474 = vsel %vm448, 0, %v473
      %475 = vst [vmem:[#allocation2 + $0x68] sm:$0x1] %v474
      %v476 = vld [vmem:[#allocation2 + $0x74] sm:$0x1]
      %v477 = vsel %vm448, 0, %v476
      %478 = vst [vmem:[#allocation2 + $0x74] sm:$0x1] %v477
      %v479 = vld [vmem:[#allocation2 + $0x80] sm:$0x1]
      %v480 = vsel %vm448, 0, %v479
      %481 = vst [vmem:[#allocation2 + $0x80] sm:$0x1] %v480
      %v482 = vld [vmem:[#allocation2 + $0x8c] sm:$0x1]
      %v483 = vsel %vm448, 0, %v482
      %484 = vst [vmem:[#allocation2 + $0x8c] sm:$0x1] %v483
      %v485 = vld [vmem:[#allocation2 + $0x98] sm:$0x1]
      %v486 = vsel %vm448, 0, %v485
      %487 = vst [vmem:[#allocation2 + $0x98] sm:$0x1] %v486
      %v488 = vld [vmem:[#allocation2 + $0xa4] sm:$0x1]
      %v489 = vsel %vm448, 0, %v488
      %490 = vst [vmem:[#allocation2 + $0xa4] sm:$0x1] %v489
      %v491 = vld [vmem:[#allocation2 + $0xb0] sm:$0x1]
      %v492 = vsel %vm448, 0, %v491
      %493 = vst [vmem:[#allocation2 + $0xb0] sm:$0x1] %v492
      %v494 = vld [vmem:[#allocation2 + $0xbc] sm:$0x1]
      %v495 = vsel %vm448, 0, %v494
      %496 = vst [vmem:[#allocation2 + $0xbc] sm:$0x1] %v495
      %v497 = vld [vmem:[#allocation2 + $0xc8] sm:$0x1]
      %v498 = vsel %vm448, 0, %v497
      %499 = vst [vmem:[#allocation2 + $0xc8] sm:$0x1] %v498
      %v500 = vld [vmem:[#allocation2 + $0xd4] sm:$0x1]
      %v501 = vsel %vm448, 0, %v500
      %502 = vst [vmem:[#allocation2 + $0xd4] sm:$0x1] %v501
      %vm503 = vcmask 60416
      %504 = vst.msk [vmem:[#allocation3] sm:$0xf] %vm503, 0
      %505 = vst.msk [vmem:[#allocation3 + $0x4] sm:$0xf] %vm503, 0
      %vm506 = vcmask 57344
      %507 = vst.msk [vmem:[#allocation3 + $0x8] sm:$0x1] %vm506, 0
      %s508 = scalar_lea.vmem [#allocation3], 204
      %509 = vst.msk [vmem:[%s508] sm:$0xf] %vm503, 0
      %510 = vst.msk [vmem:[%s508 + $0x4] sm:$0xf] %vm503, 0
      %511 = vst.msk [vmem:[%s508 + $0x8] sm:$0x1] %vm506, 0
      %vm512 = vcmask 57344
      %vm513 = vmand %vm512, %vm391
      %v514 = vld [vmem:[#allocation3] sm:$0x1]
      %v515 = vsel %vm513, 0, %v514
      %516 = vst [vmem:[#allocation3] sm:$0x1] %v515
      %v517 = vld [vmem:[#allocation3 + $0xc] sm:$0x1]
      %v518 = vsel %vm513, 0, %v517
      %519 = vst [vmem:[#allocation3 + $0xc] sm:$0x1] %v518
      %v520 = vld [vmem:[#allocation3 + $0x18] sm:$0x1]
      %v521 = vsel %vm513, 0, %v520
      %522 = vst [vmem:[#allocation3 + $0x18] sm:$0x1] %v521
      %v523 = vld [vmem:[#allocation3 + $0x24] sm:$0x1]
      %v524 = vsel %vm513, 0, %v523
      %525 = vst [vmem:[#allocation3 + $0x24] sm:$0x1] %v524
      %v526 = vld [vmem:[#allocation3 + $0x30] sm:$0x1]
      %v527 = vsel %vm513, 0, %v526
      %528 = vst [vmem:[#allocation3 + $0x30] sm:$0x1] %v527
      %v529 = vld [vmem:[#allocation3 + $0x3c] sm:$0x1]
      %v530 = vsel %vm513, 0, %v529
      %531 = vst [vmem:[#allocation3 + $0x3c] sm:$0x1] %v530
      %v532 = vld [vmem:[#allocation3 + $0x48] sm:$0x1]
      %v533 = vsel %vm513, 0, %v532
      %534 = vst [vmem:[#allocation3 + $0x48] sm:$0x1] %v533
      %v535 = vld [vmem:[#allocation3 + $0x54] sm:$0x1]
      %v536 = vsel %vm513, 0, %v535
      %537 = vst [vmem:[#allocation3 + $0x54] sm:$0x1] %v536
      %v538 = vld [vmem:[#allocation3 + $0x60] sm:$0x1]
      %v539 = vsel %vm513, 0, %v538
      %540 = vst [vmem:[#allocation3 + $0x60] sm:$0x1] %v539
      %v541 = vld [vmem:[#allocation3 + $0x6c] sm:$0x1]
      %v542 = vsel %vm513, 0, %v541
      %543 = vst [vmem:[#allocation3 + $0x6c] sm:$0x1] %v542
      %v544 = vld [vmem:[#allocation3 + $0x78] sm:$0x1]
      %v545 = vsel %vm513, 0, %v544
      %546 = vst [vmem:[#allocation3 + $0x78] sm:$0x1] %v545
      %v547 = vld [vmem:[#allocation3 + $0x84] sm:$0x1]
      %v548 = vsel %vm513, 0, %v547
      %549 = vst [vmem:[#allocation3 + $0x84] sm:$0x1] %v548
      %v550 = vld [vmem:[#allocation3 + $0x90] sm:$0x1]
      %v551 = vsel %vm513, 0, %v550
      %552 = vst [vmem:[#allocation3 + $0x90] sm:$0x1] %v551
      %v553 = vld [vmem:[#allocation3 + $0x9c] sm:$0x1]
      %v554 = vsel %vm513, 0, %v553
      %555 = vst [vmem:[#allocation3 + $0x9c] sm:$0x1] %v554
      %v556 = vld [vmem:[#allocation3 + $0xa8] sm:$0x1]
      %v557 = vsel %vm513, 0, %v556
      %558 = vst [vmem:[#allocation3 + $0xa8] sm:$0x1] %v557
      %v559 = vld [vmem:[#allocation3 + $0xb4] sm:$0x1]
      %v560 = vsel %vm513, 0, %v559
      %561 = vst [vmem:[#allocation3 + $0xb4] sm:$0x1] %v560
      %v562 = vld [vmem:[#allocation3 + $0xc0] sm:$0x1]
      %v563 = vsel %vm513, 0, %v562
      %564 = vst [vmem:[#allocation3 + $0xc0] sm:$0x1] %v563
      %v565 = vld [vmem:[#allocation3 + $0xcc] sm:$0x1]
      %v566 = vsel %vm513, 0, %v565
      %567 = vst [vmem:[#allocation3 + $0xcc] sm:$0x1] %v566
      %vm568 = vmand %vm512, %vm447
      %v569 = vld [vmem:[#allocation3 + $0x8] sm:$0x1]
      %v570 = vsel %vm568, 0, %v569
      %571 = vst [vmem:[#allocation3 + $0x8] sm:$0x1] %v570
      %v572 = vld [vmem:[#allocation3 + $0x14] sm:$0x1]
      %v573 = vsel %vm568, 0, %v572
      %574 = vst [vmem:[#allocation3 + $0x14] sm:$0x1] %v573
      %v575 = vld [vmem:[#allocation3 + $0x20] sm:$0x1]
      %v576 = vsel %vm568, 0, %v575
      %577 = vst [vmem:[#allocation3 + $0x20] sm:$0x1] %v576
      %v578 = vld [vmem:[#allocation3 + $0x2c] sm:$0x1]
      %v579 = vsel %vm568, 0, %v578
      %580 = vst [vmem:[#allocation3 + $0x2c] sm:$0x1] %v579
      %v581 = vld [vmem:[#allocation3 + $0x38] sm:$0x1]
      %v582 = vsel %vm568, 0, %v581
      %583 = vst [vmem:[#allocation3 + $0x38] sm:$0x1] %v582
      %v584 = vld [vmem:[#allocation3 + $0x44] sm:$0x1]
      %v585 = vsel %vm568, 0, %v584
      %586 = vst [vmem:[#allocation3 + $0x44] sm:$0x1] %v585
      %v587 = vld [vmem:[#allocation3 + $0x50] sm:$0x1]
      %v588 = vsel %vm568, 0, %v587
      %589 = vst [vmem:[#allocation3 + $0x50] sm:$0x1] %v588
      %v590 = vld [vmem:[#allocation3 + $0x5c] sm:$0x1]
      %v591 = vsel %vm568, 0, %v590
      %592 = vst [vmem:[#allocation3 + $0x5c] sm:$0x1] %v591
      %v593 = vld [vmem:[#allocation3 + $0x68] sm:$0x1]
      %v594 = vsel %vm568, 0, %v593
      %595 = vst [vmem:[#allocation3 + $0x68] sm:$0x1] %v594
      %v596 = vld [vmem:[#allocation3 + $0x74] sm:$0x1]
      %v597 = vsel %vm568, 0, %v596
      %598 = vst [vmem:[#allocation3 + $0x74] sm:$0x1] %v597
      %v599 = vld [vmem:[#allocation3 + $0x80] sm:$0x1]
      %v600 = vsel %vm568, 0, %v599
      %601 = vst [vmem:[#allocation3 + $0x80] sm:$0x1] %v600
      %v602 = vld [vmem:[#allocation3 + $0x8c] sm:$0x1]
      %v603 = vsel %vm568, 0, %v602
      %604 = vst [vmem:[#allocation3 + $0x8c] sm:$0x1] %v603
      %v605 = vld [vmem:[#allocation3 + $0x98] sm:$0x1]
      %v606 = vsel %vm568, 0, %v605
      %607 = vst [vmem:[#allocation3 + $0x98] sm:$0x1] %v606
      %v608 = vld [vmem:[#allocation3 + $0xa4] sm:$0x1]
      %v609 = vsel %vm568, 0, %v608
      %610 = vst [vmem:[#allocation3 + $0xa4] sm:$0x1] %v609
      %v611 = vld [vmem:[#allocation3 + $0xb0] sm:$0x1]
      %v612 = vsel %vm568, 0, %v611
      %613 = vst [vmem:[#allocation3 + $0xb0] sm:$0x1] %v612
      %v614 = vld [vmem:[#allocation3 + $0xbc] sm:$0x1]
      %v615 = vsel %vm568, 0, %v614
      %616 = vst [vmem:[#allocation3 + $0xbc] sm:$0x1] %v615
      %v617 = vld [vmem:[#allocation3 + $0xc8] sm:$0x1]
      %v618 = vsel %vm568, 0, %v617
      %619 = vst [vmem:[#allocation3 + $0xc8] sm:$0x1] %v618
      %v620 = vld [vmem:[#allocation3 + $0xd4] sm:$0x1]
      %v621 = vsel %vm568, 0, %v620
      %622 = vst [vmem:[#allocation3 + $0xd4] sm:$0x1] %v621
      %v623 = vld [vmem:[%s2] sm:$0xf]
      %v624 = vld [vmem:[%s2 + $0x4] sm:$0xf]
      %v625 = vld [vmem:[%s2 + $0x8] sm:$0xf]
      %v626 = vld [vmem:[%s2 + $0xc] sm:$0xf]
      %v627 = vld [vmem:[%s2 + $0x10] sm:$0xf]
      %v628 = vld [vmem:[%s2 + $0x14] sm:$0xf]
      %v629 = vld [vmem:[%s2 + $0x18] sm:$0xf]
      %v630 = vld [vmem:[%s2 + $0x1c] sm:$0xf]
      %v631 = vld [vmem:[%s2 + $0x20] sm:$0xf]
      %v632 = vld [vmem:[%s2 + $0x24] sm:$0xf]
      %v633 = vld [vmem:[%s2 + $0x28] sm:$0xf]
      %v634 = vld [vmem:[%s2 + $0x2c] sm:$0xf]
      %v635 = vld [vmem:[%s2 + $0x30] sm:$0xf]
      %v636 = vld [vmem:[%s2 + $0x34] sm:$0xf]
      %v637 = vld [vmem:[%s2 + $0x38] sm:$0xf]
      %v638 = vld [vmem:[%s2 + $0x3c] sm:$0xf]
      %v639 = vld [vmem:[%s2 + $0x40] sm:$0xf]
      %v640 = vld [vmem:[%s2 + $0x44] sm:$0xf]
      %v641 = vld [vmem:[%s2 + $0x48] sm:$0xf]
      %v642 = vld [vmem:[%s2 + $0x4c] sm:$0xf]
      %v643 = vld [vmem:[%s2 + $0x50] sm:$0xf]
      %v644 = vld [vmem:[%s2 + $0x54] sm:$0xf]
      %v645 = vld [vmem:[%s2 + $0x58] sm:$0xf]
      %v646 = vld [vmem:[%s2 + $0x5c] sm:$0xf]
      %v647 = vld [vmem:[%s2 + $0x60] sm:$0xf]
      %v648 = vld [vmem:[%s2 + $0x64] sm:$0xf]
      %v649 = vld [vmem:[%s2 + $0x68] sm:$0xf]
      %v650 = vld [vmem:[%s2 + $0x6c] sm:$0xf]
      %v651 = vld [vmem:[%s2 + $0x70] sm:$0xf]
      %v652 = vld [vmem:[%s2 + $0x74] sm:$0xf]
      %v653 = vld [vmem:[%s2 + $0x78] sm:$0xf]
      %v654 = vld [vmem:[%s2 + $0x7c] sm:$0xf]
      %v655 = vld [vmem:[%s369] sm:$0xf]
      %v656 = vld [vmem:[%s369 + $0x4] sm:$0xf]
      %v657 = vld [vmem:[%s369 + $0x8] sm:$0xf]
      %v658 = vld [vmem:[%s369 + $0xc] sm:$0xf]
      %v659 = vld [vmem:[%s369 + $0x10] sm:$0xf]
      %v660 = vld [vmem:[%s369 + $0x14] sm:$0xf]
      %v661 = vld [vmem:[%s369 + $0x18] sm:$0xf]
      %v662 = vld [vmem:[%s369 + $0x1c] sm:$0xf]
      %v695 = vunpack.c.l.b16 %v623
      %v696 = vunpack.c.l.b16 %v624
      %v697 = vunpack.c.l.b16 %v625
      %v698 = vunpack.c.l.b16 %v626
      %v699 = vunpack.c.l.b16 %v627
      %v700 = vunpack.c.l.b16 %v628
      %v701 = vunpack.c.l.b16 %v629
      %v702 = vunpack.c.l.b16 %v630
      %v703 = vunpack.c.l.b16 %v631
      %v704 = vunpack.c.l.b16 %v632
      %v705 = vunpack.c.l.b16 %v633
      %v706 = vunpack.c.l.b16 %v634
      %v707 = vunpack.c.l.b16 %v635
      %v708 = vunpack.c.l.b16 %v636
      %v709 = vunpack.c.l.b16 %v637
      %v710 = vunpack.c.l.b16 %v638
      %v711 = vunpack.c.l.b16 %v639
      %v712 = vunpack.c.l.b16 %v640
      %v713 = vunpack.c.l.b16 %v641
      %v714 = vunpack.c.l.b16 %v642
      %v715 = vunpack.c.l.b16 %v643
      %v716 = vunpack.c.l.b16 %v644
      %v717 = vunpack.c.l.b16 %v645
      %v718 = vunpack.c.l.b16 %v646
      %v719 = vunpack.c.l.b16 %v647
      %v720 = vunpack.c.l.b16 %v648
      %v721 = vunpack.c.l.b16 %v649
      %v722 = vunpack.c.l.b16 %v650
      %v723 = vunpack.c.l.b16 %v651
      %v724 = vunpack.c.l.b16 %v652
      %v725 = vunpack.c.l.b16 %v653
      %v726 = vunpack.c.l.b16 %v654
      %v727 = vpack.c.b16 %v696, %v695
      %v728 = vpack.c.b16 %v698, %v697
      %v729 = vpack.c.b16 %v700, %v699
      %v730 = vpack.c.b16 %v702, %v701
      %v731 = vpack.c.b16 %v704, %v703
      %v732 = vpack.c.b16 %v706, %v705
      %v733 = vpack.c.b16 %v708, %v707
      %v734 = vpack.c.b16 %v710, %v709
      %v735 = vpack.c.b16 %v712, %v711
      %v736 = vpack.c.b16 %v714, %v713
      %v737 = vpack.c.b16 %v716, %v715
      %v738 = vpack.c.b16 %v718, %v717
      %v739 = vpack.c.b16 %v720, %v719
      %v740 = vpack.c.b16 %v722, %v721
      %v741 = vpack.c.b16 %v724, %v723
      %v742 = vpack.c.b16 %v726, %v725
      %v751 = vunpack.c.l.b16 %v655
      %v752 = vunpack.c.l.b16 %v656
      %v753 = vunpack.c.l.b16 %v657
      %v754 = vunpack.c.l.b16 %v658
      %v755 = vunpack.c.l.b16 %v659
      %v756 = vunpack.c.l.b16 %v660
      %v757 = vunpack.c.l.b16 %v661
      %v758 = vunpack.c.l.b16 %v662
      %v759 = vpack.c.b16 %v752, %v751
      %v760 = vpack.c.b16 %v754, %v753
      %v761 = vpack.c.b16 %v756, %v755
      %v762 = vpack.c.b16 %v758, %v757
      %vm767 = vcmask 523264
      %v769 = vsel %vm767, %v727, 0
      %v772 = vsel %vm767, %v728, 0
      %v775 = vsel %vm767, %v729, 0
      %v778 = vsel %vm767, %v730, 0
      %v781 = vsel %vm767, %v731, 0
      %v784 = vsel %vm767, %v732, 0
      %v787 = vsel %vm767, %v733, 0
      %v790 = vsel %vm767, %v734, 0
      %v793 = vsel %vm767, %v735, 0
      %v796 = vsel %vm767, %v736, 0
      %v799 = vsel %vm767, %v737, 0
      %v802 = vsel %vm767, %v738, 0
      %v805 = vsel %vm767, %v739, 0
      %v808 = vsel %vm767, %v740, 0
      %v811 = vsel %vm767, %v741, 0
      %v814 = vsel %vm767, %v742, 0
      %816 = vmatprep.subr.bf16.mxu0 0
      %817 = vmatpush1.bf16.msra.mxu0 %v759
      %818 = vmatprep.subr.bf16.mxu0 0
      %819 = vmatpush1.bf16.msra.mxu0 %v760
      %820 = vmatprep.subr.bf16.mxu0 0
      %821 = vmatpush1.bf16.msra.mxu0 %v761
      %822 = vmatprep.subr.bf16.mxu0 0
      %823 = vmatpush1.bf16.msra.mxu0 %v762
      %824 = vmatprep.subr.bf16.mxu0 0
      %825 = vmatpush1.bf16.msra.mxu0 0
      %826 = vmatprep.subr.bf16.mxu0 0
      %827 = vmatpush1.bf16.msra.mxu0 0
      %828 = vmatprep.subr.bf16.mxu0 0
      %829 = vmatpush1.bf16.msra.mxu0 0
      %830 = vmatprep.subr.bf16.mxu0 0
      %831 = vmatpush1.bf16.msra.mxu0 0
      %832 = vmatprep.subr.bf16.mxu0 0
      %833 = vmatpush1.bf16.msra.mxu0 0
      %834 = vmatprep.subr.bf16.mxu0 0
      %835 = vmatpush1.bf16.msra.mxu0 0
      %836 = vmatprep.subr.bf16.mxu0 0
      %837 = vmatpush1.bf16.msra.mxu0 0
      %838 = vmatprep.subr.bf16.mxu0 0
      %839 = vmatpush1.bf16.msra.mxu0 0
      %840 = vmatprep.subr.bf16.mxu0 0
      %841 = vmatpush1.bf16.msra.mxu0 0
      %842 = vmatprep.subr.bf16.mxu0 0
      %843 = vmatpush1.bf16.msra.mxu0 0
      %844 = vmatprep.subr.bf16.mxu0 0
      %845 = vmatpush1.bf16.msra.mxu0 0
      %846 = vmatprep.subr.bf16.mxu0 0
      %847 = vmatpush1.bf16.msra.mxu0 0
      %848 = vmatprep.mubr.bf16.mxu0 0
      %849 = vmatmul.mubr.bf16.gmra.mrb[0].mxu0 %v769
      %v850 = vpop.f32.mrb[0].mxu0
      %v851 = vadd.f32 0.0, %v850
      %v852 = vpop.f32.mrb[0].mxu0
      %v853 = vpop.f32.mrb[0].mxu0
      %v854 = vadd.f32 0.0, %v853
      %v855 = vpop.f32.mrb[0].mxu0
      %856 = vmatprep.mubr.bf16.mxu0 0
      %857 = vmatmul.mubr.bf16.gmra.mrb[0].mxu0 %v772
      %v858 = vpop.f32.mrb[0].mxu0
      %v859 = vadd.f32 0.0, %v858
      %v860 = vpop.f32.mrb[0].mxu0
      %v861 = vpop.f32.mrb[0].mxu0
      %v862 = vadd.f32 0.0, %v861
      %v863 = vpop.f32.mrb[0].mxu0
      %864 = vmatprep.mubr.bf16.mxu0 0
      %865 = vmatmul.mubr.bf16.gmra.mrb[0].mxu0 %v775
      %v866 = vpop.f32.mrb[0].mxu0
      %v867 = vadd.f32 0.0, %v866
      %v868 = vpop.f32.mrb[0].mxu0
      %v869 = vpop.f32.mrb[0].mxu0
      %v870 = vadd.f32 0.0, %v869
      %v871 = vpop.f32.mrb[0].mxu0
      %872 = vmatprep.mubr.bf16.mxu0 0
      %873 = vmatmul.mubr.bf16.gmra.mrb[0].mxu0 %v778
      %v874 = vpop.f32.mrb[0].mxu0
      %v875 = vadd.f32 0.0, %v874
      %v876 = vpop.f32.mrb[0].mxu0
      %v877 = vpop.f32.mrb[0].mxu0
      %v878 = vadd.f32 0.0, %v877
      %v879 = vpop.f32.mrb[0].mxu0
      %880 = vmatprep.mubr.bf16.mxu0 0
      %881 = vmatmul.mubr.bf16.gmra.mrb[0].mxu0 %v781
      %v882 = vpop.f32.mrb[0].mxu0
      %v883 = vadd.f32 0.0, %v882
      %v884 = vpop.f32.mrb[0].mxu0
      %v885 = vpop.f32.mrb[0].mxu0
      %v886 = vadd.f32 0.0, %v885
      %v887 = vpop.f32.mrb[0].mxu0
      %888 = vmatprep.mubr.bf16.mxu0 0
      %889 = vmatmul.mubr.bf16.gmra.mrb[0].mxu0 %v784
      %v890 = vpop.f32.mrb[0].mxu0
      %v891 = vadd.f32 0.0, %v890
      %v892 = vpop.f32.mrb[0].mxu0
      %v893 = vpop.f32.mrb[0].mxu0
      %v894 = vadd.f32 0.0, %v893
      %v895 = vpop.f32.mrb[0].mxu0
      %896 = vmatprep.mubr.bf16.mxu0 0
      %897 = vmatmul.mubr.bf16.gmra.mrb[0].mxu0 %v787
      %v898 = vpop.f32.mrb[0].mxu0
      %v899 = vadd.f32 0.0, %v898
      %v900 = vpop.f32.mrb[0].mxu0
      %v901 = vpop.f32.mrb[0].mxu0
      %v902 = vadd.f32 0.0, %v901
      %v903 = vpop.f32.mrb[0].mxu0
      %904 = vmatprep.mubr.bf16.mxu0 0
      %905 = vmatmul.mubr.bf16.gmra.mrb[0].mxu0 %v790
      %v906 = vpop.f32.mrb[0].mxu0
      %v907 = vadd.f32 0.0, %v906
      %v908 = vpop.f32.mrb[0].mxu0
      %v909 = vpop.f32.mrb[0].mxu0
      %v910 = vadd.f32 0.0, %v909
      %v911 = vpop.f32.mrb[0].mxu0
      %912 = vmatprep.mubr.bf16.mxu0 0
      %913 = vmatmul.mubr.bf16.gmra.mrb[0].mxu0 %v793
      %v914 = vpop.f32.mrb[0].mxu0
      %v915 = vadd.f32 0.0, %v914
      %v916 = vpop.f32.mrb[0].mxu0
      %v917 = vpop.f32.mrb[0].mxu0
      %v918 = vadd.f32 0.0, %v917
      %v919 = vpop.f32.mrb[0].mxu0
      %920 = vmatprep.mubr.bf16.mxu0 0
      %921 = vmatmul.mubr.bf16.gmra.mrb[0].mxu0 %v796
      %v922 = vpop.f32.mrb[0].mxu0
      %v923 = vadd.f32 0.0, %v922
      %v924 = vpop.f32.mrb[0].mxu0
      %v925 = vpop.f32.mrb[0].mxu0
      %v926 = vadd.f32 0.0, %v925
      %v927 = vpop.f32.mrb[0].mxu0
      %928 = vmatprep.mubr.bf16.mxu0 0
      %929 = vmatmul.mubr.bf16.gmra.mrb[0].mxu0 %v799
      %v930 = vpop.f32.mrb[0].mxu0
      %v931 = vadd.f32 0.0, %v930
      %v932 = vpop.f32.mrb[0].mxu0
      %v933 = vpop.f32.mrb[0].mxu0
      %v934 = vadd.f32 0.0, %v933
      %v935 = vpop.f32.mrb[0].mxu0
      %936 = vmatprep.mubr.bf16.mxu0 0
      %937 = vmatmul.mubr.bf16.gmra.mrb[0].mxu0 %v802
      %v938 = vpop.f32.mrb[0].mxu0
      %v939 = vadd.f32 0.0, %v938
      %v940 = vpop.f32.mrb[0].mxu0
      %v941 = vpop.f32.mrb[0].mxu0
      %v942 = vadd.f32 0.0, %v941
      %v943 = vpop.f32.mrb[0].mxu0
      %944 = vmatprep.mubr.bf16.mxu0 0
      %945 = vmatmul.mubr.bf16.gmra.mrb[0].mxu0 %v805
      %v946 = vpop.f32.mrb[0].mxu0
      %v947 = vadd.f32 0.0, %v946
      %v948 = vpop.f32.mrb[0].mxu0
      %v949 = vpop.f32.mrb[0].mxu0
      %v950 = vadd.f32 0.0, %v949
      %v951 = vpop.f32.mrb[0].mxu0
      %952 = vmatprep.mubr.bf16.mxu0 0
      %953 = vmatmul.mubr.bf16.gmra.mrb[0].mxu0 %v808
      %v954 = vpop.f32.mrb[0].mxu0
      %v955 = vadd.f32 0.0, %v954
      %v956 = vpop.f32.mrb[0].mxu0
      %v957 = vpop.f32.mrb[0].mxu0
      %v958 = vadd.f32 0.0, %v957
      %v959 = vpop.f32.mrb[0].mxu0
      %960 = vmatprep.mubr.bf16.mxu0 0
      %961 = vmatmul.mubr.bf16.gmra.mrb[0].mxu0 %v811
      %v962 = vpop.f32.mrb[0].mxu0
      %v963 = vadd.f32 0.0, %v962
      %v964 = vpop.f32.mrb[0].mxu0
      %v965 = vpop.f32.mrb[0].mxu0
      %v966 = vadd.f32 0.0, %v965
      %v967 = vpop.f32.mrb[0].mxu0
      %968 = vmatprep.mubr.bf16.mxu0 0
      %969 = vmatmul.mubr.bf16.gmra.mrb[0].mxu0 %v814
      %v970 = vpop.f32.mrb[0].mxu0
      %v971 = vadd.f32 0.0, %v970
      %v972 = vpop.f32.mrb[0].mxu0
      %v973 = vpop.f32.mrb[0].mxu0
      %v974 = vadd.f32 0.0, %v973
      %v975 = vpop.f32.mrb[0].mxu0
      %976 = vdwg.mxu0
      %v977 = vpack.c.bf16 %v854, %v851
      %v978 = vpack.c.bf16 %v862, %v859
      %v979 = vpack.c.bf16 %v870, %v867
      %v980 = vpack.c.bf16 %v878, %v875
      %v981 = vpack.c.bf16 %v886, %v883
      %v982 = vpack.c.bf16 %v894, %v891
      %v983 = vpack.c.bf16 %v902, %v899
      %v984 = vpack.c.bf16 %v910, %v907
      %v985 = vpack.c.bf16 %v918, %v915
      %v986 = vpack.c.bf16 %v926, %v923
      %v987 = vpack.c.bf16 %v934, %v931
      %v988 = vpack.c.bf16 %v942, %v939
      %v989 = vpack.c.bf16 %v950, %v947
      %v990 = vpack.c.bf16 %v958, %v955
      %v991 = vpack.c.bf16 %v966, %v963
      %v992 = vpack.c.bf16 %v974, %v971
      %v993 = vld [vmem:[%s4] sm:$0xf]
      %v994 = vld [vmem:[%s4 + $0x4] sm:$0x3]
      %v997 = vunpack.c.l.b16 %v993
      %v998 = vunpack.c.l.b16 %v994
      %v999 = vpack.c.b16 %v998, %v997
      %vm1000 = vcmask 97280
      %v1002 = vsel %vm1000, %v977, 0
      %v1005 = vsel %vm1000, %v978, 0
      %v1008 = vsel %vm1000, %v979, 0
      %v1011 = vsel %vm1000, %v980, 0
      %v1014 = vsel %vm1000, %v981, 0
      %v1017 = vsel %vm1000, %v982, 0
      %v1020 = vsel %vm1000, %v983, 0
      %v1023 = vsel %vm1000, %v984, 0
      %v1026 = vsel %vm1000, %v985, 0
      %v1029 = vsel %vm1000, %v986, 0
      %v1032 = vsel %vm1000, %v987, 0
      %v1035 = vsel %vm1000, %v988, 0
      %v1038 = vsel %vm1000, %v989, 0
      %v1041 = vsel %vm1000, %v990, 0
      %v1044 = vsel %vm1000, %v991, 0
      %v1047 = vsel %vm1000, %v992, 0
      %vm1049 = vcmask 1045504
      %v1051 = vsel %vm1049, %v999, 0
      %1053 = vmatprep.subr.bf16.mxu0 0
      %1054 = vmatpush1.bf16.msra.mxu0 %v1051
      %1055 = vmatprep.subr.bf16.mxu0 0
      %1056 = vmatpush1.bf16.msra.mxu0 0
      %1057 = vmatprep.subr.bf16.mxu0 0
      %1058 = vmatpush1.bf16.msra.mxu0 0
      %1059 = vmatprep.subr.bf16.mxu0 0
      %1060 = vmatpush1.bf16.msra.mxu0 0
      %1061 = vmatprep.subr.bf16.mxu0 0
      %1062 = vmatpush1.bf16.msra.mxu0 0
      %1063 = vmatprep.subr.bf16.mxu0 0
      %1064 = vmatpush1.bf16.msra.mxu0 0
      %1065 = vmatprep.subr.bf16.mxu0 0
      %1066 = vmatpush1.bf16.msra.mxu0 0
      %1067 = vmatprep.subr.bf16.mxu0 0
      %1068 = vmatpush1.bf16.msra.mxu0 0
      %1069 = vmatprep.subr.bf16.mxu0 0
      %1070 = vmatpush1.bf16.msra.mxu0 0
      %1071 = vmatprep.subr.bf16.mxu0 0
      %1072 = vmatpush1.bf16.msra.mxu0 0
      %1073 = vmatprep.subr.bf16.mxu0 0
      %1074 = vmatpush1.bf16.msra.mxu0 0
      %1075 = vmatprep.subr.bf16.mxu0 0
      %1076 = vmatpush1.bf16.msra.mxu0 0
      %1077 = vmatprep.subr.bf16.mxu0 0
      %1078 = vmatpush1.bf16.msra.mxu0 0
      %1079 = vmatprep.subr.bf16.mxu0 0
      %1080 = vmatpush1.bf16.msra.mxu0 0
      %1081 = vmatprep.subr.bf16.mxu0 0
      %1082 = vmatpush1.bf16.msra.mxu0 0
      %1083 = vmatprep.subr.bf16.mxu0 0
      %1084 = vmatpush1.bf16.msra.mxu0 0
      %1085 = vmatprep.mubr.bf16.mxu0 0
      %1086 = vmatmul.mubr.bf16.gmra.mrb[0].mxu0 %v1002
      %v1087 = vpop.f32.mrb[0].mxu0
      %v1088 = vadd.f32 0.0, %v1087
      %v1089 = vpop.f32.mrb[0].mxu0
      %v1090 = vpop.f32.mrb[0].mxu0
      %v1091 = vadd.f32 0.0, %v1090
      %v1092 = vpop.f32.mrb[0].mxu0
      %1093 = vmatprep.mubr.bf16.mxu0 0
      %1094 = vmatmul.mubr.bf16.gmra.mrb[0].mxu0 %v1005
      %v1095 = vpop.f32.mrb[0].mxu0
      %v1096 = vadd.f32 0.0, %v1095
      %v1097 = vpop.f32.mrb[0].mxu0
      %v1098 = vpop.f32.mrb[0].mxu0
      %v1099 = vadd.f32 0.0, %v1098
      %v1100 = vpop.f32.mrb[0].mxu0
      %1101 = vmatprep.mubr.bf16.mxu0 0
      %1102 = vmatmul.mubr.bf16.gmra.mrb[0].mxu0 %v1008
      %v1103 = vpop.f32.mrb[0].mxu0
      %v1104 = vadd.f32 0.0, %v1103
      %v1105 = vpop.f32.mrb[0].mxu0
      %v1106 = vpop.f32.mrb[0].mxu0
      %v1107 = vadd.f32 0.0, %v1106
      %v1108 = vpop.f32.mrb[0].mxu0
      %1109 = vmatprep.mubr.bf16.mxu0 0
      %1110 = vmatmul.mubr.bf16.gmra.mrb[0].mxu0 %v1011
      %v1111 = vpop.f32.mrb[0].mxu0
      %v1112 = vadd.f32 0.0, %v1111
      %v1113 = vpop.f32.mrb[0].mxu0
      %v1114 = vpop.f32.mrb[0].mxu0
      %v1115 = vadd.f32 0.0, %v1114
      %v1116 = vpop.f32.mrb[0].mxu0
      %1117 = vmatprep.mubr.bf16.mxu0 0
      %1118 = vmatmul.mubr.bf16.gmra.mrb[0].mxu0 %v1014
      %v1119 = vpop.f32.mrb[0].mxu0
      %v1120 = vadd.f32 0.0, %v1119
      %v1121 = vpop.f32.mrb[0].mxu0
      %v1122 = vpop.f32.mrb[0].mxu0
      %v1123 = vadd.f32 0.0, %v1122
      %v1124 = vpop.f32.mrb[0].mxu0
      %1125 = vmatprep.mubr.bf16.mxu0 0
      %1126 = vmatmul.mubr.bf16.gmra.mrb[0].mxu0 %v1017
      %v1127 = vpop.f32.mrb[0].mxu0
      %v1128 = vadd.f32 0.0, %v1127
      %v1129 = vpop.f32.mrb[0].mxu0
      %v1130 = vpop.f32.mrb[0].mxu0
      %v1131 = vadd.f32 0.0, %v1130
      %v1132 = vpop.f32.mrb[0].mxu0
      %1133 = vmatprep.mubr.bf16.mxu0 0
      %1134 = vmatmul.mubr.bf16.gmra.mrb[0].mxu0 %v1020
      %v1135 = vpop.f32.mrb[0].mxu0
      %v1136 = vadd.f32 0.0, %v1135
      %v1137 = vpop.f32.mrb[0].mxu0
      %v1138 = vpop.f32.mrb[0].mxu0
      %v1139 = vadd.f32 0.0, %v1138
      %v1140 = vpop.f32.mrb[0].mxu0
      %1141 = vmatprep.mubr.bf16.mxu0 0
      %1142 = vmatmul.mubr.bf16.gmra.mrb[0].mxu0 %v1023
      %v1143 = vpop.f32.mrb[0].mxu0
      %v1144 = vadd.f32 0.0, %v1143
      %v1145 = vpop.f32.mrb[0].mxu0
      %v1146 = vpop.f32.mrb[0].mxu0
      %v1147 = vadd.f32 0.0, %v1146
      %v1148 = vpop.f32.mrb[0].mxu0
      %1149 = vmatprep.mubr.bf16.mxu0 0
      %1150 = vmatmul.mubr.bf16.gmra.mrb[0].mxu0 %v1026
      %v1151 = vpop.f32.mrb[0].mxu0
      %v1152 = vadd.f32 0.0, %v1151
      %v1153 = vpop.f32.mrb[0].mxu0
      %v1154 = vpop.f32.mrb[0].mxu0
      %v1155 = vadd.f32 0.0, %v1154
      %v1156 = vpop.f32.mrb[0].mxu0
      %1157 = vmatprep.mubr.bf16.mxu0 0
      %1158 = vmatmul.mubr.bf16.gmra.mrb[0].mxu0 %v1029
      %v1159 = vpop.f32.mrb[0].mxu0
      %v1160 = vadd.f32 0.0, %v1159
      %v1161 = vpop.f32.mrb[0].mxu0
      %v1162 = vpop.f32.mrb[0].mxu0
      %v1163 = vadd.f32 0.0, %v1162
      %v1164 = vpop.f32.mrb[0].mxu0
      %1165 = vmatprep.mubr.bf16.mxu0 0
      %1166 = vmatmul.mubr.bf16.gmra.mrb[0].mxu0 %v1032
      %v1167 = vpop.f32.mrb[0].mxu0
      %v1168 = vadd.f32 0.0, %v1167
      %v1169 = vpop.f32.mrb[0].mxu0
      %v1170 = vpop.f32.mrb[0].mxu0
      %v1171 = vadd.f32 0.0, %v1170
      %v1172 = vpop.f32.mrb[0].mxu0
      %1173 = vmatprep.mubr.bf16.mxu0 0
      %1174 = vmatmul.mubr.bf16.gmra.mrb[0].mxu0 %v1035
      %v1175 = vpop.f32.mrb[0].mxu0
      %v1176 = vadd.f32 0.0, %v1175
      %v1177 = vpop.f32.mrb[0].mxu0
      %v1178 = vpop.f32.mrb[0].mxu0
      %v1179 = vadd.f32 0.0, %v1178
      %v1180 = vpop.f32.mrb[0].mxu0
      %1181 = vmatprep.mubr.bf16.mxu0 0
      %1182 = vmatmul.mubr.bf16.gmra.mrb[0].mxu0 %v1038
      %v1183 = vpop.f32.mrb[0].mxu0
      %v1184 = vadd.f32 0.0, %v1183
      %v1185 = vpop.f32.mrb[0].mxu0
      %v1186 = vpop.f32.mrb[0].mxu0
      %v1187 = vadd.f32 0.0, %v1186
      %v1188 = vpop.f32.mrb[0].mxu0
      %1189 = vmatprep.mubr.bf16.mxu0 0
      %1190 = vmatmul.mubr.bf16.gmra.mrb[0].mxu0 %v1041
      %v1191 = vpop.f32.mrb[0].mxu0
      %v1192 = vadd.f32 0.0, %v1191
      %v1193 = vpop.f32.mrb[0].mxu0
      %v1194 = vpop.f32.mrb[0].mxu0
      %v1195 = vadd.f32 0.0, %v1194
      %v1196 = vpop.f32.mrb[0].mxu0
      %1197 = vmatprep.mubr.bf16.mxu0 0
      %1198 = vmatmul.mubr.bf16.gmra.mrb[0].mxu0 %v1044
      %v1199 = vpop.f32.mrb[0].mxu0
      %v1200 = vadd.f32 0.0, %v1199
      %v1201 = vpop.f32.mrb[0].mxu0
      %v1202 = vpop.f32.mrb[0].mxu0
      %v1203 = vadd.f32 0.0, %v1202
      %v1204 = vpop.f32.mrb[0].mxu0
      %1205 = vmatprep.mubr.bf16.mxu0 0
      %1206 = vmatmul.mubr.bf16.gmra.mrb[0].mxu0 %v1047
      %v1207 = vpop.f32.mrb[0].mxu0
      %v1208 = vadd.f32 0.0, %v1207
      %v1209 = vpop.f32.mrb[0].mxu0
      %v1210 = vpop.f32.mrb[0].mxu0
      %v1211 = vadd.f32 0.0, %v1210
      %v1212 = vpop.f32.mrb[0].mxu0
      %1213 = vdwg.mxu0
      %v1214 = vmax.f32 %v1088, 0.0
      %v1215 = vmax.f32 %v1091, 0.0
      %v1216 = vmax.f32 %v1096, 0.0
      %v1217 = vmax.f32 %v1099, 0.0
      %v1218 = vmax.f32 %v1104, 0.0
      %v1219 = vmax.f32 %v1107, 0.0
      %v1220 = vmax.f32 %v1112, 0.0
      %v1221 = vmax.f32 %v1115, 0.0
      %v1222 = vmax.f32 %v1120, 0.0
      %v1223 = vmax.f32 %v1123, 0.0
      %v1224 = vmax.f32 %v1128, 0.0
      %v1225 = vmax.f32 %v1131, 0.0
      %v1226 = vmax.f32 %v1136, 0.0
      %v1227 = vmax.f32 %v1139, 0.0
      %v1228 = vmax.f32 %v1144, 0.0
      %v1229 = vmax.f32 %v1147, 0.0
      %v1230 = vmax.f32 %v1152, 0.0
      %v1231 = vmax.f32 %v1155, 0.0
      %v1232 = vmax.f32 %v1160, 0.0
      %v1233 = vmax.f32 %v1163, 0.0
      %v1234 = vmax.f32 %v1168, 0.0
      %v1235 = vmax.f32 %v1171, 0.0
      %v1236 = vmax.f32 %v1176, 0.0
      %v1237 = vmax.f32 %v1179, 0.0
      %v1238 = vmax.f32 %v1184, 0.0
      %v1239 = vmax.f32 %v1187, 0.0
      %v1240 = vmax.f32 %v1192, 0.0
      %v1241 = vmax.f32 %v1195, 0.0
      %v1242 = vmax.f32 %v1200, 0.0
      %v1243 = vmax.f32 %v1203, 0.0
      %v1244 = vmax.f32 %v1208, 0.0
      %v1245 = vmax.f32 %v1211, 0.0
      %v1246 = vld [vmem:[%s374] sm:$0xf]
      %v1247 = vld [vmem:[%s374 + $0x4] sm:$0xf]
      %v1248 = vld [vmem:[%s374 + $0x8] sm:$0xf]
      %v1249 = vld [vmem:[%s374 + $0xc] sm:$0xf]
      %v1250 = vld [vmem:[%s374 + $0x10] sm:$0xf]
      %v1251 = vld [vmem:[%s374 + $0x14] sm:$0xf]
      %v1252 = vld [vmem:[%s374 + $0x18] sm:$0xf]
      %v1253 = vld [vmem:[%s374 + $0x1c] sm:$0xf]
      %v1254 = vld [vmem:[%s374 + $0x20] sm:$0xf]
      %v1255 = vld [vmem:[%s374 + $0x24] sm:$0xf]
      %v1256 = vld [vmem:[%s374 + $0x28] sm:$0xf]
      %v1257 = vld [vmem:[%s374 + $0x2c] sm:$0xf]
      %v1258 = vld [vmem:[%s374 + $0x30] sm:$0xf]
      %v1259 = vld [vmem:[%s374 + $0x34] sm:$0xf]
      %v1260 = vld [vmem:[%s374 + $0x38] sm:$0xf]
      %v1261 = vld [vmem:[%s374 + $0x3c] sm:$0xf]
      %v1262 = vld [vmem:[%s374 + $0x40] sm:$0xf]
      %v1263 = vld [vmem:[%s374 + $0x44] sm:$0xf]
      %v1264 = vld [vmem:[%s374 + $0x48] sm:$0xf]
      %v1265 = vld [vmem:[%s374 + $0x4c] sm:$0xf]
      %v1266 = vld [vmem:[%s374 + $0x50] sm:$0xf]
      %v1267 = vld [vmem:[%s374 + $0x54] sm:$0xf]
      %v1268 = vld [vmem:[%s374 + $0x58] sm:$0xf]
      %v1269 = vld [vmem:[%s374 + $0x5c] sm:$0xf]
      %v1270 = vld [vmem:[%s374 + $0x60] sm:$0xf]
      %v1271 = vld [vmem:[%s374 + $0x64] sm:$0xf]
      %v1272 = vld [vmem:[%s374 + $0x68] sm:$0xf]
      %v1273 = vld [vmem:[%s374 + $0x6c] sm:$0xf]
      %v1274 = vld [vmem:[%s374 + $0x70] sm:$0xf]
      %v1275 = vld [vmem:[%s374 + $0x74] sm:$0xf]
      %v1276 = vld [vmem:[%s374 + $0x78] sm:$0xf]
      %v1277 = vld [vmem:[%s374 + $0x7c] sm:$0xf]
      %v1278 = vld [vmem:[%s3] sm:$0xf]
      %v1279 = vld [vmem:[%s9] sm:$0x1]
      %v1280 = vlaneseq
      %v1281 = vshrl.u32 %v1280, 7
      %v1282 = vsub.s32 0, %v1281
      %v1283 = vrot.slane %v1279, %v1282
      %v1316 = vunpack.c.l.b16 %v1246
      %v1317 = vunpack.c.l.b16 %v1247
      %v1318 = vunpack.c.l.b16 %v1248
      %v1319 = vunpack.c.l.b16 %v1249
      %v1320 = vunpack.c.l.b16 %v1250
      %v1321 = vunpack.c.l.b16 %v1251
      %v1322 = vunpack.c.l.b16 %v1252
      %v1323 = vunpack.c.l.b16 %v1253
      %v1324 = vunpack.c.l.b16 %v1254
      %v1325 = vunpack.c.l.b16 %v1255
      %v1326 = vunpack.c.l.b16 %v1256
      %v1327 = vunpack.c.l.b16 %v1257
      %v1328 = vunpack.c.l.b16 %v1258
      %v1329 = vunpack.c.l.b16 %v1259
      %v1330 = vunpack.c.l.b16 %v1260
      %v1331 = vunpack.c.l.b16 %v1261
      %v1332 = vunpack.c.l.b16 %v1262
      %v1333 = vunpack.c.l.b16 %v1263
      %v1334 = vunpack.c.l.b16 %v1264
      %v1335 = vunpack.c.l.b16 %v1265
      %v1336 = vunpack.c.l.b16 %v1266
      %v1337 = vunpack.c.l.b16 %v1267
      %v1338 = vunpack.c.l.b16 %v1268
      %v1339 = vunpack.c.l.b16 %v1269
      %v1340 = vunpack.c.l.b16 %v1270
      %v1341 = vunpack.c.l.b16 %v1271
      %v1342 = vunpack.c.l.b16 %v1272
      %v1343 = vunpack.c.l.b16 %v1273
      %v1344 = vunpack.c.l.b16 %v1274
      %v1345 = vunpack.c.l.b16 %v1275
      %v1346 = vunpack.c.l.b16 %v1276
      %v1347 = vunpack.c.l.b16 %v1277
      %v1348 = vpack.c.b16 %v1317, %v1316
      %v1349 = vpack.c.b16 %v1319, %v1318
      %v1350 = vpack.c.b16 %v1321, %v1320
      %v1351 = vpack.c.b16 %v1323, %v1322
      %v1352 = vpack.c.b16 %v1325, %v1324
      %v1353 = vpack.c.b16 %v1327, %v1326
      %v1354 = vpack.c.b16 %v1329, %v1328
      %v1355 = vpack.c.b16 %v1331, %v1330
      %v1356 = vpack.c.b16 %v1333, %v1332
      %v1357 = vpack.c.b16 %v1335, %v1334
      %v1358 = vpack.c.b16 %v1337, %v1336
      %v1359 = vpack.c.b16 %v1339, %v1338
      %v1360 = vpack.c.b16 %v1341, %v1340
      %v1361 = vpack.c.b16 %v1343, %v1342
      %v1362 = vpack.c.b16 %v1345, %v1344
      %v1363 = vpack.c.b16 %v1347, %v1346
      %vm1364 = vcmask 64512
      %v1366 = vsel %vm1364, %v1348, 0
      %v1369 = vsel %vm1364, %v1349, 0
      %v1372 = vsel %vm1364, %v1350, 0
      %v1375 = vsel %vm1364, %v1351, 0
      %v1378 = vsel %vm1364, %v1352, 0
      %v1381 = vsel %vm1364, %v1353, 0
      %v1384 = vsel %vm1364, %v1354, 0
      %v1387 = vsel %vm1364, %v1355, 0
      %v1390 = vsel %vm1364, %v1356, 0
      %v1393 = vsel %vm1364, %v1357, 0
      %v1396 = vsel %vm1364, %v1358, 0
      %v1399 = vsel %vm1364, %v1359, 0
      %v1402 = vsel %vm1364, %v1360, 0
      %v1405 = vsel %vm1364, %v1361, 0
      %v1408 = vsel %vm1364, %v1362, 0
      %v1411 = vsel %vm1364, %v1363, 0
      %vm1413 = vcmask 1043456
      %v1415 = vsel %vm1413, %v1278, 0
      %1417 = vmatprep.subr.bf16.mxu0 0
      %1418 = vmatpush1.bf16.msra.mxu0 %v1415
      %1419 = vmatprep.subr.bf16.mxu0 0
      %1420 = vmatpush1.bf16.msra.mxu0 0
      %1421 = vmatprep.subr.bf16.mxu0 0
      %1422 = vmatpush1.bf16.msra.mxu0 0
      %1423 = vmatprep.subr.bf16.mxu0 0
      %1424 = vmatpush1.bf16.msra.mxu0 0
      %1425 = vmatprep.subr.bf16.mxu0 0
      %1426 = vmatpush1.bf16.msra.mxu0 0
      %1427 = vmatprep.subr.bf16.mxu0 0
      %1428 = vmatpush1.bf16.msra.mxu0 0
      %1429 = vmatprep.subr.bf16.mxu0 0
      %1430 = vmatpush1.bf16.msra.mxu0 0
      %1431 = vmatprep.subr.bf16.mxu0 0
      %1432 = vmatpush1.bf16.msra.mxu0 0
      %1433 = vmatprep.subr.bf16.mxu0 0
      %1434 = vmatpush1.bf16.msra.mxu0 0
      %1435 = vmatprep.subr.bf16.mxu0 0
      %1436 = vmatpush1.bf16.msra.mxu0 0
      %1437 = vmatprep.subr.bf16.mxu0 0
      %1438 = vmatpush1.bf16.msra.mxu0 0
      %1439 = vmatprep.subr.bf16.mxu0 0
      %1440 = vmatpush1.bf16.msra.mxu0 0
      %1441 = vmatprep.subr.bf16.mxu0 0
      %1442 = vmatpush1.bf16.msra.mxu0 0
      %1443 = vmatprep.subr.bf16.mxu0 0
      %1444 = vmatpush1.bf16.msra.mxu0 0
      %1445 = vmatprep.subr.bf16.mxu0 0
      %1446 = vmatpush1.bf16.msra.mxu0 0
      %1447 = vmatprep.subr.bf16.mxu0 0
      %1448 = vmatpush1.bf16.msra.mxu0 0
      %1449 = vmatprep.mubr.bf16.mxu0 0
      %1450 = vmatmul.mubr.bf16.gmra.mrb[0].mxu0 %v1366
      %v1451 = vpop.f32.mrb[0].mxu0
      %v1452 = vadd.f32 %v1283, %v1451
      %v1453 = vpop.f32.mrb[0].mxu0
      %v1454 = vpop.f32.mrb[0].mxu0
      %v1455 = vadd.f32 %v1283, %v1454
      %v1456 = vpop.f32.mrb[0].mxu0
      %1457 = vmatprep.mubr.bf16.mxu0 0
      %1458 = vmatmul.mubr.bf16.gmra.mrb[0].mxu0 %v1369
      %v1459 = vpop.f32.mrb[0].mxu0
      %v1460 = vadd.f32 %v1283, %v1459
      %v1461 = vpop.f32.mrb[0].mxu0
      %v1462 = vpop.f32.mrb[0].mxu0
      %v1463 = vadd.f32 %v1283, %v1462
      %v1464 = vpop.f32.mrb[0].mxu0
      %1465 = vmatprep.mubr.bf16.mxu0 0
      %1466 = vmatmul.mubr.bf16.gmra.mrb[0].mxu0 %v1372
      %v1467 = vpop.f32.mrb[0].mxu0
      %v1468 = vadd.f32 %v1283, %v1467
      %v1469 = vpop.f32.mrb[0].mxu0
      %v1470 = vpop.f32.mrb[0].mxu0
      %v1471 = vadd.f32 %v1283, %v1470
      %v1472 = vpop.f32.mrb[0].mxu0
      %1473 = vmatprep.mubr.bf16.mxu0 0
      %1474 = vmatmul.mubr.bf16.gmra.mrb[0].mxu0 %v1375
      %v1475 = vpop.f32.mrb[0].mxu0
      %v1476 = vadd.f32 %v1283, %v1475
      %v1477 = vpop.f32.mrb[0].mxu0
      %v1478 = vpop.f32.mrb[0].mxu0
      %v1479 = vadd.f32 %v1283, %v1478
      %v1480 = vpop.f32.mrb[0].mxu0
      %1481 = vmatprep.mubr.bf16.mxu0 0
      %1482 = vmatmul.mubr.bf16.gmra.mrb[0].mxu0 %v1378
      %v1483 = vpop.f32.mrb[0].mxu0
      %v1484 = vadd.f32 %v1283, %v1483
      %v1485 = vpop.f32.mrb[0].mxu0
      %v1486 = vpop.f32.mrb[0].mxu0
      %v1487 = vadd.f32 %v1283, %v1486
      %v1488 = vpop.f32.mrb[0].mxu0
      %1489 = vmatprep.mubr.bf16.mxu0 0
      %1490 = vmatmul.mubr.bf16.gmra.mrb[0].mxu0 %v1381
      %v1491 = vpop.f32.mrb[0].mxu0
      %v1492 = vadd.f32 %v1283, %v1491
      %v1493 = vpop.f32.mrb[0].mxu0
      %v1494 = vpop.f32.mrb[0].mxu0
      %v1495 = vadd.f32 %v1283, %v1494
      %v1496 = vpop.f32.mrb[0].mxu0
      %1497 = vmatprep.mubr.bf16.mxu0 0
      %1498 = vmatmul.mubr.bf16.gmra.mrb[0].mxu0 %v1384
      %v1499 = vpop.f32.mrb[0].mxu0
      %v1500 = vadd.f32 %v1283, %v1499
      %v1501 = vpop.f32.mrb[0].mxu0
      %v1502 = vpop.f32.mrb[0].mxu0
      %v1503 = vadd.f32 %v1283, %v1502
      %v1504 = vpop.f32.mrb[0].mxu0
      %1505 = vmatprep.mubr.bf16.mxu0 0
      %1506 = vmatmul.mubr.bf16.gmra.mrb[0].mxu0 %v1387
      %v1507 = vpop.f32.mrb[0].mxu0
      %v1508 = vadd.f32 %v1283, %v1507
      %v1509 = vpop.f32.mrb[0].mxu0
      %v1510 = vpop.f32.mrb[0].mxu0
      %v1511 = vadd.f32 %v1283, %v1510
      %v1512 = vpop.f32.mrb[0].mxu0
      %1513 = vmatprep.mubr.bf16.mxu0 0
      %1514 = vmatmul.mubr.bf16.gmra.mrb[0].mxu0 %v1390
      %v1515 = vpop.f32.mrb[0].mxu0
      %v1516 = vadd.f32 %v1283, %v1515
      %v1517 = vpop.f32.mrb[0].mxu0
      %v1518 = vpop.f32.mrb[0].mxu0
      %v1519 = vadd.f32 %v1283, %v1518
      %v1520 = vpop.f32.mrb[0].mxu0
      %1521 = vmatprep.mubr.bf16.mxu0 0
      %1522 = vmatmul.mubr.bf16.gmra.mrb[0].mxu0 %v1393
      %v1523 = vpop.f32.mrb[0].mxu0
      %v1524 = vadd.f32 %v1283, %v1523
      %v1525 = vpop.f32.mrb[0].mxu0
      %v1526 = vpop.f32.mrb[0].mxu0
      %v1527 = vadd.f32 %v1283, %v1526
      %v1528 = vpop.f32.mrb[0].mxu0
      %1529 = vmatprep.mubr.bf16.mxu0 0
      %1530 = vmatmul.mubr.bf16.gmra.mrb[0].mxu0 %v1396
      %v1531 = vpop.f32.mrb[0].mxu0
      %v1532 = vadd.f32 %v1283, %v1531
      %v1533 = vpop.f32.mrb[0].mxu0
      %v1534 = vpop.f32.mrb[0].mxu0
      %v1535 = vadd.f32 %v1283, %v1534
      %v1536 = vpop.f32.mrb[0].mxu0
      %1537 = vmatprep.mubr.bf16.mxu0 0
      %1538 = vmatmul.mubr.bf16.gmra.mrb[0].mxu0 %v1399
      %v1539 = vpop.f32.mrb[0].mxu0
      %v1540 = vadd.f32 %v1283, %v1539
      %v1541 = vpop.f32.mrb[0].mxu0
      %v1542 = vpop.f32.mrb[0].mxu0
      %v1543 = vadd.f32 %v1283, %v1542
      %v1544 = vpop.f32.mrb[0].mxu0
      %1545 = vmatprep.mubr.bf16.mxu0 0
      %1546 = vmatmul.mubr.bf16.gmra.mrb[0].mxu0 %v1402
      %v1547 = vpop.f32.mrb[0].mxu0
      %v1548 = vadd.f32 %v1283, %v1547
      %v1549 = vpop.f32.mrb[0].mxu0
      %v1550 = vpop.f32.mrb[0].mxu0
      %v1551 = vadd.f32 %v1283, %v1550
      %v1552 = vpop.f32.mrb[0].mxu0
      %1553 = vmatprep.mubr.bf16.mxu0 0
      %1554 = vmatmul.mubr.bf16.gmra.mrb[0].mxu0 %v1405
      %v1555 = vpop.f32.mrb[0].mxu0
      %v1556 = vadd.f32 %v1283, %v1555
      %v1557 = vpop.f32.mrb[0].mxu0
      %v1558 = vpop.f32.mrb[0].mxu0
      %v1559 = vadd.f32 %v1283, %v1558
      %v1560 = vpop.f32.mrb[0].mxu0
      %1561 = vmatprep.mubr.bf16.mxu0 0
      %1562 = vmatmul.mubr.bf16.gmra.mrb[0].mxu0 %v1408
      %v1563 = vpop.f32.mrb[0].mxu0
      %v1564 = vadd.f32 %v1283, %v1563
      %v1565 = vpop.f32.mrb[0].mxu0
      %v1566 = vpop.f32.mrb[0].mxu0
      %v1567 = vadd.f32 %v1283, %v1566
      %v1568 = vpop.f32.mrb[0].mxu0
      %1569 = vmatprep.mubr.bf16.mxu0 0
      %1570 = vmatmul.mubr.bf16.gmra.mrb[0].mxu0 %v1411
      %v1571 = vpop.f32.mrb[0].mxu0
      %v1572 = vadd.f32 %v1283, %v1571
      %v1573 = vpop.f32.mrb[0].mxu0
      %v1574 = vpop.f32.mrb[0].mxu0
      %v1575 = vadd.f32 %v1283, %v1574
      %v1576 = vpop.f32.mrb[0].mxu0
      %1577 = vdwg.mxu0
      %vm1578 = vcmp.gt.f32.partialorder %v1452, 0.0
      %vm1579 = vcmp.gt.f32.partialorder %v1455, 0.0
      %vm1580 = vcmp.gt.f32.partialorder %v1460, 0.0
      %vm1581 = vcmp.gt.f32.partialorder %v1463, 0.0
      %vm1582 = vcmp.gt.f32.partialorder %v1468, 0.0
      %vm1583 = vcmp.gt.f32.partialorder %v1471, 0.0
      %vm1584 = vcmp.gt.f32.partialorder %v1476, 0.0
      %vm1585 = vcmp.gt.f32.partialorder %v1479, 0.0
      %vm1586 = vcmp.gt.f32.partialorder %v1484, 0.0
      %vm1587 = vcmp.gt.f32.partialorder %v1487, 0.0
      %vm1588 = vcmp.gt.f32.partialorder %v1492, 0.0
      %vm1589 = vcmp.gt.f32.partialorder %v1495, 0.0
      %vm1590 = vcmp.gt.f32.partialorder %v1500, 0.0
      %vm1591 = vcmp.gt.f32.partialorder %v1503, 0.0
      %vm1592 = vcmp.gt.f32.partialorder %v1508, 0.0
      %vm1593 = vcmp.gt.f32.partialorder %v1511, 0.0
      %vm1594 = vcmp.gt.f32.partialorder %v1516, 0.0
      %vm1595 = vcmp.gt.f32.partialorder %v1519, 0.0
      %vm1596 = vcmp.gt.f32.partialorder %v1524, 0.0
      %vm1597 = vcmp.gt.f32.partialorder %v1527, 0.0
      %vm1598 = vcmp.gt.f32.partialorder %v1532, 0.0
      %vm1599 = vcmp.gt.f32.partialorder %v1535, 0.0
      %vm1600 = vcmp.gt.f32.partialorder %v1540, 0.0
      %vm1601 = vcmp.gt.f32.partialorder %v1543, 0.0
      %vm1602 = vcmp.gt.f32.partialorder %v1548, 0.0
      %vm1603 = vcmp.gt.f32.partialorder %v1551, 0.0
      %vm1604 = vcmp.gt.f32.partialorder %v1556, 0.0
      %vm1605 = vcmp.gt.f32.partialorder %v1559, 0.0
      %vm1606 = vcmp.gt.f32.partialorder %v1564, 0.0
      %vm1607 = vcmp.gt.f32.partialorder %v1567, 0.0
      %vm1608 = vcmp.gt.f32.partialorder %v1572, 0.0
      %vm1609 = vcmp.gt.f32.partialorder %v1575, 0.0
      %v1610 = vld [vmem:[%s9 + $0x1] sm:$0x1]
      %v1611 = vlaneseq
      %v1612 = vshrl.u32 %v1611, 7
      %v1613 = vsub.s32 0, %v1612
      %v1614 = vrot.slane %v1610, %v1613
      %v1615 = vmul.f32 %v1614, %v1452
      %v1616 = vmul.f32 %v1614, %v1455
      %v1617 = vmul.f32 %v1614, %v1460
      %v1618 = vmul.f32 %v1614, %v1463
      %v1619 = vmul.f32 %v1614, %v1468
      %v1620 = vmul.f32 %v1614, %v1471
      %v1621 = vmul.f32 %v1614, %v1476
      %v1622 = vmul.f32 %v1614, %v1479
      %v1623 = vmul.f32 %v1614, %v1484
      %v1624 = vmul.f32 %v1614, %v1487
      %v1625 = vmul.f32 %v1614, %v1492
      %v1626 = vmul.f32 %v1614, %v1495
      %v1627 = vmul.f32 %v1614, %v1500
      %v1628 = vmul.f32 %v1614, %v1503
      %v1629 = vmul.f32 %v1614, %v1508
      %v1630 = vmul.f32 %v1614, %v1511
      %v1631 = vmul.f32 %v1614, %v1516
      %v1632 = vmul.f32 %v1614, %v1519
      %v1633 = vmul.f32 %v1614, %v1524
      %v1634 = vmul.f32 %v1614, %v1527
      %v1635 = vmul.f32 %v1614, %v1532
      %v1636 = vmul.f32 %v1614, %v1535
      %v1637 = vmul.f32 %v1614, %v1540
      %v1638 = vmul.f32 %v1614, %v1543
      %v1639 = vmul.f32 %v1614, %v1548
      %v1640 = vmul.f32 %v1614, %v1551
      %v1641 = vmul.f32 %v1614, %v1556
      %v1642 = vmul.f32 %v1614, %v1559
      %v1643 = vmul.f32 %v1614, %v1564
      %v1644 = vmul.f32 %v1614, %v1567
      %v1645 = vmul.f32 %v1614, %v1572
      %v1646 = vmul.f32 %v1614, %v1575
      %v1647 = vsel %vm1578, %v1452, %v1615
      %v1648 = vsel %vm1579, %v1455, %v1616
      %v1649 = vsel %vm1580, %v1460, %v1617
      %v1650 = vsel %vm1581, %v1463, %v1618
      %v1651 = vsel %vm1582, %v1468, %v1619
      %v1652 = vsel %vm1583, %v1471, %v1620
      %v1653 = vsel %vm1584, %v1476, %v1621
      %v1654 = vsel %vm1585, %v1479, %v1622
      %v1655 = vsel %vm1586, %v1484, %v1623
      %v1656 = vsel %vm1587, %v1487, %v1624
      %v1657 = vsel %vm1588, %v1492, %v1625
      %v1658 = vsel %vm1589, %v1495, %v1626
      %v1659 = vsel %vm1590, %v1500, %v1627
      %v1660 = vsel %vm1591, %v1503, %v1628
      %v1661 = vsel %vm1592, %v1508, %v1629
      %v1662 = vsel %vm1593, %v1511, %v1630
      %v1663 = vsel %vm1594, %v1516, %v1631
      %v1664 = vsel %vm1595, %v1519, %v1632
      %v1665 = vsel %vm1596, %v1524, %v1633
      %v1666 = vsel %vm1597, %v1527, %v1634
      %v1667 = vsel %vm1598, %v1532, %v1635
      %v1668 = vsel %vm1599, %v1535, %v1636
      %v1669 = vsel %vm1600, %v1540, %v1637
      %v1670 = vsel %vm1601, %v1543, %v1638
      %v1671 = vsel %vm1602, %v1548, %v1639
      %v1672 = vsel %vm1603, %v1551, %v1640
      %v1673 = vsel %vm1604, %v1556, %v1641
      %v1674 = vsel %vm1605, %v1559, %v1642
      %v1675 = vsel %vm1606, %v1564, %v1643
      %v1676 = vsel %vm1607, %v1567, %v1644
      %v1677 = vsel %vm1608, %v1572, %v1645
      %v1678 = vsel %vm1609, %v1575, %v1646
      %v1679 = vadd.f32 %v1214, %v1647
      %v1680 = vadd.f32 %v1215, %v1648
      %v1681 = vadd.f32 %v1216, %v1649
      %v1682 = vadd.f32 %v1217, %v1650
      %v1683 = vadd.f32 %v1218, %v1651
      %v1684 = vadd.f32 %v1219, %v1652
      %v1685 = vadd.f32 %v1220, %v1653
      %v1686 = vadd.f32 %v1221, %v1654
      %v1687 = vadd.f32 %v1222, %v1655
      %v1688 = vadd.f32 %v1223, %v1656
      %v1689 = vadd.f32 %v1224, %v1657
      %v1690 = vadd.f32 %v1225, %v1658
      %v1691 = vadd.f32 %v1226, %v1659
      %v1692 = vadd.f32 %v1227, %v1660
      %v1693 = vadd.f32 %v1228, %v1661
      %v1694 = vadd.f32 %v1229, %v1662
      %v1695 = vadd.f32 %v1230, %v1663
      %v1696 = vadd.f32 %v1231, %v1664
      %v1697 = vadd.f32 %v1232, %v1665
      %v1698 = vadd.f32 %v1233, %v1666
      %v1699 = vadd.f32 %v1234, %v1667
      %v1700 = vadd.f32 %v1235, %v1668
      %v1701 = vadd.f32 %v1236, %v1669
      %v1702 = vadd.f32 %v1237, %v1670
      %v1703 = vadd.f32 %v1238, %v1671
      %v1704 = vadd.f32 %v1239, %v1672
      %v1705 = vadd.f32 %v1240, %v1673
      %v1706 = vadd.f32 %v1241, %v1674
      %v1707 = vadd.f32 %v1242, %v1675
      %v1708 = vadd.f32 %v1243, %v1676
      %v1709 = vadd.f32 %v1244, %v1677
      %v1710 = vadd.f32 %v1245, %v1678
      %v1711 = vpack.c.bf16 %v1680, %v1679
      %v1712 = vpack.c.bf16 %v1682, %v1681
      %v1713 = vpack.c.bf16 %v1684, %v1683
      %v1714 = vpack.c.bf16 %v1686, %v1685
      %v1715 = vpack.c.bf16 %v1688, %v1687
      %v1716 = vpack.c.bf16 %v1690, %v1689
      %v1717 = vpack.c.bf16 %v1692, %v1691
      %v1718 = vpack.c.bf16 %v1694, %v1693
      %v1719 = vpack.c.bf16 %v1696, %v1695
      %v1720 = vpack.c.bf16 %v1698, %v1697
      %v1721 = vpack.c.bf16 %v1700, %v1699
      %v1722 = vpack.c.bf16 %v1702, %v1701
      %v1723 = vpack.c.bf16 %v1704, %v1703
      %v1724 = vpack.c.bf16 %v1706, %v1705
      %v1725 = vpack.c.bf16 %v1708, %v1707
      %v1726 = vpack.c.bf16 %v1710, %v1709
      %v1743 = vunpack.c.l.b16 %v1711
      %v1744 = vunpack.c.h.b16 %v1711
      %v1745 = vunpack.c.l.b16 %v1712
      %v1746 = vunpack.c.h.b16 %v1712
      %v1747 = vunpack.c.l.b16 %v1713
      %v1748 = vunpack.c.h.b16 %v1713
      %v1749 = vunpack.c.l.b16 %v1714
      %v1750 = vunpack.c.h.b16 %v1714
      %v1751 = vunpack.c.l.b16 %v1715
      %v1752 = vunpack.c.h.b16 %v1715
      %v1753 = vunpack.c.l.b16 %v1716
      %v1754 = vunpack.c.h.b16 %v1716
      %v1755 = vunpack.c.l.b16 %v1717
      %v1756 = vunpack.c.h.b16 %v1717
      %v1757 = vunpack.c.l.b16 %v1718
      %v1758 = vunpack.c.h.b16 %v1718
      %v1759 = vunpack.c.l.b16 %v1719
      %v1760 = vunpack.c.h.b16 %v1719
      %v1761 = vunpack.c.l.b16 %v1720
      %v1762 = vunpack.c.h.b16 %v1720
      %v1763 = vunpack.c.l.b16 %v1721
      %v1764 = vunpack.c.h.b16 %v1721
      %v1765 = vunpack.c.l.b16 %v1722
      %v1766 = vunpack.c.h.b16 %v1722
      %v1767 = vunpack.c.l.b16 %v1723
      %v1768 = vunpack.c.h.b16 %v1723
      %v1769 = vunpack.c.l.b16 %v1724
      %v1770 = vunpack.c.h.b16 %v1724
      %v1771 = vunpack.c.l.b16 %v1725
      %v1772 = vunpack.c.h.b16 %v1725
      %v1773 = vunpack.c.l.b16 %v1726
      %v1774 = vunpack.c.h.b16 %v1726
      %v1775 = vpack.c.b16 %v1743, %v1743
      %v1776 = vpack.c.b16 %v1744, %v1744
      %v1777 = vpack.c.b16 %v1745, %v1745
      %v1778 = vpack.c.b16 %v1746, %v1746
      %v1779 = vpack.c.b16 %v1747, %v1747
      %v1780 = vpack.c.b16 %v1748, %v1748
      %v1781 = vpack.c.b16 %v1749, %v1749
      %v1782 = vpack.c.b16 %v1750, %v1750
      %v1783 = vpack.c.b16 %v1751, %v1751
      %v1784 = vpack.c.b16 %v1752, %v1752
      %v1785 = vpack.c.b16 %v1753, %v1753
      %v1786 = vpack.c.b16 %v1754, %v1754
      %v1787 = vpack.c.b16 %v1755, %v1755
      %v1788 = vpack.c.b16 %v1756, %v1756
      %v1789 = vpack.c.b16 %v1757, %v1757
      %v1790 = vpack.c.b16 %v1758, %v1758
      %v1791 = vpack.c.b16 %v1759, %v1759
      %v1792 = vpack.c.b16 %v1760, %v1760
      %v1793 = vpack.c.b16 %v1761, %v1761
      %v1794 = vpack.c.b16 %v1762, %v1762
      %v1795 = vpack.c.b16 %v1763, %v1763
      %v1796 = vpack.c.b16 %v1764, %v1764
      %v1797 = vpack.c.b16 %v1765, %v1765
      %v1798 = vpack.c.b16 %v1766, %v1766
      %v1799 = vpack.c.b16 %v1767, %v1767
      %v1800 = vpack.c.b16 %v1768, %v1768
      %v1801 = vpack.c.b16 %v1769, %v1769
      %v1802 = vpack.c.b16 %v1770, %v1770
      %v1803 = vpack.c.b16 %v1771, %v1771
      %v1804 = vpack.c.b16 %v1772, %v1772
      %v1805 = vpack.c.b16 %v1773, %v1773
      %v1806 = vpack.c.b16 %v1774, %v1774
      %vm1807 = vsmask.f32 4368
      %vm1808 = vmor %vm391, %vm1807
      %v1810 = vshrl.u32 %v1775, 16
      %v1812 = vrot.slane %v1810, 7
      %v1813 = vshll.u32 %v1775, 16
      %v1815 = vor.u32 %v1812, %v1813
      %v1816 = vrot.slane %v1812, 4
      %v1818 = vshrl.u32 %v1776, 16
      %v1820 = vrot.slane %v1818, 7
      %v1821 = vshll.u32 %v1776, 16
      %v1823 = vor.u32 %v1820, %v1821
      %v1824 = vsel %vm1808, %v1816, %v1823
      %v1825 = vrot.slane %v1820, 4
      %v1827 = vshrl.u32 %v1777, 16
      %v1829 = vrot.slane %v1827, 7
      %v1830 = vshll.u32 %v1777, 16
      %v1832 = vor.u32 %v1829, %v1830
      %v1833 = vrot.slane %v1829, 4
      %v1835 = vshrl.u32 %v1778, 16
      %v1837 = vrot.slane %v1835, 7
      %v1838 = vshll.u32 %v1778, 16
      %v1840 = vor.u32 %v1837, %v1838
      %v1841 = vsel %vm1808, %v1833, %v1840
      %v1842 = vrot.slane %v1837, 4
      %v1844 = vshrl.u32 %v1779, 16
      %v1846 = vrot.slane %v1844, 7
      %v1847 = vshll.u32 %v1779, 16
      %v1849 = vor.u32 %v1846, %v1847
      %v1850 = vrot.slane %v1846, 4
      %v1852 = vshrl.u32 %v1780, 16
      %v1854 = vrot.slane %v1852, 7
      %v1855 = vshll.u32 %v1780, 16
      %v1857 = vor.u32 %v1854, %v1855
      %v1858 = vsel %vm1808, %v1850, %v1857
      %v1859 = vrot.slane %v1854, 4
      %v1861 = vshrl.u32 %v1781, 16
      %v1863 = vrot.slane %v1861, 7
      %v1864 = vshll.u32 %v1781, 16
      %v1866 = vor.u32 %v1863, %v1864
      %v1867 = vrot.slane %v1863, 4
      %v1869 = vshrl.u32 %v1782, 16
      %v1871 = vrot.slane %v1869, 7
      %v1872 = vshll.u32 %v1782, 16
      %v1874 = vor.u32 %v1871, %v1872
      %v1875 = vsel %vm1808, %v1867, %v1874
      %v1876 = vrot.slane %v1871, 4
      %v1878 = vshrl.u32 %v1783, 16
      %v1880 = vrot.slane %v1878, 7
      %v1881 = vshll.u32 %v1783, 16
      %v1883 = vor.u32 %v1880, %v1881
      %v1884 = vrot.slane %v1880, 4
      %v1886 = vshrl.u32 %v1784, 16
      %v1888 = vrot.slane %v1886, 7
      %v1889 = vshll.u32 %v1784, 16
      %v1891 = vor.u32 %v1888, %v1889
      %v1892 = vsel %vm1808, %v1884, %v1891
      %v1893 = vrot.slane %v1888, 4
      %v1895 = vshrl.u32 %v1785, 16
      %v1897 = vrot.slane %v1895, 7
      %v1898 = vshll.u32 %v1785, 16
      %v1900 = vor.u32 %v1897, %v1898
      %v1901 = vrot.slane %v1897, 4
      %v1903 = vshrl.u32 %v1786, 16
      %v1905 = vrot.slane %v1903, 7
      %v1906 = vshll.u32 %v1786, 16
      %v1908 = vor.u32 %v1905, %v1906
      %v1909 = vsel %vm1808, %v1901, %v1908
      %v1910 = vrot.slane %v1905, 4
      %v1912 = vshrl.u32 %v1787, 16
      %v1914 = vrot.slane %v1912, 7
      %v1915 = vshll.u32 %v1787, 16
      %v1917 = vor.u32 %v1914, %v1915
      %v1918 = vrot.slane %v1914, 4
      %v1920 = vshrl.u32 %v1788, 16
      %v1922 = vrot.slane %v1920, 7
      %v1923 = vshll.u32 %v1788, 16
      %v1925 = vor.u32 %v1922, %v1923
      %v1926 = vsel %vm1808, %v1918, %v1925
      %v1927 = vrot.slane %v1922, 4
      %v1929 = vshrl.u32 %v1789, 16
      %v1931 = vrot.slane %v1929, 7
      %v1932 = vshll.u32 %v1789, 16
      %v1934 = vor.u32 %v1931, %v1932
      %v1935 = vrot.slane %v1931, 4
      %v1937 = vshrl.u32 %v1790, 16
      %v1939 = vrot.slane %v1937, 7
      %v1940 = vshll.u32 %v1790, 16
      %v1942 = vor.u32 %v1939, %v1940
      %v1943 = vsel %vm1808, %v1935, %v1942
      %v1944 = vrot.slane %v1939, 4
      %v1946 = vshrl.u32 %v1791, 16
      %v1948 = vrot.slane %v1946, 7
      %v1949 = vshll.u32 %v1791, 16
      %v1951 = vor.u32 %v1948, %v1949
      %v1952 = vrot.slane %v1948, 4
      %v1954 = vshrl.u32 %v1792, 16
      %v1956 = vrot.slane %v1954, 7
      %v1957 = vshll.u32 %v1792, 16
      %v1959 = vor.u32 %v1956, %v1957
      %v1960 = vsel %vm1808, %v1952, %v1959
      %v1961 = vrot.slane %v1956, 4
      %v1963 = vshrl.u32 %v1793, 16
      %v1965 = vrot.slane %v1963, 7
      %v1966 = vshll.u32 %v1793, 16
      %v1968 = vor.u32 %v1965, %v1966
      %v1969 = vrot.slane %v1965, 4
      %v1971 = vshrl.u32 %v1794, 16
      %v1973 = vrot.slane %v1971, 7
      %v1974 = vshll.u32 %v1794, 16
      %v1976 = vor.u32 %v1973, %v1974
      %v1977 = vsel %vm1808, %v1969, %v1976
      %v1978 = vrot.slane %v1973, 4
      %v1980 = vshrl.u32 %v1795, 16
      %v1982 = vrot.slane %v1980, 7
      %v1983 = vshll.u32 %v1795, 16
      %v1985 = vor.u32 %v1982, %v1983
      %v1986 = vrot.slane %v1982, 4
      %v1988 = vshrl.u32 %v1796, 16
      %v1990 = vrot.slane %v1988, 7
      %v1991 = vshll.u32 %v1796, 16
      %v1993 = vor.u32 %v1990, %v1991
      %v1994 = vsel %vm1808, %v1986, %v1993
      %v1995 = vrot.slane %v1990, 4
      %v1997 = vshrl.u32 %v1797, 16
      %v1999 = vrot.slane %v1997, 7
      %v2000 = vshll.u32 %v1797, 16
      %v2002 = vor.u32 %v1999, %v2000
      %v2003 = vrot.slane %v1999, 4
      %v2005 = vshrl.u32 %v1798, 16
      %v2007 = vrot.slane %v2005, 7
      %v2008 = vshll.u32 %v1798, 16
      %v2010 = vor.u32 %v2007, %v2008
      %v2011 = vsel %vm1808, %v2003, %v2010
      %v2012 = vrot.slane %v2007, 4
      %v2014 = vshrl.u32 %v1799, 16
      %v2016 = vrot.slane %v2014, 7
      %v2017 = vshll.u32 %v1799, 16
      %v2019 = vor.u32 %v2016, %v2017
      %v2020 = vrot.slane %v2016, 4
      %v2022 = vshrl.u32 %v1800, 16
      %v2024 = vrot.slane %v2022, 7
      %v2025 = vshll.u32 %v1800, 16
      %v2027 = vor.u32 %v2024, %v2025
      %v2028 = vsel %vm1808, %v2020, %v2027
      %v2029 = vrot.slane %v2024, 4
      %v2031 = vshrl.u32 %v1801, 16
      %v2033 = vrot.slane %v2031, 7
      %v2034 = vshll.u32 %v1801, 16
      %v2036 = vor.u32 %v2033, %v2034
      %v2037 = vrot.slane %v2033, 4
      %v2039 = vshrl.u32 %v1802, 16
      %v2041 = vrot.slane %v2039, 7
      %v2042 = vshll.u32 %v1802, 16
      %v2044 = vor.u32 %v2041, %v2042
      %v2045 = vsel %vm1808, %v2037, %v2044
      %v2046 = vrot.slane %v2041, 4
      %v2048 = vshrl.u32 %v1803, 16
      %v2050 = vrot.slane %v2048, 7
      %v2051 = vshll.u32 %v1803, 16
      %v2053 = vor.u32 %v2050, %v2051
      %v2054 = vrot.slane %v2050, 4
      %v2056 = vshrl.u32 %v1804, 16
      %v2058 = vrot.slane %v2056, 7
      %v2059 = vshll.u32 %v1804, 16
      %v2061 = vor.u32 %v2058, %v2059
      %v2062 = vsel %vm1808, %v2054, %v2061
      %v2063 = vrot.slane %v2058, 4
      %v2065 = vshrl.u32 %v1805, 16
      %v2067 = vrot.slane %v2065, 7
      %v2068 = vshll.u32 %v1805, 16
      %v2070 = vor.u32 %v2067, %v2068
      %v2071 = vrot.slane %v2067, 4
      %v2073 = vshrl.u32 %v1806, 16
      %v2075 = vrot.slane %v2073, 7
      %v2076 = vshll.u32 %v1806, 16
      %v2078 = vor.u32 %v2075, %v2076
      %v2079 = vsel %vm1808, %v2071, %v2078
      %v2080 = vrot.slane %v2075, 4
      %s2129 = scalar_lea.vmem [#allocation2], 12
      %vm2130 = vcmask 125952
      %vm2131 = vmand %vm2130, %vm447
      %v2132 = vld [vmem:[%s2129] sm:$0xf]
      %v2133 = vsel %vm2131, %v1815, %v2132
      %2134 = vst [vmem:[%s2129] sm:$0xf] %v2133
      %vm2135 = vcmask 125952
      %2136 = vst.msk [vmem:[%s2129 + $0x4] sm:$0xf] %vm2135, %v1824
      %vm2137 = vcmask 122880
      %vm2138 = vmand %vm2137, %vm391
      %v2139 = vld [vmem:[%s2129 + $0x8] sm:$0x1]
      %v2140 = vsel %vm2138, %v1825, %v2139
      %2141 = vst [vmem:[%s2129 + $0x8] sm:$0x1] %v2140
      %v2142 = vld [vmem:[%s2129 + $0xc] sm:$0xf]
      %v2143 = vsel %vm2131, %v1832, %v2142
      %2144 = vst [vmem:[%s2129 + $0xc] sm:$0xf] %v2143
      %2145 = vst.msk [vmem:[%s2129 + $0x10] sm:$0xf] %vm2135, %v1841
      %v2146 = vld [vmem:[%s2129 + $0x14] sm:$0x1]
      %v2147 = vsel %vm2138, %v1842, %v2146
      %2148 = vst [vmem:[%s2129 + $0x14] sm:$0x1] %v2147
      %v2149 = vld [vmem:[%s2129 + $0x18] sm:$0xf]
      %v2150 = vsel %vm2131, %v1849, %v2149
      %2151 = vst [vmem:[%s2129 + $0x18] sm:$0xf] %v2150
      %2152 = vst.msk [vmem:[%s2129 + $0x1c] sm:$0xf] %vm2135, %v1858
      %v2153 = vld [vmem:[%s2129 + $0x20] sm:$0x1]
      %v2154 = vsel %vm2138, %v1859, %v2153
      %2155 = vst [vmem:[%s2129 + $0x20] sm:$0x1] %v2154
      %v2156 = vld [vmem:[%s2129 + $0x24] sm:$0xf]
      %v2157 = vsel %vm2131, %v1866, %v2156
      %2158 = vst [vmem:[%s2129 + $0x24] sm:$0xf] %v2157
      %2159 = vst.msk [vmem:[%s2129 + $0x28] sm:$0xf] %vm2135, %v1875
      %v2160 = vld [vmem:[%s2129 + $0x2c] sm:$0x1]
      %v2161 = vsel %vm2138, %v1876, %v2160
      %2162 = vst [vmem:[%s2129 + $0x2c] sm:$0x1] %v2161
      %v2163 = vld [vmem:[%s2129 + $0x30] sm:$0xf]
      %v2164 = vsel %vm2131, %v1883, %v2163
      %2165 = vst [vmem:[%s2129 + $0x30] sm:$0xf] %v2164
      %2166 = vst.msk [vmem:[%s2129 + $0x34] sm:$0xf] %vm2135, %v1892
      %v2167 = vld [vmem:[%s2129 + $0x38] sm:$0x1]
      %v2168 = vsel %vm2138, %v1893, %v2167
      %2169 = vst [vmem:[%s2129 + $0x38] sm:$0x1] %v2168
      %v2170 = vld [vmem:[%s2129 + $0x3c] sm:$0xf]
      %v2171 = vsel %vm2131, %v1900, %v2170
      %2172 = vst [vmem:[%s2129 + $0x3c] sm:$0xf] %v2171
      %2173 = vst.msk [vmem:[%s2129 + $0x40] sm:$0xf] %vm2135, %v1909
      %v2174 = vld [vmem:[%s2129 + $0x44] sm:$0x1]
      %v2175 = vsel %vm2138, %v1910, %v2174
      %2176 = vst [vmem:[%s2129 + $0x44] sm:$0x1] %v2175
      %v2177 = vld [vmem:[%s2129 + $0x48] sm:$0xf]
      %v2178 = vsel %vm2131, %v1917, %v2177
      %2179 = vst [vmem:[%s2129 + $0x48] sm:$0xf] %v2178
      %2180 = vst.msk [vmem:[%s2129 + $0x4c] sm:$0xf] %vm2135, %v1926
      %v2181 = vld [vmem:[%s2129 + $0x50] sm:$0x1]
      %v2182 = vsel %vm2138, %v1927, %v2181
      %2183 = vst [vmem:[%s2129 + $0x50] sm:$0x1] %v2182
      %v2184 = vld [vmem:[%s2129 + $0x54] sm:$0xf]
      %v2185 = vsel %vm2131, %v1934, %v2184
      %2186 = vst [vmem:[%s2129 + $0x54] sm:$0xf] %v2185
      %2187 = vst.msk [vmem:[%s2129 + $0x58] sm:$0xf] %vm2135, %v1943
      %v2188 = vld [vmem:[%s2129 + $0x5c] sm:$0x1]
      %v2189 = vsel %vm2138, %v1944, %v2188
      %2190 = vst [vmem:[%s2129 + $0x5c] sm:$0x1] %v2189
      %v2191 = vld [vmem:[%s2129 + $0x60] sm:$0xf]
      %v2192 = vsel %vm2131, %v1951, %v2191
      %2193 = vst [vmem:[%s2129 + $0x60] sm:$0xf] %v2192
      %2194 = vst.msk [vmem:[%s2129 + $0x64] sm:$0xf] %vm2135, %v1960
      %v2195 = vld [vmem:[%s2129 + $0x68] sm:$0x1]
      %v2196 = vsel %vm2138, %v1961, %v2195
      %2197 = vst [vmem:[%s2129 + $0x68] sm:$0x1] %v2196
      %v2198 = vld [vmem:[%s2129 + $0x6c] sm:$0xf]
      %v2199 = vsel %vm2131, %v1968, %v2198
      %2200 = vst [vmem:[%s2129 + $0x6c] sm:$0xf] %v2199
      %2201 = vst.msk [vmem:[%s2129 + $0x70] sm:$0xf] %vm2135, %v1977
      %v2202 = vld [vmem:[%s2129 + $0x74] sm:$0x1]
      %v2203 = vsel %vm2138, %v1978, %v2202
      %2204 = vst [vmem:[%s2129 + $0x74] sm:$0x1] %v2203
      %v2205 = vld [vmem:[%s2129 + $0x78] sm:$0xf]
      %v2206 = vsel %vm2131, %v1985, %v2205
      %2207 = vst [vmem:[%s2129 + $0x78] sm:$0xf] %v2206
      %2208 = vst.msk [vmem:[%s2129 + $0x7c] sm:$0xf] %vm2135, %v1994
      %v2209 = vld [vmem:[%s2129 + $0x80] sm:$0x1]
      %v2210 = vsel %vm2138, %v1995, %v2209
      %2211 = vst [vmem:[%s2129 + $0x80] sm:$0x1] %v2210
      %v2212 = vld [vmem:[%s2129 + $0x84] sm:$0xf]
      %v2213 = vsel %vm2131, %v2002, %v2212
      %2214 = vst [vmem:[%s2129 + $0x84] sm:$0xf] %v2213
      %2215 = vst.msk [vmem:[%s2129 + $0x88] sm:$0xf] %vm2135, %v2011
      %v2216 = vld [vmem:[%s2129 + $0x8c] sm:$0x1]
      %v2217 = vsel %vm2138, %v2012, %v2216
      %2218 = vst [vmem:[%s2129 + $0x8c] sm:$0x1] %v2217
      %v2219 = vld [vmem:[%s2129 + $0x90] sm:$0xf]
      %v2220 = vsel %vm2131, %v2019, %v2219
      %2221 = vst [vmem:[%s2129 + $0x90] sm:$0xf] %v2220
      %2222 = vst.msk [vmem:[%s2129 + $0x94] sm:$0xf] %vm2135, %v2028
      %v2223 = vld [vmem:[%s2129 + $0x98] sm:$0x1]
      %v2224 = vsel %vm2138, %v2029, %v2223
      %2225 = vst [vmem:[%s2129 + $0x98] sm:$0x1] %v2224
      %v2226 = vld [vmem:[%s2129 + $0x9c] sm:$0xf]
      %v2227 = vsel %vm2131, %v2036, %v2226
      %2228 = vst [vmem:[%s2129 + $0x9c] sm:$0xf] %v2227
      %2229 = vst.msk [vmem:[%s2129 + $0xa0] sm:$0xf] %vm2135, %v2045
      %v2230 = vld [vmem:[%s2129 + $0xa4] sm:$0x1]
      %v2231 = vsel %vm2138, %v2046, %v2230
      %2232 = vst [vmem:[%s2129 + $0xa4] sm:$0x1] %v2231
      %v2233 = vld [vmem:[%s2129 + $0xa8] sm:$0xf]
      %v2234 = vsel %vm2131, %v2053, %v2233
      %2235 = vst [vmem:[%s2129 + $0xa8] sm:$0xf] %v2234
      %2236 = vst.msk [vmem:[%s2129 + $0xac] sm:$0xf] %vm2135, %v2062
      %v2237 = vld [vmem:[%s2129 + $0xb0] sm:$0x1]
      %v2238 = vsel %vm2138, %v2063, %v2237
      %2239 = vst [vmem:[%s2129 + $0xb0] sm:$0x1] %v2238
      %v2240 = vld [vmem:[%s2129 + $0xb4] sm:$0xf]
      %v2241 = vsel %vm2131, %v2070, %v2240
      %2242 = vst [vmem:[%s2129 + $0xb4] sm:$0xf] %v2241
      %2243 = vst.msk [vmem:[%s2129 + $0xb8] sm:$0xf] %vm2135, %v2079
      %v2244 = vld [vmem:[%s2129 + $0xbc] sm:$0x1]
      %v2245 = vsel %vm2138, %v2080, %v2244
      %2246 = vst [vmem:[%s2129 + $0xbc] sm:$0x1] %v2245
      %v2247 = vld [vmem:[#allocation2] sm:$0xf]
      %v2248 = vld [vmem:[#allocation2 + $0x4] sm:$0xf]
      %v2249 = vld [vmem:[#allocation2 + $0x8] sm:$0x1]
      %v2250 = vld [vmem:[#allocation2 + $0xc] sm:$0xf]
      %v2251 = vld [vmem:[#allocation2 + $0x10] sm:$0xf]
      %v2252 = vld [vmem:[#allocation2 + $0x14] sm:$0x1]
      %v2253 = vld [vmem:[#allocation2 + $0x18] sm:$0xf]
      %v2254 = vld [vmem:[#allocation2 + $0x1c] sm:$0xf]
      %v2255 = vld [vmem:[#allocation2 + $0x20] sm:$0x1]
      %v2256 = vld [vmem:[#allocation2 + $0x24] sm:$0xf]
      %v2257 = vld [vmem:[#allocation2 + $0x28] sm:$0xf]
      %v2258 = vld [vmem:[#allocation2 + $0x2c] sm:$0x1]
      %v2259 = vld [vmem:[#allocation2 + $0x30] sm:$0xf]
      %v2260 = vld [vmem:[#allocation2 + $0x34] sm:$0xf]
      %v2261 = vld [vmem:[#allocation2 + $0x38] sm:$0x1]
      %v2262 = vld [vmem:[#allocation2 + $0x3c] sm:$0xf]
      %v2263 = vld [vmem:[#allocation2 + $0x40] sm:$0xf]
      %v2264 = vld [vmem:[#allocation2 + $0x44] sm:$0x1]
      %v2265 = vld [vmem:[#allocation2 + $0x48] sm:$0xf]
      %v2266 = vld [vmem:[#allocation2 + $0x4c] sm:$0xf]
      %v2267 = vld [vmem:[#allocation2 + $0x50] sm:$0x1]
      %v2268 = vld [vmem:[#allocation2 + $0x54] sm:$0xf]
      %v2269 = vld [vmem:[#allocation2 + $0x58] sm:$0xf]
      %v2270 = vld [vmem:[#allocation2 + $0x5c] sm:$0x1]
      %v2271 = vld [vmem:[#allocation2 + $0x60] sm:$0xf]
      %v2272 = vld [vmem:[#allocation2 + $0x64] sm:$0xf]
      %v2273 = vld [vmem:[#allocation2 + $0x68] sm:$0x1]
      %v2274 = vld [vmem:[#allocation2 + $0x6c] sm:$0xf]
      %v2275 = vld [vmem:[#allocation2 + $0x70] sm:$0xf]
      %v2276 = vld [vmem:[#allocation2 + $0x74] sm:$0x1]
      %v2277 = vld [vmem:[#allocation2 + $0x78] sm:$0xf]
      %v2278 = vld [vmem:[#allocation2 + $0x7c] sm:$0xf]
      %v2279 = vld [vmem:[#allocation2 + $0x80] sm:$0x1]
      %v2280 = vld [vmem:[#allocation2 + $0x84] sm:$0xf]
      %v2281 = vld [vmem:[#allocation2 + $0x88] sm:$0xf]
      %v2282 = vld [vmem:[#allocation2 + $0x8c] sm:$0x1]
      %v2283 = vld [vmem:[#allocation2 + $0x90] sm:$0xf]
      %v2284 = vld [vmem:[#allocation2 + $0x94] sm:$0xf]
      %v2285 = vld [vmem:[#allocation2 + $0x98] sm:$0x1]
      %v2286 = vld [vmem:[#allocation2 + $0x9c] sm:$0xf]
      %v2287 = vld [vmem:[#allocation2 + $0xa0] sm:$0xf]
      %v2288 = vld [vmem:[#allocation2 + $0xa4] sm:$0x1]
      %v2289 = vld [vmem:[#allocation2 + $0xa8] sm:$0xf]
      %v2290 = vld [vmem:[#allocation2 + $0xac] sm:$0xf]
      %v2291 = vld [vmem:[#allocation2 + $0xb0] sm:$0x1]
      %v2292 = vld [vmem:[#allocation2 + $0xb4] sm:$0xf]
      %v2293 = vld [vmem:[#allocation2 + $0xb8] sm:$0xf]
      %v2294 = vld [vmem:[#allocation2 + $0xbc] sm:$0x1]
      %v2295 = vld [vmem:[#allocation2 + $0xc0] sm:$0xf]
      %v2296 = vld [vmem:[#allocation2 + $0xc4] sm:$0xf]
      %v2297 = vld [vmem:[#allocation2 + $0xc8] sm:$0x1]
      %v2298 = vld [vmem:[#allocation2 + $0xcc] sm:$0xf]
      %v2299 = vld [vmem:[#allocation2 + $0xd0] sm:$0xf]
      %v2300 = vld [vmem:[#allocation2 + $0xd4] sm:$0x1]
      %v2333 = vunpack.c.l.b16 %v2247
      %v2334 = vunpack.c.l.b16 %v2248
      %v2335 = vunpack.c.l.b16 %v2250
      %v2336 = vunpack.c.l.b16 %v2251
      %v2337 = vunpack.c.l.b16 %v2253
      %v2338 = vunpack.c.l.b16 %v2254
      %v2339 = vunpack.c.l.b16 %v2256
      %v2340 = vunpack.c.l.b16 %v2257
      %v2341 = vunpack.c.l.b16 %v2259
      %v2342 = vunpack.c.l.b16 %v2260
      %v2343 = vunpack.c.l.b16 %v2262
      %v2344 = vunpack.c.l.b16 %v2263
      %v2345 = vunpack.c.l.b16 %v2265
      %v2346 = vunpack.c.l.b16 %v2266
      %v2347 = vunpack.c.l.b16 %v2268
      %v2348 = vunpack.c.l.b16 %v2269
      %v2349 = vunpack.c.l.b16 %v2271
      %v2350 = vunpack.c.l.b16 %v2272
      %v2351 = vunpack.c.l.b16 %v2274
      %v2352 = vunpack.c.l.b16 %v2275
      %v2353 = vunpack.c.l.b16 %v2277
      %v2354 = vunpack.c.l.b16 %v2278
      %v2355 = vunpack.c.l.b16 %v2280
      %v2356 = vunpack.c.l.b16 %v2281
      %v2357 = vunpack.c.l.b16 %v2283
      %v2358 = vunpack.c.l.b16 %v2284
      %v2359 = vunpack.c.l.b16 %v2286
      %v2360 = vunpack.c.l.b16 %v2287
      %v2361 = vunpack.c.l.b16 %v2289
      %v2362 = vunpack.c.l.b16 %v2290
      %v2363 = vunpack.c.l.b16 %v2292
      %v2364 = vunpack.c.l.b16 %v2293
      %v2365 = vpack.c.b16 %v2334, %v2333
      %v2366 = vpack.c.b16 %v2336, %v2335
      %v2367 = vpack.c.b16 %v2338, %v2337
      %v2368 = vpack.c.b16 %v2340, %v2339
      %v2369 = vpack.c.b16 %v2342, %v2341
      %v2370 = vpack.c.b16 %v2344, %v2343
      %v2371 = vpack.c.b16 %v2346, %v2345
      %v2372 = vpack.c.b16 %v2348, %v2347
      %v2373 = vpack.c.b16 %v2350, %v2349
      %v2374 = vpack.c.b16 %v2352, %v2351
      %v2375 = vpack.c.b16 %v2354, %v2353
      %v2376 = vpack.c.b16 %v2356, %v2355
      %v2377 = vpack.c.b16 %v2358, %v2357
      %v2378 = vpack.c.b16 %v2360, %v2359
      %v2379 = vpack.c.b16 %v2362, %v2361
      %v2380 = vpack.c.b16 %v2364, %v2363
      %vm2397 = vcmask 130048
      %2398 = vst.msk [vmem:[#allocation4] sm:$0xff] %vm2397, %v2365
      %2399 = vst.msk [vmem:[#allocation4 + $0x18] sm:$0xff] %vm2397, %v2366
      %2400 = vst.msk [vmem:[#allocation4 + $0x30] sm:$0xff] %vm2397, %v2367
      %2401 = vst.msk [vmem:[#allocation4 + $0x48] sm:$0xff] %vm2397, %v2368
      %2402 = vst.msk [vmem:[#allocation4 + $0x60] sm:$0xff] %vm2397, %v2369
      %2403 = vst.msk [vmem:[#allocation4 + $0x78] sm:$0xff] %vm2397, %v2370
      %2404 = vst.msk [vmem:[#allocation4 + $0x90] sm:$0xff] %vm2397, %v2371
      %2405 = vst.msk [vmem:[#allocation4 + $0xa8] sm:$0xff] %vm2397, %v2372
      %2406 = vst.msk [vmem:[#allocation4 + $0xc0] sm:$0xff] %vm2397, %v2373
      %2407 = vst.msk [vmem:[#allocation4 + $0xd8] sm:$0xff] %vm2397, %v2374
      %2408 = vst.msk [vmem:[#allocation4 + $0xf0] sm:$0xff] %vm2397, %v2375
      %2409 = vst.msk [vmem:[#allocation4 + $0x108] sm:$0xff] %vm2397, %v2376
      %2410 = vst.msk [vmem:[#allocation4 + $0x120] sm:$0xff] %vm2397, %v2377
      %2411 = vst.msk [vmem:[#allocation4 + $0x138] sm:$0xff] %vm2397, %v2378
      %2412 = vst.msk [vmem:[#allocation4 + $0x150] sm:$0xff] %vm2397, %v2379
      %2413 = vst.msk [vmem:[#allocation4 + $0x168] sm:$0xff] %vm2397, %v2380
      %vm2414 = vsmask.f32 3328
      %vm2415 = vsmask.f32 7440
      %vm2416 = vmor %vm2414, %vm2415
      %v2418 = vshrl.u32 %v2247, 16
      %v2420 = vrot.slane %v2418, 4
      %v2421 = vshll.u32 %v2247, 16
      %v2423 = vrot.slane %v2421, 5
      %v2424 = vor.u32 %v2420, %v2423
      %v2425 = vrot.slane %v2424, 4
      %v2427 = vshll.u32 %v2248, 16
      %v2429 = vrot.slane %v2427, 5
      %v2430 = vsel %vm2416, %v2425, %v2429
      %v2431 = vshrl.u32 %v2248, 16
      %v2433 = vrot.slane %v2431, 4
      %v2434 = vor.u32 %v2433, %v2429
      %v2435 = vrot.slane %v2434, 4
      %v2437 = vshll.u32 %v2249, 16
      %v2439 = vrot.slane %v2437, 5
      %v2440 = vsel %vm2416, %v2435, %v2439
      %v2442 = vshrl.u32 %v2250, 16
      %v2444 = vrot.slane %v2442, 4
      %v2445 = vshll.u32 %v2250, 16
      %v2447 = vrot.slane %v2445, 5
      %v2448 = vor.u32 %v2444, %v2447
      %v2449 = vrot.slane %v2448, 4
      %v2451 = vshll.u32 %v2251, 16
      %v2453 = vrot.slane %v2451, 5
      %v2454 = vsel %vm2416, %v2449, %v2453
      %v2455 = vshrl.u32 %v2251, 16
      %v2457 = vrot.slane %v2455, 4
      %v2458 = vor.u32 %v2457, %v2453
      %v2459 = vrot.slane %v2458, 4
      %v2461 = vshll.u32 %v2252, 16
      %v2463 = vrot.slane %v2461, 5
      %v2464 = vsel %vm2416, %v2459, %v2463
      %v2466 = vshrl.u32 %v2253, 16
      %v2468 = vrot.slane %v2466, 4
      %v2469 = vshll.u32 %v2253, 16
      %v2471 = vrot.slane %v2469, 5
      %v2472 = vor.u32 %v2468, %v2471
      %v2473 = vrot.slane %v2472, 4
      %v2475 = vshll.u32 %v2254, 16
      %v2477 = vrot.slane %v2475, 5
      %v2478 = vsel %vm2416, %v2473, %v2477
      %v2479 = vshrl.u32 %v2254, 16
      %v2481 = vrot.slane %v2479, 4
      %v2482 = vor.u32 %v2481, %v2477
      %v2483 = vrot.slane %v2482, 4
      %v2485 = vshll.u32 %v2255, 16
      %v2487 = vrot.slane %v2485, 5
      %v2488 = vsel %vm2416, %v2483, %v2487
      %v2490 = vshrl.u32 %v2256, 16
      %v2492 = vrot.slane %v2490, 4
      %v2493 = vshll.u32 %v2256, 16
      %v2495 = vrot.slane %v2493, 5
      %v2496 = vor.u32 %v2492, %v2495
      %v2497 = vrot.slane %v2496, 4
      %v2499 = vshll.u32 %v2257, 16
      %v2501 = vrot.slane %v2499, 5
      %v2502 = vsel %vm2416, %v2497, %v2501
      %v2503 = vshrl.u32 %v2257, 16
      %v2505 = vrot.slane %v2503, 4
      %v2506 = vor.u32 %v2505, %v2501
      %v2507 = vrot.slane %v2506, 4
      %v2509 = vshll.u32 %v2258, 16
      %v2511 = vrot.slane %v2509, 5
      %v2512 = vsel %vm2416, %v2507, %v2511
      %v2514 = vshrl.u32 %v2259, 16
      %v2516 = vrot.slane %v2514, 4
      %v2517 = vshll.u32 %v2259, 16
      %v2519 = vrot.slane %v2517, 5
      %v2520 = vor.u32 %v2516, %v2519
      %v2521 = vrot.slane %v2520, 4
      %v2523 = vshll.u32 %v2260, 16
      %v2525 = vrot.slane %v2523, 5
      %v2526 = vsel %vm2416, %v2521, %v2525
      %v2527 = vshrl.u32 %v2260, 16
      %v2529 = vrot.slane %v2527, 4
      %v2530 = vor.u32 %v2529, %v2525
      %v2531 = vrot.slane %v2530, 4
      %v2533 = vshll.u32 %v2261, 16
      %v2535 = vrot.slane %v2533, 5
      %v2536 = vsel %vm2416, %v2531, %v2535
      %v2538 = vshrl.u32 %v2262, 16
      %v2540 = vrot.slane %v2538, 4
      %v2541 = vshll.u32 %v2262, 16
      %v2543 = vrot.slane %v2541, 5
      %v2544 = vor.u32 %v2540, %v2543
      %v2545 = vrot.slane %v2544, 4
      %v2547 = vshll.u32 %v2263, 16
      %v2549 = vrot.slane %v2547, 5
      %v2550 = vsel %vm2416, %v2545, %v2549
      %v2551 = vshrl.u32 %v2263, 16
      %v2553 = vrot.slane %v2551, 4
      %v2554 = vor.u32 %v2553, %v2549
      %v2555 = vrot.slane %v2554, 4
      %v2557 = vshll.u32 %v2264, 16
      %v2559 = vrot.slane %v2557, 5
      %v2560 = vsel %vm2416, %v2555, %v2559
      %v2562 = vshrl.u32 %v2265, 16
      %v2564 = vrot.slane %v2562, 4
      %v2565 = vshll.u32 %v2265, 16
      %v2567 = vrot.slane %v2565, 5
      %v2568 = vor.u32 %v2564, %v2567
      %v2569 = vrot.slane %v2568, 4
      %v2571 = vshll.u32 %v2266, 16
      %v2573 = vrot.slane %v2571, 5
      %v2574 = vsel %vm2416, %v2569, %v2573
      %v2575 = vshrl.u32 %v2266, 16
      %v2577 = vrot.slane %v2575, 4
      %v2578 = vor.u32 %v2577, %v2573
      %v2579 = vrot.slane %v2578, 4
      %v2581 = vshll.u32 %v2267, 16
      %v2583 = vrot.slane %v2581, 5
      %v2584 = vsel %vm2416, %v2579, %v2583
      %v2586 = vshrl.u32 %v2268, 16
      %v2588 = vrot.slane %v2586, 4
      %v2589 = vshll.u32 %v2268, 16
      %v2591 = vrot.slane %v2589, 5
      %v2592 = vor.u32 %v2588, %v2591
      %v2593 = vrot.slane %v2592, 4
      %v2595 = vshll.u32 %v2269, 16
      %v2597 = vrot.slane %v2595, 5
      %v2598 = vsel %vm2416, %v2593, %v2597
      %v2599 = vshrl.u32 %v2269, 16
      %v2601 = vrot.slane %v2599, 4
      %v2602 = vor.u32 %v2601, %v2597
      %v2603 = vrot.slane %v2602, 4
      %v2605 = vshll.u32 %v2270, 16
      %v2607 = vrot.slane %v2605, 5
      %v2608 = vsel %vm2416, %v2603, %v2607
      %v2610 = vshrl.u32 %v2271, 16
      %v2612 = vrot.slane %v2610, 4
      %v2613 = vshll.u32 %v2271, 16
      %v2615 = vrot.slane %v2613, 5
      %v2616 = vor.u32 %v2612, %v2615
      %v2617 = vrot.slane %v2616, 4
      %v2619 = vshll.u32 %v2272, 16
      %v2621 = vrot.slane %v2619, 5
      %v2622 = vsel %vm2416, %v2617, %v2621
      %v2623 = vshrl.u32 %v2272, 16
      %v2625 = vrot.slane %v2623, 4
      %v2626 = vor.u32 %v2625, %v2621
      %v2627 = vrot.slane %v2626, 4
      %v2629 = vshll.u32 %v2273, 16
      %v2631 = vrot.slane %v2629, 5
      %v2632 = vsel %vm2416, %v2627, %v2631
      %v2634 = vshrl.u32 %v2274, 16
      %v2636 = vrot.slane %v2634, 4
      %v2637 = vshll.u32 %v2274, 16
      %v2639 = vrot.slane %v2637, 5
      %v2640 = vor.u32 %v2636, %v2639
      %v2641 = vrot.slane %v2640, 4
      %v2643 = vshll.u32 %v2275, 16
      %v2645 = vrot.slane %v2643, 5
      %v2646 = vsel %vm2416, %v2641, %v2645
      %v2647 = vshrl.u32 %v2275, 16
      %v2649 = vrot.slane %v2647, 4
      %v2650 = vor.u32 %v2649, %v2645
      %v2651 = vrot.slane %v2650, 4
      %v2653 = vshll.u32 %v2276, 16
      %v2655 = vrot.slane %v2653, 5
      %v2656 = vsel %vm2416, %v2651, %v2655
      %v2658 = vshrl.u32 %v2277, 16
      %v2660 = vrot.slane %v2658, 4
      %v2661 = vshll.u32 %v2277, 16
      %v2663 = vrot.slane %v2661, 5
      %v2664 = vor.u32 %v2660, %v2663
      %v2665 = vrot.slane %v2664, 4
      %v2667 = vshll.u32 %v2278, 16
      %v2669 = vrot.slane %v2667, 5
      %v2670 = vsel %vm2416, %v2665, %v2669
      %v2671 = vshrl.u32 %v2278, 16
      %v2673 = vrot.slane %v2671, 4
      %v2674 = vor.u32 %v2673, %v2669
      %v2675 = vrot.slane %v2674, 4
      %v2677 = vshll.u32 %v2279, 16
      %v2679 = vrot.slane %v2677, 5
      %v2680 = vsel %vm2416, %v2675, %v2679
      %v2682 = vshrl.u32 %v2280, 16
      %v2684 = vrot.slane %v2682, 4
      %v2685 = vshll.u32 %v2280, 16
      %v2687 = vrot.slane %v2685, 5
      %v2688 = vor.u32 %v2684, %v2687
      %v2689 = vrot.slane %v2688, 4
      %v2691 = vshll.u32 %v2281, 16
      %v2693 = vrot.slane %v2691, 5
      %v2694 = vsel %vm2416, %v2689, %v2693
      %v2695 = vshrl.u32 %v2281, 16
      %v2697 = vrot.slane %v2695, 4
      %v2698 = vor.u32 %v2697, %v2693
      %v2699 = vrot.slane %v2698, 4
      %v2701 = vshll.u32 %v2282, 16
      %v2703 = vrot.slane %v2701, 5
      %v2704 = vsel %vm2416, %v2699, %v2703
      %v2706 = vshrl.u32 %v2283, 16
      %v2708 = vrot.slane %v2706, 4
      %v2709 = vshll.u32 %v2283, 16
      %v2711 = vrot.slane %v2709, 5
      %v2712 = vor.u32 %v2708, %v2711
      %v2713 = vrot.slane %v2712, 4
      %v2715 = vshll.u32 %v2284, 16
      %v2717 = vrot.slane %v2715, 5
      %v2718 = vsel %vm2416, %v2713, %v2717
      %v2719 = vshrl.u32 %v2284, 16
      %v2721 = vrot.slane %v2719, 4
      %v2722 = vor.u32 %v2721, %v2717
      %v2723 = vrot.slane %v2722, 4
      %v2725 = vshll.u32 %v2285, 16
      %v2727 = vrot.slane %v2725, 5
      %v2728 = vsel %vm2416, %v2723, %v2727
      %v2730 = vshrl.u32 %v2286, 16
      %v2732 = vrot.slane %v2730, 4
      %v2733 = vshll.u32 %v2286, 16
      %v2735 = vrot.slane %v2733, 5
      %v2736 = vor.u32 %v2732, %v2735
      %v2737 = vrot.slane %v2736, 4
      %v2739 = vshll.u32 %v2287, 16
      %v2741 = vrot.slane %v2739, 5
      %v2742 = vsel %vm2416, %v2737, %v2741
      %v2743 = vshrl.u32 %v2287, 16
      %v2745 = vrot.slane %v2743, 4
      %v2746 = vor.u32 %v2745, %v2741
      %v2747 = vrot.slane %v2746, 4
      %v2749 = vshll.u32 %v2288, 16
      %v2751 = vrot.slane %v2749, 5
      %v2752 = vsel %vm2416, %v2747, %v2751
      %v2754 = vshrl.u32 %v2289, 16
      %v2756 = vrot.slane %v2754, 4
      %v2757 = vshll.u32 %v2289, 16
      %v2759 = vrot.slane %v2757, 5
      %v2760 = vor.u32 %v2756, %v2759
      %v2761 = vrot.slane %v2760, 4
      %v2763 = vshll.u32 %v2290, 16
      %v2765 = vrot.slane %v2763, 5
      %v2766 = vsel %vm2416, %v2761, %v2765
      %v2767 = vshrl.u32 %v2290, 16
      %v2769 = vrot.slane %v2767, 4
      %v2770 = vor.u32 %v2769, %v2765
      %v2771 = vrot.slane %v2770, 4
      %v2773 = vshll.u32 %v2291, 16
      %v2775 = vrot.slane %v2773, 5
      %v2776 = vsel %vm2416, %v2771, %v2775
      %v2778 = vshrl.u32 %v2292, 16
      %v2780 = vrot.slane %v2778, 4
      %v2781 = vshll.u32 %v2292, 16
      %v2783 = vrot.slane %v2781, 5
      %v2784 = vor.u32 %v2780, %v2783
      %v2785 = vrot.slane %v2784, 4
      %v2787 = vshll.u32 %v2293, 16
      %v2789 = vrot.slane %v2787, 5
      %v2790 = vsel %vm2416, %v2785, %v2789
      %v2791 = vshrl.u32 %v2293, 16
      %v2793 = vrot.slane %v2791, 4
      %v2794 = vor.u32 %v2793, %v2789
      %v2795 = vrot.slane %v2794, 4
      %v2797 = vshll.u32 %v2294, 16
      %v2799 = vrot.slane %v2797, 5
      %v2800 = vsel %vm2416, %v2795, %v2799
      %v2801 = vunpack.c.l.b16 %v2430
      %v2802 = vunpack.c.l.b16 %v2440
      %v2803 = vunpack.c.l.b16 %v2454
      %v2804 = vunpack.c.l.b16 %v2464
      %v2805 = vunpack.c.l.b16 %v2478
      %v2806 = vunpack.c.l.b16 %v2488
      %v2807 = vunpack.c.l.b16 %v2502
      %v2808 = vunpack.c.l.b16 %v2512
      %v2809 = vunpack.c.l.b16 %v2526
      %v2810 = vunpack.c.l.b16 %v2536
      %v2811 = vunpack.c.l.b16 %v2550
      %v2812 = vunpack.c.l.b16 %v2560
      %v2813 = vunpack.c.l.b16 %v2574
      %v2814 = vunpack.c.l.b16 %v2584
      %v2815 = vunpack.c.l.b16 %v2598
      %v2816 = vunpack.c.l.b16 %v2608
      %v2817 = vunpack.c.l.b16 %v2622
      %v2818 = vunpack.c.l.b16 %v2632
      %v2819 = vunpack.c.l.b16 %v2646
      %v2820 = vunpack.c.l.b16 %v2656
      %v2821 = vunpack.c.l.b16 %v2670
      %v2822 = vunpack.c.l.b16 %v2680
      %v2823 = vunpack.c.l.b16 %v2694
      %v2824 = vunpack.c.l.b16 %v2704
      %v2825 = vunpack.c.l.b16 %v2718
      %v2826 = vunpack.c.l.b16 %v2728
      %v2827 = vunpack.c.l.b16 %v2742
      %v2828 = vunpack.c.l.b16 %v2752
      %v2829 = vunpack.c.l.b16 %v2766
      %v2830 = vunpack.c.l.b16 %v2776
      %v2831 = vunpack.c.l.b16 %v2790
      %v2832 = vunpack.c.l.b16 %v2800
      %v2833 = vpack.c.b16 %v2802, %v2801
      %v2834 = vpack.c.b16 %v2804, %v2803
      %v2835 = vpack.c.b16 %v2806, %v2805
      %v2836 = vpack.c.b16 %v2808, %v2807
      %v2837 = vpack.c.b16 %v2810, %v2809
      %v2838 = vpack.c.b16 %v2812, %v2811
      %v2839 = vpack.c.b16 %v2814, %v2813
      %v2840 = vpack.c.b16 %v2816, %v2815
      %v2841 = vpack.c.b16 %v2818, %v2817
      %v2842 = vpack.c.b16 %v2820, %v2819
      %v2843 = vpack.c.b16 %v2822, %v2821
      %v2844 = vpack.c.b16 %v2824, %v2823
      %v2845 = vpack.c.b16 %v2826, %v2825
      %v2846 = vpack.c.b16 %v2828, %v2827
      %v2847 = vpack.c.b16 %v2830, %v2829
      %v2848 = vpack.c.b16 %v2832, %v2831
      %2849 = vrot.lane.b32.xlu0 %v2833, 16
      %v2850 = vpop.permute.xlu0 %2849
      %2851 = vrot.lane.b32.xlu0 %v2834, 16
      %v2852 = vpop.permute.xlu0 %2851
      %2853 = vrot.lane.b32.xlu0 %v2835, 16
      %v2854 = vpop.permute.xlu0 %2853
      %2855 = vrot.lane.b32.xlu0 %v2836, 16
      %v2856 = vpop.permute.xlu0 %2855
      %2857 = vrot.lane.b32.xlu0 %v2837, 16
      %v2858 = vpop.permute.xlu0 %2857
      %2859 = vrot.lane.b32.xlu0 %v2838, 16
      %v2860 = vpop.permute.xlu0 %2859
      %2861 = vrot.lane.b32.xlu0 %v2839, 16
      %v2862 = vpop.permute.xlu0 %2861
      %2863 = vrot.lane.b32.xlu0 %v2840, 16
      %v2864 = vpop.permute.xlu0 %2863
      %2865 = vrot.lane.b32.xlu0 %v2841, 16
      %v2866 = vpop.permute.xlu0 %2865
      %2867 = vrot.lane.b32.xlu0 %v2842, 16
      %v2868 = vpop.permute.xlu0 %2867
      %2869 = vrot.lane.b32.xlu0 %v2843, 16
      %v2870 = vpop.permute.xlu0 %2869
      %2871 = vrot.lane.b32.xlu0 %v2844, 16
      %v2872 = vpop.permute.xlu0 %2871
      %2873 = vrot.lane.b32.xlu0 %v2845, 16
      %v2874 = vpop.permute.xlu0 %2873
      %2875 = vrot.lane.b32.xlu0 %v2846, 16
      %v2876 = vpop.permute.xlu0 %2875
      %2877 = vrot.lane.b32.xlu0 %v2847, 16
      %v2878 = vpop.permute.xlu0 %2877
      %2879 = vrot.lane.b32.xlu0 %v2848, 16
      %v2880 = vpop.permute.xlu0 %2879
      %vm2897 = vcmask 261248
      %2898 = vst.msk [vmem:[#allocation4] sm:$0xff] %vm2897, %v2850
      %2899 = vst.msk [vmem:[#allocation4 + $0x18] sm:$0xff] %vm2897, %v2852
      %2900 = vst.msk [vmem:[#allocation4 + $0x30] sm:$0xff] %vm2897, %v2854
      %2901 = vst.msk [vmem:[#allocation4 + $0x48] sm:$0xff] %vm2897, %v2856
      %2902 = vst.msk [vmem:[#allocation4 + $0x60] sm:$0xff] %vm2897, %v2858
      %2903 = vst.msk [vmem:[#allocation4 + $0x78] sm:$0xff] %vm2897, %v2860
      %2904 = vst.msk [vmem:[#allocation4 + $0x90] sm:$0xff] %vm2897, %v2862
      %2905 = vst.msk [vmem:[#allocation4 + $0xa8] sm:$0xff] %vm2897, %v2864
      %2906 = vst.msk [vmem:[#allocation4 + $0xc0] sm:$0xff] %vm2897, %v2866
      %2907 = vst.msk [vmem:[#allocation4 + $0xd8] sm:$0xff] %vm2897, %v2868
      %2908 = vst.msk [vmem:[#allocation4 + $0xf0] sm:$0xff] %vm2897, %v2870
      %2909 = vst.msk [vmem:[#allocation4 + $0x108] sm:$0xff] %vm2897, %v2872
      %2910 = vst.msk [vmem:[#allocation4 + $0x120] sm:$0xff] %vm2897, %v2874
      %2911 = vst.msk [vmem:[#allocation4 + $0x138] sm:$0xff] %vm2897, %v2876
      %2912 = vst.msk [vmem:[#allocation4 + $0x150] sm:$0xff] %vm2897, %v2878
      %2913 = vst.msk [vmem:[#allocation4 + $0x168] sm:$0xff] %vm2897, %v2880
      %vm2930 = vcmask 1042432
      %vm2931 = vcmask 1046532
      %vm2932 = vmor %vm2930, %vm2931
      %v2933 = vrot.slane %v2247, 5
      %v2934 = vrot.slane %v2933, 4
      %v2935 = vrot.slane %v2248, 5
      %v2936 = vsel %vm2932, %v2934, %v2935
      %v2937 = vrot.slane %v2935, 4
      %v2938 = vrot.slane %v2249, 5
      %v2939 = vsel %vm2932, %v2937, %v2938
      %v2940 = vrot.slane %v2250, 5
      %v2941 = vrot.slane %v2940, 4
      %v2942 = vrot.slane %v2251, 5
      %v2943 = vsel %vm2932, %v2941, %v2942
      %v2944 = vrot.slane %v2942, 4
      %v2945 = vrot.slane %v2252, 5
      %v2946 = vsel %vm2932, %v2944, %v2945
      %v2947 = vrot.slane %v2253, 5
      %v2948 = vrot.slane %v2947, 4
      %v2949 = vrot.slane %v2254, 5
      %v2950 = vsel %vm2932, %v2948, %v2949
      %v2951 = vrot.slane %v2949, 4
      %v2952 = vrot.slane %v2255, 5
      %v2953 = vsel %vm2932, %v2951, %v2952
      %v2954 = vrot.slane %v2256, 5
      %v2955 = vrot.slane %v2954, 4
      %v2956 = vrot.slane %v2257, 5
      %v2957 = vsel %vm2932, %v2955, %v2956
      %v2958 = vrot.slane %v2956, 4
      %v2959 = vrot.slane %v2258, 5
      %v2960 = vsel %vm2932, %v2958, %v2959
      %v2961 = vrot.slane %v2259, 5
      %v2962 = vrot.slane %v2961, 4
      %v2963 = vrot.slane %v2260, 5
      %v2964 = vsel %vm2932, %v2962, %v2963
      %v2965 = vrot.slane %v2963, 4
      %v2966 = vrot.slane %v2261, 5
      %v2967 = vsel %vm2932, %v2965, %v2966
      %v2968 = vrot.slane %v2262, 5
      %v2969 = vrot.slane %v2968, 4
      %v2970 = vrot.slane %v2263, 5
      %v2971 = vsel %vm2932, %v2969, %v2970
      %v2972 = vrot.slane %v2970, 4
      %v2973 = vrot.slane %v2264, 5
      %v2974 = vsel %vm2932, %v2972, %v2973
      %v2975 = vrot.slane %v2265, 5
      %v2976 = vrot.slane %v2975, 4
      %v2977 = vrot.slane %v2266, 5
      %v2978 = vsel %vm2932, %v2976, %v2977
      %v2979 = vrot.slane %v2977, 4
      %v2980 = vrot.slane %v2267, 5
      %v2981 = vsel %vm2932, %v2979, %v2980
      %v2982 = vrot.slane %v2268, 5
      %v2983 = vrot.slane %v2982, 4
      %v2984 = vrot.slane %v2269, 5
      %v2985 = vsel %vm2932, %v2983, %v2984
      %v2986 = vrot.slane %v2984, 4
      %v2987 = vrot.slane %v2270, 5
      %v2988 = vsel %vm2932, %v2986, %v2987
      %v2989 = vrot.slane %v2271, 5
      %v2990 = vrot.slane %v2989, 4
      %v2991 = vrot.slane %v2272, 5
      %v2992 = vsel %vm2932, %v2990, %v2991
      %v2993 = vrot.slane %v2991, 4
      %v2994 = vrot.slane %v2273, 5
      %v2995 = vsel %vm2932, %v2993, %v2994
      %v2996 = vrot.slane %v2274, 5
      %v2997 = vrot.slane %v2996, 4
      %v2998 = vrot.slane %v2275, 5
      %v2999 = vsel %vm2932, %v2997, %v2998
      %v3000 = vrot.slane %v2998, 4
      %v3001 = vrot.slane %v2276, 5
      %v3002 = vsel %vm2932, %v3000, %v3001
      %v3003 = vrot.slane %v2277, 5
      %v3004 = vrot.slane %v3003, 4
      %v3005 = vrot.slane %v2278, 5
      %v3006 = vsel %vm2932, %v3004, %v3005
      %v3007 = vrot.slane %v3005, 4
      %v3008 = vrot.slane %v2279, 5
      %v3009 = vsel %vm2932, %v3007, %v3008
      %v3010 = vrot.slane %v2280, 5
      %v3011 = vrot.slane %v3010, 4
      %v3012 = vrot.slane %v2281, 5
      %v3013 = vsel %vm2932, %v3011, %v3012
      %v3014 = vrot.slane %v3012, 4
      %v3015 = vrot.slane %v2282, 5
      %v3016 = vsel %vm2932, %v3014, %v3015
      %v3017 = vrot.slane %v2283, 5
      %v3018 = vrot.slane %v3017, 4
      %v3019 = vrot.slane %v2284, 5
      %v3020 = vsel %vm2932, %v3018, %v3019
      %v3021 = vrot.slane %v3019, 4
      %v3022 = vrot.slane %v2285, 5
      %v3023 = vsel %vm2932, %v3021, %v3022
      %v3024 = vrot.slane %v2286, 5
      %v3025 = vrot.slane %v3024, 4
      %v3026 = vrot.slane %v2287, 5
      %v3027 = vsel %vm2932, %v3025, %v3026
      %v3028 = vrot.slane %v3026, 4
      %v3029 = vrot.slane %v2288, 5
      %v3030 = vsel %vm2932, %v3028, %v3029
      %v3031 = vrot.slane %v2289, 5
      %v3032 = vrot.slane %v3031, 4
      %v3033 = vrot.slane %v2290, 5
      %v3034 = vsel %vm2932, %v3032, %v3033
      %v3035 = vrot.slane %v3033, 4
      %v3036 = vrot.slane %v2291, 5
      %v3037 = vsel %vm2932, %v3035, %v3036
      %v3038 = vrot.slane %v2292, 5
      %v3039 = vrot.slane %v3038, 4
      %v3040 = vrot.slane %v2293, 5
      %v3041 = vsel %vm2932, %v3039, %v3040
      %v3042 = vrot.slane %v3040, 4
      %v3043 = vrot.slane %v2294, 5
      %v3044 = vsel %vm2932, %v3042, %v3043
      %v3045 = vunpack.c.l.b16 %v2936
      %v3046 = vunpack.c.l.b16 %v2939
      %v3047 = vunpack.c.l.b16 %v2943
      %v3048 = vunpack.c.l.b16 %v2946
      %v3049 = vunpack.c.l.b16 %v2950
      %v3050 = vunpack.c.l.b16 %v2953
      %v3051 = vunpack.c.l.b16 %v2957
      %v3052 = vunpack.c.l.b16 %v2960
      %v3053 = vunpack.c.l.b16 %v2964
      %v3054 = vunpack.c.l.b16 %v2967
      %v3055 = vunpack.c.l.b16 %v2971
      %v3056 = vunpack.c.l.b16 %v2974
      %v3057 = vunpack.c.l.b16 %v2978
      %v3058 = vunpack.c.l.b16 %v2981
      %v3059 = vunpack.c.l.b16 %v2985
      %v3060 = vunpack.c.l.b16 %v2988
      %v3061 = vunpack.c.l.b16 %v2992
      %v3062 = vunpack.c.l.b16 %v2995
      %v3063 = vunpack.c.l.b16 %v2999
      %v3064 = vunpack.c.l.b16 %v3002
      %v3065 = vunpack.c.l.b16 %v3006
      %v3066 = vunpack.c.l.b16 %v3009
      %v3067 = vunpack.c.l.b16 %v3013
      %v3068 = vunpack.c.l.b16 %v3016
      %v3069 = vunpack.c.l.b16 %v3020
      %v3070 = vunpack.c.l.b16 %v3023
      %v3071 = vunpack.c.l.b16 %v3027
      %v3072 = vunpack.c.l.b16 %v3030
      %v3073 = vunpack.c.l.b16 %v3034
      %v3074 = vunpack.c.l.b16 %v3037
      %v3075 = vunpack.c.l.b16 %v3041
      %v3076 = vunpack.c.l.b16 %v3044
      %v3077 = vpack.c.b16 %v3046, %v3045
      %v3078 = vpack.c.b16 %v3048, %v3047
      %v3079 = vpack.c.b16 %v3050, %v3049
      %v3080 = vpack.c.b16 %v3052, %v3051
      %v3081 = vpack.c.b16 %v3054, %v3053
      %v3082 = vpack.c.b16 %v3056, %v3055
      %v3083 = vpack.c.b16 %v3058, %v3057
      %v3084 = vpack.c.b16 %v3060, %v3059
      %v3085 = vpack.c.b16 %v3062, %v3061
      %v3086 = vpack.c.b16 %v3064, %v3063
      %v3087 = vpack.c.b16 %v3066, %v3065
      %v3088 = vpack.c.b16 %v3068, %v3067
      %v3089 = vpack.c.b16 %v3070, %v3069
      %v3090 = vpack.c.b16 %v3072, %v3071
      %v3091 = vpack.c.b16 %v3074, %v3073
      %v3092 = vpack.c.b16 %v3076, %v3075
      %3093 = vrot.lane.b32.xlu0 %v3077, 32
      %v3094 = vpop.permute.xlu0 %3093
      %3095 = vrot.lane.b32.xlu0 %v3078, 32
      %v3096 = vpop.permute.xlu0 %3095
      %3097 = vrot.lane.b32.xlu0 %v3079, 32
      %v3098 = vpop.permute.xlu0 %3097
      %3099 = vrot.lane.b32.xlu0 %v3080, 32
      %v3100 = vpop.permute.xlu0 %3099
      %3101 = vrot.lane.b32.xlu0 %v3081, 32
      %v3102 = vpop.permute.xlu0 %3101
      %3103 = vrot.lane.b32.xlu0 %v3082, 32
      %v3104 = vpop.permute.xlu0 %3103
      %3105 = vrot.lane.b32.xlu0 %v3083, 32
      %v3106 = vpop.permute.xlu0 %3105
      %3107 = vrot.lane.b32.xlu0 %v3084, 32
      %v3108 = vpop.permute.xlu0 %3107
      %3109 = vrot.lane.b32.xlu0 %v3085, 32
      %v3110 = vpop.permute.xlu0 %3109
      %3111 = vrot.lane.b32.xlu0 %v3086, 32
      %v3112 = vpop.permute.xlu0 %3111
      %3113 = vrot.lane.b32.xlu0 %v3087, 32
      %v3114 = vpop.permute.xlu0 %3113
      %3115 = vrot.lane.b32.xlu0 %v3088, 32
      %v3116 = vpop.permute.xlu0 %3115
      %3117 = vrot.lane.b32.xlu0 %v3089, 32
      %v3118 = vpop.permute.xlu0 %3117
      %3119 = vrot.lane.b32.xlu0 %v3090, 32
      %v3120 = vpop.permute.xlu0 %3119
      %3121 = vrot.lane.b32.xlu0 %v3091, 32
      %v3122 = vpop.permute.xlu0 %3121
      %3123 = vrot.lane.b32.xlu0 %v3092, 32
      %v3124 = vpop.permute.xlu0 %3123
      %vm3141 = vcmask 392448
      %3142 = vst.msk [vmem:[#allocation4] sm:$0xff] %vm3141, %v3094
      %3143 = vst.msk [vmem:[#allocation4 + $0x18] sm:$0xff] %vm3141, %v3096
      %3144 = vst.msk [vmem:[#allocation4 + $0x30] sm:$0xff] %vm3141, %v3098
      %3145 = vst.msk [vmem:[#allocation4 + $0x48] sm:$0xff] %vm3141, %v3100
      %3146 = vst.msk [vmem:[#allocation4 + $0x60] sm:$0xff] %vm3141, %v3102
      %3147 = vst.msk [vmem:[#allocation4 + $0x78] sm:$0xff] %vm3141, %v3104
      %3148 = vst.msk [vmem:[#allocation4 + $0x90] sm:$0xff] %vm3141, %v3106
      %3149 = vst.msk [vmem:[#allocation4 + $0xa8] sm:$0xff] %vm3141, %v3108
      %3150 = vst.msk [vmem:[#allocation4 + $0xc0] sm:$0xff] %vm3141, %v3110
      %3151 = vst.msk [vmem:[#allocation4 + $0xd8] sm:$0xff] %vm3141, %v3112
      %3152 = vst.msk [vmem:[#allocation4 + $0xf0] sm:$0xff] %vm3141, %v3114
      %3153 = vst.msk [vmem:[#allocation4 + $0x108] sm:$0xff] %vm3141, %v3116
      %3154 = vst.msk [vmem:[#allocation4 + $0x120] sm:$0xff] %vm3141, %v3118
      %3155 = vst.msk [vmem:[#allocation4 + $0x138] sm:$0xff] %vm3141, %v3120
      %3156 = vst.msk [vmem:[#allocation4 + $0x150] sm:$0xff] %vm3141, %v3122
      %3157 = vst.msk [vmem:[#allocation4 + $0x168] sm:$0xff] %vm3141, %v3124
      %v3160 = vunpack.c.l.b16 %v2295
      %v3161 = vunpack.c.l.b16 %v2296
      %v3162 = vpack.c.b16 %v3161, %v3160
      %3163 = vrot.lane.b32.xlu0 %v2366, 48
      %v3164 = vpop.permute.xlu0 %3163
      %3165 = vrot.lane.b32.xlu0 %v2367, 48
      %v3166 = vpop.permute.xlu0 %3165
      %3167 = vrot.lane.b32.xlu0 %v2368, 48
      %v3168 = vpop.permute.xlu0 %3167
      %3169 = vrot.lane.b32.xlu0 %v2369, 48
      %v3170 = vpop.permute.xlu0 %3169
      %3171 = vrot.lane.b32.xlu0 %v2370, 48
      %v3172 = vpop.permute.xlu0 %3171
      %3173 = vrot.lane.b32.xlu0 %v2371, 48
      %v3174 = vpop.permute.xlu0 %3173
      %3175 = vrot.lane.b32.xlu0 %v2372, 48
      %v3176 = vpop.permute.xlu0 %3175
      %3177 = vrot.lane.b32.xlu0 %v2373, 48
      %v3178 = vpop.permute.xlu0 %3177
      %3179 = vrot.lane.b32.xlu0 %v2374, 48
      %v3180 = vpop.permute.xlu0 %3179
      %3181 = vrot.lane.b32.xlu0 %v2375, 48
      %v3182 = vpop.permute.xlu0 %3181
      %3183 = vrot.lane.b32.xlu0 %v2376, 48
      %v3184 = vpop.permute.xlu0 %3183
      %3185 = vrot.lane.b32.xlu0 %v2377, 48
      %v3186 = vpop.permute.xlu0 %3185
      %3187 = vrot.lane.b32.xlu0 %v2378, 48
      %v3188 = vpop.permute.xlu0 %3187
      %3189 = vrot.lane.b32.xlu0 %v2379, 48
      %v3190 = vpop.permute.xlu0 %3189
      %3191 = vrot.lane.b32.xlu0 %v2380, 48
      %v3192 = vpop.permute.xlu0 %3191
      %3193 = vrot.lane.b32.xlu0 %v3162, 48
      %v3194 = vpop.permute.xlu0 %3193
      %vm3211 = vcmask 523648
      %3212 = vst.msk [vmem:[#allocation4] sm:$0xff] %vm3211, %v3164
      %3213 = vst.msk [vmem:[#allocation4 + $0x18] sm:$0xff] %vm3211, %v3166
      %3214 = vst.msk [vmem:[#allocation4 + $0x30] sm:$0xff] %vm3211, %v3168
      %3215 = vst.msk [vmem:[#allocation4 + $0x48] sm:$0xff] %vm3211, %v3170
      %3216 = vst.msk [vmem:[#allocation4 + $0x60] sm:$0xff] %vm3211, %v3172
      %3217 = vst.msk [vmem:[#allocation4 + $0x78] sm:$0xff] %vm3211, %v3174
      %3218 = vst.msk [vmem:[#allocation4 + $0x90] sm:$0xff] %vm3211, %v3176
      %3219 = vst.msk [vmem:[#allocation4 + $0xa8] sm:$0xff] %vm3211, %v3178
      %3220 = vst.msk [vmem:[#allocation4 + $0xc0] sm:$0xff] %vm3211, %v3180
      %3221 = vst.msk [vmem:[#allocation4 + $0xd8] sm:$0xff] %vm3211, %v3182
      %3222 = vst.msk [vmem:[#allocation4 + $0xf0] sm:$0xff] %vm3211, %v3184
      %3223 = vst.msk [vmem:[#allocation4 + $0x108] sm:$0xff] %vm3211, %v3186
      %3224 = vst.msk [vmem:[#allocation4 + $0x120] sm:$0xff] %vm3211, %v3188
      %3225 = vst.msk [vmem:[#allocation4 + $0x138] sm:$0xff] %vm3211, %v3190
      %3226 = vst.msk [vmem:[#allocation4 + $0x150] sm:$0xff] %vm3211, %v3192
      %3227 = vst.msk [vmem:[#allocation4 + $0x168] sm:$0xff] %vm3211, %v3194
      %v3229 = vshrl.u32 %v2295, 16
      %v3231 = vrot.slane %v3229, 4
      %v3232 = vshll.u32 %v2295, 16
      %v3234 = vrot.slane %v3232, 5
      %v3235 = vor.u32 %v3231, %v3234
      %v3236 = vrot.slane %v3235, 4
      %v3238 = vshll.u32 %v2296, 16
      %v3240 = vrot.slane %v3238, 5
      %v3241 = vsel %vm2416, %v3236, %v3240
      %v3242 = vshrl.u32 %v2296, 16
      %v3244 = vrot.slane %v3242, 4
      %v3245 = vor.u32 %v3244, %v3240
      %v3246 = vrot.slane %v3245, 4
      %v3248 = vshll.u32 %v2297, 16
      %v3250 = vrot.slane %v3248, 5
      %v3251 = vsel %vm2416, %v3246, %v3250
      %v3252 = vunpack.c.l.b16 %v3241
      %v3253 = vunpack.c.l.b16 %v3251
      %v3254 = vpack.c.b16 %v3253, %v3252
      %3255 = vrot.lane.b32.xlu0 %v2834, 64
      %v3256 = vpop.permute.xlu0 %3255
      %3257 = vrot.lane.b32.xlu0 %v2835, 64
      %v3258 = vpop.permute.xlu0 %3257
      %3259 = vrot.lane.b32.xlu0 %v2836, 64
      %v3260 = vpop.permute.xlu0 %3259
      %3261 = vrot.lane.b32.xlu0 %v2837, 64
      %v3262 = vpop.permute.xlu0 %3261
      %3263 = vrot.lane.b32.xlu0 %v2838, 64
      %v3264 = vpop.permute.xlu0 %3263
      %3265 = vrot.lane.b32.xlu0 %v2839, 64
      %v3266 = vpop.permute.xlu0 %3265
      %3267 = vrot.lane.b32.xlu0 %v2840, 64
      %v3268 = vpop.permute.xlu0 %3267
      %3269 = vrot.lane.b32.xlu0 %v2841, 64
      %v3270 = vpop.permute.xlu0 %3269
      %3271 = vrot.lane.b32.xlu0 %v2842, 64
      %v3272 = vpop.permute.xlu0 %3271
      %3273 = vrot.lane.b32.xlu0 %v2843, 64
      %v3274 = vpop.permute.xlu0 %3273
      %3275 = vrot.lane.b32.xlu0 %v2844, 64
      %v3276 = vpop.permute.xlu0 %3275
      %3277 = vrot.lane.b32.xlu0 %v2845, 64
      %v3278 = vpop.permute.xlu0 %3277
      %3279 = vrot.lane.b32.xlu0 %v2846, 64
      %v3280 = vpop.permute.xlu0 %3279
      %3281 = vrot.lane.b32.xlu0 %v2847, 64
      %v3282 = vpop.permute.xlu0 %3281
      %3283 = vrot.lane.b32.xlu0 %v2848, 64
      %v3284 = vpop.permute.xlu0 %3283
      %3285 = vrot.lane.b32.xlu0 %v3254, 64
      %v3286 = vpop.permute.xlu0 %3285
      %vm3303 = vcmask 654848
      %3304 = vst.msk [vmem:[#allocation4] sm:$0xff] %vm3303, %v3256
      %3305 = vst.msk [vmem:[#allocation4 + $0x18] sm:$0xff] %vm3303, %v3258
      %3306 = vst.msk [vmem:[#allocation4 + $0x30] sm:$0xff] %vm3303, %v3260
      %3307 = vst.msk [vmem:[#allocation4 + $0x48] sm:$0xff] %vm3303, %v3262
      %3308 = vst.msk [vmem:[#allocation4 + $0x60] sm:$0xff] %vm3303, %v3264
      %3309 = vst.msk [vmem:[#allocation4 + $0x78] sm:$0xff] %vm3303, %v3266
      %3310 = vst.msk [vmem:[#allocation4 + $0x90] sm:$0xff] %vm3303, %v3268
      %3311 = vst.msk [vmem:[#allocation4 + $0xa8] sm:$0xff] %vm3303, %v3270
      %3312 = vst.msk [vmem:[#allocation4 + $0xc0] sm:$0xff] %vm3303, %v3272
      %3313 = vst.msk [vmem:[#allocation4 + $0xd8] sm:$0xff] %vm3303, %v3274
      %3314 = vst.msk [vmem:[#allocation4 + $0xf0] sm:$0xff] %vm3303, %v3276
      %3315 = vst.msk [vmem:[#allocation4 + $0x108] sm:$0xff] %vm3303, %v3278
      %3316 = vst.msk [vmem:[#allocation4 + $0x120] sm:$0xff] %vm3303, %v3280
      %3317 = vst.msk [vmem:[#allocation4 + $0x138] sm:$0xff] %vm3303, %v3282
      %3318 = vst.msk [vmem:[#allocation4 + $0x150] sm:$0xff] %vm3303, %v3284
      %3319 = vst.msk [vmem:[#allocation4 + $0x168] sm:$0xff] %vm3303, %v3286
      %v3321 = vrot.slane %v2295, 5
      %v3322 = vrot.slane %v3321, 4
      %v3323 = vrot.slane %v2296, 5
      %v3324 = vsel %vm2932, %v3322, %v3323
      %v3325 = vrot.slane %v3323, 4
      %v3326 = vrot.slane %v2297, 5
      %v3327 = vsel %vm2932, %v3325, %v3326
      %v3328 = vunpack.c.l.b16 %v3324
      %v3329 = vunpack.c.l.b16 %v3327
      %v3330 = vpack.c.b16 %v3329, %v3328
      %3331 = vrot.lane.b32.xlu0 %v3078, 80
      %v3332 = vpop.permute.xlu0 %3331
      %3333 = vrot.lane.b32.xlu0 %v3079, 80
      %v3334 = vpop.permute.xlu0 %3333
      %3335 = vrot.lane.b32.xlu0 %v3080, 80
      %v3336 = vpop.permute.xlu0 %3335
      %3337 = vrot.lane.b32.xlu0 %v3081, 80
      %v3338 = vpop.permute.xlu0 %3337
      %3339 = vrot.lane.b32.xlu0 %v3082, 80
      %v3340 = vpop.permute.xlu0 %3339
      %3341 = vrot.lane.b32.xlu0 %v3083, 80
      %v3342 = vpop.permute.xlu0 %3341
      %3343 = vrot.lane.b32.xlu0 %v3084, 80
      %v3344 = vpop.permute.xlu0 %3343
      %3345 = vrot.lane.b32.xlu0 %v3085, 80
      %v3346 = vpop.permute.xlu0 %3345
      %3347 = vrot.lane.b32.xlu0 %v3086, 80
      %v3348 = vpop.permute.xlu0 %3347
      %3349 = vrot.lane.b32.xlu0 %v3087, 80
      %v3350 = vpop.permute.xlu0 %3349
      %3351 = vrot.lane.b32.xlu0 %v3088, 80
      %v3352 = vpop.permute.xlu0 %3351
      %3353 = vrot.lane.b32.xlu0 %v3089, 80
      %v3354 = vpop.permute.xlu0 %3353
      %3355 = vrot.lane.b32.xlu0 %v3090, 80
      %v3356 = vpop.permute.xlu0 %3355
      %3357 = vrot.lane.b32.xlu0 %v3091, 80
      %v3358 = vpop.permute.xlu0 %3357
      %3359 = vrot.lane.b32.xlu0 %v3092, 80
      %v3360 = vpop.permute.xlu0 %3359
      %3361 = vrot.lane.b32.xlu0 %v3330, 80
      %v3362 = vpop.permute.xlu0 %3361
      %vm3379 = vcmask 786048
      %3380 = vst.msk [vmem:[#allocation4] sm:$0xff] %vm3379, %v3332
      %3381 = vst.msk [vmem:[#allocation4 + $0x18] sm:$0xff] %vm3379, %v3334
      %3382 = vst.msk [vmem:[#allocation4 + $0x30] sm:$0xff] %vm3379, %v3336
      %3383 = vst.msk [vmem:[#allocation4 + $0x48] sm:$0xff] %vm3379, %v3338
      %3384 = vst.msk [vmem:[#allocation4 + $0x60] sm:$0xff] %vm3379, %v3340
      %3385 = vst.msk [vmem:[#allocation4 + $0x78] sm:$0xff] %vm3379, %v3342
      %3386 = vst.msk [vmem:[#allocation4 + $0x90] sm:$0xff] %vm3379, %v3344
      %3387 = vst.msk [vmem:[#allocation4 + $0xa8] sm:$0xff] %vm3379, %v3346
      %3388 = vst.msk [vmem:[#allocation4 + $0xc0] sm:$0xff] %vm3379, %v3348
      %3389 = vst.msk [vmem:[#allocation4 + $0xd8] sm:$0xff] %vm3379, %v3350
      %3390 = vst.msk [vmem:[#allocation4 + $0xf0] sm:$0xff] %vm3379, %v3352
      %3391 = vst.msk [vmem:[#allocation4 + $0x108] sm:$0xff] %vm3379, %v3354
      %3392 = vst.msk [vmem:[#allocation4 + $0x120] sm:$0xff] %vm3379, %v3356
      %3393 = vst.msk [vmem:[#allocation4 + $0x138] sm:$0xff] %vm3379, %v3358
      %3394 = vst.msk [vmem:[#allocation4 + $0x150] sm:$0xff] %vm3379, %v3360
      %3395 = vst.msk [vmem:[#allocation4 + $0x168] sm:$0xff] %vm3379, %v3362
      %v3398 = vunpack.c.l.b16 %v2298
      %v3399 = vunpack.c.l.b16 %v2299
      %v3400 = vpack.c.b16 %v3399, %v3398
      %3401 = vrot.lane.b32.xlu0 %v2367, 96
      %v3402 = vpop.permute.xlu0 %3401
      %3403 = vrot.lane.b32.xlu0 %v2368, 96
      %v3404 = vpop.permute.xlu0 %3403
      %3405 = vrot.lane.b32.xlu0 %v2369, 96
      %v3406 = vpop.permute.xlu0 %3405
      %3407 = vrot.lane.b32.xlu0 %v2370, 96
      %v3408 = vpop.permute.xlu0 %3407
      %3409 = vrot.lane.b32.xlu0 %v2371, 96
      %v3410 = vpop.permute.xlu0 %3409
      %3411 = vrot.lane.b32.xlu0 %v2372, 96
      %v3412 = vpop.permute.xlu0 %3411
      %3413 = vrot.lane.b32.xlu0 %v2373, 96
      %v3414 = vpop.permute.xlu0 %3413
      %3415 = vrot.lane.b32.xlu0 %v2374, 96
      %v3416 = vpop.permute.xlu0 %3415
      %3417 = vrot.lane.b32.xlu0 %v2375, 96
      %v3418 = vpop.permute.xlu0 %3417
      %3419 = vrot.lane.b32.xlu0 %v2376, 96
      %v3420 = vpop.permute.xlu0 %3419
      %3421 = vrot.lane.b32.xlu0 %v2377, 96
      %v3422 = vpop.permute.xlu0 %3421
      %3423 = vrot.lane.b32.xlu0 %v2378, 96
      %v3424 = vpop.permute.xlu0 %3423
      %3425 = vrot.lane.b32.xlu0 %v2379, 96
      %v3426 = vpop.permute.xlu0 %3425
      %3427 = vrot.lane.b32.xlu0 %v2380, 96
      %v3428 = vpop.permute.xlu0 %3427
      %3429 = vrot.lane.b32.xlu0 %v3162, 96
      %v3430 = vpop.permute.xlu0 %3429
      %3431 = vrot.lane.b32.xlu0 %v3400, 96
      %v3432 = vpop.permute.xlu0 %3431
      %vm3449 = vcmask 917248
      %3450 = vst.msk [vmem:[#allocation4] sm:$0xff] %vm3449, %v3402
      %3451 = vst.msk [vmem:[#allocation4 + $0x18] sm:$0xff] %vm3449, %v3404
      %3452 = vst.msk [vmem:[#allocation4 + $0x30] sm:$0xff] %vm3449, %v3406
      %3453 = vst.msk [vmem:[#allocation4 + $0x48] sm:$0xff] %vm3449, %v3408
      %3454 = vst.msk [vmem:[#allocation4 + $0x60] sm:$0xff] %vm3449, %v3410
      %3455 = vst.msk [vmem:[#allocation4 + $0x78] sm:$0xff] %vm3449, %v3412
      %3456 = vst.msk [vmem:[#allocation4 + $0x90] sm:$0xff] %vm3449, %v3414
      %3457 = vst.msk [vmem:[#allocation4 + $0xa8] sm:$0xff] %vm3449, %v3416
      %3458 = vst.msk [vmem:[#allocation4 + $0xc0] sm:$0xff] %vm3449, %v3418
      %3459 = vst.msk [vmem:[#allocation4 + $0xd8] sm:$0xff] %vm3449, %v3420
      %3460 = vst.msk [vmem:[#allocation4 + $0xf0] sm:$0xff] %vm3449, %v3422
      %3461 = vst.msk [vmem:[#allocation4 + $0x108] sm:$0xff] %vm3449, %v3424
      %3462 = vst.msk [vmem:[#allocation4 + $0x120] sm:$0xff] %vm3449, %v3426
      %3463 = vst.msk [vmem:[#allocation4 + $0x138] sm:$0xff] %vm3449, %v3428
      %3464 = vst.msk [vmem:[#allocation4 + $0x150] sm:$0xff] %vm3449, %v3430
      %3465 = vst.msk [vmem:[#allocation4 + $0x168] sm:$0xff] %vm3449, %v3432
      %v3467 = vshrl.u32 %v2298, 16
      %v3469 = vrot.slane %v3467, 4
      %v3470 = vshll.u32 %v2298, 16
      %v3472 = vrot.slane %v3470, 5
      %v3473 = vor.u32 %v3469, %v3472
      %v3474 = vrot.slane %v3473, 4
      %v3476 = vshll.u32 %v2299, 16
      %v3478 = vrot.slane %v3476, 5
      %v3479 = vsel %vm2416, %v3474, %v3478
      %v3480 = vshrl.u32 %v2299, 16
      %v3482 = vrot.slane %v3480, 4
      %v3483 = vor.u32 %v3482, %v3478
      %v3484 = vrot.slane %v3483, 4
      %v3486 = vshll.u32 %v2300, 16
      %v3488 = vrot.slane %v3486, 5
      %v3489 = vsel %vm2416, %v3484, %v3488
      %v3490 = vunpack.c.l.b16 %v3479
      %v3491 = vunpack.c.l.b16 %v3489
      %v3492 = vpack.c.b16 %v3491, %v3490
      %3493 = vrot.lane.b32.xlu0 %v2835, 112
      %v3494 = vpop.permute.xlu0 %3493
      %3495 = vrot.lane.b32.xlu0 %v2836, 112
      %v3496 = vpop.permute.xlu0 %3495
      %3497 = vrot.lane.b32.xlu0 %v2837, 112
      %v3498 = vpop.permute.xlu0 %3497
      %3499 = vrot.lane.b32.xlu0 %v2838, 112
      %v3500 = vpop.permute.xlu0 %3499
      %3501 = vrot.lane.b32.xlu0 %v2839, 112
      %v3502 = vpop.permute.xlu0 %3501
      %3503 = vrot.lane.b32.xlu0 %v2840, 112
      %v3504 = vpop.permute.xlu0 %3503
      %3505 = vrot.lane.b32.xlu0 %v2841, 112
      %v3506 = vpop.permute.xlu0 %3505
      %3507 = vrot.lane.b32.xlu0 %v2842, 112
      %v3508 = vpop.permute.xlu0 %3507
      %3509 = vrot.lane.b32.xlu0 %v2843, 112
      %v3510 = vpop.permute.xlu0 %3509
      %3511 = vrot.lane.b32.xlu0 %v2844, 112
      %v3512 = vpop.permute.xlu0 %3511
      %3513 = vrot.lane.b32.xlu0 %v2845, 112
      %v3514 = vpop.permute.xlu0 %3513
      %3515 = vrot.lane.b32.xlu0 %v2846, 112
      %v3516 = vpop.permute.xlu0 %3515
      %3517 = vrot.lane.b32.xlu0 %v2847, 112
      %v3518 = vpop.permute.xlu0 %3517
      %3519 = vrot.lane.b32.xlu0 %v2848, 112
      %v3520 = vpop.permute.xlu0 %3519
      %3521 = vrot.lane.b32.xlu0 %v3254, 112
      %v3522 = vpop.permute.xlu0 %3521
      %3523 = vrot.lane.b32.xlu0 %v3492, 112
      %v3524 = vpop.permute.xlu0 %3523
      %vm3541 = vcmask 1048448
      %3542 = vst.msk [vmem:[#allocation4] sm:$0xff] %vm3541, %v3494
      %3543 = vst.msk [vmem:[#allocation4 + $0x18] sm:$0xff] %vm3541, %v3496
      %3544 = vst.msk [vmem:[#allocation4 + $0x30] sm:$0xff] %vm3541, %v3498
      %3545 = vst.msk [vmem:[#allocation4 + $0x48] sm:$0xff] %vm3541, %v3500
      %3546 = vst.msk [vmem:[#allocation4 + $0x60] sm:$0xff] %vm3541, %v3502
      %3547 = vst.msk [vmem:[#allocation4 + $0x78] sm:$0xff] %vm3541, %v3504
      %3548 = vst.msk [vmem:[#allocation4 + $0x90] sm:$0xff] %vm3541, %v3506
      %3549 = vst.msk [vmem:[#allocation4 + $0xa8] sm:$0xff] %vm3541, %v3508
      %3550 = vst.msk [vmem:[#allocation4 + $0xc0] sm:$0xff] %vm3541, %v3510
      %3551 = vst.msk [vmem:[#allocation4 + $0xd8] sm:$0xff] %vm3541, %v3512
      %3552 = vst.msk [vmem:[#allocation4 + $0xf0] sm:$0xff] %vm3541, %v3514
      %3553 = vst.msk [vmem:[#allocation4 + $0x108] sm:$0xff] %vm3541, %v3516
      %3554 = vst.msk [vmem:[#allocation4 + $0x120] sm:$0xff] %vm3541, %v3518
      %3555 = vst.msk [vmem:[#allocation4 + $0x138] sm:$0xff] %vm3541, %v3520
      %3556 = vst.msk [vmem:[#allocation4 + $0x150] sm:$0xff] %vm3541, %v3522
      %3557 = vst.msk [vmem:[#allocation4 + $0x168] sm:$0xff] %vm3541, %v3524
      %v3559 = vrot.slane %v2298, 5
      %v3560 = vrot.slane %v3559, 4
      %v3561 = vrot.slane %v2299, 5
      %v3562 = vsel %vm2932, %v3560, %v3561
      %v3563 = vrot.slane %v3561, 4
      %v3564 = vrot.slane %v2300, 5
      %v3565 = vsel %vm2932, %v3563, %v3564
      %v3566 = vunpack.c.l.b16 %v3562
      %v3567 = vunpack.c.l.b16 %v3565
      %v3568 = vpack.c.b16 %v3567, %v3566
      %3585 = vst.msk [vmem:[#allocation4 + $0x8] sm:$0xff] %vm2397, %v3079
      %3586 = vst.msk [vmem:[#allocation4 + $0x20] sm:$0xff] %vm2397, %v3080
      %3587 = vst.msk [vmem:[#allocation4 + $0x38] sm:$0xff] %vm2397, %v3081
      %3588 = vst.msk [vmem:[#allocation4 + $0x50] sm:$0xff] %vm2397, %v3082
      %3589 = vst.msk [vmem:[#allocation4 + $0x68] sm:$0xff] %vm2397, %v3083
      %3590 = vst.msk [vmem:[#allocation4 + $0x80] sm:$0xff] %vm2397, %v3084
      %3591 = vst.msk [vmem:[#allocation4 + $0x98] sm:$0xff] %vm2397, %v3085
      %3592 = vst.msk [vmem:[#allocation4 + $0xb0] sm:$0xff] %vm2397, %v3086
      %3593 = vst.msk [vmem:[#allocation4 + $0xc8] sm:$0xff] %vm2397, %v3087
      %3594 = vst.msk [vmem:[#allocation4 + $0xe0] sm:$0xff] %vm2397, %v3088
      %3595 = vst.msk [vmem:[#allocation4 + $0xf8] sm:$0xff] %vm2397, %v3089
      %3596 = vst.msk [vmem:[#allocation4 + $0x110] sm:$0xff] %vm2397, %v3090
      %3597 = vst.msk [vmem:[#allocation4 + $0x128] sm:$0xff] %vm2397, %v3091
      %3598 = vst.msk [vmem:[#allocation4 + $0x140] sm:$0xff] %vm2397, %v3092
      %3599 = vst.msk [vmem:[#allocation4 + $0x158] sm:$0xff] %vm2397, %v3330
      %3600 = vst.msk [vmem:[#allocation4 + $0x170] sm:$0xff] %vm2397, %v3568
      %v3601 = vld [vmem:[#allocation4] sm:$0xff]
      %v3602 = vld [vmem:[#allocation4 + $0x8] sm:$0xff]
      %v3603 = vld [vmem:[#allocation4 + $0x18] sm:$0xff]
      %v3604 = vld [vmem:[#allocation4 + $0x20] sm:$0xff]
      %v3605 = vld [vmem:[#allocation4 + $0x30] sm:$0xff]
      %v3606 = vld [vmem:[#allocation4 + $0x38] sm:$0xff]
      %v3607 = vld [vmem:[#allocation4 + $0x48] sm:$0xff]
      %v3608 = vld [vmem:[#allocation4 + $0x50] sm:$0xff]
      %v3609 = vld [vmem:[#allocation4 + $0x60] sm:$0xff]
      %v3610 = vld [vmem:[#allocation4 + $0x68] sm:$0xff]
      %v3611 = vld [vmem:[#allocation4 + $0x78] sm:$0xff]
      %v3612 = vld [vmem:[#allocation4 + $0x80] sm:$0xff]
      %v3613 = vld [vmem:[#allocation4 + $0x90] sm:$0xff]
      %v3614 = vld [vmem:[#allocation4 + $0x98] sm:$0xff]
      %v3615 = vld [vmem:[#allocation4 + $0xa8] sm:$0xff]
      %v3616 = vld [vmem:[#allocation4 + $0xb0] sm:$0xff]
      %v3617 = vld [vmem:[#allocation4 + $0xc0] sm:$0xff]
      %v3618 = vld [vmem:[#allocation4 + $0xc8] sm:$0xff]
      %v3619 = vld [vmem:[#allocation4 + $0xd8] sm:$0xff]
      %v3620 = vld [vmem:[#allocation4 + $0xe0] sm:$0xff]
      %v3621 = vld [vmem:[#allocation4 + $0xf0] sm:$0xff]
      %v3622 = vld [vmem:[#allocation4 + $0xf8] sm:$0xff]
      %v3623 = vld [vmem:[#allocation4 + $0x108] sm:$0xff]
      %v3624 = vld [vmem:[#allocation4 + $0x110] sm:$0xff]
      %v3625 = vld [vmem:[#allocation4 + $0x120] sm:$0xff]
      %v3626 = vld [vmem:[#allocation4 + $0x128] sm:$0xff]
      %v3627 = vld [vmem:[#allocation4 + $0x138] sm:$0xff]
      %v3628 = vld [vmem:[#allocation4 + $0x140] sm:$0xff]
      %v3629 = vld [vmem:[#allocation4 + $0x150] sm:$0xff]
      %v3630 = vld [vmem:[#allocation4 + $0x158] sm:$0xff]
      %v3631 = vld [vmem:[#allocation4 + $0x168] sm:$0xff]
      %v3632 = vld [vmem:[#allocation4 + $0x170] sm:$0xff]
      %v3633 = vld [vmem:[%s5] sm:$0xf]
      %v3634 = vld [vmem:[%s5 + $0x4] sm:$0xf]
      %v3635 = vld [vmem:[%s5 + $0x8] sm:$0xf]
      %v3636 = vld [vmem:[%s5 + $0xc] sm:$0xf]
      %v3637 = vld [vmem:[%s5 + $0x10] sm:$0xf]
      %v3638 = vld [vmem:[%s5 + $0x14] sm:$0xf]
      %v3639 = vld [vmem:[%s5 + $0x18] sm:$0xf]
      %v3640 = vld [vmem:[%s5 + $0x1c] sm:$0xf]
      %v3641 = vld [vmem:[%s5 + $0x20] sm:$0xf]
      %v3642 = vld [vmem:[%s5 + $0x24] sm:$0xf]
      %v3643 = vld [vmem:[%s5 + $0x28] sm:$0xf]
      %v3644 = vld [vmem:[%s5 + $0x2c] sm:$0xf]
      %v3645 = vld [vmem:[%s5 + $0x30] sm:$0xf]
      %v3646 = vld [vmem:[%s5 + $0x34] sm:$0xf]
      %v3647 = vld [vmem:[%s5 + $0x38] sm:$0xf]
      %v3648 = vld [vmem:[%s5 + $0x3c] sm:$0xf]
      %v3649 = vld [vmem:[%s5 + $0x40] sm:$0xf]
      %v3650 = vld [vmem:[%s5 + $0x44] sm:$0xf]
      %v3651 = vld [vmem:[%s9 + $0x2] sm:$0x1]
      %v3652 = vlaneseq
      %v3653 = vshrl.u32 %v3652, 7
      %v3654 = vsub.s32 0, %v3653
      %v3655 = vrot.slane %v3651, %v3654
      %v3674 = vunpack.c.l.b16 %v3633
      %v3675 = vunpack.c.l.b16 %v3634
      %v3676 = vunpack.c.l.b16 %v3635
      %v3677 = vunpack.c.l.b16 %v3636
      %v3678 = vunpack.c.l.b16 %v3637
      %v3679 = vunpack.c.l.b16 %v3638
      %v3680 = vunpack.c.l.b16 %v3639
      %v3681 = vunpack.c.l.b16 %v3640
      %v3682 = vunpack.c.l.b16 %v3641
      %v3683 = vunpack.c.l.b16 %v3642
      %v3684 = vunpack.c.l.b16 %v3643
      %v3685 = vunpack.c.l.b16 %v3644
      %v3686 = vunpack.c.l.b16 %v3645
      %v3687 = vunpack.c.l.b16 %v3646
      %v3688 = vunpack.c.l.b16 %v3647
      %v3689 = vunpack.c.l.b16 %v3648
      %v3690 = vunpack.c.l.b16 %v3649
      %v3691 = vunpack.c.l.b16 %v3650
      %v3692 = vpack.c.b16 %v3675, %v3674
      %v3693 = vpack.c.b16 %v3677, %v3676
      %v3694 = vpack.c.b16 %v3679, %v3678
      %v3695 = vpack.c.b16 %v3681, %v3680
      %v3696 = vpack.c.b16 %v3683, %v3682
      %v3697 = vpack.c.b16 %v3685, %v3684
      %v3698 = vpack.c.b16 %v3687, %v3686
      %v3699 = vpack.c.b16 %v3689, %v3688
      %v3700 = vpack.c.b16 %v3691, %v3690
      %v3711 = vsel %vm2397, %v3602, 0
      %v3714 = vsel %vm2397, %v3604, 0
      %v3717 = vsel %vm2397, %v3606, 0
      %v3720 = vsel %vm2397, %v3608, 0
      %v3723 = vsel %vm2397, %v3610, 0
      %v3726 = vsel %vm2397, %v3612, 0
      %v3729 = vsel %vm2397, %v3614, 0
      %v3732 = vsel %vm2397, %v3616, 0
      %v3735 = vsel %vm2397, %v3618, 0
      %v3738 = vsel %vm2397, %v3620, 0
      %v3741 = vsel %vm2397, %v3622, 0
      %v3744 = vsel %vm2397, %v3624, 0
      %v3747 = vsel %vm2397, %v3626, 0
      %v3750 = vsel %vm2397, %v3628, 0
      %v3753 = vsel %vm2397, %v3630, 0
      %v3756 = vsel %vm2397, %v3632, 0
      %3758 = vmatprep.subr.bf16.mxu0 0
      %3759 = vmatpush1.bf16.msra.mxu0 %v3692
      %3760 = vmatprep.subr.bf16.mxu0 0
      %3761 = vmatpush1.bf16.msra.mxu0 %v3693
      %3762 = vmatprep.subr.bf16.mxu0 0
      %3763 = vmatpush1.bf16.msra.mxu0 %v3694
      %3764 = vmatprep.subr.bf16.mxu0 0
      %3765 = vmatpush1.bf16.msra.mxu0 %v3695
      %3766 = vmatprep.subr.bf16.mxu0 0
      %3767 = vmatpush1.bf16.msra.mxu0 %v3696
      %3768 = vmatprep.subr.bf16.mxu0 0
      %3769 = vmatpush1.bf16.msra.mxu0 %v3697
      %3770 = vmatprep.subr.bf16.mxu0 0
      %3771 = vmatpush1.bf16.msra.mxu0 %v3698
      %3772 = vmatprep.subr.bf16.mxu0 0
      %3773 = vmatpush1.bf16.msra.mxu0 %v3699
      %3774 = vmatprep.subr.bf16.mxu0 0
      %3775 = vmatpush1.bf16.msra.mxu0 %v3700
      %3776 = vmatprep.subr.bf16.mxu0 0
      %3777 = vmatpush1.bf16.msra.mxu0 0
      %3778 = vmatprep.subr.bf16.mxu0 0
      %3779 = vmatpush1.bf16.msra.mxu0 0
      %3780 = vmatprep.subr.bf16.mxu0 0
      %3781 = vmatpush1.bf16.msra.mxu0 0
      %3782 = vmatprep.subr.bf16.mxu0 0
      %3783 = vmatpush1.bf16.msra.mxu0 0
      %3784 = vmatprep.subr.bf16.mxu0 0
      %3785 = vmatpush1.bf16.msra.mxu0 0
      %3786 = vmatprep.subr.bf16.mxu0 0
      %3787 = vmatpush1.bf16.msra.mxu0 0
      %3788 = vmatprep.subr.bf16.mxu0 0
      %3789 = vmatpush1.bf16.msra.mxu0 0
      %3790 = vmatprep.mubr.bf16.mxu0 %v3711
      %3791 = vmatmul.mubr.bf16.gmra.mrb[0].mxu0 %v3601
      %v3792 = vpop.f32.mrb[0].mxu0
      %v3793 = vadd.f32 %v3655, %v3792
      %v3794 = vpop.f32.mrb[0].mxu0
      %v3795 = vpop.f32.mrb[0].mxu0
      %v3796 = vadd.f32 %v3655, %v3795
      %v3797 = vpop.f32.mrb[0].mxu0
      %3798 = vmatprep.mubr.bf16.mxu0 %v3714
      %3799 = vmatmul.mubr.bf16.gmra.mrb[0].mxu0 %v3603
      %v3800 = vpop.f32.mrb[0].mxu0
      %v3801 = vadd.f32 %v3655, %v3800
      %v3802 = vpop.f32.mrb[0].mxu0
      %v3803 = vpop.f32.mrb[0].mxu0
      %v3804 = vadd.f32 %v3655, %v3803
      %v3805 = vpop.f32.mrb[0].mxu0
      %3806 = vmatprep.mubr.bf16.mxu0 %v3717
      %3807 = vmatmul.mubr.bf16.gmra.mrb[0].mxu0 %v3605
      %v3808 = vpop.f32.mrb[0].mxu0
      %v3809 = vadd.f32 %v3655, %v3808
      %v3810 = vpop.f32.mrb[0].mxu0
      %v3811 = vpop.f32.mrb[0].mxu0
      %v3812 = vadd.f32 %v3655, %v3811
      %v3813 = vpop.f32.mrb[0].mxu0
      %3814 = vmatprep.mubr.bf16.mxu0 %v3720
      %3815 = vmatmul.mubr.bf16.gmra.mrb[0].mxu0 %v3607
      %v3816 = vpop.f32.mrb[0].mxu0
      %v3817 = vadd.f32 %v3655, %v3816
      %v3818 = vpop.f32.mrb[0].mxu0
      %v3819 = vpop.f32.mrb[0].mxu0
      %v3820 = vadd.f32 %v3655, %v3819
      %v3821 = vpop.f32.mrb[0].mxu0
      %3822 = vmatprep.mubr.bf16.mxu0 %v3723
      %3823 = vmatmul.mubr.bf16.gmra.mrb[0].mxu0 %v3609
      %v3824 = vpop.f32.mrb[0].mxu0
      %v3825 = vadd.f32 %v3655, %v3824
      %v3826 = vpop.f32.mrb[0].mxu0
      %v3827 = vpop.f32.mrb[0].mxu0
      %v3828 = vadd.f32 %v3655, %v3827
      %v3829 = vpop.f32.mrb[0].mxu0
      %3830 = vmatprep.mubr.bf16.mxu0 %v3726
      %3831 = vmatmul.mubr.bf16.gmra.mrb[0].mxu0 %v3611
      %v3832 = vpop.f32.mrb[0].mxu0
      %v3833 = vadd.f32 %v3655, %v3832
      %v3834 = vpop.f32.mrb[0].mxu0
      %v3835 = vpop.f32.mrb[0].mxu0
      %v3836 = vadd.f32 %v3655, %v3835
      %v3837 = vpop.f32.mrb[0].mxu0
      %3838 = vmatprep.mubr.bf16.mxu0 %v3729
      %3839 = vmatmul.mubr.bf16.gmra.mrb[0].mxu0 %v3613
      %v3840 = vpop.f32.mrb[0].mxu0
      %v3841 = vadd.f32 %v3655, %v3840
      %v3842 = vpop.f32.mrb[0].mxu0
      %v3843 = vpop.f32.mrb[0].mxu0
      %v3844 = vadd.f32 %v3655, %v3843
      %v3845 = vpop.f32.mrb[0].mxu0
      %3846 = vmatprep.mubr.bf16.mxu0 %v3732
      %3847 = vmatmul.mubr.bf16.gmra.mrb[0].mxu0 %v3615
      %v3848 = vpop.f32.mrb[0].mxu0
      %v3849 = vadd.f32 %v3655, %v3848
      %v3850 = vpop.f32.mrb[0].mxu0
      %v3851 = vpop.f32.mrb[0].mxu0
      %v3852 = vadd.f32 %v3655, %v3851
      %v3853 = vpop.f32.mrb[0].mxu0
      %3854 = vmatprep.mubr.bf16.mxu0 %v3735
      %3855 = vmatmul.mubr.bf16.gmra.mrb[0].mxu0 %v3617
      %v3856 = vpop.f32.mrb[0].mxu0
      %v3857 = vadd.f32 %v3655, %v3856
      %v3858 = vpop.f32.mrb[0].mxu0
      %v3859 = vpop.f32.mrb[0].mxu0
      %v3860 = vadd.f32 %v3655, %v3859
      %v3861 = vpop.f32.mrb[0].mxu0
      %3862 = vmatprep.mubr.bf16.mxu0 %v3738
      %3863 = vmatmul.mubr.bf16.gmra.mrb[0].mxu0 %v3619
      %v3864 = vpop.f32.mrb[0].mxu0
      %v3865 = vadd.f32 %v3655, %v3864
      %v3866 = vpop.f32.mrb[0].mxu0
      %v3867 = vpop.f32.mrb[0].mxu0
      %v3868 = vadd.f32 %v3655, %v3867
      %v3869 = vpop.f32.mrb[0].mxu0
      %3870 = vmatprep.mubr.bf16.mxu0 %v3741
      %3871 = vmatmul.mubr.bf16.gmra.mrb[0].mxu0 %v3621
      %v3872 = vpop.f32.mrb[0].mxu0
      %v3873 = vadd.f32 %v3655, %v3872
      %v3874 = vpop.f32.mrb[0].mxu0
      %v3875 = vpop.f32.mrb[0].mxu0
      %v3876 = vadd.f32 %v3655, %v3875
      %v3877 = vpop.f32.mrb[0].mxu0
      %3878 = vmatprep.mubr.bf16.mxu0 %v3744
      %3879 = vmatmul.mubr.bf16.gmra.mrb[0].mxu0 %v3623
      %v3880 = vpop.f32.mrb[0].mxu0
      %v3881 = vadd.f32 %v3655, %v3880
      %v3882 = vpop.f32.mrb[0].mxu0
      %v3883 = vpop.f32.mrb[0].mxu0
      %v3884 = vadd.f32 %v3655, %v3883
      %v3885 = vpop.f32.mrb[0].mxu0
      %3886 = vmatprep.mubr.bf16.mxu0 %v3747
      %3887 = vmatmul.mubr.bf16.gmra.mrb[0].mxu0 %v3625
      %v3888 = vpop.f32.mrb[0].mxu0
      %v3889 = vadd.f32 %v3655, %v3888
      %v3890 = vpop.f32.mrb[0].mxu0
      %v3891 = vpop.f32.mrb[0].mxu0
      %v3892 = vadd.f32 %v3655, %v3891
      %v3893 = vpop.f32.mrb[0].mxu0
      %3894 = vmatprep.mubr.bf16.mxu0 %v3750
      %3895 = vmatmul.mubr.bf16.gmra.mrb[0].mxu0 %v3627
      %v3896 = vpop.f32.mrb[0].mxu0
      %v3897 = vadd.f32 %v3655, %v3896
      %v3898 = vpop.f32.mrb[0].mxu0
      %v3899 = vpop.f32.mrb[0].mxu0
      %v3900 = vadd.f32 %v3655, %v3899
      %v3901 = vpop.f32.mrb[0].mxu0
      %3902 = vmatprep.mubr.bf16.mxu0 %v3753
      %3903 = vmatmul.mubr.bf16.gmra.mrb[0].mxu0 %v3629
      %v3904 = vpop.f32.mrb[0].mxu0
      %v3905 = vadd.f32 %v3655, %v3904
      %v3906 = vpop.f32.mrb[0].mxu0
      %v3907 = vpop.f32.mrb[0].mxu0
      %v3908 = vadd.f32 %v3655, %v3907
      %v3909 = vpop.f32.mrb[0].mxu0
      %3910 = vmatprep.mubr.bf16.mxu0 %v3756
      %3911 = vmatmul.mubr.bf16.gmra.mrb[0].mxu0 %v3631
      %v3912 = vpop.f32.mrb[0].mxu0
      %v3913 = vadd.f32 %v3655, %v3912
      %v3914 = vpop.f32.mrb[0].mxu0
      %v3915 = vpop.f32.mrb[0].mxu0
      %v3916 = vadd.f32 %v3655, %v3915
      %v3917 = vpop.f32.mrb[0].mxu0
      %3918 = vdwg.mxu0
      %vm3919 = vcmp.gt.f32.partialorder %v3793, 0.0
      %vm3920 = vcmp.gt.f32.partialorder %v3796, 0.0
      %vm3921 = vcmp.gt.f32.partialorder %v3801, 0.0
      %vm3922 = vcmp.gt.f32.partialorder %v3804, 0.0
      %vm3923 = vcmp.gt.f32.partialorder %v3809, 0.0
      %vm3924 = vcmp.gt.f32.partialorder %v3812, 0.0
      %vm3925 = vcmp.gt.f32.partialorder %v3817, 0.0
      %vm3926 = vcmp.gt.f32.partialorder %v3820, 0.0
      %vm3927 = vcmp.gt.f32.partialorder %v3825, 0.0
      %vm3928 = vcmp.gt.f32.partialorder %v3828, 0.0
      %vm3929 = vcmp.gt.f32.partialorder %v3833, 0.0
      %vm3930 = vcmp.gt.f32.partialorder %v3836, 0.0
      %vm3931 = vcmp.gt.f32.partialorder %v3841, 0.0
      %vm3932 = vcmp.gt.f32.partialorder %v3844, 0.0
      %vm3933 = vcmp.gt.f32.partialorder %v3849, 0.0
      %vm3934 = vcmp.gt.f32.partialorder %v3852, 0.0
      %vm3935 = vcmp.gt.f32.partialorder %v3857, 0.0
      %vm3936 = vcmp.gt.f32.partialorder %v3860, 0.0
      %vm3937 = vcmp.gt.f32.partialorder %v3865, 0.0
      %vm3938 = vcmp.gt.f32.partialorder %v3868, 0.0
      %vm3939 = vcmp.gt.f32.partialorder %v3873, 0.0
      %vm3940 = vcmp.gt.f32.partialorder %v3876, 0.0
      %vm3941 = vcmp.gt.f32.partialorder %v3881, 0.0
      %vm3942 = vcmp.gt.f32.partialorder %v3884, 0.0
      %vm3943 = vcmp.gt.f32.partialorder %v3889, 0.0
      %vm3944 = vcmp.gt.f32.partialorder %v3892, 0.0
      %vm3945 = vcmp.gt.f32.partialorder %v3897, 0.0
      %vm3946 = vcmp.gt.f32.partialorder %v3900, 0.0
      %vm3947 = vcmp.gt.f32.partialorder %v3905, 0.0
      %vm3948 = vcmp.gt.f32.partialorder %v3908, 0.0
      %vm3949 = vcmp.gt.f32.partialorder %v3913, 0.0
      %vm3950 = vcmp.gt.f32.partialorder %v3916, 0.0
      %v3951 = vld [vmem:[%s9 + $0x3] sm:$0x1]
      %v3952 = vlaneseq
      %v3953 = vshrl.u32 %v3952, 7
      %v3954 = vsub.s32 0, %v3953
      %v3955 = vrot.slane %v3951, %v3954
      %v3956 = vmul.f32 %v3955, %v3793
      %v3957 = vmul.f32 %v3955, %v3796
      %v3958 = vmul.f32 %v3955, %v3801
      %v3959 = vmul.f32 %v3955, %v3804
      %v3960 = vmul.f32 %v3955, %v3809
      %v3961 = vmul.f32 %v3955, %v3812
      %v3962 = vmul.f32 %v3955, %v3817
      %v3963 = vmul.f32 %v3955, %v3820
      %v3964 = vmul.f32 %v3955, %v3825
      %v3965 = vmul.f32 %v3955, %v3828
      %v3966 = vmul.f32 %v3955, %v3833
      %v3967 = vmul.f32 %v3955, %v3836
      %v3968 = vmul.f32 %v3955, %v3841
      %v3969 = vmul.f32 %v3955, %v3844
      %v3970 = vmul.f32 %v3955, %v3849
      %v3971 = vmul.f32 %v3955, %v3852
      %v3972 = vmul.f32 %v3955, %v3857
      %v3973 = vmul.f32 %v3955, %v3860
      %v3974 = vmul.f32 %v3955, %v3865
      %v3975 = vmul.f32 %v3955, %v3868
      %v3976 = vmul.f32 %v3955, %v3873
      %v3977 = vmul.f32 %v3955, %v3876
      %v3978 = vmul.f32 %v3955, %v3881
      %v3979 = vmul.f32 %v3955, %v3884
      %v3980 = vmul.f32 %v3955, %v3889
      %v3981 = vmul.f32 %v3955, %v3892
      %v3982 = vmul.f32 %v3955, %v3897
      %v3983 = vmul.f32 %v3955, %v3900
      %v3984 = vmul.f32 %v3955, %v3905
      %v3985 = vmul.f32 %v3955, %v3908
      %v3986 = vmul.f32 %v3955, %v3913
      %v3987 = vmul.f32 %v3955, %v3916
      %v3988 = vsel %vm3919, %v3793, %v3956
      %v3989 = vsel %vm3920, %v3796, %v3957
      %v3990 = vsel %vm3921, %v3801, %v3958
      %v3991 = vsel %vm3922, %v3804, %v3959
      %v3992 = vsel %vm3923, %v3809, %v3960
      %v3993 = vsel %vm3924, %v3812, %v3961
      %v3994 = vsel %vm3925, %v3817, %v3962
      %v3995 = vsel %vm3926, %v3820, %v3963
      %v3996 = vsel %vm3927, %v3825, %v3964
      %v3997 = vsel %vm3928, %v3828, %v3965
      %v3998 = vsel %vm3929, %v3833, %v3966
      %v3999 = vsel %vm3930, %v3836, %v3967
      %v4000 = vsel %vm3931, %v3841, %v3968
      %v4001 = vsel %vm3932, %v3844, %v3969
      %v4002 = vsel %vm3933, %v3849, %v3970
      %v4003 = vsel %vm3934, %v3852, %v3971
      %v4004 = vsel %vm3935, %v3857, %v3972
      %v4005 = vsel %vm3936, %v3860, %v3973
      %v4006 = vsel %vm3937, %v3865, %v3974
      %v4007 = vsel %vm3938, %v3868, %v3975
      %v4008 = vsel %vm3939, %v3873, %v3976
      %v4009 = vsel %vm3940, %v3876, %v3977
      %v4010 = vsel %vm3941, %v3881, %v3978
      %v4011 = vsel %vm3942, %v3884, %v3979
      %v4012 = vsel %vm3943, %v3889, %v3980
      %v4013 = vsel %vm3944, %v3892, %v3981
      %v4014 = vsel %vm3945, %v3897, %v3982
      %v4015 = vsel %vm3946, %v3900, %v3983
      %v4016 = vsel %vm3947, %v3905, %v3984
      %v4017 = vsel %vm3948, %v3908, %v3985
      %v4018 = vsel %vm3949, %v3913, %v3986
      %v4019 = vsel %vm3950, %v3916, %v3987
      %v4020 = vpack.c.bf16 %v3989, %v3988
      %v4021 = vpack.c.bf16 %v3991, %v3990
      %v4022 = vpack.c.bf16 %v3993, %v3992
      %v4023 = vpack.c.bf16 %v3995, %v3994
      %v4024 = vpack.c.bf16 %v3997, %v3996
      %v4025 = vpack.c.bf16 %v3999, %v3998
      %v4026 = vpack.c.bf16 %v4001, %v4000
      %v4027 = vpack.c.bf16 %v4003, %v4002
      %v4028 = vpack.c.bf16 %v4005, %v4004
      %v4029 = vpack.c.bf16 %v4007, %v4006
      %v4030 = vpack.c.bf16 %v4009, %v4008
      %v4031 = vpack.c.bf16 %v4011, %v4010
      %v4032 = vpack.c.bf16 %v4013, %v4012
      %v4033 = vpack.c.bf16 %v4015, %v4014
      %v4034 = vpack.c.bf16 %v4017, %v4016
      %v4035 = vpack.c.bf16 %v4019, %v4018
      %v4052 = vunpack.c.l.b16 %v4020
      %v4053 = vunpack.c.h.b16 %v4020
      %v4054 = vunpack.c.l.b16 %v4021
      %v4055 = vunpack.c.h.b16 %v4021
      %v4056 = vunpack.c.l.b16 %v4022
      %v4057 = vunpack.c.h.b16 %v4022
      %v4058 = vunpack.c.l.b16 %v4023
      %v4059 = vunpack.c.h.b16 %v4023
      %v4060 = vunpack.c.l.b16 %v4024
      %v4061 = vunpack.c.h.b16 %v4024
      %v4062 = vunpack.c.l.b16 %v4025
      %v4063 = vunpack.c.h.b16 %v4025
      %v4064 = vunpack.c.l.b16 %v4026
      %v4065 = vunpack.c.h.b16 %v4026
      %v4066 = vunpack.c.l.b16 %v4027
      %v4067 = vunpack.c.h.b16 %v4027
      %v4068 = vunpack.c.l.b16 %v4028
      %v4069 = vunpack.c.h.b16 %v4028
      %v4070 = vunpack.c.l.b16 %v4029
      %v4071 = vunpack.c.h.b16 %v4029
      %v4072 = vunpack.c.l.b16 %v4030
      %v4073 = vunpack.c.h.b16 %v4030
      %v4074 = vunpack.c.l.b16 %v4031
      %v4075 = vunpack.c.h.b16 %v4031
      %v4076 = vunpack.c.l.b16 %v4032
      %v4077 = vunpack.c.h.b16 %v4032
      %v4078 = vunpack.c.l.b16 %v4033
      %v4079 = vunpack.c.h.b16 %v4033
      %v4080 = vunpack.c.l.b16 %v4034
      %v4081 = vunpack.c.h.b16 %v4034
      %v4082 = vunpack.c.l.b16 %v4035
      %v4083 = vunpack.c.h.b16 %v4035
      %v4084 = vpack.c.b16 %v4052, %v4052
      %v4085 = vpack.c.b16 %v4053, %v4053
      %v4086 = vpack.c.b16 %v4054, %v4054
      %v4087 = vpack.c.b16 %v4055, %v4055
      %v4088 = vpack.c.b16 %v4056, %v4056
      %v4089 = vpack.c.b16 %v4057, %v4057
      %v4090 = vpack.c.b16 %v4058, %v4058
      %v4091 = vpack.c.b16 %v4059, %v4059
      %v4092 = vpack.c.b16 %v4060, %v4060
      %v4093 = vpack.c.b16 %v4061, %v4061
      %v4094 = vpack.c.b16 %v4062, %v4062
      %v4095 = vpack.c.b16 %v4063, %v4063
      %v4096 = vpack.c.b16 %v4064, %v4064
      %v4097 = vpack.c.b16 %v4065, %v4065
      %v4098 = vpack.c.b16 %v4066, %v4066
      %v4099 = vpack.c.b16 %v4067, %v4067
      %v4100 = vpack.c.b16 %v4068, %v4068
      %v4101 = vpack.c.b16 %v4069, %v4069
      %v4102 = vpack.c.b16 %v4070, %v4070
      %v4103 = vpack.c.b16 %v4071, %v4071
      %v4104 = vpack.c.b16 %v4072, %v4072
      %v4105 = vpack.c.b16 %v4073, %v4073
      %v4106 = vpack.c.b16 %v4074, %v4074
      %v4107 = vpack.c.b16 %v4075, %v4075
      %v4108 = vpack.c.b16 %v4076, %v4076
      %v4109 = vpack.c.b16 %v4077, %v4077
      %v4110 = vpack.c.b16 %v4078, %v4078
      %v4111 = vpack.c.b16 %v4079, %v4079
      %v4112 = vpack.c.b16 %v4080, %v4080
      %v4113 = vpack.c.b16 %v4081, %v4081
      %v4114 = vpack.c.b16 %v4082, %v4082
      %v4115 = vpack.c.b16 %v4083, %v4083
      %v4117 = vshrl.u32 %v4084, 16
      %v4119 = vrot.slane %v4117, 7
      %v4120 = vshll.u32 %v4084, 16
      %v4122 = vor.u32 %v4119, %v4120
      %v4123 = vrot.slane %v4119, 4
      %v4125 = vshrl.u32 %v4085, 16
      %v4127 = vrot.slane %v4125, 7
      %v4128 = vshll.u32 %v4085, 16
      %v4130 = vor.u32 %v4127, %v4128
      %v4131 = vsel %vm1808, %v4123, %v4130
      %v4132 = vrot.slane %v4127, 4
      %v4134 = vshrl.u32 %v4086, 16
      %v4136 = vrot.slane %v4134, 7
      %v4137 = vshll.u32 %v4086, 16
      %v4139 = vor.u32 %v4136, %v4137
      %v4140 = vrot.slane %v4136, 4
      %v4142 = vshrl.u32 %v4087, 16
      %v4144 = vrot.slane %v4142, 7
      %v4145 = vshll.u32 %v4087, 16
      %v4147 = vor.u32 %v4144, %v4145
      %v4148 = vsel %vm1808, %v4140, %v4147
      %v4149 = vrot.slane %v4144, 4
      %v4151 = vshrl.u32 %v4088, 16
      %v4153 = vrot.slane %v4151, 7
      %v4154 = vshll.u32 %v4088, 16
      %v4156 = vor.u32 %v4153, %v4154
      %v4157 = vrot.slane %v4153, 4
      %v4159 = vshrl.u32 %v4089, 16
      %v4161 = vrot.slane %v4159, 7
      %v4162 = vshll.u32 %v4089, 16
      %v4164 = vor.u32 %v4161, %v4162
      %v4165 = vsel %vm1808, %v4157, %v4164
      %v4166 = vrot.slane %v4161, 4
      %v4168 = vshrl.u32 %v4090, 16
      %v4170 = vrot.slane %v4168, 7
      %v4171 = vshll.u32 %v4090, 16
      %v4173 = vor.u32 %v4170, %v4171
      %v4174 = vrot.slane %v4170, 4
      %v4176 = vshrl.u32 %v4091, 16
      %v4178 = vrot.slane %v4176, 7
      %v4179 = vshll.u32 %v4091, 16
      %v4181 = vor.u32 %v4178, %v4179
      %v4182 = vsel %vm1808, %v4174, %v4181
      %v4183 = vrot.slane %v4178, 4
      %v4185 = vshrl.u32 %v4092, 16
      %v4187 = vrot.slane %v4185, 7
      %v4188 = vshll.u32 %v4092, 16
      %v4190 = vor.u32 %v4187, %v4188
      %v4191 = vrot.slane %v4187, 4
      %v4193 = vshrl.u32 %v4093, 16
      %v4195 = vrot.slane %v4193, 7
      %v4196 = vshll.u32 %v4093, 16
      %v4198 = vor.u32 %v4195, %v4196
      %v4199 = vsel %vm1808, %v4191, %v4198
      %v4200 = vrot.slane %v4195, 4
      %v4202 = vshrl.u32 %v4094, 16
      %v4204 = vrot.slane %v4202, 7
      %v4205 = vshll.u32 %v4094, 16
      %v4207 = vor.u32 %v4204, %v4205
      %v4208 = vrot.slane %v4204, 4
      %v4210 = vshrl.u32 %v4095, 16
      %v4212 = vrot.slane %v4210, 7
      %v4213 = vshll.u32 %v4095, 16
      %v4215 = vor.u32 %v4212, %v4213
      %v4216 = vsel %vm1808, %v4208, %v4215
      %v4217 = vrot.slane %v4212, 4
      %v4219 = vshrl.u32 %v4096, 16
      %v4221 = vrot.slane %v4219, 7
      %v4222 = vshll.u32 %v4096, 16
      %v4224 = vor.u32 %v4221, %v4222
      %v4225 = vrot.slane %v4221, 4
      %v4227 = vshrl.u32 %v4097, 16
      %v4229 = vrot.slane %v4227, 7
      %v4230 = vshll.u32 %v4097, 16
      %v4232 = vor.u32 %v4229, %v4230
      %v4233 = vsel %vm1808, %v4225, %v4232
      %v4234 = vrot.slane %v4229, 4
      %v4236 = vshrl.u32 %v4098, 16
      %v4238 = vrot.slane %v4236, 7
      %v4239 = vshll.u32 %v4098, 16
      %v4241 = vor.u32 %v4238, %v4239
      %v4242 = vrot.slane %v4238, 4
      %v4244 = vshrl.u32 %v4099, 16
      %v4246 = vrot.slane %v4244, 7
      %v4247 = vshll.u32 %v4099, 16
      %v4249 = vor.u32 %v4246, %v4247
      %v4250 = vsel %vm1808, %v4242, %v4249
      %v4251 = vrot.slane %v4246, 4
      %v4253 = vshrl.u32 %v4100, 16
      %v4255 = vrot.slane %v4253, 7
      %v4256 = vshll.u32 %v4100, 16
      %v4258 = vor.u32 %v4255, %v4256
      %v4259 = vrot.slane %v4255, 4
      %v4261 = vshrl.u32 %v4101, 16
      %v4263 = vrot.slane %v4261, 7
      %v4264 = vshll.u32 %v4101, 16
      %v4266 = vor.u32 %v4263, %v4264
      %v4267 = vsel %vm1808, %v4259, %v4266
      %v4268 = vrot.slane %v4263, 4
      %v4270 = vshrl.u32 %v4102, 16
      %v4272 = vrot.slane %v4270, 7
      %v4273 = vshll.u32 %v4102, 16
      %v4275 = vor.u32 %v4272, %v4273
      %v4276 = vrot.slane %v4272, 4
      %v4278 = vshrl.u32 %v4103, 16
      %v4280 = vrot.slane %v4278, 7
      %v4281 = vshll.u32 %v4103, 16
      %v4283 = vor.u32 %v4280, %v4281
      %v4284 = vsel %vm1808, %v4276, %v4283
      %v4285 = vrot.slane %v4280, 4
      %v4287 = vshrl.u32 %v4104, 16
      %v4289 = vrot.slane %v4287, 7
      %v4290 = vshll.u32 %v4104, 16
      %v4292 = vor.u32 %v4289, %v4290
      %v4293 = vrot.slane %v4289, 4
      %v4295 = vshrl.u32 %v4105, 16
      %v4297 = vrot.slane %v4295, 7
      %v4298 = vshll.u32 %v4105, 16
      %v4300 = vor.u32 %v4297, %v4298
      %v4301 = vsel %vm1808, %v4293, %v4300
      %v4302 = vrot.slane %v4297, 4
      %v4304 = vshrl.u32 %v4106, 16
      %v4306 = vrot.slane %v4304, 7
      %v4307 = vshll.u32 %v4106, 16
      %v4309 = vor.u32 %v4306, %v4307
      %v4310 = vrot.slane %v4306, 4
      %v4312 = vshrl.u32 %v4107, 16
      %v4314 = vrot.slane %v4312, 7
      %v4315 = vshll.u32 %v4107, 16
      %v4317 = vor.u32 %v4314, %v4315
      %v4318 = vsel %vm1808, %v4310, %v4317
      %v4319 = vrot.slane %v4314, 4
      %v4321 = vshrl.u32 %v4108, 16
      %v4323 = vrot.slane %v4321, 7
      %v4324 = vshll.u32 %v4108, 16
      %v4326 = vor.u32 %v4323, %v4324
      %v4327 = vrot.slane %v4323, 4
      %v4329 = vshrl.u32 %v4109, 16
      %v4331 = vrot.slane %v4329, 7
      %v4332 = vshll.u32 %v4109, 16
      %v4334 = vor.u32 %v4331, %v4332
      %v4335 = vsel %vm1808, %v4327, %v4334
      %v4336 = vrot.slane %v4331, 4
      %v4338 = vshrl.u32 %v4110, 16
      %v4340 = vrot.slane %v4338, 7
      %v4341 = vshll.u32 %v4110, 16
      %v4343 = vor.u32 %v4340, %v4341
      %v4344 = vrot.slane %v4340, 4
      %v4346 = vshrl.u32 %v4111, 16
      %v4348 = vrot.slane %v4346, 7
      %v4349 = vshll.u32 %v4111, 16
      %v4351 = vor.u32 %v4348, %v4349
      %v4352 = vsel %vm1808, %v4344, %v4351
      %v4353 = vrot.slane %v4348, 4
      %v4355 = vshrl.u32 %v4112, 16
      %v4357 = vrot.slane %v4355, 7
      %v4358 = vshll.u32 %v4112, 16
      %v4360 = vor.u32 %v4357, %v4358
      %v4361 = vrot.slane %v4357, 4
      %v4363 = vshrl.u32 %v4113, 16
      %v4365 = vrot.slane %v4363, 7
      %v4366 = vshll.u32 %v4113, 16
      %v4368 = vor.u32 %v4365, %v4366
      %v4369 = vsel %vm1808, %v4361, %v4368
      %v4370 = vrot.slane %v4365, 4
      %v4372 = vshrl.u32 %v4114, 16
      %v4374 = vrot.slane %v4372, 7
      %v4375 = vshll.u32 %v4114, 16
      %v4377 = vor.u32 %v4374, %v4375
      %v4378 = vrot.slane %v4374, 4
      %v4380 = vshrl.u32 %v4115, 16
      %v4382 = vrot.slane %v4380, 7
      %v4383 = vshll.u32 %v4115, 16
      %v4385 = vor.u32 %v4382, %v4383
      %v4386 = vsel %vm1808, %v4378, %v4385
      %v4387 = vrot.slane %v4382, 4
      %s4436 = scalar_lea.vmem [#allocation3], 12
      %vm4437 = vcmask 60416
      %vm4438 = vmand %vm4437, %vm447
      %v4439 = vld [vmem:[%s4436] sm:$0xf]
      %v4440 = vsel %vm4438, %v4122, %v4439
      %4441 = vst [vmem:[%s4436] sm:$0xf] %v4440
      %4442 = vst.msk [vmem:[%s4436 + $0x4] sm:$0xf] %vm503, %v4131
      %v4443 = vld [vmem:[%s4436 + $0x8] sm:$0x1]
      %v4444 = vsel %vm513, %v4132, %v4443
      %4445 = vst [vmem:[%s4436 + $0x8] sm:$0x1] %v4444
      %v4446 = vld [vmem:[%s4436 + $0xc] sm:$0xf]
      %v4447 = vsel %vm4438, %v4139, %v4446
      %4448 = vst [vmem:[%s4436 + $0xc] sm:$0xf] %v4447
      %4449 = vst.msk [vmem:[%s4436 + $0x10] sm:$0xf] %vm503, %v4148
      %v4450 = vld [vmem:[%s4436 + $0x14] sm:$0x1]
      %v4451 = vsel %vm513, %v4149, %v4450
      %4452 = vst [vmem:[%s4436 + $0x14] sm:$0x1] %v4451
      %v4453 = vld [vmem:[%s4436 + $0x18] sm:$0xf]
      %v4454 = vsel %vm4438, %v4156, %v4453
      %4455 = vst [vmem:[%s4436 + $0x18] sm:$0xf] %v4454
      %4456 = vst.msk [vmem:[%s4436 + $0x1c] sm:$0xf] %vm503, %v4165
      %v4457 = vld [vmem:[%s4436 + $0x20] sm:$0x1]
      %v4458 = vsel %vm513, %v4166, %v4457
      %4459 = vst [vmem:[%s4436 + $0x20] sm:$0x1] %v4458
      %v4460 = vld [vmem:[%s4436 + $0x24] sm:$0xf]
      %v4461 = vsel %vm4438, %v4173, %v4460
      %4462 = vst [vmem:[%s4436 + $0x24] sm:$0xf] %v4461
      %4463 = vst.msk [vmem:[%s4436 + $0x28] sm:$0xf] %vm503, %v4182
      %v4464 = vld [vmem:[%s4436 + $0x2c] sm:$0x1]
      %v4465 = vsel %vm513, %v4183, %v4464
      %4466 = vst [vmem:[%s4436 + $0x2c] sm:$0x1] %v4465
      %v4467 = vld [vmem:[%s4436 + $0x30] sm:$0xf]
      %v4468 = vsel %vm4438, %v4190, %v4467
      %4469 = vst [vmem:[%s4436 + $0x30] sm:$0xf] %v4468
      %4470 = vst.msk [vmem:[%s4436 + $0x34] sm:$0xf] %vm503, %v4199
      %v4471 = vld [vmem:[%s4436 + $0x38] sm:$0x1]
      %v4472 = vsel %vm513, %v4200, %v4471
      %4473 = vst [vmem:[%s4436 + $0x38] sm:$0x1] %v4472
      %v4474 = vld [vmem:[%s4436 + $0x3c] sm:$0xf]
      %v4475 = vsel %vm4438, %v4207, %v4474
      %4476 = vst [vmem:[%s4436 + $0x3c] sm:$0xf] %v4475
      %4477 = vst.msk [vmem:[%s4436 + $0x40] sm:$0xf] %vm503, %v4216
      %v4478 = vld [vmem:[%s4436 + $0x44] sm:$0x1]
      %v4479 = vsel %vm513, %v4217, %v4478
      %4480 = vst [vmem:[%s4436 + $0x44] sm:$0x1] %v4479
      %v4481 = vld [vmem:[%s4436 + $0x48] sm:$0xf]
      %v4482 = vsel %vm4438, %v4224, %v4481
      %4483 = vst [vmem:[%s4436 + $0x48] sm:$0xf] %v4482
      %4484 = vst.msk [vmem:[%s4436 + $0x4c] sm:$0xf] %vm503, %v4233
      %v4485 = vld [vmem:[%s4436 + $0x50] sm:$0x1]
      %v4486 = vsel %vm513, %v4234, %v4485
      %4487 = vst [vmem:[%s4436 + $0x50] sm:$0x1] %v4486
      %v4488 = vld [vmem:[%s4436 + $0x54] sm:$0xf]
      %v4489 = vsel %vm4438, %v4241, %v4488
      %4490 = vst [vmem:[%s4436 + $0x54] sm:$0xf] %v4489
      %4491 = vst.msk [vmem:[%s4436 + $0x58] sm:$0xf] %vm503, %v4250
      %v4492 = vld [vmem:[%s4436 + $0x5c] sm:$0x1]
      %v4493 = vsel %vm513, %v4251, %v4492
      %4494 = vst [vmem:[%s4436 + $0x5c] sm:$0x1] %v4493
      %v4495 = vld [vmem:[%s4436 + $0x60] sm:$0xf]
      %v4496 = vsel %vm4438, %v4258, %v4495
      %4497 = vst [vmem:[%s4436 + $0x60] sm:$0xf] %v4496
      %4498 = vst.msk [vmem:[%s4436 + $0x64] sm:$0xf] %vm503, %v4267
      %v4499 = vld [vmem:[%s4436 + $0x68] sm:$0x1]
      %v4500 = vsel %vm513, %v4268, %v4499
      %4501 = vst [vmem:[%s4436 + $0x68] sm:$0x1] %v4500
      %v4502 = vld [vmem:[%s4436 + $0x6c] sm:$0xf]
      %v4503 = vsel %vm4438, %v4275, %v4502
      %4504 = vst [vmem:[%s4436 + $0x6c] sm:$0xf] %v4503
      %4505 = vst.msk [vmem:[%s4436 + $0x70] sm:$0xf] %vm503, %v4284
      %v4506 = vld [vmem:[%s4436 + $0x74] sm:$0x1]
      %v4507 = vsel %vm513, %v4285, %v4506
      %4508 = vst [vmem:[%s4436 + $0x74] sm:$0x1] %v4507
      %v4509 = vld [vmem:[%s4436 + $0x78] sm:$0xf]
      %v4510 = vsel %vm4438, %v4292, %v4509
      %4511 = vst [vmem:[%s4436 + $0x78] sm:$0xf] %v4510
      %4512 = vst.msk [vmem:[%s4436 + $0x7c] sm:$0xf] %vm503, %v4301
      %v4513 = vld [vmem:[%s4436 + $0x80] sm:$0x1]
      %v4514 = vsel %vm513, %v4302, %v4513
      %4515 = vst [vmem:[%s4436 + $0x80] sm:$0x1] %v4514
      %v4516 = vld [vmem:[%s4436 + $0x84] sm:$0xf]
      %v4517 = vsel %vm4438, %v4309, %v4516
      %4518 = vst [vmem:[%s4436 + $0x84] sm:$0xf] %v4517
      %4519 = vst.msk [vmem:[%s4436 + $0x88] sm:$0xf] %vm503, %v4318
      %v4520 = vld [vmem:[%s4436 + $0x8c] sm:$0x1]
      %v4521 = vsel %vm513, %v4319, %v4520
      %4522 = vst [vmem:[%s4436 + $0x8c] sm:$0x1] %v4521
      %v4523 = vld [vmem:[%s4436 + $0x90] sm:$0xf]
      %v4524 = vsel %vm4438, %v4326, %v4523
      %4525 = vst [vmem:[%s4436 + $0x90] sm:$0xf] %v4524
      %4526 = vst.msk [vmem:[%s4436 + $0x94] sm:$0xf] %vm503, %v4335
      %v4527 = vld [vmem:[%s4436 + $0x98] sm:$0x1]
      %v4528 = vsel %vm513, %v4336, %v4527
      %4529 = vst [vmem:[%s4436 + $0x98] sm:$0x1] %v4528
      %v4530 = vld [vmem:[%s4436 + $0x9c] sm:$0xf]
      %v4531 = vsel %vm4438, %v4343, %v4530
      %4532 = vst [vmem:[%s4436 + $0x9c] sm:$0xf] %v4531
      %4533 = vst.msk [vmem:[%s4436 + $0xa0] sm:$0xf] %vm503, %v4352
      %v4534 = vld [vmem:[%s4436 + $0xa4] sm:$0x1]
      %v4535 = vsel %vm513, %v4353, %v4534
      %4536 = vst [vmem:[%s4436 + $0xa4] sm:$0x1] %v4535
      %v4537 = vld [vmem:[%s4436 + $0xa8] sm:$0xf]
      %v4538 = vsel %vm4438, %v4360, %v4537
      %4539 = vst [vmem:[%s4436 + $0xa8] sm:$0xf] %v4538
      %4540 = vst.msk [vmem:[%s4436 + $0xac] sm:$0xf] %vm503, %v4369
      %v4541 = vld [vmem:[%s4436 + $0xb0] sm:$0x1]
      %v4542 = vsel %vm513, %v4370, %v4541
      %4543 = vst [vmem:[%s4436 + $0xb0] sm:$0x1] %v4542
      %v4544 = vld [vmem:[%s4436 + $0xb4] sm:$0xf]
      %v4545 = vsel %vm4438, %v4377, %v4544
      %4546 = vst [vmem:[%s4436 + $0xb4] sm:$0xf] %v4545
      %4547 = vst.msk [vmem:[%s4436 + $0xb8] sm:$0xf] %vm503, %v4386
      %v4548 = vld [vmem:[%s4436 + $0xbc] sm:$0x1]
      %v4549 = vsel %vm513, %v4387, %v4548
      %4550 = vst [vmem:[%s4436 + $0xbc] sm:$0x1] %v4549
      %v4551 = vld [vmem:[#allocation3] sm:$0xf]
      %v4552 = vld [vmem:[#allocation3 + $0x4] sm:$0xf]
      %v4553 = vld [vmem:[#allocation3 + $0x8] sm:$0x1]
      %v4554 = vld [vmem:[#allocation3 + $0xc] sm:$0xf]
      %v4555 = vld [vmem:[#allocation3 + $0x10] sm:$0xf]
      %v4556 = vld [vmem:[#allocation3 + $0x14] sm:$0x1]
      %v4557 = vld [vmem:[#allocation3 + $0x18] sm:$0xf]
      %v4558 = vld [vmem:[#allocation3 + $0x1c] sm:$0xf]
      %v4559 = vld [vmem:[#allocation3 + $0x20] sm:$0x1]
      %v4560 = vld [vmem:[#allocation3 + $0x24] sm:$0xf]
      %v4561 = vld [vmem:[#allocation3 + $0x28] sm:$0xf]
      %v4562 = vld [vmem:[#allocation3 + $0x2c] sm:$0x1]
      %v4563 = vld [vmem:[#allocation3 + $0x30] sm:$0xf]
      %v4564 = vld [vmem:[#allocation3 + $0x34] sm:$0xf]
      %v4565 = vld [vmem:[#allocation3 + $0x38] sm:$0x1]
      %v4566 = vld [vmem:[#allocation3 + $0x3c] sm:$0xf]
      %v4567 = vld [vmem:[#allocation3 + $0x40] sm:$0xf]
      %v4568 = vld [vmem:[#allocation3 + $0x44] sm:$0x1]
      %v4569 = vld [vmem:[#allocation3 + $0x48] sm:$0xf]
      %v4570 = vld [vmem:[#allocation3 + $0x4c] sm:$0xf]
      %v4571 = vld [vmem:[#allocation3 + $0x50] sm:$0x1]
      %v4572 = vld [vmem:[#allocation3 + $0x54] sm:$0xf]
      %v4573 = vld [vmem:[#allocation3 + $0x58] sm:$0xf]
      %v4574 = vld [vmem:[#allocation3 + $0x5c] sm:$0x1]
      %v4575 = vld [vmem:[#allocation3 + $0x60] sm:$0xf]
      %v4576 = vld [vmem:[#allocation3 + $0x64] sm:$0xf]
      %v4577 = vld [vmem:[#allocation3 + $0x68] sm:$0x1]
      %v4578 = vld [vmem:[#allocation3 + $0x6c] sm:$0xf]
      %v4579 = vld [vmem:[#allocation3 + $0x70] sm:$0xf]
      %v4580 = vld [vmem:[#allocation3 + $0x74] sm:$0x1]
      %v4581 = vld [vmem:[#allocation3 + $0x78] sm:$0xf]
      %v4582 = vld [vmem:[#allocation3 + $0x7c] sm:$0xf]
      %v4583 = vld [vmem:[#allocation3 + $0x80] sm:$0x1]
      %v4584 = vld [vmem:[#allocation3 + $0x84] sm:$0xf]
      %v4585 = vld [vmem:[#allocation3 + $0x88] sm:$0xf]
      %v4586 = vld [vmem:[#allocation3 + $0x8c] sm:$0x1]
      %v4587 = vld [vmem:[#allocation3 + $0x90] sm:$0xf]
      %v4588 = vld [vmem:[#allocation3 + $0x94] sm:$0xf]
      %v4589 = vld [vmem:[#allocation3 + $0x98] sm:$0x1]
      %v4590 = vld [vmem:[#allocation3 + $0x9c] sm:$0xf]
      %v4591 = vld [vmem:[#allocation3 + $0xa0] sm:$0xf]
      %v4592 = vld [vmem:[#allocation3 + $0xa4] sm:$0x1]
      %v4593 = vld [vmem:[#allocation3 + $0xa8] sm:$0xf]
      %v4594 = vld [vmem:[#allocation3 + $0xac] sm:$0xf]
      %v4595 = vld [vmem:[#allocation3 + $0xb0] sm:$0x1]
      %v4596 = vld [vmem:[#allocation3 + $0xb4] sm:$0xf]
      %v4597 = vld [vmem:[#allocation3 + $0xb8] sm:$0xf]
      %v4598 = vld [vmem:[#allocation3 + $0xbc] sm:$0x1]
      %v4599 = vld [vmem:[#allocation3 + $0xc0] sm:$0xf]
      %v4600 = vld [vmem:[#allocation3 + $0xc4] sm:$0xf]
      %v4601 = vld [vmem:[#allocation3 + $0xc8] sm:$0x1]
      %v4602 = vld [vmem:[#allocation3 + $0xcc] sm:$0xf]
      %v4603 = vld [vmem:[#allocation3 + $0xd0] sm:$0xf]
      %v4604 = vld [vmem:[#allocation3 + $0xd4] sm:$0x1]
      %v4637 = vunpack.c.l.b16 %v4551
      %v4638 = vunpack.c.l.b16 %v4552
      %v4639 = vunpack.c.l.b16 %v4554
      %v4640 = vunpack.c.l.b16 %v4555
      %v4641 = vunpack.c.l.b16 %v4557
      %v4642 = vunpack.c.l.b16 %v4558
      %v4643 = vunpack.c.l.b16 %v4560
      %v4644 = vunpack.c.l.b16 %v4561
      %v4645 = vunpack.c.l.b16 %v4563
      %v4646 = vunpack.c.l.b16 %v4564
      %v4647 = vunpack.c.l.b16 %v4566
      %v4648 = vunpack.c.l.b16 %v4567
      %v4649 = vunpack.c.l.b16 %v4569
      %v4650 = vunpack.c.l.b16 %v4570
      %v4651 = vunpack.c.l.b16 %v4572
      %v4652 = vunpack.c.l.b16 %v4573
      %v4653 = vunpack.c.l.b16 %v4575
      %v4654 = vunpack.c.l.b16 %v4576
      %v4655 = vunpack.c.l.b16 %v4578
      %v4656 = vunpack.c.l.b16 %v4579
      %v4657 = vunpack.c.l.b16 %v4581
      %v4658 = vunpack.c.l.b16 %v4582
      %v4659 = vunpack.c.l.b16 %v4584
      %v4660 = vunpack.c.l.b16 %v4585
      %v4661 = vunpack.c.l.b16 %v4587
      %v4662 = vunpack.c.l.b16 %v4588
      %v4663 = vunpack.c.l.b16 %v4590
      %v4664 = vunpack.c.l.b16 %v4591
      %v4665 = vunpack.c.l.b16 %v4593
      %v4666 = vunpack.c.l.b16 %v4594
      %v4667 = vunpack.c.l.b16 %v4596
      %v4668 = vunpack.c.l.b16 %v4597
      %v4669 = vpack.c.b16 %v4638, %v4637
      %v4670 = vpack.c.b16 %v4640, %v4639
      %v4671 = vpack.c.b16 %v4642, %v4641
      %v4672 = vpack.c.b16 %v4644, %v4643
      %v4673 = vpack.c.b16 %v4646, %v4645
      %v4674 = vpack.c.b16 %v4648, %v4647
      %v4675 = vpack.c.b16 %v4650, %v4649
      %v4676 = vpack.c.b16 %v4652, %v4651
      %v4677 = vpack.c.b16 %v4654, %v4653
      %v4678 = vpack.c.b16 %v4656, %v4655
      %v4679 = vpack.c.b16 %v4658, %v4657
      %v4680 = vpack.c.b16 %v4660, %v4659
      %v4681 = vpack.c.b16 %v4662, %v4661
      %v4682 = vpack.c.b16 %v4664, %v4663
      %v4683 = vpack.c.b16 %v4666, %v4665
      %v4684 = vpack.c.b16 %v4668, %v4667
      %4701 = vst.msk [vmem:[#allocation4] sm:$0xff] %vm1364, %v4669
      %4702 = vst.msk [vmem:[#allocation4 + $0x18] sm:$0xff] %vm1364, %v4670
      %4703 = vst.msk [vmem:[#allocation4 + $0x30] sm:$0xff] %vm1364, %v4671
      %4704 = vst.msk [vmem:[#allocation4 + $0x48] sm:$0xff] %vm1364, %v4672
      %4705 = vst.msk [vmem:[#allocation4 + $0x60] sm:$0xff] %vm1364, %v4673
      %4706 = vst.msk [vmem:[#allocation4 + $0x78] sm:$0xff] %vm1364, %v4674
      %4707 = vst.msk [vmem:[#allocation4 + $0x90] sm:$0xff] %vm1364, %v4675
      %4708 = vst.msk [vmem:[#allocation4 + $0xa8] sm:$0xff] %vm1364, %v4676
      %4709 = vst.msk [vmem:[#allocation4 + $0xc0] sm:$0xff] %vm1364, %v4677
      %4710 = vst.msk [vmem:[#allocation4 + $0xd8] sm:$0xff] %vm1364, %v4678
      %4711 = vst.msk [vmem:[#allocation4 + $0xf0] sm:$0xff] %vm1364, %v4679
      %4712 = vst.msk [vmem:[#allocation4 + $0x108] sm:$0xff] %vm1364, %v4680
      %4713 = vst.msk [vmem:[#allocation4 + $0x120] sm:$0xff] %vm1364, %v4681
      %4714 = vst.msk [vmem:[#allocation4 + $0x138] sm:$0xff] %vm1364, %v4682
      %4715 = vst.msk [vmem:[#allocation4 + $0x150] sm:$0xff] %vm1364, %v4683
      %4716 = vst.msk [vmem:[#allocation4 + $0x168] sm:$0xff] %vm1364, %v4684
      %v4718 = vshrl.u32 %v4551, 16
      %v4720 = vrot.slane %v4718, 4
      %v4721 = vshll.u32 %v4551, 16
      %v4723 = vrot.slane %v4721, 5
      %v4724 = vor.u32 %v4720, %v4723
      %v4725 = vrot.slane %v4724, 4
      %v4727 = vshll.u32 %v4552, 16
      %v4729 = vrot.slane %v4727, 5
      %v4730 = vsel %vm2416, %v4725, %v4729
      %v4731 = vshrl.u32 %v4552, 16
      %v4733 = vrot.slane %v4731, 4
      %v4734 = vor.u32 %v4733, %v4729
      %v4735 = vrot.slane %v4734, 4
      %v4737 = vshll.u32 %v4553, 16
      %v4739 = vrot.slane %v4737, 5
      %v4740 = vsel %vm2416, %v4735, %v4739
      %v4742 = vshrl.u32 %v4554, 16
      %v4744 = vrot.slane %v4742, 4
      %v4745 = vshll.u32 %v4554, 16
      %v4747 = vrot.slane %v4745, 5
      %v4748 = vor.u32 %v4744, %v4747
      %v4749 = vrot.slane %v4748, 4
      %v4751 = vshll.u32 %v4555, 16
      %v4753 = vrot.slane %v4751, 5
      %v4754 = vsel %vm2416, %v4749, %v4753
      %v4755 = vshrl.u32 %v4555, 16
      %v4757 = vrot.slane %v4755, 4
      %v4758 = vor.u32 %v4757, %v4753
      %v4759 = vrot.slane %v4758, 4
      %v4761 = vshll.u32 %v4556, 16
      %v4763 = vrot.slane %v4761, 5
      %v4764 = vsel %vm2416, %v4759, %v4763
      %v4766 = vshrl.u32 %v4557, 16
      %v4768 = vrot.slane %v4766, 4
      %v4769 = vshll.u32 %v4557, 16
      %v4771 = vrot.slane %v4769, 5
      %v4772 = vor.u32 %v4768, %v4771
      %v4773 = vrot.slane %v4772, 4
      %v4775 = vshll.u32 %v4558, 16
      %v4777 = vrot.slane %v4775, 5
      %v4778 = vsel %vm2416, %v4773, %v4777
      %v4779 = vshrl.u32 %v4558, 16
      %v4781 = vrot.slane %v4779, 4
      %v4782 = vor.u32 %v4781, %v4777
      %v4783 = vrot.slane %v4782, 4
      %v4785 = vshll.u32 %v4559, 16
      %v4787 = vrot.slane %v4785, 5
      %v4788 = vsel %vm2416, %v4783, %v4787
      %v4790 = vshrl.u32 %v4560, 16
      %v4792 = vrot.slane %v4790, 4
      %v4793 = vshll.u32 %v4560, 16
      %v4795 = vrot.slane %v4793, 5
      %v4796 = vor.u32 %v4792, %v4795
      %v4797 = vrot.slane %v4796, 4
      %v4799 = vshll.u32 %v4561, 16
      %v4801 = vrot.slane %v4799, 5
      %v4802 = vsel %vm2416, %v4797, %v4801
      %v4803 = vshrl.u32 %v4561, 16
      %v4805 = vrot.slane %v4803, 4
      %v4806 = vor.u32 %v4805, %v4801
      %v4807 = vrot.slane %v4806, 4
      %v4809 = vshll.u32 %v4562, 16
      %v4811 = vrot.slane %v4809, 5
      %v4812 = vsel %vm2416, %v4807, %v4811
      %v4814 = vshrl.u32 %v4563, 16
      %v4816 = vrot.slane %v4814, 4
      %v4817 = vshll.u32 %v4563, 16
      %v4819 = vrot.slane %v4817, 5
      %v4820 = vor.u32 %v4816, %v4819
      %v4821 = vrot.slane %v4820, 4
      %v4823 = vshll.u32 %v4564, 16
      %v4825 = vrot.slane %v4823, 5
      %v4826 = vsel %vm2416, %v4821, %v4825
      %v4827 = vshrl.u32 %v4564, 16
      %v4829 = vrot.slane %v4827, 4
      %v4830 = vor.u32 %v4829, %v4825
      %v4831 = vrot.slane %v4830, 4
      %v4833 = vshll.u32 %v4565, 16
      %v4835 = vrot.slane %v4833, 5
      %v4836 = vsel %vm2416, %v4831, %v4835
      %v4838 = vshrl.u32 %v4566, 16
      %v4840 = vrot.slane %v4838, 4
      %v4841 = vshll.u32 %v4566, 16
      %v4843 = vrot.slane %v4841, 5
      %v4844 = vor.u32 %v4840, %v4843
      %v4845 = vrot.slane %v4844, 4
      %v4847 = vshll.u32 %v4567, 16
      %v4849 = vrot.slane %v4847, 5
      %v4850 = vsel %vm2416, %v4845, %v4849
      %v4851 = vshrl.u32 %v4567, 16
      %v4853 = vrot.slane %v4851, 4
      %v4854 = vor.u32 %v4853, %v4849
      %v4855 = vrot.slane %v4854, 4
      %v4857 = vshll.u32 %v4568, 16
      %v4859 = vrot.slane %v4857, 5
      %v4860 = vsel %vm2416, %v4855, %v4859
      %v4862 = vshrl.u32 %v4569, 16
      %v4864 = vrot.slane %v4862, 4
      %v4865 = vshll.u32 %v4569, 16
      %v4867 = vrot.slane %v4865, 5
      %v4868 = vor.u32 %v4864, %v4867
      %v4869 = vrot.slane %v4868, 4
      %v4871 = vshll.u32 %v4570, 16
      %v4873 = vrot.slane %v4871, 5
      %v4874 = vsel %vm2416, %v4869, %v4873
      %v4875 = vshrl.u32 %v4570, 16
      %v4877 = vrot.slane %v4875, 4
      %v4878 = vor.u32 %v4877, %v4873
      %v4879 = vrot.slane %v4878, 4
      %v4881 = vshll.u32 %v4571, 16
      %v4883 = vrot.slane %v4881, 5
      %v4884 = vsel %vm2416, %v4879, %v4883
      %v4886 = vshrl.u32 %v4572, 16
      %v4888 = vrot.slane %v4886, 4
      %v4889 = vshll.u32 %v4572, 16
      %v4891 = vrot.slane %v4889, 5
      %v4892 = vor.u32 %v4888, %v4891
      %v4893 = vrot.slane %v4892, 4
      %v4895 = vshll.u32 %v4573, 16
      %v4897 = vrot.slane %v4895, 5
      %v4898 = vsel %vm2416, %v4893, %v4897
      %v4899 = vshrl.u32 %v4573, 16
      %v4901 = vrot.slane %v4899, 4
      %v4902 = vor.u32 %v4901, %v4897
      %v4903 = vrot.slane %v4902, 4
      %v4905 = vshll.u32 %v4574, 16
      %v4907 = vrot.slane %v4905, 5
      %v4908 = vsel %vm2416, %v4903, %v4907
      %v4910 = vshrl.u32 %v4575, 16
      %v4912 = vrot.slane %v4910, 4
      %v4913 = vshll.u32 %v4575, 16
      %v4915 = vrot.slane %v4913, 5
      %v4916 = vor.u32 %v4912, %v4915
      %v4917 = vrot.slane %v4916, 4
      %v4919 = vshll.u32 %v4576, 16
      %v4921 = vrot.slane %v4919, 5
      %v4922 = vsel %vm2416, %v4917, %v4921
      %v4923 = vshrl.u32 %v4576, 16
      %v4925 = vrot.slane %v4923, 4
      %v4926 = vor.u32 %v4925, %v4921
      %v4927 = vrot.slane %v4926, 4
      %v4929 = vshll.u32 %v4577, 16
      %v4931 = vrot.slane %v4929, 5
      %v4932 = vsel %vm2416, %v4927, %v4931
      %v4934 = vshrl.u32 %v4578, 16
      %v4936 = vrot.slane %v4934, 4
      %v4937 = vshll.u32 %v4578, 16
      %v4939 = vrot.slane %v4937, 5
      %v4940 = vor.u32 %v4936, %v4939
      %v4941 = vrot.slane %v4940, 4
      %v4943 = vshll.u32 %v4579, 16
      %v4945 = vrot.slane %v4943, 5
      %v4946 = vsel %vm2416, %v4941, %v4945
      %v4947 = vshrl.u32 %v4579, 16
      %v4949 = vrot.slane %v4947, 4
      %v4950 = vor.u32 %v4949, %v4945
      %v4951 = vrot.slane %v4950, 4
      %v4953 = vshll.u32 %v4580, 16
      %v4955 = vrot.slane %v4953, 5
      %v4956 = vsel %vm2416, %v4951, %v4955
      %v4958 = vshrl.u32 %v4581, 16
      %v4960 = vrot.slane %v4958, 4
      %v4961 = vshll.u32 %v4581, 16
      %v4963 = vrot.slane %v4961, 5
      %v4964 = vor.u32 %v4960, %v4963
      %v4965 = vrot.slane %v4964, 4
      %v4967 = vshll.u32 %v4582, 16
      %v4969 = vrot.slane %v4967, 5
      %v4970 = vsel %vm2416, %v4965, %v4969
      %v4971 = vshrl.u32 %v4582, 16
      %v4973 = vrot.slane %v4971, 4
      %v4974 = vor.u32 %v4973, %v4969
      %v4975 = vrot.slane %v4974, 4
      %v4977 = vshll.u32 %v4583, 16
      %v4979 = vrot.slane %v4977, 5
      %v4980 = vsel %vm2416, %v4975, %v4979
      %v4982 = vshrl.u32 %v4584, 16
      %v4984 = vrot.slane %v4982, 4
      %v4985 = vshll.u32 %v4584, 16
      %v4987 = vrot.slane %v4985, 5
      %v4988 = vor.u32 %v4984, %v4987
      %v4989 = vrot.slane %v4988, 4
      %v4991 = vshll.u32 %v4585, 16
      %v4993 = vrot.slane %v4991, 5
      %v4994 = vsel %vm2416, %v4989, %v4993
      %v4995 = vshrl.u32 %v4585, 16
      %v4997 = vrot.slane %v4995, 4
      %v4998 = vor.u32 %v4997, %v4993
      %v4999 = vrot.slane %v4998, 4
      %v5001 = vshll.u32 %v4586, 16
      %v5003 = vrot.slane %v5001, 5
      %v5004 = vsel %vm2416, %v4999, %v5003
      %v5006 = vshrl.u32 %v4587, 16
      %v5008 = vrot.slane %v5006, 4
      %v5009 = vshll.u32 %v4587, 16
      %v5011 = vrot.slane %v5009, 5
      %v5012 = vor.u32 %v5008, %v5011
      %v5013 = vrot.slane %v5012, 4
      %v5015 = vshll.u32 %v4588, 16
      %v5017 = vrot.slane %v5015, 5
      %v5018 = vsel %vm2416, %v5013, %v5017
      %v5019 = vshrl.u32 %v4588, 16
      %v5021 = vrot.slane %v5019, 4
      %v5022 = vor.u32 %v5021, %v5017
      %v5023 = vrot.slane %v5022, 4
      %v5025 = vshll.u32 %v4589, 16
      %v5027 = vrot.slane %v5025, 5
      %v5028 = vsel %vm2416, %v5023, %v5027
      %v5030 = vshrl.u32 %v4590, 16
      %v5032 = vrot.slane %v5030, 4
      %v5033 = vshll.u32 %v4590, 16
      %v5035 = vrot.slane %v5033, 5
      %v5036 = vor.u32 %v5032, %v5035
      %v5037 = vrot.slane %v5036, 4
      %v5039 = vshll.u32 %v4591, 16
      %v5041 = vrot.slane %v5039, 5
      %v5042 = vsel %vm2416, %v5037, %v5041
      %v5043 = vshrl.u32 %v4591, 16
      %v5045 = vrot.slane %v5043, 4
      %v5046 = vor.u32 %v5045, %v5041
      %v5047 = vrot.slane %v5046, 4
      %v5049 = vshll.u32 %v4592, 16
      %v5051 = vrot.slane %v5049, 5
      %v5052 = vsel %vm2416, %v5047, %v5051
      %v5054 = vshrl.u32 %v4593, 16
      %v5056 = vrot.slane %v5054, 4
      %v5057 = vshll.u32 %v4593, 16
      %v5059 = vrot.slane %v5057, 5
      %v5060 = vor.u32 %v5056, %v5059
      %v5061 = vrot.slane %v5060, 4
      %v5063 = vshll.u32 %v4594, 16
      %v5065 = vrot.slane %v5063, 5
      %v5066 = vsel %vm2416, %v5061, %v5065
      %v5067 = vshrl.u32 %v4594, 16
      %v5069 = vrot.slane %v5067, 4
      %v5070 = vor.u32 %v5069, %v5065
      %v5071 = vrot.slane %v5070, 4
      %v5073 = vshll.u32 %v4595, 16
      %v5075 = vrot.slane %v5073, 5
      %v5076 = vsel %vm2416, %v5071, %v5075
      %v5078 = vshrl.u32 %v4596, 16
      %v5080 = vrot.slane %v5078, 4
      %v5081 = vshll.u32 %v4596, 16
      %v5083 = vrot.slane %v5081, 5
      %v5084 = vor.u32 %v5080, %v5083
      %v5085 = vrot.slane %v5084, 4
      %v5087 = vshll.u32 %v4597, 16
      %v5089 = vrot.slane %v5087, 5
      %v5090 = vsel %vm2416, %v5085, %v5089
      %v5091 = vshrl.u32 %v4597, 16
      %v5093 = vrot.slane %v5091, 4
      %v5094 = vor.u32 %v5093, %v5089
      %v5095 = vrot.slane %v5094, 4
      %v5097 = vshll.u32 %v4598, 16
      %v5099 = vrot.slane %v5097, 5
      %v5100 = vsel %vm2416, %v5095, %v5099
      %v5101 = vunpack.c.l.b16 %v4730
      %v5102 = vunpack.c.l.b16 %v4740
      %v5103 = vunpack.c.l.b16 %v4754
      %v5104 = vunpack.c.l.b16 %v4764
      %v5105 = vunpack.c.l.b16 %v4778
      %v5106 = vunpack.c.l.b16 %v4788
      %v5107 = vunpack.c.l.b16 %v4802
      %v5108 = vunpack.c.l.b16 %v4812
      %v5109 = vunpack.c.l.b16 %v4826
      %v5110 = vunpack.c.l.b16 %v4836
      %v5111 = vunpack.c.l.b16 %v4850
      %v5112 = vunpack.c.l.b16 %v4860
      %v5113 = vunpack.c.l.b16 %v4874
      %v5114 = vunpack.c.l.b16 %v4884
      %v5115 = vunpack.c.l.b16 %v4898
      %v5116 = vunpack.c.l.b16 %v4908
      %v5117 = vunpack.c.l.b16 %v4922
      %v5118 = vunpack.c.l.b16 %v4932
      %v5119 = vunpack.c.l.b16 %v4946
      %v5120 = vunpack.c.l.b16 %v4956
      %v5121 = vunpack.c.l.b16 %v4970
      %v5122 = vunpack.c.l.b16 %v4980
      %v5123 = vunpack.c.l.b16 %v4994
      %v5124 = vunpack.c.l.b16 %v5004
      %v5125 = vunpack.c.l.b16 %v5018
      %v5126 = vunpack.c.l.b16 %v5028
      %v5127 = vunpack.c.l.b16 %v5042
      %v5128 = vunpack.c.l.b16 %v5052
      %v5129 = vunpack.c.l.b16 %v5066
      %v5130 = vunpack.c.l.b16 %v5076
      %v5131 = vunpack.c.l.b16 %v5090
      %v5132 = vunpack.c.l.b16 %v5100
      %v5133 = vpack.c.b16 %v5102, %v5101
      %v5134 = vpack.c.b16 %v5104, %v5103
      %v5135 = vpack.c.b16 %v5106, %v5105
      %v5136 = vpack.c.b16 %v5108, %v5107
      %v5137 = vpack.c.b16 %v5110, %v5109
      %v5138 = vpack.c.b16 %v5112, %v5111
      %v5139 = vpack.c.b16 %v5114, %v5113
      %v5140 = vpack.c.b16 %v5116, %v5115
      %v5141 = vpack.c.b16 %v5118, %v5117
      %v5142 = vpack.c.b16 %v5120, %v5119
      %v5143 = vpack.c.b16 %v5122, %v5121
      %v5144 = vpack.c.b16 %v5124, %v5123
      %v5145 = vpack.c.b16 %v5126, %v5125
      %v5146 = vpack.c.b16 %v5128, %v5127
      %v5147 = vpack.c.b16 %v5130, %v5129
      %v5148 = vpack.c.b16 %v5132, %v5131
      %5149 = vrot.lane.b32.xlu0 %v5133, 8
      %v5150 = vpop.permute.xlu0 %5149
      %5151 = vrot.lane.b32.xlu0 %v5134, 8
      %v5152 = vpop.permute.xlu0 %5151
      %5153 = vrot.lane.b32.xlu0 %v5135, 8
      %v5154 = vpop.permute.xlu0 %5153
      %5155 = vrot.lane.b32.xlu0 %v5136, 8
      %v5156 = vpop.permute.xlu0 %5155
      %5157 = vrot.lane.b32.xlu0 %v5137, 8
      %v5158 = vpop.permute.xlu0 %5157
      %5159 = vrot.lane.b32.xlu0 %v5138, 8
      %v5160 = vpop.permute.xlu0 %5159
      %5161 = vrot.lane.b32.xlu0 %v5139, 8
      %v5162 = vpop.permute.xlu0 %5161
      %5163 = vrot.lane.b32.xlu0 %v5140, 8
      %v5164 = vpop.permute.xlu0 %5163
      %5165 = vrot.lane.b32.xlu0 %v5141, 8
      %v5166 = vpop.permute.xlu0 %5165
      %5167 = vrot.lane.b32.xlu0 %v5142, 8
      %v5168 = vpop.permute.xlu0 %5167
      %5169 = vrot.lane.b32.xlu0 %v5143, 8
      %v5170 = vpop.permute.xlu0 %5169
      %5171 = vrot.lane.b32.xlu0 %v5144, 8
      %v5172 = vpop.permute.xlu0 %5171
      %5173 = vrot.lane.b32.xlu0 %v5145, 8
      %v5174 = vpop.permute.xlu0 %5173
      %5175 = vrot.lane.b32.xlu0 %v5146, 8
      %v5176 = vpop.permute.xlu0 %5175
      %5177 = vrot.lane.b32.xlu0 %v5147, 8
      %v5178 = vpop.permute.xlu0 %5177
      %5179 = vrot.lane.b32.xlu0 %v5148, 8
      %v5180 = vpop.permute.xlu0 %5179
      %vm5197 = vcmask 130112
      %5198 = vst.msk [vmem:[#allocation4] sm:$0xff] %vm5197, %v5150
      %5199 = vst.msk [vmem:[#allocation4 + $0x18] sm:$0xff] %vm5197, %v5152
      %5200 = vst.msk [vmem:[#allocation4 + $0x30] sm:$0xff] %vm5197, %v5154
      %5201 = vst.msk [vmem:[#allocation4 + $0x48] sm:$0xff] %vm5197, %v5156
      %5202 = vst.msk [vmem:[#allocation4 + $0x60] sm:$0xff] %vm5197, %v5158
      %5203 = vst.msk [vmem:[#allocation4 + $0x78] sm:$0xff] %vm5197, %v5160
      %5204 = vst.msk [vmem:[#allocation4 + $0x90] sm:$0xff] %vm5197, %v5162
      %5205 = vst.msk [vmem:[#allocation4 + $0xa8] sm:$0xff] %vm5197, %v5164
      %5206 = vst.msk [vmem:[#allocation4 + $0xc0] sm:$0xff] %vm5197, %v5166
      %5207 = vst.msk [vmem:[#allocation4 + $0xd8] sm:$0xff] %vm5197, %v5168
      %5208 = vst.msk [vmem:[#allocation4 + $0xf0] sm:$0xff] %vm5197, %v5170
      %5209 = vst.msk [vmem:[#allocation4 + $0x108] sm:$0xff] %vm5197, %v5172
      %5210 = vst.msk [vmem:[#allocation4 + $0x120] sm:$0xff] %vm5197, %v5174
      %5211 = vst.msk [vmem:[#allocation4 + $0x138] sm:$0xff] %vm5197, %v5176
      %5212 = vst.msk [vmem:[#allocation4 + $0x150] sm:$0xff] %vm5197, %v5178
      %5213 = vst.msk [vmem:[#allocation4 + $0x168] sm:$0xff] %vm5197, %v5180
      %v5230 = vrot.slane %v4551, 5
      %v5231 = vrot.slane %v5230, 4
      %v5232 = vrot.slane %v4552, 5
      %v5233 = vsel %vm2932, %v5231, %v5232
      %v5234 = vrot.slane %v5232, 4
      %v5235 = vrot.slane %v4553, 5
      %v5236 = vsel %vm2932, %v5234, %v5235
      %v5237 = vrot.slane %v4554, 5
      %v5238 = vrot.slane %v5237, 4
      %v5239 = vrot.slane %v4555, 5
      %v5240 = vsel %vm2932, %v5238, %v5239
      %v5241 = vrot.slane %v5239, 4
      %v5242 = vrot.slane %v4556, 5
      %v5243 = vsel %vm2932, %v5241, %v5242
      %v5244 = vrot.slane %v4557, 5
      %v5245 = vrot.slane %v5244, 4
      %v5246 = vrot.slane %v4558, 5
      %v5247 = vsel %vm2932, %v5245, %v5246
      %v5248 = vrot.slane %v5246, 4
      %v5249 = vrot.slane %v4559, 5
      %v5250 = vsel %vm2932, %v5248, %v5249
      %v5251 = vrot.slane %v4560, 5
      %v5252 = vrot.slane %v5251, 4
      %v5253 = vrot.slane %v4561, 5
      %v5254 = vsel %vm2932, %v5252, %v5253
      %v5255 = vrot.slane %v5253, 4
      %v5256 = vrot.slane %v4562, 5
      %v5257 = vsel %vm2932, %v5255, %v5256
      %v5258 = vrot.slane %v4563, 5
      %v5259 = vrot.slane %v5258, 4
      %v5260 = vrot.slane %v4564, 5
      %v5261 = vsel %vm2932, %v5259, %v5260
      %v5262 = vrot.slane %v5260, 4
      %v5263 = vrot.slane %v4565, 5
      %v5264 = vsel %vm2932, %v5262, %v5263
      %v5265 = vrot.slane %v4566, 5
      %v5266 = vrot.slane %v5265, 4
      %v5267 = vrot.slane %v4567, 5
      %v5268 = vsel %vm2932, %v5266, %v5267
      %v5269 = vrot.slane %v5267, 4
      %v5270 = vrot.slane %v4568, 5
      %v5271 = vsel %vm2932, %v5269, %v5270
      %v5272 = vrot.slane %v4569, 5
      %v5273 = vrot.slane %v5272, 4
      %v5274 = vrot.slane %v4570, 5
      %v5275 = vsel %vm2932, %v5273, %v5274
      %v5276 = vrot.slane %v5274, 4
      %v5277 = vrot.slane %v4571, 5
      %v5278 = vsel %vm2932, %v5276, %v5277
      %v5279 = vrot.slane %v4572, 5
      %v5280 = vrot.slane %v5279, 4
      %v5281 = vrot.slane %v4573, 5
      %v5282 = vsel %vm2932, %v5280, %v5281
      %v5283 = vrot.slane %v5281, 4
      %v5284 = vrot.slane %v4574, 5
      %v5285 = vsel %vm2932, %v5283, %v5284
      %v5286 = vrot.slane %v4575, 5
      %v5287 = vrot.slane %v5286, 4
      %v5288 = vrot.slane %v4576, 5
      %v5289 = vsel %vm2932, %v5287, %v5288
      %v5290 = vrot.slane %v5288, 4
      %v5291 = vrot.slane %v4577, 5
      %v5292 = vsel %vm2932, %v5290, %v5291
      %v5293 = vrot.slane %v4578, 5
      %v5294 = vrot.slane %v5293, 4
      %v5295 = vrot.slane %v4579, 5
      %v5296 = vsel %vm2932, %v5294, %v5295
      %v5297 = vrot.slane %v5295, 4
      %v5298 = vrot.slane %v4580, 5
      %v5299 = vsel %vm2932, %v5297, %v5298
      %v5300 = vrot.slane %v4581, 5
      %v5301 = vrot.slane %v5300, 4
      %v5302 = vrot.slane %v4582, 5
      %v5303 = vsel %vm2932, %v5301, %v5302
      %v5304 = vrot.slane %v5302, 4
      %v5305 = vrot.slane %v4583, 5
      %v5306 = vsel %vm2932, %v5304, %v5305
      %v5307 = vrot.slane %v4584, 5
      %v5308 = vrot.slane %v5307, 4
      %v5309 = vrot.slane %v4585, 5
      %v5310 = vsel %vm2932, %v5308, %v5309
      %v5311 = vrot.slane %v5309, 4
      %v5312 = vrot.slane %v4586, 5
      %v5313 = vsel %vm2932, %v5311, %v5312
      %v5314 = vrot.slane %v4587, 5
      %v5315 = vrot.slane %v5314, 4
      %v5316 = vrot.slane %v4588, 5
      %v5317 = vsel %vm2932, %v5315, %v5316
      %v5318 = vrot.slane %v5316, 4
      %v5319 = vrot.slane %v4589, 5
      %v5320 = vsel %vm2932, %v5318, %v5319
      %v5321 = vrot.slane %v4590, 5
      %v5322 = vrot.slane %v5321, 4
      %v5323 = vrot.slane %v4591, 5
      %v5324 = vsel %vm2932, %v5322, %v5323
      %v5325 = vrot.slane %v5323, 4
      %v5326 = vrot.slane %v4592, 5
      %v5327 = vsel %vm2932, %v5325, %v5326
      %v5328 = vrot.slane %v4593, 5
      %v5329 = vrot.slane %v5328, 4
      %v5330 = vrot.slane %v4594, 5
      %v5331 = vsel %vm2932, %v5329, %v5330
      %v5332 = vrot.slane %v5330, 4
      %v5333 = vrot.slane %v4595, 5
      %v5334 = vsel %vm2932, %v5332, %v5333
      %v5335 = vrot.slane %v4596, 5
      %v5336 = vrot.slane %v5335, 4
      %v5337 = vrot.slane %v4597, 5
      %v5338 = vsel %vm2932, %v5336, %v5337
      %v5339 = vrot.slane %v5337, 4
      %v5340 = vrot.slane %v4598, 5
      %v5341 = vsel %vm2932, %v5339, %v5340
      %v5342 = vunpack.c.l.b16 %v5233
      %v5343 = vunpack.c.l.b16 %v5236
      %v5344 = vunpack.c.l.b16 %v5240
      %v5345 = vunpack.c.l.b16 %v5243
      %v5346 = vunpack.c.l.b16 %v5247
      %v5347 = vunpack.c.l.b16 %v5250
      %v5348 = vunpack.c.l.b16 %v5254
      %v5349 = vunpack.c.l.b16 %v5257
      %v5350 = vunpack.c.l.b16 %v5261
      %v5351 = vunpack.c.l.b16 %v5264
      %v5352 = vunpack.c.l.b16 %v5268
      %v5353 = vunpack.c.l.b16 %v5271
      %v5354 = vunpack.c.l.b16 %v5275
      %v5355 = vunpack.c.l.b16 %v5278
      %v5356 = vunpack.c.l.b16 %v5282
      %v5357 = vunpack.c.l.b16 %v5285
      %v5358 = vunpack.c.l.b16 %v5289
      %v5359 = vunpack.c.l.b16 %v5292
      %v5360 = vunpack.c.l.b16 %v5296
      %v5361 = vunpack.c.l.b16 %v5299
      %v5362 = vunpack.c.l.b16 %v5303
      %v5363 = vunpack.c.l.b16 %v5306
      %v5364 = vunpack.c.l.b16 %v5310
      %v5365 = vunpack.c.l.b16 %v5313
      %v5366 = vunpack.c.l.b16 %v5317
      %v5367 = vunpack.c.l.b16 %v5320
      %v5368 = vunpack.c.l.b16 %v5324
      %v5369 = vunpack.c.l.b16 %v5327
      %v5370 = vunpack.c.l.b16 %v5331
      %v5371 = vunpack.c.l.b16 %v5334
      %v5372 = vunpack.c.l.b16 %v5338
      %v5373 = vunpack.c.l.b16 %v5341
      %v5374 = vpack.c.b16 %v5343, %v5342
      %v5375 = vpack.c.b16 %v5345, %v5344
      %v5376 = vpack.c.b16 %v5347, %v5346
      %v5377 = vpack.c.b16 %v5349, %v5348
      %v5378 = vpack.c.b16 %v5351, %v5350
      %v5379 = vpack.c.b16 %v5353, %v5352
      %v5380 = vpack.c.b16 %v5355, %v5354
      %v5381 = vpack.c.b16 %v5357, %v5356
      %v5382 = vpack.c.b16 %v5359, %v5358
      %v5383 = vpack.c.b16 %v5361, %v5360
      %v5384 = vpack.c.b16 %v5363, %v5362
      %v5385 = vpack.c.b16 %v5365, %v5364
      %v5386 = vpack.c.b16 %v5367, %v5366
      %v5387 = vpack.c.b16 %v5369, %v5368
      %v5388 = vpack.c.b16 %v5371, %v5370
      %v5389 = vpack.c.b16 %v5373, %v5372
      %5390 = vrot.lane.b32.xlu0 %v5374, 16
      %v5391 = vpop.permute.xlu0 %5390
      %5392 = vrot.lane.b32.xlu0 %v5375, 16
      %v5393 = vpop.permute.xlu0 %5392
      %5394 = vrot.lane.b32.xlu0 %v5376, 16
      %v5395 = vpop.permute.xlu0 %5394
      %5396 = vrot.lane.b32.xlu0 %v5377, 16
      %v5397 = vpop.permute.xlu0 %5396
      %5398 = vrot.lane.b32.xlu0 %v5378, 16
      %v5399 = vpop.permute.xlu0 %5398
      %5400 = vrot.lane.b32.xlu0 %v5379, 16
      %v5401 = vpop.permute.xlu0 %5400
      %5402 = vrot.lane.b32.xlu0 %v5380, 16
      %v5403 = vpop.permute.xlu0 %5402
      %5404 = vrot.lane.b32.xlu0 %v5381, 16
      %v5405 = vpop.permute.xlu0 %5404
      %5406 = vrot.lane.b32.xlu0 %v5382, 16
      %v5407 = vpop.permute.xlu0 %5406
      %5408 = vrot.lane.b32.xlu0 %v5383, 16
      %v5409 = vpop.permute.xlu0 %5408
      %5410 = vrot.lane.b32.xlu0 %v5384, 16
      %v5411 = vpop.permute.xlu0 %5410
      %5412 = vrot.lane.b32.xlu0 %v5385, 16
      %v5413 = vpop.permute.xlu0 %5412
      %5414 = vrot.lane.b32.xlu0 %v5386, 16
      %v5415 = vpop.permute.xlu0 %5414
      %5416 = vrot.lane.b32.xlu0 %v5387, 16
      %v5417 = vpop.permute.xlu0 %5416
      %5418 = vrot.lane.b32.xlu0 %v5388, 16
      %v5419 = vpop.permute.xlu0 %5418
      %5420 = vrot.lane.b32.xlu0 %v5389, 16
      %v5421 = vpop.permute.xlu0 %5420
      %vm5438 = vcmask 195712
      %5439 = vst.msk [vmem:[#allocation4] sm:$0xff] %vm5438, %v5391
      %5440 = vst.msk [vmem:[#allocation4 + $0x18] sm:$0xff] %vm5438, %v5393
      %5441 = vst.msk [vmem:[#allocation4 + $0x30] sm:$0xff] %vm5438, %v5395
      %5442 = vst.msk [vmem:[#allocation4 + $0x48] sm:$0xff] %vm5438, %v5397
      %5443 = vst.msk [vmem:[#allocation4 + $0x60] sm:$0xff] %vm5438, %v5399
      %5444 = vst.msk [vmem:[#allocation4 + $0x78] sm:$0xff] %vm5438, %v5401
      %5445 = vst.msk [vmem:[#allocation4 + $0x90] sm:$0xff] %vm5438, %v5403
      %5446 = vst.msk [vmem:[#allocation4 + $0xa8] sm:$0xff] %vm5438, %v5405
      %5447 = vst.msk [vmem:[#allocation4 + $0xc0] sm:$0xff] %vm5438, %v5407
      %5448 = vst.msk [vmem:[#allocation4 + $0xd8] sm:$0xff] %vm5438, %v5409
      %5449 = vst.msk [vmem:[#allocation4 + $0xf0] sm:$0xff] %vm5438, %v5411
      %5450 = vst.msk [vmem:[#allocation4 + $0x108] sm:$0xff] %vm5438, %v5413
      %5451 = vst.msk [vmem:[#allocation4 + $0x120] sm:$0xff] %vm5438, %v5415
      %5452 = vst.msk [vmem:[#allocation4 + $0x138] sm:$0xff] %vm5438, %v5417
      %5453 = vst.msk [vmem:[#allocation4 + $0x150] sm:$0xff] %vm5438, %v5419
      %5454 = vst.msk [vmem:[#allocation4 + $0x168] sm:$0xff] %vm5438, %v5421
      %v5457 = vunpack.c.l.b16 %v4599
      %v5458 = vunpack.c.l.b16 %v4600
      %v5459 = vpack.c.b16 %v5458, %v5457
      %5460 = vrot.lane.b32.xlu0 %v4670, 24
      %v5461 = vpop.permute.xlu0 %5460
      %5462 = vrot.lane.b32.xlu0 %v4671, 24
      %v5463 = vpop.permute.xlu0 %5462
      %5464 = vrot.lane.b32.xlu0 %v4672, 24
      %v5465 = vpop.permute.xlu0 %5464
      %5466 = vrot.lane.b32.xlu0 %v4673, 24
      %v5467 = vpop.permute.xlu0 %5466
      %5468 = vrot.lane.b32.xlu0 %v4674, 24
      %v5469 = vpop.permute.xlu0 %5468
      %5470 = vrot.lane.b32.xlu0 %v4675, 24
      %v5471 = vpop.permute.xlu0 %5470
      %5472 = vrot.lane.b32.xlu0 %v4676, 24
      %v5473 = vpop.permute.xlu0 %5472
      %5474 = vrot.lane.b32.xlu0 %v4677, 24
      %v5475 = vpop.permute.xlu0 %5474
      %5476 = vrot.lane.b32.xlu0 %v4678, 24
      %v5477 = vpop.permute.xlu0 %5476
      %5478 = vrot.lane.b32.xlu0 %v4679, 24
      %v5479 = vpop.permute.xlu0 %5478
      %5480 = vrot.lane.b32.xlu0 %v4680, 24
      %v5481 = vpop.permute.xlu0 %5480
      %5482 = vrot.lane.b32.xlu0 %v4681, 24
      %v5483 = vpop.permute.xlu0 %5482
      %5484 = vrot.lane.b32.xlu0 %v4682, 24
      %v5485 = vpop.permute.xlu0 %5484
      %5486 = vrot.lane.b32.xlu0 %v4683, 24
      %v5487 = vpop.permute.xlu0 %5486
      %5488 = vrot.lane.b32.xlu0 %v4684, 24
      %v5489 = vpop.permute.xlu0 %5488
      %5490 = vrot.lane.b32.xlu0 %v5459, 24
      %v5491 = vpop.permute.xlu0 %5490
      %vm5508 = vcmask 261312
      %5509 = vst.msk [vmem:[#allocation4] sm:$0xff] %vm5508, %v5461
      %5510 = vst.msk [vmem:[#allocation4 + $0x18] sm:$0xff] %vm5508, %v5463
      %5511 = vst.msk [vmem:[#allocation4 + $0x30] sm:$0xff] %vm5508, %v5465
      %5512 = vst.msk [vmem:[#allocation4 + $0x48] sm:$0xff] %vm5508, %v5467
      %5513 = vst.msk [vmem:[#allocation4 + $0x60] sm:$0xff] %vm5508, %v5469
      %5514 = vst.msk [vmem:[#allocation4 + $0x78] sm:$0xff] %vm5508, %v5471
      %5515 = vst.msk [vmem:[#allocation4 + $0x90] sm:$0xff] %vm5508, %v5473
      %5516 = vst.msk [vmem:[#allocation4 + $0xa8] sm:$0xff] %vm5508, %v5475
      %5517 = vst.msk [vmem:[#allocation4 + $0xc0] sm:$0xff] %vm5508, %v5477
      %5518 = vst.msk [vmem:[#allocation4 + $0xd8] sm:$0xff] %vm5508, %v5479
      %5519 = vst.msk [vmem:[#allocation4 + $0xf0] sm:$0xff] %vm5508, %v5481
      %5520 = vst.msk [vmem:[#allocation4 + $0x108] sm:$0xff] %vm5508, %v5483
      %5521 = vst.msk [vmem:[#allocation4 + $0x120] sm:$0xff] %vm5508, %v5485
      %5522 = vst.msk [vmem:[#allocation4 + $0x138] sm:$0xff] %vm5508, %v5487
      %5523 = vst.msk [vmem:[#allocation4 + $0x150] sm:$0xff] %vm5508, %v5489
      %5524 = vst.msk [vmem:[#allocation4 + $0x168] sm:$0xff] %vm5508, %v5491
      %v5526 = vshrl.u32 %v4599, 16
      %v5528 = vrot.slane %v5526, 4
      %v5529 = vshll.u32 %v4599, 16
      %v5531 = vrot.slane %v5529, 5
      %v5532 = vor.u32 %v5528, %v5531
      %v5533 = vrot.slane %v5532, 4
      %v5535 = vshll.u32 %v4600, 16
      %v5537 = vrot.slane %v5535, 5
      %v5538 = vsel %vm2416, %v5533, %v5537
      %v5539 = vshrl.u32 %v4600, 16
      %v5541 = vrot.slane %v5539, 4
      %v5542 = vor.u32 %v5541, %v5537
      %v5543 = vrot.slane %v5542, 4
      %v5545 = vshll.u32 %v4601, 16
      %v5547 = vrot.slane %v5545, 5
      %v5548 = vsel %vm2416, %v5543, %v5547
      %v5549 = vunpack.c.l.b16 %v5538
      %v5550 = vunpack.c.l.b16 %v5548
      %v5551 = vpack.c.b16 %v5550, %v5549
      %5552 = vrot.lane.b32.xlu0 %v5134, 32
      %v5553 = vpop.permute.xlu0 %5552
      %5554 = vrot.lane.b32.xlu0 %v5135, 32
      %v5555 = vpop.permute.xlu0 %5554
      %5556 = vrot.lane.b32.xlu0 %v5136, 32
      %v5557 = vpop.permute.xlu0 %5556
      %5558 = vrot.lane.b32.xlu0 %v5137, 32
      %v5559 = vpop.permute.xlu0 %5558
      %5560 = vrot.lane.b32.xlu0 %v5138, 32
      %v5561 = vpop.permute.xlu0 %5560
      %5562 = vrot.lane.b32.xlu0 %v5139, 32
      %v5563 = vpop.permute.xlu0 %5562
      %5564 = vrot.lane.b32.xlu0 %v5140, 32
      %v5565 = vpop.permute.xlu0 %5564
      %5566 = vrot.lane.b32.xlu0 %v5141, 32
      %v5567 = vpop.permute.xlu0 %5566
      %5568 = vrot.lane.b32.xlu0 %v5142, 32
      %v5569 = vpop.permute.xlu0 %5568
      %5570 = vrot.lane.b32.xlu0 %v5143, 32
      %v5571 = vpop.permute.xlu0 %5570
      %5572 = vrot.lane.b32.xlu0 %v5144, 32
      %v5573 = vpop.permute.xlu0 %5572
      %5574 = vrot.lane.b32.xlu0 %v5145, 32
      %v5575 = vpop.permute.xlu0 %5574
      %5576 = vrot.lane.b32.xlu0 %v5146, 32
      %v5577 = vpop.permute.xlu0 %5576
      %5578 = vrot.lane.b32.xlu0 %v5147, 32
      %v5579 = vpop.permute.xlu0 %5578
      %5580 = vrot.lane.b32.xlu0 %v5148, 32
      %v5581 = vpop.permute.xlu0 %5580
      %5582 = vrot.lane.b32.xlu0 %v5551, 32
      %v5583 = vpop.permute.xlu0 %5582
      %vm5600 = vcmask 326912
      %5601 = vst.msk [vmem:[#allocation4] sm:$0xff] %vm5600, %v5553
      %5602 = vst.msk [vmem:[#allocation4 + $0x18] sm:$0xff] %vm5600, %v5555
      %5603 = vst.msk [vmem:[#allocation4 + $0x30] sm:$0xff] %vm5600, %v5557
      %5604 = vst.msk [vmem:[#allocation4 + $0x48] sm:$0xff] %vm5600, %v5559
      %5605 = vst.msk [vmem:[#allocation4 + $0x60] sm:$0xff] %vm5600, %v5561
      %5606 = vst.msk [vmem:[#allocation4 + $0x78] sm:$0xff] %vm5600, %v5563
      %5607 = vst.msk [vmem:[#allocation4 + $0x90] sm:$0xff] %vm5600, %v5565
      %5608 = vst.msk [vmem:[#allocation4 + $0xa8] sm:$0xff] %vm5600, %v5567
      %5609 = vst.msk [vmem:[#allocation4 + $0xc0] sm:$0xff] %vm5600, %v5569
      %5610 = vst.msk [vmem:[#allocation4 + $0xd8] sm:$0xff] %vm5600, %v5571
      %5611 = vst.msk [vmem:[#allocation4 + $0xf0] sm:$0xff] %vm5600, %v5573
      %5612 = vst.msk [vmem:[#allocation4 + $0x108] sm:$0xff] %vm5600, %v5575
      %5613 = vst.msk [vmem:[#allocation4 + $0x120] sm:$0xff] %vm5600, %v5577
      %5614 = vst.msk [vmem:[#allocation4 + $0x138] sm:$0xff] %vm5600, %v5579
      %5615 = vst.msk [vmem:[#allocation4 + $0x150] sm:$0xff] %vm5600, %v5581
      %5616 = vst.msk [vmem:[#allocation4 + $0x168] sm:$0xff] %vm5600, %v5583
      %v5618 = vrot.slane %v4599, 5
      %v5619 = vrot.slane %v5618, 4
      %v5620 = vrot.slane %v4600, 5
      %v5621 = vsel %vm2932, %v5619, %v5620
      %v5622 = vrot.slane %v5620, 4
      %v5623 = vrot.slane %v4601, 5
      %v5624 = vsel %vm2932, %v5622, %v5623
      %v5625 = vunpack.c.l.b16 %v5621
      %v5626 = vunpack.c.l.b16 %v5624
      %v5627 = vpack.c.b16 %v5626, %v5625
      %5628 = vrot.lane.b32.xlu0 %v5375, 40
      %v5629 = vpop.permute.xlu0 %5628
      %5630 = vrot.lane.b32.xlu0 %v5376, 40
      %v5631 = vpop.permute.xlu0 %5630
      %5632 = vrot.lane.b32.xlu0 %v5377, 40
      %v5633 = vpop.permute.xlu0 %5632
      %5634 = vrot.lane.b32.xlu0 %v5378, 40
      %v5635 = vpop.permute.xlu0 %5634
      %5636 = vrot.lane.b32.xlu0 %v5379, 40
      %v5637 = vpop.permute.xlu0 %5636
      %5638 = vrot.lane.b32.xlu0 %v5380, 40
      %v5639 = vpop.permute.xlu0 %5638
      %5640 = vrot.lane.b32.xlu0 %v5381, 40
      %v5641 = vpop.permute.xlu0 %5640
      %5642 = vrot.lane.b32.xlu0 %v5382, 40
      %v5643 = vpop.permute.xlu0 %5642
      %5644 = vrot.lane.b32.xlu0 %v5383, 40
      %v5645 = vpop.permute.xlu0 %5644
      %5646 = vrot.lane.b32.xlu0 %v5384, 40
      %v5647 = vpop.permute.xlu0 %5646
      %5648 = vrot.lane.b32.xlu0 %v5385, 40
      %v5649 = vpop.permute.xlu0 %5648
      %5650 = vrot.lane.b32.xlu0 %v5386, 40
      %v5651 = vpop.permute.xlu0 %5650
      %5652 = vrot.lane.b32.xlu0 %v5387, 40
      %v5653 = vpop.permute.xlu0 %5652
      %5654 = vrot.lane.b32.xlu0 %v5388, 40
      %v5655 = vpop.permute.xlu0 %5654
      %5656 = vrot.lane.b32.xlu0 %v5389, 40
      %v5657 = vpop.permute.xlu0 %5656
      %5658 = vrot.lane.b32.xlu0 %v5627, 40
      %v5659 = vpop.permute.xlu0 %5658
      %vm5676 = vcmask 392512
      %5677 = vst.msk [vmem:[#allocation4] sm:$0xff] %vm5676, %v5629
      %5678 = vst.msk [vmem:[#allocation4 + $0x18] sm:$0xff] %vm5676, %v5631
      %5679 = vst.msk [vmem:[#allocation4 + $0x30] sm:$0xff] %vm5676, %v5633
      %5680 = vst.msk [vmem:[#allocation4 + $0x48] sm:$0xff] %vm5676, %v5635
      %5681 = vst.msk [vmem:[#allocation4 + $0x60] sm:$0xff] %vm5676, %v5637
      %5682 = vst.msk [vmem:[#allocation4 + $0x78] sm:$0xff] %vm5676, %v5639
      %5683 = vst.msk [vmem:[#allocation4 + $0x90] sm:$0xff] %vm5676, %v5641
      %5684 = vst.msk [vmem:[#allocation4 + $0xa8] sm:$0xff] %vm5676, %v5643
      %5685 = vst.msk [vmem:[#allocation4 + $0xc0] sm:$0xff] %vm5676, %v5645
      %5686 = vst.msk [vmem:[#allocation4 + $0xd8] sm:$0xff] %vm5676, %v5647
      %5687 = vst.msk [vmem:[#allocation4 + $0xf0] sm:$0xff] %vm5676, %v5649
      %5688 = vst.msk [vmem:[#allocation4 + $0x108] sm:$0xff] %vm5676, %v5651
      %5689 = vst.msk [vmem:[#allocation4 + $0x120] sm:$0xff] %vm5676, %v5653
      %5690 = vst.msk [vmem:[#allocation4 + $0x138] sm:$0xff] %vm5676, %v5655
      %5691 = vst.msk [vmem:[#allocation4 + $0x150] sm:$0xff] %vm5676, %v5657
      %5692 = vst.msk [vmem:[#allocation4 + $0x168] sm:$0xff] %vm5676, %v5659
      %v5695 = vunpack.c.l.b16 %v4602
      %v5696 = vunpack.c.l.b16 %v4603
      %v5697 = vpack.c.b16 %v5696, %v5695
      %5698 = vrot.lane.b32.xlu0 %v4671, 48
      %v5699 = vpop.permute.xlu0 %5698
      %5700 = vrot.lane.b32.xlu0 %v4672, 48
      %v5701 = vpop.permute.xlu0 %5700
      %5702 = vrot.lane.b32.xlu0 %v4673, 48
      %v5703 = vpop.permute.xlu0 %5702
      %5704 = vrot.lane.b32.xlu0 %v4674, 48
      %v5705 = vpop.permute.xlu0 %5704
      %5706 = vrot.lane.b32.xlu0 %v4675, 48
      %v5707 = vpop.permute.xlu0 %5706
      %5708 = vrot.lane.b32.xlu0 %v4676, 48
      %v5709 = vpop.permute.xlu0 %5708
      %5710 = vrot.lane.b32.xlu0 %v4677, 48
      %v5711 = vpop.permute.xlu0 %5710
      %5712 = vrot.lane.b32.xlu0 %v4678, 48
      %v5713 = vpop.permute.xlu0 %5712
      %5714 = vrot.lane.b32.xlu0 %v4679, 48
      %v5715 = vpop.permute.xlu0 %5714
      %5716 = vrot.lane.b32.xlu0 %v4680, 48
      %v5717 = vpop.permute.xlu0 %5716
      %5718 = vrot.lane.b32.xlu0 %v4681, 48
      %v5719 = vpop.permute.xlu0 %5718
      %5720 = vrot.lane.b32.xlu0 %v4682, 48
      %v5721 = vpop.permute.xlu0 %5720
      %5722 = vrot.lane.b32.xlu0 %v4683, 48
      %v5723 = vpop.permute.xlu0 %5722
      %5724 = vrot.lane.b32.xlu0 %v4684, 48
      %v5725 = vpop.permute.xlu0 %5724
      %5726 = vrot.lane.b32.xlu0 %v5459, 48
      %v5727 = vpop.permute.xlu0 %5726
      %5728 = vrot.lane.b32.xlu0 %v5697, 48
      %v5729 = vpop.permute.xlu0 %5728
      %vm5746 = vcmask 458112
      %5747 = vst.msk [vmem:[#allocation4] sm:$0xff] %vm5746, %v5699
      %5748 = vst.msk [vmem:[#allocation4 + $0x18] sm:$0xff] %vm5746, %v5701
      %5749 = vst.msk [vmem:[#allocation4 + $0x30] sm:$0xff] %vm5746, %v5703
      %5750 = vst.msk [vmem:[#allocation4 + $0x48] sm:$0xff] %vm5746, %v5705
      %5751 = vst.msk [vmem:[#allocation4 + $0x60] sm:$0xff] %vm5746, %v5707
      %5752 = vst.msk [vmem:[#allocation4 + $0x78] sm:$0xff] %vm5746, %v5709
      %5753 = vst.msk [vmem:[#allocation4 + $0x90] sm:$0xff] %vm5746, %v5711
      %5754 = vst.msk [vmem:[#allocation4 + $0xa8] sm:$0xff] %vm5746, %v5713
      %5755 = vst.msk [vmem:[#allocation4 + $0xc0] sm:$0xff] %vm5746, %v5715
      %5756 = vst.msk [vmem:[#allocation4 + $0xd8] sm:$0xff] %vm5746, %v5717
      %5757 = vst.msk [vmem:[#allocation4 + $0xf0] sm:$0xff] %vm5746, %v5719
      %5758 = vst.msk [vmem:[#allocation4 + $0x108] sm:$0xff] %vm5746, %v5721
      %5759 = vst.msk [vmem:[#allocation4 + $0x120] sm:$0xff] %vm5746, %v5723
      %5760 = vst.msk [vmem:[#allocation4 + $0x138] sm:$0xff] %vm5746, %v5725
      %5761 = vst.msk [vmem:[#allocation4 + $0x150] sm:$0xff] %vm5746, %v5727
      %5762 = vst.msk [vmem:[#allocation4 + $0x168] sm:$0xff] %vm5746, %v5729
      %v5764 = vshrl.u32 %v4602, 16
      %v5766 = vrot.slane %v5764, 4
      %v5767 = vshll.u32 %v4602, 16
      %v5769 = vrot.slane %v5767, 5
      %v5770 = vor.u32 %v5766, %v5769
      %v5771 = vrot.slane %v5770, 4
      %v5773 = vshll.u32 %v4603, 16
      %v5775 = vrot.slane %v5773, 5
      %v5776 = vsel %vm2416, %v5771, %v5775
      %v5777 = vshrl.u32 %v4603, 16
      %v5779 = vrot.slane %v5777, 4
      %v5780 = vor.u32 %v5779, %v5775
      %v5781 = vrot.slane %v5780, 4
      %v5783 = vshll.u32 %v4604, 16
      %v5785 = vrot.slane %v5783, 5
      %v5786 = vsel %vm2416, %v5781, %v5785
      %v5787 = vunpack.c.l.b16 %v5776
      %v5788 = vunpack.c.l.b16 %v5786
      %v5789 = vpack.c.b16 %v5788, %v5787
      %5790 = vrot.lane.b32.xlu0 %v5135, 56
      %v5791 = vpop.permute.xlu0 %5790
      %5792 = vrot.lane.b32.xlu0 %v5136, 56
      %v5793 = vpop.permute.xlu0 %5792
      %5794 = vrot.lane.b32.xlu0 %v5137, 56
      %v5795 = vpop.permute.xlu0 %5794
      %5796 = vrot.lane.b32.xlu0 %v5138, 56
      %v5797 = vpop.permute.xlu0 %5796
      %5798 = vrot.lane.b32.xlu0 %v5139, 56
      %v5799 = vpop.permute.xlu0 %5798
      %5800 = vrot.lane.b32.xlu0 %v5140, 56
      %v5801 = vpop.permute.xlu0 %5800
      %5802 = vrot.lane.b32.xlu0 %v5141, 56
      %v5803 = vpop.permute.xlu0 %5802
      %5804 = vrot.lane.b32.xlu0 %v5142, 56
      %v5805 = vpop.permute.xlu0 %5804
      %5806 = vrot.lane.b32.xlu0 %v5143, 56
      %v5807 = vpop.permute.xlu0 %5806
      %5808 = vrot.lane.b32.xlu0 %v5144, 56
      %v5809 = vpop.permute.xlu0 %5808
      %5810 = vrot.lane.b32.xlu0 %v5145, 56
      %v5811 = vpop.permute.xlu0 %5810
      %5812 = vrot.lane.b32.xlu0 %v5146, 56
      %v5813 = vpop.permute.xlu0 %5812
      %5814 = vrot.lane.b32.xlu0 %v5147, 56
      %v5815 = vpop.permute.xlu0 %5814
      %5816 = vrot.lane.b32.xlu0 %v5148, 56
      %v5817 = vpop.permute.xlu0 %5816
      %5818 = vrot.lane.b32.xlu0 %v5551, 56
      %v5819 = vpop.permute.xlu0 %5818
      %5820 = vrot.lane.b32.xlu0 %v5789, 56
      %v5821 = vpop.permute.xlu0 %5820
      %vm5838 = vcmask 523712
      %5839 = vst.msk [vmem:[#allocation4] sm:$0xff] %vm5838, %v5791
      %5840 = vst.msk [vmem:[#allocation4 + $0x18] sm:$0xff] %vm5838, %v5793
      %5841 = vst.msk [vmem:[#allocation4 + $0x30] sm:$0xff] %vm5838, %v5795
      %5842 = vst.msk [vmem:[#allocation4 + $0x48] sm:$0xff] %vm5838, %v5797
      %5843 = vst.msk [vmem:[#allocation4 + $0x60] sm:$0xff] %vm5838, %v5799
      %5844 = vst.msk [vmem:[#allocation4 + $0x78] sm:$0xff] %vm5838, %v5801
      %5845 = vst.msk [vmem:[#allocation4 + $0x90] sm:$0xff] %vm5838, %v5803
      %5846 = vst.msk [vmem:[#allocation4 + $0xa8] sm:$0xff] %vm5838, %v5805
      %5847 = vst.msk [vmem:[#allocation4 + $0xc0] sm:$0xff] %vm5838, %v5807
      %5848 = vst.msk [vmem:[#allocation4 + $0xd8] sm:$0xff] %vm5838, %v5809
      %5849 = vst.msk [vmem:[#allocation4 + $0xf0] sm:$0xff] %vm5838, %v5811
      %5850 = vst.msk [vmem:[#allocation4 + $0x108] sm:$0xff] %vm5838, %v5813
      %5851 = vst.msk [vmem:[#allocation4 + $0x120] sm:$0xff] %vm5838, %v5815
      %5852 = vst.msk [vmem:[#allocation4 + $0x138] sm:$0xff] %vm5838, %v5817
      %5853 = vst.msk [vmem:[#allocation4 + $0x150] sm:$0xff] %vm5838, %v5819
      %5854 = vst.msk [vmem:[#allocation4 + $0x168] sm:$0xff] %vm5838, %v5821
      %v5856 = vrot.slane %v4602, 5
      %v5857 = vrot.slane %v5856, 4
      %v5858 = vrot.slane %v4603, 5
      %v5859 = vsel %vm2932, %v5857, %v5858
      %v5860 = vrot.slane %v5858, 4
      %v5861 = vrot.slane %v4604, 5
      %v5862 = vsel %vm2932, %v5860, %v5861
      %v5863 = vunpack.c.l.b16 %v5859
      %v5864 = vunpack.c.l.b16 %v5862
      %v5865 = vpack.c.b16 %v5864, %v5863
      %5866 = vrot.lane.b32.xlu0 %v5376, 64
      %v5867 = vpop.permute.xlu0 %5866
      %5868 = vrot.lane.b32.xlu0 %v5377, 64
      %v5869 = vpop.permute.xlu0 %5868
      %5870 = vrot.lane.b32.xlu0 %v5378, 64
      %v5871 = vpop.permute.xlu0 %5870
      %5872 = vrot.lane.b32.xlu0 %v5379, 64
      %v5873 = vpop.permute.xlu0 %5872
      %5874 = vrot.lane.b32.xlu0 %v5380, 64
      %v5875 = vpop.permute.xlu0 %5874
      %5876 = vrot.lane.b32.xlu0 %v5381, 64
      %v5877 = vpop.permute.xlu0 %5876
      %5878 = vrot.lane.b32.xlu0 %v5382, 64
      %v5879 = vpop.permute.xlu0 %5878
      %5880 = vrot.lane.b32.xlu0 %v5383, 64
      %v5881 = vpop.permute.xlu0 %5880
      %5882 = vrot.lane.b32.xlu0 %v5384, 64
      %v5883 = vpop.permute.xlu0 %5882
      %5884 = vrot.lane.b32.xlu0 %v5385, 64
      %v5885 = vpop.permute.xlu0 %5884
      %5886 = vrot.lane.b32.xlu0 %v5386, 64
      %v5887 = vpop.permute.xlu0 %5886
      %5888 = vrot.lane.b32.xlu0 %v5387, 64
      %v5889 = vpop.permute.xlu0 %5888
      %5890 = vrot.lane.b32.xlu0 %v5388, 64
      %v5891 = vpop.permute.xlu0 %5890
      %5892 = vrot.lane.b32.xlu0 %v5389, 64
      %v5893 = vpop.permute.xlu0 %5892
      %5894 = vrot.lane.b32.xlu0 %v5627, 64
      %v5895 = vpop.permute.xlu0 %5894
      %5896 = vrot.lane.b32.xlu0 %v5865, 64
      %v5897 = vpop.permute.xlu0 %5896
      %vm5914 = vcmask 589312
      %5915 = vst.msk [vmem:[#allocation4] sm:$0xff] %vm5914, %v5867
      %5916 = vst.msk [vmem:[#allocation4 + $0x18] sm:$0xff] %vm5914, %v5869
      %5917 = vst.msk [vmem:[#allocation4 + $0x30] sm:$0xff] %vm5914, %v5871
      %5918 = vst.msk [vmem:[#allocation4 + $0x48] sm:$0xff] %vm5914, %v5873
      %5919 = vst.msk [vmem:[#allocation4 + $0x60] sm:$0xff] %vm5914, %v5875
      %5920 = vst.msk [vmem:[#allocation4 + $0x78] sm:$0xff] %vm5914, %v5877
      %5921 = vst.msk [vmem:[#allocation4 + $0x90] sm:$0xff] %vm5914, %v5879
      %5922 = vst.msk [vmem:[#allocation4 + $0xa8] sm:$0xff] %vm5914, %v5881
      %5923 = vst.msk [vmem:[#allocation4 + $0xc0] sm:$0xff] %vm5914, %v5883
      %5924 = vst.msk [vmem:[#allocation4 + $0xd8] sm:$0xff] %vm5914, %v5885
      %5925 = vst.msk [vmem:[#allocation4 + $0xf0] sm:$0xff] %vm5914, %v5887
      %5926 = vst.msk [vmem:[#allocation4 + $0x108] sm:$0xff] %vm5914, %v5889
      %5927 = vst.msk [vmem:[#allocation4 + $0x120] sm:$0xff] %vm5914, %v5891
      %5928 = vst.msk [vmem:[#allocation4 + $0x138] sm:$0xff] %vm5914, %v5893
      %5929 = vst.msk [vmem:[#allocation4 + $0x150] sm:$0xff] %vm5914, %v5895
      %5930 = vst.msk [vmem:[#allocation4 + $0x168] sm:$0xff] %vm5914, %v5897
      %v5931 = vld [vmem:[#allocation4] sm:$0xff]
      %v5932 = vld [vmem:[#allocation4 + $0x18] sm:$0xff]
      %v5933 = vld [vmem:[#allocation4 + $0x30] sm:$0xff]
      %v5934 = vld [vmem:[#allocation4 + $0x48] sm:$0xff]
      %v5935 = vld [vmem:[#allocation4 + $0x60] sm:$0xff]
      %v5936 = vld [vmem:[#allocation4 + $0x78] sm:$0xff]
      %v5937 = vld [vmem:[#allocation4 + $0x90] sm:$0xff]
      %v5938 = vld [vmem:[#allocation4 + $0xa8] sm:$0xff]
      %v5939 = vld [vmem:[#allocation4 + $0xc0] sm:$0xff]
      %v5940 = vld [vmem:[#allocation4 + $0xd8] sm:$0xff]
      %v5941 = vld [vmem:[#allocation4 + $0xf0] sm:$0xff]
      %v5942 = vld [vmem:[#allocation4 + $0x108] sm:$0xff]
      %v5943 = vld [vmem:[#allocation4 + $0x120] sm:$0xff]
      %v5944 = vld [vmem:[#allocation4 + $0x138] sm:$0xff]
      %v5945 = vld [vmem:[#allocation4 + $0x150] sm:$0xff]
      %v5946 = vld [vmem:[#allocation4 + $0x168] sm:$0xff]
      %v5947 = vld [vmem:[%s6] sm:$0xf]
      %v5948 = vld [vmem:[%s6 + $0x4] sm:$0xf]
      %v5949 = vld [vmem:[%s6 + $0x8] sm:$0xf]
      %v5950 = vld [vmem:[%s6 + $0xc] sm:$0xf]
      %v5951 = vld [vmem:[%s6 + $0x10] sm:$0xf]
      %v5952 = vld [vmem:[%s6 + $0x14] sm:$0xf]
      %v5953 = vld [vmem:[%s6 + $0x18] sm:$0xf]
      %v5954 = vld [vmem:[%s6 + $0x1c] sm:$0xf]
      %v5955 = vld [vmem:[%s6 + $0x20] sm:$0xf]
      %v5956 = vld [vmem:[%s9 + $0x4] sm:$0x1]
      %v5957 = vlaneseq
      %v5958 = vshrl.u32 %v5957, 7
      %v5959 = vsub.s32 0, %v5958
      %v5960 = vrot.slane %v5956, %v5959
      %v5970 = vunpack.c.l.b16 %v5947
      %v5971 = vunpack.c.l.b16 %v5948
      %v5972 = vunpack.c.l.b16 %v5949
      %v5973 = vunpack.c.l.b16 %v5950
      %v5974 = vunpack.c.l.b16 %v5951
      %v5975 = vunpack.c.l.b16 %v5952
      %v5976 = vunpack.c.l.b16 %v5953
      %v5977 = vunpack.c.l.b16 %v5954
      %v5978 = vunpack.c.l.b16 %v5955
      %v5979 = vpack.c.b16 %v5971, %v5970
      %v5980 = vpack.c.b16 %v5973, %v5972
      %v5981 = vpack.c.b16 %v5975, %v5974
      %v5982 = vpack.c.b16 %v5977, %v5976
      %v5983 = vpack.c.b16 %v5978, %v5978
      %vm5988 = vcmask 588800
      %v5990 = vsel %vm5988, %v5931, 0
      %v5993 = vsel %vm5988, %v5932, 0
      %v5996 = vsel %vm5988, %v5933, 0
      %v5999 = vsel %vm5988, %v5934, 0
      %v6002 = vsel %vm5988, %v5935, 0
      %v6005 = vsel %vm5988, %v5936, 0
      %v6008 = vsel %vm5988, %v5937, 0
      %v6011 = vsel %vm5988, %v5938, 0
      %v6014 = vsel %vm5988, %v5939, 0
      %v6017 = vsel %vm5988, %v5940, 0
      %v6020 = vsel %vm5988, %v5941, 0
      %v6023 = vsel %vm5988, %v5942, 0
      %v6026 = vsel %vm5988, %v5943, 0
      %v6029 = vsel %vm5988, %v5944, 0
      %v6032 = vsel %vm5988, %v5945, 0
      %v6035 = vsel %vm5988, %v5946, 0
      %v6038 = vsel %vm1413, %v5983, 0
      %6040 = vmatprep.subr.bf16.mxu0 0
      %6041 = vmatpush1.bf16.msra.mxu0 %v5979
      %6042 = vmatprep.subr.bf16.mxu0 0
      %6043 = vmatpush1.bf16.msra.mxu0 %v5980
      %6044 = vmatprep.subr.bf16.mxu0 0
      %6045 = vmatpush1.bf16.msra.mxu0 %v5981
      %6046 = vmatprep.subr.bf16.mxu0 0
      %6047 = vmatpush1.bf16.msra.mxu0 %v5982
      %6048 = vmatprep.subr.bf16.mxu0 0
      %6049 = vmatpush1.bf16.msra.mxu0 %v6038
      %6050 = vmatprep.subr.bf16.mxu0 0
      %6051 = vmatpush1.bf16.msra.mxu0 0
      %6052 = vmatprep.subr.bf16.mxu0 0
      %6053 = vmatpush1.bf16.msra.mxu0 0
      %6054 = vmatprep.subr.bf16.mxu0 0
      %6055 = vmatpush1.bf16.msra.mxu0 0
      %6056 = vmatprep.subr.bf16.mxu0 0
      %6057 = vmatpush1.bf16.msra.mxu0 0
      %6058 = vmatprep.subr.bf16.mxu0 0
      %6059 = vmatpush1.bf16.msra.mxu0 0
      %6060 = vmatprep.subr.bf16.mxu0 0
      %6061 = vmatpush1.bf16.msra.mxu0 0
      %6062 = vmatprep.subr.bf16.mxu0 0
      %6063 = vmatpush1.bf16.msra.mxu0 0
      %6064 = vmatprep.subr.bf16.mxu0 0
      %6065 = vmatpush1.bf16.msra.mxu0 0
      %6066 = vmatprep.subr.bf16.mxu0 0
      %6067 = vmatpush1.bf16.msra.mxu0 0
      %6068 = vmatprep.subr.bf16.mxu0 0
      %6069 = vmatpush1.bf16.msra.mxu0 0
      %6070 = vmatprep.subr.bf16.mxu0 0
      %6071 = vmatpush1.bf16.msra.mxu0 0
      %6072 = vmatprep.mubr.bf16.mxu0 0
      %6073 = vmatmul.mubr.bf16.gmra.mrb[0].mxu0 %v5990
      %v6074 = vpop.f32.mrb[0].mxu0
      %v6075 = vadd.f32 %v5960, %v6074
      %v6076 = vpop.f32.mrb[0].mxu0
      %v6077 = vpop.f32.mrb[0].mxu0
      %v6078 = vadd.f32 %v5960, %v6077
      %v6079 = vpop.f32.mrb[0].mxu0
      %6080 = vmatprep.mubr.bf16.mxu0 0
      %6081 = vmatmul.mubr.bf16.gmra.mrb[0].mxu0 %v5993
      %v6082 = vpop.f32.mrb[0].mxu0
      %v6083 = vadd.f32 %v5960, %v6082
      %v6084 = vpop.f32.mrb[0].mxu0
      %v6085 = vpop.f32.mrb[0].mxu0
      %v6086 = vadd.f32 %v5960, %v6085
      %v6087 = vpop.f32.mrb[0].mxu0
      %6088 = vmatprep.mubr.bf16.mxu0 0
      %6089 = vmatmul.mubr.bf16.gmra.mrb[0].mxu0 %v5996
      %v6090 = vpop.f32.mrb[0].mxu0
      %v6091 = vadd.f32 %v5960, %v6090
      %v6092 = vpop.f32.mrb[0].mxu0
      %v6093 = vpop.f32.mrb[0].mxu0
      %v6094 = vadd.f32 %v5960, %v6093
      %v6095 = vpop.f32.mrb[0].mxu0
      %6096 = vmatprep.mubr.bf16.mxu0 0
      %6097 = vmatmul.mubr.bf16.gmra.mrb[0].mxu0 %v5999
      %v6098 = vpop.f32.mrb[0].mxu0
      %v6099 = vadd.f32 %v5960, %v6098
      %v6100 = vpop.f32.mrb[0].mxu0
      %v6101 = vpop.f32.mrb[0].mxu0
      %v6102 = vadd.f32 %v5960, %v6101
      %v6103 = vpop.f32.mrb[0].mxu0
      %6104 = vmatprep.mubr.bf16.mxu0 0
      %6105 = vmatmul.mubr.bf16.gmra.mrb[0].mxu0 %v6002
      %v6106 = vpop.f32.mrb[0].mxu0
      %v6107 = vadd.f32 %v5960, %v6106
      %v6108 = vpop.f32.mrb[0].mxu0
      %v6109 = vpop.f32.mrb[0].mxu0
      %v6110 = vadd.f32 %v5960, %v6109
      %v6111 = vpop.f32.mrb[0].mxu0
      %6112 = vmatprep.mubr.bf16.mxu0 0
      %6113 = vmatmul.mubr.bf16.gmra.mrb[0].mxu0 %v6005
      %v6114 = vpop.f32.mrb[0].mxu0
      %v6115 = vadd.f32 %v5960, %v6114
      %v6116 = vpop.f32.mrb[0].mxu0
      %v6117 = vpop.f32.mrb[0].mxu0
      %v6118 = vadd.f32 %v5960, %v6117
      %v6119 = vpop.f32.mrb[0].mxu0
      %6120 = vmatprep.mubr.bf16.mxu0 0
      %6121 = vmatmul.mubr.bf16.gmra.mrb[0].mxu0 %v6008
      %v6122 = vpop.f32.mrb[0].mxu0
      %v6123 = vadd.f32 %v5960, %v6122
      %v6124 = vpop.f32.mrb[0].mxu0
      %v6125 = vpop.f32.mrb[0].mxu0
      %v6126 = vadd.f32 %v5960, %v6125
      %v6127 = vpop.f32.mrb[0].mxu0
      %6128 = vmatprep.mubr.bf16.mxu0 0
      %6129 = vmatmul.mubr.bf16.gmra.mrb[0].mxu0 %v6011
      %v6130 = vpop.f32.mrb[0].mxu0
      %v6131 = vadd.f32 %v5960, %v6130
      %v6132 = vpop.f32.mrb[0].mxu0
      %v6133 = vpop.f32.mrb[0].mxu0
      %v6134 = vadd.f32 %v5960, %v6133
      %v6135 = vpop.f32.mrb[0].mxu0
      %6136 = vmatprep.mubr.bf16.mxu0 0
      %6137 = vmatmul.mubr.bf16.gmra.mrb[0].mxu0 %v6014
      %v6138 = vpop.f32.mrb[0].mxu0
      %v6139 = vadd.f32 %v5960, %v6138
      %v6140 = vpop.f32.mrb[0].mxu0
      %v6141 = vpop.f32.mrb[0].mxu0
      %v6142 = vadd.f32 %v5960, %v6141
      %v6143 = vpop.f32.mrb[0].mxu0
      %6144 = vmatprep.mubr.bf16.mxu0 0
      %6145 = vmatmul.mubr.bf16.gmra.mrb[0].mxu0 %v6017
      %v6146 = vpop.f32.mrb[0].mxu0
      %v6147 = vadd.f32 %v5960, %v6146
      %v6148 = vpop.f32.mrb[0].mxu0
      %v6149 = vpop.f32.mrb[0].mxu0
      %v6150 = vadd.f32 %v5960, %v6149
      %v6151 = vpop.f32.mrb[0].mxu0
      %6152 = vmatprep.mubr.bf16.mxu0 0
      %6153 = vmatmul.mubr.bf16.gmra.mrb[0].mxu0 %v6020
      %v6154 = vpop.f32.mrb[0].mxu0
      %v6155 = vadd.f32 %v5960, %v6154
      %v6156 = vpop.f32.mrb[0].mxu0
      %v6157 = vpop.f32.mrb[0].mxu0
      %v6158 = vadd.f32 %v5960, %v6157
      %v6159 = vpop.f32.mrb[0].mxu0
      %6160 = vmatprep.mubr.bf16.mxu0 0
      %6161 = vmatmul.mubr.bf16.gmra.mrb[0].mxu0 %v6023
      %v6162 = vpop.f32.mrb[0].mxu0
      %v6163 = vadd.f32 %v5960, %v6162
      %v6164 = vpop.f32.mrb[0].mxu0
      %v6165 = vpop.f32.mrb[0].mxu0
      %v6166 = vadd.f32 %v5960, %v6165
      %v6167 = vpop.f32.mrb[0].mxu0
      %6168 = vmatprep.mubr.bf16.mxu0 0
      %6169 = vmatmul.mubr.bf16.gmra.mrb[0].mxu0 %v6026
      %v6170 = vpop.f32.mrb[0].mxu0
      %v6171 = vadd.f32 %v5960, %v6170
      %v6172 = vpop.f32.mrb[0].mxu0
      %v6173 = vpop.f32.mrb[0].mxu0
      %v6174 = vadd.f32 %v5960, %v6173
      %v6175 = vpop.f32.mrb[0].mxu0
      %6176 = vmatprep.mubr.bf16.mxu0 0
      %6177 = vmatmul.mubr.bf16.gmra.mrb[0].mxu0 %v6029
      %v6178 = vpop.f32.mrb[0].mxu0
      %v6179 = vadd.f32 %v5960, %v6178
      %v6180 = vpop.f32.mrb[0].mxu0
      %v6181 = vpop.f32.mrb[0].mxu0
      %v6182 = vadd.f32 %v5960, %v6181
      %v6183 = vpop.f32.mrb[0].mxu0
      %6184 = vmatprep.mubr.bf16.mxu0 0
      %6185 = vmatmul.mubr.bf16.gmra.mrb[0].mxu0 %v6032
      %v6186 = vpop.f32.mrb[0].mxu0
      %v6187 = vadd.f32 %v5960, %v6186
      %v6188 = vpop.f32.mrb[0].mxu0
      %v6189 = vpop.f32.mrb[0].mxu0
      %v6190 = vadd.f32 %v5960, %v6189
      %v6191 = vpop.f32.mrb[0].mxu0
      %6192 = vmatprep.mubr.bf16.mxu0 0
      %6193 = vmatmul.mubr.bf16.gmra.mrb[0].mxu0 %v6035
      %v6194 = vpop.f32.mrb[0].mxu0
      %v6195 = vadd.f32 %v5960, %v6194
      %v6196 = vpop.f32.mrb[0].mxu0
      %v6197 = vpop.f32.mrb[0].mxu0
      %v6198 = vadd.f32 %v5960, %v6197
      %v6199 = vpop.f32.mrb[0].mxu0
      %6200 = vdwg.mxu0
      %vm6201 = vcmp.gt.f32.partialorder %v6075, 0.0
      %vm6202 = vcmp.gt.f32.partialorder %v6078, 0.0
      %vm6203 = vcmp.gt.f32.partialorder %v6083, 0.0
      %vm6204 = vcmp.gt.f32.partialorder %v6086, 0.0
      %vm6205 = vcmp.gt.f32.partialorder %v6091, 0.0
      %vm6206 = vcmp.gt.f32.partialorder %v6094, 0.0
      %vm6207 = vcmp.gt.f32.partialorder %v6099, 0.0
      %vm6208 = vcmp.gt.f32.partialorder %v6102, 0.0
      %vm6209 = vcmp.gt.f32.partialorder %v6107, 0.0
      %vm6210 = vcmp.gt.f32.partialorder %v6110, 0.0
      %vm6211 = vcmp.gt.f32.partialorder %v6115, 0.0
      %vm6212 = vcmp.gt.f32.partialorder %v6118, 0.0
      %vm6213 = vcmp.gt.f32.partialorder %v6123, 0.0
      %vm6214 = vcmp.gt.f32.partialorder %v6126, 0.0
      %vm6215 = vcmp.gt.f32.partialorder %v6131, 0.0
      %vm6216 = vcmp.gt.f32.partialorder %v6134, 0.0
      %vm6217 = vcmp.gt.f32.partialorder %v6139, 0.0
      %vm6218 = vcmp.gt.f32.partialorder %v6142, 0.0
      %vm6219 = vcmp.gt.f32.partialorder %v6147, 0.0
      %vm6220 = vcmp.gt.f32.partialorder %v6150, 0.0
      %vm6221 = vcmp.gt.f32.partialorder %v6155, 0.0
      %vm6222 = vcmp.gt.f32.partialorder %v6158, 0.0
      %vm6223 = vcmp.gt.f32.partialorder %v6163, 0.0
      %vm6224 = vcmp.gt.f32.partialorder %v6166, 0.0
      %vm6225 = vcmp.gt.f32.partialorder %v6171, 0.0
      %vm6226 = vcmp.gt.f32.partialorder %v6174, 0.0
      %vm6227 = vcmp.gt.f32.partialorder %v6179, 0.0
      %vm6228 = vcmp.gt.f32.partialorder %v6182, 0.0
      %vm6229 = vcmp.gt.f32.partialorder %v6187, 0.0
      %vm6230 = vcmp.gt.f32.partialorder %v6190, 0.0
      %vm6231 = vcmp.gt.f32.partialorder %v6195, 0.0
      %vm6232 = vcmp.gt.f32.partialorder %v6198, 0.0
      %v6233 = vld [vmem:[%s9 + $0x5] sm:$0x1]
      %v6234 = vlaneseq
      %v6235 = vshrl.u32 %v6234, 7
      %v6236 = vsub.s32 0, %v6235
      %v6237 = vrot.slane %v6233, %v6236
      %v6238 = vmul.f32 %v6237, %v6075
      %v6239 = vmul.f32 %v6237, %v6078
      %v6240 = vmul.f32 %v6237, %v6083
      %v6241 = vmul.f32 %v6237, %v6086
      %v6242 = vmul.f32 %v6237, %v6091
      %v6243 = vmul.f32 %v6237, %v6094
      %v6244 = vmul.f32 %v6237, %v6099
      %v6245 = vmul.f32 %v6237, %v6102
      %v6246 = vmul.f32 %v6237, %v6107
      %v6247 = vmul.f32 %v6237, %v6110
      %v6248 = vmul.f32 %v6237, %v6115
      %v6249 = vmul.f32 %v6237, %v6118
      %v6250 = vmul.f32 %v6237, %v6123
      %v6251 = vmul.f32 %v6237, %v6126
      %v6252 = vmul.f32 %v6237, %v6131
      %v6253 = vmul.f32 %v6237, %v6134
      %v6254 = vmul.f32 %v6237, %v6139
      %v6255 = vmul.f32 %v6237, %v6142
      %v6256 = vmul.f32 %v6237, %v6147
      %v6257 = vmul.f32 %v6237, %v6150
      %v6258 = vmul.f32 %v6237, %v6155
      %v6259 = vmul.f32 %v6237, %v6158
      %v6260 = vmul.f32 %v6237, %v6163
      %v6261 = vmul.f32 %v6237, %v6166
      %v6262 = vmul.f32 %v6237, %v6171
      %v6263 = vmul.f32 %v6237, %v6174
      %v6264 = vmul.f32 %v6237, %v6179
      %v6265 = vmul.f32 %v6237, %v6182
      %v6266 = vmul.f32 %v6237, %v6187
      %v6267 = vmul.f32 %v6237, %v6190
      %v6268 = vmul.f32 %v6237, %v6195
      %v6269 = vmul.f32 %v6237, %v6198
      %v6270 = vsel %vm6201, %v6075, %v6238
      %v6271 = vsel %vm6202, %v6078, %v6239
      %v6272 = vsel %vm6203, %v6083, %v6240
      %v6273 = vsel %vm6204, %v6086, %v6241
      %v6274 = vsel %vm6205, %v6091, %v6242
      %v6275 = vsel %vm6206, %v6094, %v6243
      %v6276 = vsel %vm6207, %v6099, %v6244
      %v6277 = vsel %vm6208, %v6102, %v6245
      %v6278 = vsel %vm6209, %v6107, %v6246
      %v6279 = vsel %vm6210, %v6110, %v6247
      %v6280 = vsel %vm6211, %v6115, %v6248
      %v6281 = vsel %vm6212, %v6118, %v6249
      %v6282 = vsel %vm6213, %v6123, %v6250
      %v6283 = vsel %vm6214, %v6126, %v6251
      %v6284 = vsel %vm6215, %v6131, %v6252
      %v6285 = vsel %vm6216, %v6134, %v6253
      %v6286 = vsel %vm6217, %v6139, %v6254
      %v6287 = vsel %vm6218, %v6142, %v6255
      %v6288 = vsel %vm6219, %v6147, %v6256
      %v6289 = vsel %vm6220, %v6150, %v6257
      %v6290 = vsel %vm6221, %v6155, %v6258
      %v6291 = vsel %vm6222, %v6158, %v6259
      %v6292 = vsel %vm6223, %v6163, %v6260
      %v6293 = vsel %vm6224, %v6166, %v6261
      %v6294 = vsel %vm6225, %v6171, %v6262
      %v6295 = vsel %vm6226, %v6174, %v6263
      %v6296 = vsel %vm6227, %v6179, %v6264
      %v6297 = vsel %vm6228, %v6182, %v6265
      %v6298 = vsel %vm6229, %v6187, %v6266
      %v6299 = vsel %vm6230, %v6190, %v6267
      %v6300 = vsel %vm6231, %v6195, %v6268
      %v6301 = vsel %vm6232, %v6198, %v6269
      %v6302 = vld [vmem:[%s7] sm:$0xf]
      %v6303 = vld [vmem:[%s9 + $0x6] sm:$0x1]
      %v6304 = vlaneseq
      %v6305 = vshrl.u32 %v6304, 7
      %v6306 = vsub.s32 0, %v6305
      %v6307 = vrot.slane %v6303, %v6306
      %6308 = vrot.lane.b32.xlu0 %v4020, 120
      %v6309 = vpop.permute.xlu0 %6308
      %6310 = vrot.lane.b32.xlu0 %v4021, 120
      %v6311 = vpop.permute.xlu0 %6310
      %6312 = vrot.lane.b32.xlu0 %v4022, 120
      %v6313 = vpop.permute.xlu0 %6312
      %6314 = vrot.lane.b32.xlu0 %v4023, 120
      %v6315 = vpop.permute.xlu0 %6314
      %6316 = vrot.lane.b32.xlu0 %v4024, 120
      %v6317 = vpop.permute.xlu0 %6316
      %6318 = vrot.lane.b32.xlu0 %v4025, 120
      %v6319 = vpop.permute.xlu0 %6318
      %6320 = vrot.lane.b32.xlu0 %v4026, 120
      %v6321 = vpop.permute.xlu0 %6320
      %6322 = vrot.lane.b32.xlu0 %v4027, 120
      %v6323 = vpop.permute.xlu0 %6322
      %6324 = vrot.lane.b32.xlu0 %v4028, 120
      %v6325 = vpop.permute.xlu0 %6324
      %6326 = vrot.lane.b32.xlu0 %v4029, 120
      %v6327 = vpop.permute.xlu0 %6326
      %6328 = vrot.lane.b32.xlu0 %v4030, 120
      %v6329 = vpop.permute.xlu0 %6328
      %6330 = vrot.lane.b32.xlu0 %v4031, 120
      %v6331 = vpop.permute.xlu0 %6330
      %6332 = vrot.lane.b32.xlu0 %v4032, 120
      %v6333 = vpop.permute.xlu0 %6332
      %6334 = vrot.lane.b32.xlu0 %v4033, 120
      %v6335 = vpop.permute.xlu0 %6334
      %6336 = vrot.lane.b32.xlu0 %v4034, 120
      %v6337 = vpop.permute.xlu0 %6336
      %6338 = vrot.lane.b32.xlu0 %v4035, 120
      %v6339 = vpop.permute.xlu0 %6338
      %v6341 = vsel %vm1364, %v6309, 0
      %v6344 = vsel %vm1364, %v6311, 0
      %v6347 = vsel %vm1364, %v6313, 0
      %v6350 = vsel %vm1364, %v6315, 0
      %v6353 = vsel %vm1364, %v6317, 0
      %v6356 = vsel %vm1364, %v6319, 0
      %v6359 = vsel %vm1364, %v6321, 0
      %v6362 = vsel %vm1364, %v6323, 0
      %v6365 = vsel %vm1364, %v6325, 0
      %v6368 = vsel %vm1364, %v6327, 0
      %v6371 = vsel %vm1364, %v6329, 0
      %v6374 = vsel %vm1364, %v6331, 0
      %v6377 = vsel %vm1364, %v6333, 0
      %v6380 = vsel %vm1364, %v6335, 0
      %v6383 = vsel %vm1364, %v6337, 0
      %v6386 = vsel %vm1364, %v6339, 0
      %v6389 = vsel %vm1413, %v6302, 0
      %6391 = vmatprep.subr.bf16.mxu0 0
      %6392 = vmatpush1.bf16.msra.mxu0 %v6389
      %6393 = vmatprep.subr.bf16.mxu0 0
      %6394 = vmatpush1.bf16.msra.mxu0 0
      %6395 = vmatprep.subr.bf16.mxu0 0
      %6396 = vmatpush1.bf16.msra.mxu0 0
      %6397 = vmatprep.subr.bf16.mxu0 0
      %6398 = vmatpush1.bf16.msra.mxu0 0
      %6399 = vmatprep.subr.bf16.mxu0 0
      %6400 = vmatpush1.bf16.msra.mxu0 0
      %6401 = vmatprep.subr.bf16.mxu0 0
      %6402 = vmatpush1.bf16.msra.mxu0 0
      %6403 = vmatprep.subr.bf16.mxu0 0
      %6404 = vmatpush1.bf16.msra.mxu0 0
      %6405 = vmatprep.subr.bf16.mxu0 0
      %6406 = vmatpush1.bf16.msra.mxu0 0
      %6407 = vmatprep.subr.bf16.mxu0 0
      %6408 = vmatpush1.bf16.msra.mxu0 0
      %6409 = vmatprep.subr.bf16.mxu0 0
      %6410 = vmatpush1.bf16.msra.mxu0 0
      %6411 = vmatprep.subr.bf16.mxu0 0
      %6412 = vmatpush1.bf16.msra.mxu0 0
      %6413 = vmatprep.subr.bf16.mxu0 0
      %6414 = vmatpush1.bf16.msra.mxu0 0
      %6415 = vmatprep.subr.bf16.mxu0 0
      %6416 = vmatpush1.bf16.msra.mxu0 0
      %6417 = vmatprep.subr.bf16.mxu0 0
      %6418 = vmatpush1.bf16.msra.mxu0 0
      %6419 = vmatprep.subr.bf16.mxu0 0
      %6420 = vmatpush1.bf16.msra.mxu0 0
      %6421 = vmatprep.subr.bf16.mxu0 0
      %6422 = vmatpush1.bf16.msra.mxu0 0
      %6423 = vmatprep.mubr.bf16.mxu0 0
      %6424 = vmatmul.mubr.bf16.gmra.mrb[0].mxu0 %v6341
      %v6425 = vpop.f32.mrb[0].mxu0
      %v6426 = vadd.f32 %v6307, %v6425
      %v6427 = vpop.f32.mrb[0].mxu0
      %v6428 = vpop.f32.mrb[0].mxu0
      %v6429 = vadd.f32 %v6307, %v6428
      %v6430 = vpop.f32.mrb[0].mxu0
      %6431 = vmatprep.mubr.bf16.mxu0 0
      %6432 = vmatmul.mubr.bf16.gmra.mrb[0].mxu0 %v6344
      %v6433 = vpop.f32.mrb[0].mxu0
      %v6434 = vadd.f32 %v6307, %v6433
      %v6435 = vpop.f32.mrb[0].mxu0
      %v6436 = vpop.f32.mrb[0].mxu0
      %v6437 = vadd.f32 %v6307, %v6436
      %v6438 = vpop.f32.mrb[0].mxu0
      %6439 = vmatprep.mubr.bf16.mxu0 0
      %6440 = vmatmul.mubr.bf16.gmra.mrb[0].mxu0 %v6347
      %v6441 = vpop.f32.mrb[0].mxu0
      %v6442 = vadd.f32 %v6307, %v6441
      %v6443 = vpop.f32.mrb[0].mxu0
      %v6444 = vpop.f32.mrb[0].mxu0
      %v6445 = vadd.f32 %v6307, %v6444
      %v6446 = vpop.f32.mrb[0].mxu0
      %6447 = vmatprep.mubr.bf16.mxu0 0
      %6448 = vmatmul.mubr.bf16.gmra.mrb[0].mxu0 %v6350
      %v6449 = vpop.f32.mrb[0].mxu0
      %v6450 = vadd.f32 %v6307, %v6449
      %v6451 = vpop.f32.mrb[0].mxu0
      %v6452 = vpop.f32.mrb[0].mxu0
      %v6453 = vadd.f32 %v6307, %v6452
      %v6454 = vpop.f32.mrb[0].mxu0
      %6455 = vmatprep.mubr.bf16.mxu0 0
      %6456 = vmatmul.mubr.bf16.gmra.mrb[0].mxu0 %v6353
      %v6457 = vpop.f32.mrb[0].mxu0
      %v6458 = vadd.f32 %v6307, %v6457
      %v6459 = vpop.f32.mrb[0].mxu0
      %v6460 = vpop.f32.mrb[0].mxu0
      %v6461 = vadd.f32 %v6307, %v6460
      %v6462 = vpop.f32.mrb[0].mxu0
      %6463 = vmatprep.mubr.bf16.mxu0 0
      %6464 = vmatmul.mubr.bf16.gmra.mrb[0].mxu0 %v6356
      %v6465 = vpop.f32.mrb[0].mxu0
      %v6466 = vadd.f32 %v6307, %v6465
      %v6467 = vpop.f32.mrb[0].mxu0
      %v6468 = vpop.f32.mrb[0].mxu0
      %v6469 = vadd.f32 %v6307, %v6468
      %v6470 = vpop.f32.mrb[0].mxu0
      %6471 = vmatprep.mubr.bf16.mxu0 0
      %6472 = vmatmul.mubr.bf16.gmra.mrb[0].mxu0 %v6359
      %v6473 = vpop.f32.mrb[0].mxu0
      %v6474 = vadd.f32 %v6307, %v6473
      %v6475 = vpop.f32.mrb[0].mxu0
      %v6476 = vpop.f32.mrb[0].mxu0
      %v6477 = vadd.f32 %v6307, %v6476
      %v6478 = vpop.f32.mrb[0].mxu0
      %6479 = vmatprep.mubr.bf16.mxu0 0
      %6480 = vmatmul.mubr.bf16.gmra.mrb[0].mxu0 %v6362
      %v6481 = vpop.f32.mrb[0].mxu0
      %v6482 = vadd.f32 %v6307, %v6481
      %v6483 = vpop.f32.mrb[0].mxu0
      %v6484 = vpop.f32.mrb[0].mxu0
      %v6485 = vadd.f32 %v6307, %v6484
      %v6486 = vpop.f32.mrb[0].mxu0
      %6487 = vmatprep.mubr.bf16.mxu0 0
      %6488 = vmatmul.mubr.bf16.gmra.mrb[0].mxu0 %v6365
      %v6489 = vpop.f32.mrb[0].mxu0
      %v6490 = vadd.f32 %v6307, %v6489
      %v6491 = vpop.f32.mrb[0].mxu0
      %v6492 = vpop.f32.mrb[0].mxu0
      %v6493 = vadd.f32 %v6307, %v6492
      %v6494 = vpop.f32.mrb[0].mxu0
      %6495 = vmatprep.mubr.bf16.mxu0 0
      %6496 = vmatmul.mubr.bf16.gmra.mrb[0].mxu0 %v6368
      %v6497 = vpop.f32.mrb[0].mxu0
      %v6498 = vadd.f32 %v6307, %v6497
      %v6499 = vpop.f32.mrb[0].mxu0
      %v6500 = vpop.f32.mrb[0].mxu0
      %v6501 = vadd.f32 %v6307, %v6500
      %v6502 = vpop.f32.mrb[0].mxu0
      %6503 = vmatprep.mubr.bf16.mxu0 0
      %6504 = vmatmul.mubr.bf16.gmra.mrb[0].mxu0 %v6371
      %v6505 = vpop.f32.mrb[0].mxu0
      %v6506 = vadd.f32 %v6307, %v6505
      %v6507 = vpop.f32.mrb[0].mxu0
      %v6508 = vpop.f32.mrb[0].mxu0
      %v6509 = vadd.f32 %v6307, %v6508
      %v6510 = vpop.f32.mrb[0].mxu0
      %6511 = vmatprep.mubr.bf16.mxu0 0
      %6512 = vmatmul.mubr.bf16.gmra.mrb[0].mxu0 %v6374
      %v6513 = vpop.f32.mrb[0].mxu0
      %v6514 = vadd.f32 %v6307, %v6513
      %v6515 = vpop.f32.mrb[0].mxu0
      %v6516 = vpop.f32.mrb[0].mxu0
      %v6517 = vadd.f32 %v6307, %v6516
      %v6518 = vpop.f32.mrb[0].mxu0
      %6519 = vmatprep.mubr.bf16.mxu0 0
      %6520 = vmatmul.mubr.bf16.gmra.mrb[0].mxu0 %v6377
      %v6521 = vpop.f32.mrb[0].mxu0
      %v6522 = vadd.f32 %v6307, %v6521
      %v6523 = vpop.f32.mrb[0].mxu0
      %v6524 = vpop.f32.mrb[0].mxu0
      %v6525 = vadd.f32 %v6307, %v6524
      %v6526 = vpop.f32.mrb[0].mxu0
      %6527 = vmatprep.mubr.bf16.mxu0 0
      %6528 = vmatmul.mubr.bf16.gmra.mrb[0].mxu0 %v6380
      %v6529 = vpop.f32.mrb[0].mxu0
      %v6530 = vadd.f32 %v6307, %v6529
      %v6531 = vpop.f32.mrb[0].mxu0
      %v6532 = vpop.f32.mrb[0].mxu0
      %v6533 = vadd.f32 %v6307, %v6532
      %v6534 = vpop.f32.mrb[0].mxu0
      %6535 = vmatprep.mubr.bf16.mxu0 0
      %6536 = vmatmul.mubr.bf16.gmra.mrb[0].mxu0 %v6383
      %v6537 = vpop.f32.mrb[0].mxu0
      %v6538 = vadd.f32 %v6307, %v6537
      %v6539 = vpop.f32.mrb[0].mxu0
      %v6540 = vpop.f32.mrb[0].mxu0
      %v6541 = vadd.f32 %v6307, %v6540
      %v6542 = vpop.f32.mrb[0].mxu0
      %6543 = vmatprep.mubr.bf16.mxu0 0
      %6544 = vmatmul.mubr.bf16.gmra.mrb[0].mxu0 %v6386
      %v6545 = vpop.f32.mrb[0].mxu0
      %v6546 = vadd.f32 %v6307, %v6545
      %v6547 = vpop.f32.mrb[0].mxu0
      %v6548 = vpop.f32.mrb[0].mxu0
      %v6549 = vadd.f32 %v6307, %v6548
      %v6550 = vpop.f32.mrb[0].mxu0
      %6551 = vdwg.mxu0
      %v6552 = vsub.f32 0.0, %v6426
      %v6553 = vsub.f32 0.0, %v6429
      %v6554 = vsub.f32 0.0, %v6434
      %v6555 = vsub.f32 0.0, %v6437
      %v6556 = vsub.f32 0.0, %v6442
      %v6557 = vsub.f32 0.0, %v6445
      %v6558 = vsub.f32 0.0, %v6450
      %v6559 = vsub.f32 0.0, %v6453
      %v6560 = vsub.f32 0.0, %v6458
      %v6561 = vsub.f32 0.0, %v6461
      %v6562 = vsub.f32 0.0, %v6466
      %v6563 = vsub.f32 0.0, %v6469
      %v6564 = vsub.f32 0.0, %v6474
      %v6565 = vsub.f32 0.0, %v6477
      %v6566 = vsub.f32 0.0, %v6482
      %v6567 = vsub.f32 0.0, %v6485
      %v6568 = vsub.f32 0.0, %v6490
      %v6569 = vsub.f32 0.0, %v6493
      %v6570 = vsub.f32 0.0, %v6498
      %v6571 = vsub.f32 0.0, %v6501
      %v6572 = vsub.f32 0.0, %v6506
      %v6573 = vsub.f32 0.0, %v6509
      %v6574 = vsub.f32 0.0, %v6514
      %v6575 = vsub.f32 0.0, %v6517
      %v6576 = vsub.f32 0.0, %v6522
      %v6577 = vsub.f32 0.0, %v6525
      %v6578 = vsub.f32 0.0, %v6530
      %v6579 = vsub.f32 0.0, %v6533
      %v6580 = vsub.f32 0.0, %v6538
      %v6581 = vsub.f32 0.0, %v6541
      %v6582 = vsub.f32 0.0, %v6546
      %v6583 = vsub.f32 0.0, %v6549
      %v6584 = vmul.f32 %v6552, 1.442695
      %v6585 = vpow.pop %v6584
      %v6586 = vmul.f32 %v6553, 1.442695
      %v6587 = vpow.pop %v6586
      %v6588 = vmul.f32 %v6554, 1.442695
      %v6589 = vpow.pop %v6588
      %v6590 = vmul.f32 %v6555, 1.442695
      %v6591 = vpow.pop %v6590
      %v6592 = vmul.f32 %v6556, 1.442695
      %v6593 = vpow.pop %v6592
      %v6594 = vmul.f32 %v6557, 1.442695
      %v6595 = vpow.pop %v6594
      %v6596 = vmul.f32 %v6558, 1.442695
      %v6597 = vpow.pop %v6596
      %v6598 = vmul.f32 %v6559, 1.442695
      %v6599 = vpow.pop %v6598
      %v6600 = vmul.f32 %v6560, 1.442695
      %v6601 = vpow.pop %v6600
      %v6602 = vmul.f32 %v6561, 1.442695
      %v6603 = vpow.pop %v6602
      %v6604 = vmul.f32 %v6562, 1.442695
      %v6605 = vpow.pop %v6604
      %v6606 = vmul.f32 %v6563, 1.442695
      %v6607 = vpow.pop %v6606
      %v6608 = vmul.f32 %v6564, 1.442695
      %v6609 = vpow.pop %v6608
      %v6610 = vmul.f32 %v6565, 1.442695
      %v6611 = vpow.pop %v6610
      %v6612 = vmul.f32 %v6566, 1.442695
      %v6613 = vpow.pop %v6612
      %v6614 = vmul.f32 %v6567, 1.442695
      %v6615 = vpow.pop %v6614
      %v6616 = vmul.f32 %v6568, 1.442695
      %v6617 = vpow.pop %v6616
      %v6618 = vmul.f32 %v6569, 1.442695
      %v6619 = vpow.pop %v6618
      %v6620 = vmul.f32 %v6570, 1.442695
      %v6621 = vpow.pop %v6620
      %v6622 = vmul.f32 %v6571, 1.442695
      %v6623 = vpow.pop %v6622
      %v6624 = vmul.f32 %v6572, 1.442695
      %v6625 = vpow.pop %v6624
      %v6626 = vmul.f32 %v6573, 1.442695
      %v6627 = vpow.pop %v6626
      %v6628 = vmul.f32 %v6574, 1.442695
      %v6629 = vpow.pop %v6628
      %v6630 = vmul.f32 %v6575, 1.442695
      %v6631 = vpow.pop %v6630
      %v6632 = vmul.f32 %v6576, 1.442695
      %v6633 = vpow.pop %v6632
      %v6634 = vmul.f32 %v6577, 1.442695
      %v6635 = vpow.pop %v6634
      %v6636 = vmul.f32 %v6578, 1.442695
      %v6637 = vpow.pop %v6636
      %v6638 = vmul.f32 %v6579, 1.442695
      %v6639 = vpow.pop %v6638
      %v6640 = vmul.f32 %v6580, 1.442695
      %v6641 = vpow.pop %v6640
      %v6642 = vmul.f32 %v6581, 1.442695
      %v6643 = vpow.pop %v6642
      %v6644 = vmul.f32 %v6582, 1.442695
      %v6645 = vpow.pop %v6644
      %v6646 = vmul.f32 %v6583, 1.442695
      %v6647 = vpow.pop %v6646
      %v6648 = vadd.f32 %v6585, 1.0
      %v6649 = vadd.f32 %v6587, 1.0
      %v6650 = vadd.f32 %v6589, 1.0
      %v6651 = vadd.f32 %v6591, 1.0
      %v6652 = vadd.f32 %v6593, 1.0
      %v6653 = vadd.f32 %v6595, 1.0
      %v6654 = vadd.f32 %v6597, 1.0
      %v6655 = vadd.f32 %v6599, 1.0
      %v6656 = vadd.f32 %v6601, 1.0
      %v6657 = vadd.f32 %v6603, 1.0
      %v6658 = vadd.f32 %v6605, 1.0
      %v6659 = vadd.f32 %v6607, 1.0
      %v6660 = vadd.f32 %v6609, 1.0
      %v6661 = vadd.f32 %v6611, 1.0
      %v6662 = vadd.f32 %v6613, 1.0
      %v6663 = vadd.f32 %v6615, 1.0
      %v6664 = vadd.f32 %v6617, 1.0
      %v6665 = vadd.f32 %v6619, 1.0
      %v6666 = vadd.f32 %v6621, 1.0
      %v6667 = vadd.f32 %v6623, 1.0
      %v6668 = vadd.f32 %v6625, 1.0
      %v6669 = vadd.f32 %v6627, 1.0
      %v6670 = vadd.f32 %v6629, 1.0
      %v6671 = vadd.f32 %v6631, 1.0
      %v6672 = vadd.f32 %v6633, 1.0
      %v6673 = vadd.f32 %v6635, 1.0
      %v6674 = vadd.f32 %v6637, 1.0
      %v6675 = vadd.f32 %v6639, 1.0
      %v6676 = vadd.f32 %v6641, 1.0
      %v6677 = vadd.f32 %v6643, 1.0
      %v6678 = vadd.f32 %v6645, 1.0
      %v6679 = vadd.f32 %v6647, 1.0
      %v6680 = vrcp.pop %v6648
      %v6681 = vrcp.pop %v6649
      %v6682 = vrcp.pop %v6650
      %v6683 = vrcp.pop %v6651
      %v6684 = vrcp.pop %v6652
      %v6685 = vrcp.pop %v6653
      %v6686 = vrcp.pop %v6654
      %v6687 = vrcp.pop %v6655
      %v6688 = vrcp.pop %v6656
      %v6689 = vrcp.pop %v6657
      %v6690 = vrcp.pop %v6658
      %v6691 = vrcp.pop %v6659
      %v6692 = vrcp.pop %v6660
      %v6693 = vrcp.pop %v6661
      %v6694 = vrcp.pop %v6662
      %v6695 = vrcp.pop %v6663
      %v6696 = vrcp.pop %v6664
      %v6697 = vrcp.pop %v6665
      %v6698 = vrcp.pop %v6666
      %v6699 = vrcp.pop %v6667
      %v6700 = vrcp.pop %v6668
      %v6701 = vrcp.pop %v6669
      %v6702 = vrcp.pop %v6670
      %v6703 = vrcp.pop %v6671
      %v6704 = vrcp.pop %v6672
      %v6705 = vrcp.pop %v6673
      %v6706 = vrcp.pop %v6674
      %v6707 = vrcp.pop %v6675
      %v6708 = vrcp.pop %v6676
      %v6709 = vrcp.pop %v6677
      %v6710 = vrcp.pop %v6678
      %v6711 = vrcp.pop %v6679
      %v6712 = vmul.f32 %v6270, %v1214
      %v6713 = vmul.f32 %v6271, %v1215
      %v6714 = vmul.f32 %v6272, %v1216
      %v6715 = vmul.f32 %v6273, %v1217
      %v6716 = vmul.f32 %v6274, %v1218
      %v6717 = vmul.f32 %v6275, %v1219
      %v6718 = vmul.f32 %v6276, %v1220
      %v6719 = vmul.f32 %v6277, %v1221
      %v6720 = vmul.f32 %v6278, %v1222
      %v6721 = vmul.f32 %v6279, %v1223
      %v6722 = vmul.f32 %v6280, %v1224
      %v6723 = vmul.f32 %v6281, %v1225
      %v6724 = vmul.f32 %v6282, %v1226
      %v6725 = vmul.f32 %v6283, %v1227
      %v6726 = vmul.f32 %v6284, %v1228
      %v6727 = vmul.f32 %v6285, %v1229
      %v6728 = vmul.f32 %v6286, %v1230
      %v6729 = vmul.f32 %v6287, %v1231
      %v6730 = vmul.f32 %v6288, %v1232
      %v6731 = vmul.f32 %v6289, %v1233
      %v6732 = vmul.f32 %v6290, %v1234
      %v6733 = vmul.f32 %v6291, %v1235
      %v6734 = vmul.f32 %v6292, %v1236
      %v6735 = vmul.f32 %v6293, %v1237
      %v6736 = vmul.f32 %v6294, %v1238
      %v6737 = vmul.f32 %v6295, %v1239
      %v6738 = vmul.f32 %v6296, %v1240
      %v6739 = vmul.f32 %v6297, %v1241
      %v6740 = vmul.f32 %v6298, %v1242
      %v6741 = vmul.f32 %v6299, %v1243
      %v6742 = vmul.f32 %v6300, %v1244
      %v6743 = vmul.f32 %v6301, %v1245
      %v6744 = vpack.c.bf16 %v6713, %v6712
      %v6745 = vpack.c.bf16 %v6715, %v6714
      %v6746 = vpack.c.bf16 %v6717, %v6716
      %v6747 = vpack.c.bf16 %v6719, %v6718
      %v6748 = vpack.c.bf16 %v6721, %v6720
      %v6749 = vpack.c.bf16 %v6723, %v6722
      %v6750 = vpack.c.bf16 %v6725, %v6724
      %v6751 = vpack.c.bf16 %v6727, %v6726
      %v6752 = vpack.c.bf16 %v6729, %v6728
      %v6753 = vpack.c.bf16 %v6731, %v6730
      %v6754 = vpack.c.bf16 %v6733, %v6732
      %v6755 = vpack.c.bf16 %v6735, %v6734
      %v6756 = vpack.c.bf16 %v6737, %v6736
      %v6757 = vpack.c.bf16 %v6739, %v6738
      %v6758 = vpack.c.bf16 %v6741, %v6740
      %v6759 = vpack.c.bf16 %v6743, %v6742
      %v6776 = vunpack.c.l.b16 %v6744
      %v6777 = vunpack.c.h.b16 %v6744
      %v6778 = vunpack.c.l.b16 %v6745
      %v6779 = vunpack.c.h.b16 %v6745
      %v6780 = vunpack.c.l.b16 %v6746
      %v6781 = vunpack.c.h.b16 %v6746
      %v6782 = vunpack.c.l.b16 %v6747
      %v6783 = vunpack.c.h.b16 %v6747
      %v6784 = vunpack.c.l.b16 %v6748
      %v6785 = vunpack.c.h.b16 %v6748
      %v6786 = vunpack.c.l.b16 %v6749
      %v6787 = vunpack.c.h.b16 %v6749
      %v6788 = vunpack.c.l.b16 %v6750
      %v6789 = vunpack.c.h.b16 %v6750
      %v6790 = vunpack.c.l.b16 %v6751
      %v6791 = vunpack.c.h.b16 %v6751
      %v6792 = vunpack.c.l.b16 %v6752
      %v6793 = vunpack.c.h.b16 %v6752
      %v6794 = vunpack.c.l.b16 %v6753
      %v6795 = vunpack.c.h.b16 %v6753
      %v6796 = vunpack.c.l.b16 %v6754
      %v6797 = vunpack.c.h.b16 %v6754
      %v6798 = vunpack.c.l.b16 %v6755
      %v6799 = vunpack.c.h.b16 %v6755
      %v6800 = vunpack.c.l.b16 %v6756
      %v6801 = vunpack.c.h.b16 %v6756
      %v6802 = vunpack.c.l.b16 %v6757
      %v6803 = vunpack.c.h.b16 %v6757
      %v6804 = vunpack.c.l.b16 %v6758
      %v6805 = vunpack.c.h.b16 %v6758
      %v6806 = vunpack.c.l.b16 %v6759
      %v6807 = vunpack.c.h.b16 %v6759
      %v6808 = vpack.c.b16 %v6776, %v6776
      %v6809 = vpack.c.b16 %v6777, %v6777
      %v6810 = vpack.c.b16 %v6778, %v6778
      %v6811 = vpack.c.b16 %v6779, %v6779
      %v6812 = vpack.c.b16 %v6780, %v6780
      %v6813 = vpack.c.b16 %v6781, %v6781
      %v6814 = vpack.c.b16 %v6782, %v6782
      %v6815 = vpack.c.b16 %v6783, %v6783
      %v6816 = vpack.c.b16 %v6784, %v6784
      %v6817 = vpack.c.b16 %v6785, %v6785
      %v6818 = vpack.c.b16 %v6786, %v6786
      %v6819 = vpack.c.b16 %v6787, %v6787
      %v6820 = vpack.c.b16 %v6788, %v6788
      %v6821 = vpack.c.b16 %v6789, %v6789
      %v6822 = vpack.c.b16 %v6790, %v6790
      %v6823 = vpack.c.b16 %v6791, %v6791
      %v6824 = vpack.c.b16 %v6792, %v6792
      %v6825 = vpack.c.b16 %v6793, %v6793
      %v6826 = vpack.c.b16 %v6794, %v6794
      %v6827 = vpack.c.b16 %v6795, %v6795
      %v6828 = vpack.c.b16 %v6796, %v6796
      %v6829 = vpack.c.b16 %v6797, %v6797
      %v6830 = vpack.c.b16 %v6798, %v6798
      %v6831 = vpack.c.b16 %v6799, %v6799
      %v6832 = vpack.c.b16 %v6800, %v6800
      %v6833 = vpack.c.b16 %v6801, %v6801
      %v6834 = vpack.c.b16 %v6802, %v6802
      %v6835 = vpack.c.b16 %v6803, %v6803
      %v6836 = vpack.c.b16 %v6804, %v6804
      %v6837 = vpack.c.b16 %v6805, %v6805
      %v6838 = vpack.c.b16 %v6806, %v6806
      %v6839 = vpack.c.b16 %v6807, %v6807
      %v6841 = vshrl.u32 %v6808, 16
      %v6843 = vrot.slane %v6841, 7
      %v6844 = vshll.u32 %v6808, 16
      %v6846 = vor.u32 %v6843, %v6844
      %v6847 = vrot.slane %v6843, 4
      %v6849 = vshrl.u32 %v6809, 16
      %v6851 = vrot.slane %v6849, 7
      %v6852 = vshll.u32 %v6809, 16
      %v6854 = vor.u32 %v6851, %v6852
      %v6855 = vsel %vm1808, %v6847, %v6854
      %v6856 = vrot.slane %v6851, 4
      %v6858 = vshrl.u32 %v6810, 16
      %v6860 = vrot.slane %v6858, 7
      %v6861 = vshll.u32 %v6810, 16
      %v6863 = vor.u32 %v6860, %v6861
      %v6864 = vrot.slane %v6860, 4
      %v6866 = vshrl.u32 %v6811, 16
      %v6868 = vrot.slane %v6866, 7
      %v6869 = vshll.u32 %v6811, 16
      %v6871 = vor.u32 %v6868, %v6869
      %v6872 = vsel %vm1808, %v6864, %v6871
      %v6873 = vrot.slane %v6868, 4
      %v6875 = vshrl.u32 %v6812, 16
      %v6877 = vrot.slane %v6875, 7
      %v6878 = vshll.u32 %v6812, 16
      %v6880 = vor.u32 %v6877, %v6878
      %v6881 = vrot.slane %v6877, 4
      %v6883 = vshrl.u32 %v6813, 16
      %v6885 = vrot.slane %v6883, 7
      %v6886 = vshll.u32 %v6813, 16
      %v6888 = vor.u32 %v6885, %v6886
      %v6889 = vsel %vm1808, %v6881, %v6888
      %v6890 = vrot.slane %v6885, 4
      %v6892 = vshrl.u32 %v6814, 16
      %v6894 = vrot.slane %v6892, 7
      %v6895 = vshll.u32 %v6814, 16
      %v6897 = vor.u32 %v6894, %v6895
      %v6898 = vrot.slane %v6894, 4
      %v6900 = vshrl.u32 %v6815, 16
      %v6902 = vrot.slane %v6900, 7
      %v6903 = vshll.u32 %v6815, 16
      %v6905 = vor.u32 %v6902, %v6903
      %v6906 = vsel %vm1808, %v6898, %v6905
      %v6907 = vrot.slane %v6902, 4
      %v6909 = vshrl.u32 %v6816, 16
      %v6911 = vrot.slane %v6909, 7
      %v6912 = vshll.u32 %v6816, 16
      %v6914 = vor.u32 %v6911, %v6912
      %v6915 = vrot.slane %v6911, 4
      %v6917 = vshrl.u32 %v6817, 16
      %v6919 = vrot.slane %v6917, 7
      %v6920 = vshll.u32 %v6817, 16
      %v6922 = vor.u32 %v6919, %v6920
      %v6923 = vsel %vm1808, %v6915, %v6922
      %v6924 = vrot.slane %v6919, 4
      %v6926 = vshrl.u32 %v6818, 16
      %v6928 = vrot.slane %v6926, 7
      %v6929 = vshll.u32 %v6818, 16
      %v6931 = vor.u32 %v6928, %v6929
      %v6932 = vrot.slane %v6928, 4
      %v6934 = vshrl.u32 %v6819, 16
      %v6936 = vrot.slane %v6934, 7
      %v6937 = vshll.u32 %v6819, 16
      %v6939 = vor.u32 %v6936, %v6937
      %v6940 = vsel %vm1808, %v6932, %v6939
      %v6941 = vrot.slane %v6936, 4
      %v6943 = vshrl.u32 %v6820, 16
      %v6945 = vrot.slane %v6943, 7
      %v6946 = vshll.u32 %v6820, 16
      %v6948 = vor.u32 %v6945, %v6946
      %v6949 = vrot.slane %v6945, 4
      %v6951 = vshrl.u32 %v6821, 16
      %v6953 = vrot.slane %v6951, 7
      %v6954 = vshll.u32 %v6821, 16
      %v6956 = vor.u32 %v6953, %v6954
      %v6957 = vsel %vm1808, %v6949, %v6956
      %v6958 = vrot.slane %v6953, 4
      %v6960 = vshrl.u32 %v6822, 16
      %v6962 = vrot.slane %v6960, 7
      %v6963 = vshll.u32 %v6822, 16
      %v6965 = vor.u32 %v6962, %v6963
      %v6966 = vrot.slane %v6962, 4
      %v6968 = vshrl.u32 %v6823, 16
      %v6970 = vrot.slane %v6968, 7
      %v6971 = vshll.u32 %v6823, 16
      %v6973 = vor.u32 %v6970, %v6971
      %v6974 = vsel %vm1808, %v6966, %v6973
      %v6975 = vrot.slane %v6970, 4
      %v6977 = vshrl.u32 %v6824, 16
      %v6979 = vrot.slane %v6977, 7
      %v6980 = vshll.u32 %v6824, 16
      %v6982 = vor.u32 %v6979, %v6980
      %v6983 = vrot.slane %v6979, 4
      %v6985 = vshrl.u32 %v6825, 16
      %v6987 = vrot.slane %v6985, 7
      %v6988 = vshll.u32 %v6825, 16
      %v6990 = vor.u32 %v6987, %v6988
      %v6991 = vsel %vm1808, %v6983, %v6990
      %v6992 = vrot.slane %v6987, 4
      %v6994 = vshrl.u32 %v6826, 16
      %v6996 = vrot.slane %v6994, 7
      %v6997 = vshll.u32 %v6826, 16
      %v6999 = vor.u32 %v6996, %v6997
      %v7000 = vrot.slane %v6996, 4
      %v7002 = vshrl.u32 %v6827, 16
      %v7004 = vrot.slane %v7002, 7
      %v7005 = vshll.u32 %v6827, 16
      %v7007 = vor.u32 %v7004, %v7005
      %v7008 = vsel %vm1808, %v7000, %v7007
      %v7009 = vrot.slane %v7004, 4
      %v7011 = vshrl.u32 %v6828, 16
      %v7013 = vrot.slane %v7011, 7
      %v7014 = vshll.u32 %v6828, 16
      %v7016 = vor.u32 %v7013, %v7014
      %v7017 = vrot.slane %v7013, 4
      %v7019 = vshrl.u32 %v6829, 16
      %v7021 = vrot.slane %v7019, 7
      %v7022 = vshll.u32 %v6829, 16
      %v7024 = vor.u32 %v7021, %v7022
      %v7025 = vsel %vm1808, %v7017, %v7024
      %v7026 = vrot.slane %v7021, 4
      %v7028 = vshrl.u32 %v6830, 16
      %v7030 = vrot.slane %v7028, 7
      %v7031 = vshll.u32 %v6830, 16
      %v7033 = vor.u32 %v7030, %v7031
      %v7034 = vrot.slane %v7030, 4
      %v7036 = vshrl.u32 %v6831, 16
      %v7038 = vrot.slane %v7036, 7
      %v7039 = vshll.u32 %v6831, 16
      %v7041 = vor.u32 %v7038, %v7039
      %v7042 = vsel %vm1808, %v7034, %v7041
      %v7043 = vrot.slane %v7038, 4
      %v7045 = vshrl.u32 %v6832, 16
      %v7047 = vrot.slane %v7045, 7
      %v7048 = vshll.u32 %v6832, 16
      %v7050 = vor.u32 %v7047, %v7048
      %v7051 = vrot.slane %v7047, 4
      %v7053 = vshrl.u32 %v6833, 16
      %v7055 = vrot.slane %v7053, 7
      %v7056 = vshll.u32 %v6833, 16
      %v7058 = vor.u32 %v7055, %v7056
      %v7059 = vsel %vm1808, %v7051, %v7058
      %v7060 = vrot.slane %v7055, 4
      %v7062 = vshrl.u32 %v6834, 16
      %v7064 = vrot.slane %v7062, 7
      %v7065 = vshll.u32 %v6834, 16
      %v7067 = vor.u32 %v7064, %v7065
      %v7068 = vrot.slane %v7064, 4
      %v7070 = vshrl.u32 %v6835, 16
      %v7072 = vrot.slane %v7070, 7
      %v7073 = vshll.u32 %v6835, 16
      %v7075 = vor.u32 %v7072, %v7073
      %v7076 = vsel %vm1808, %v7068, %v7075
      %v7077 = vrot.slane %v7072, 4
      %v7079 = vshrl.u32 %v6836, 16
      %v7081 = vrot.slane %v7079, 7
      %v7082 = vshll.u32 %v6836, 16
      %v7084 = vor.u32 %v7081, %v7082
      %v7085 = vrot.slane %v7081, 4
      %v7087 = vshrl.u32 %v6837, 16
      %v7089 = vrot.slane %v7087, 7
      %v7090 = vshll.u32 %v6837, 16
      %v7092 = vor.u32 %v7089, %v7090
      %v7093 = vsel %vm1808, %v7085, %v7092
      %v7094 = vrot.slane %v7089, 4
      %v7096 = vshrl.u32 %v6838, 16
      %v7098 = vrot.slane %v7096, 7
      %v7099 = vshll.u32 %v6838, 16
      %v7101 = vor.u32 %v7098, %v7099
      %v7102 = vrot.slane %v7098, 4
      %v7104 = vshrl.u32 %v6839, 16
      %v7106 = vrot.slane %v7104, 7
      %v7107 = vshll.u32 %v6839, 16
      %v7109 = vor.u32 %v7106, %v7107
      %v7110 = vsel %vm1808, %v7102, %v7109
      %v7111 = vrot.slane %v7106, 4
      %v7160 = vld [vmem:[%s2129] sm:$0xf]
      %v7161 = vsel %vm2131, %v6846, %v7160
      %7162 = vst [vmem:[%s2129] sm:$0xf] %v7161
      %7163 = vst.msk [vmem:[%s2129 + $0x4] sm:$0xf] %vm2135, %v6855
      %v7164 = vld [vmem:[%s2129 + $0x8] sm:$0x1]
      %v7165 = vsel %vm2138, %v6856, %v7164
      %7166 = vst [vmem:[%s2129 + $0x8] sm:$0x1] %v7165
      %v7167 = vld [vmem:[%s2129 + $0xc] sm:$0xf]
      %v7168 = vsel %vm2131, %v6863, %v7167
      %7169 = vst [vmem:[%s2129 + $0xc] sm:$0xf] %v7168
      %7170 = vst.msk [vmem:[%s2129 + $0x10] sm:$0xf] %vm2135, %v6872
      %v7171 = vld [vmem:[%s2129 + $0x14] sm:$0x1]
      %v7172 = vsel %vm2138, %v6873, %v7171
      %7173 = vst [vmem:[%s2129 + $0x14] sm:$0x1] %v7172
      %v7174 = vld [vmem:[%s2129 + $0x18] sm:$0xf]
      %v7175 = vsel %vm2131, %v6880, %v7174
      %7176 = vst [vmem:[%s2129 + $0x18] sm:$0xf] %v7175
      %7177 = vst.msk [vmem:[%s2129 + $0x1c] sm:$0xf] %vm2135, %v6889
      %v7178 = vld [vmem:[%s2129 + $0x20] sm:$0x1]
      %v7179 = vsel %vm2138, %v6890, %v7178
      %7180 = vst [vmem:[%s2129 + $0x20] sm:$0x1] %v7179
      %v7181 = vld [vmem:[%s2129 + $0x24] sm:$0xf]
      %v7182 = vsel %vm2131, %v6897, %v7181
      %7183 = vst [vmem:[%s2129 + $0x24] sm:$0xf] %v7182
      %7184 = vst.msk [vmem:[%s2129 + $0x28] sm:$0xf] %vm2135, %v6906
      %v7185 = vld [vmem:[%s2129 + $0x2c] sm:$0x1]
      %v7186 = vsel %vm2138, %v6907, %v7185
      %7187 = vst [vmem:[%s2129 + $0x2c] sm:$0x1] %v7186
      %v7188 = vld [vmem:[%s2129 + $0x30] sm:$0xf]
      %v7189 = vsel %vm2131, %v6914, %v7188
      %7190 = vst [vmem:[%s2129 + $0x30] sm:$0xf] %v7189
      %7191 = vst.msk [vmem:[%s2129 + $0x34] sm:$0xf] %vm2135, %v6923
      %v7192 = vld [vmem:[%s2129 + $0x38] sm:$0x1]
      %v7193 = vsel %vm2138, %v6924, %v7192
      %7194 = vst [vmem:[%s2129 + $0x38] sm:$0x1] %v7193
      %v7195 = vld [vmem:[%s2129 + $0x3c] sm:$0xf]
      %v7196 = vsel %vm2131, %v6931, %v7195
      %7197 = vst [vmem:[%s2129 + $0x3c] sm:$0xf] %v7196
      %7198 = vst.msk [vmem:[%s2129 + $0x40] sm:$0xf] %vm2135, %v6940
      %v7199 = vld [vmem:[%s2129 + $0x44] sm:$0x1]
      %v7200 = vsel %vm2138, %v6941, %v7199
      %7201 = vst [vmem:[%s2129 + $0x44] sm:$0x1] %v7200
      %v7202 = vld [vmem:[%s2129 + $0x48] sm:$0xf]
      %v7203 = vsel %vm2131, %v6948, %v7202
      %7204 = vst [vmem:[%s2129 + $0x48] sm:$0xf] %v7203
      %7205 = vst.msk [vmem:[%s2129 + $0x4c] sm:$0xf] %vm2135, %v6957
      %v7206 = vld [vmem:[%s2129 + $0x50] sm:$0x1]
      %v7207 = vsel %vm2138, %v6958, %v7206
      %7208 = vst [vmem:[%s2129 + $0x50] sm:$0x1] %v7207
      %v7209 = vld [vmem:[%s2129 + $0x54] sm:$0xf]
      %v7210 = vsel %vm2131, %v6965, %v7209
      %7211 = vst [vmem:[%s2129 + $0x54] sm:$0xf] %v7210
      %7212 = vst.msk [vmem:[%s2129 + $0x58] sm:$0xf] %vm2135, %v6974
      %v7213 = vld [vmem:[%s2129 + $0x5c] sm:$0x1]
      %v7214 = vsel %vm2138, %v6975, %v7213
      %7215 = vst [vmem:[%s2129 + $0x5c] sm:$0x1] %v7214
      %v7216 = vld [vmem:[%s2129 + $0x60] sm:$0xf]
      %v7217 = vsel %vm2131, %v6982, %v7216
      %7218 = vst [vmem:[%s2129 + $0x60] sm:$0xf] %v7217
      %7219 = vst.msk [vmem:[%s2129 + $0x64] sm:$0xf] %vm2135, %v6991
      %v7220 = vld [vmem:[%s2129 + $0x68] sm:$0x1]
      %v7221 = vsel %vm2138, %v6992, %v7220
      %7222 = vst [vmem:[%s2129 + $0x68] sm:$0x1] %v7221
      %v7223 = vld [vmem:[%s2129 + $0x6c] sm:$0xf]
      %v7224 = vsel %vm2131, %v6999, %v7223
      %7225 = vst [vmem:[%s2129 + $0x6c] sm:$0xf] %v7224
      %7226 = vst.msk [vmem:[%s2129 + $0x70] sm:$0xf] %vm2135, %v7008
      %v7227 = vld [vmem:[%s2129 + $0x74] sm:$0x1]
      %v7228 = vsel %vm2138, %v7009, %v7227
      %7229 = vst [vmem:[%s2129 + $0x74] sm:$0x1] %v7228
      %v7230 = vld [vmem:[%s2129 + $0x78] sm:$0xf]
      %v7231 = vsel %vm2131, %v7016, %v7230
      %7232 = vst [vmem:[%s2129 + $0x78] sm:$0xf] %v7231
      %7233 = vst.msk [vmem:[%s2129 + $0x7c] sm:$0xf] %vm2135, %v7025
      %v7234 = vld [vmem:[%s2129 + $0x80] sm:$0x1]
      %v7235 = vsel %vm2138, %v7026, %v7234
      %7236 = vst [vmem:[%s2129 + $0x80] sm:$0x1] %v7235
      %v7237 = vld [vmem:[%s2129 + $0x84] sm:$0xf]
      %v7238 = vsel %vm2131, %v7033, %v7237
      %7239 = vst [vmem:[%s2129 + $0x84] sm:$0xf] %v7238
      %7240 = vst.msk [vmem:[%s2129 + $0x88] sm:$0xf] %vm2135, %v7042
      %v7241 = vld [vmem:[%s2129 + $0x8c] sm:$0x1]
      %v7242 = vsel %vm2138, %v7043, %v7241
      %7243 = vst [vmem:[%s2129 + $0x8c] sm:$0x1] %v7242
      %v7244 = vld [vmem:[%s2129 + $0x90] sm:$0xf]
      %v7245 = vsel %vm2131, %v7050, %v7244
      %7246 = vst [vmem:[%s2129 + $0x90] sm:$0xf] %v7245
      %7247 = vst.msk [vmem:[%s2129 + $0x94] sm:$0xf] %vm2135, %v7059
      %v7248 = vld [vmem:[%s2129 + $0x98] sm:$0x1]
      %v7249 = vsel %vm2138, %v7060, %v7248
      %7250 = vst [vmem:[%s2129 + $0x98] sm:$0x1] %v7249
      %v7251 = vld [vmem:[%s2129 + $0x9c] sm:$0xf]
      %v7252 = vsel %vm2131, %v7067, %v7251
      %7253 = vst [vmem:[%s2129 + $0x9c] sm:$0xf] %v7252
      %7254 = vst.msk [vmem:[%s2129 + $0xa0] sm:$0xf] %vm2135, %v7076
      %v7255 = vld [vmem:[%s2129 + $0xa4] sm:$0x1]
      %v7256 = vsel %vm2138, %v7077, %v7255
      %7257 = vst [vmem:[%s2129 + $0xa4] sm:$0x1] %v7256
      %v7258 = vld [vmem:[%s2129 + $0xa8] sm:$0xf]
      %v7259 = vsel %vm2131, %v7084, %v7258
      %7260 = vst [vmem:[%s2129 + $0xa8] sm:$0xf] %v7259
      %7261 = vst.msk [vmem:[%s2129 + $0xac] sm:$0xf] %vm2135, %v7093
      %v7262 = vld [vmem:[%s2129 + $0xb0] sm:$0x1]
      %v7263 = vsel %vm2138, %v7094, %v7262
      %7264 = vst [vmem:[%s2129 + $0xb0] sm:$0x1] %v7263
      %v7265 = vld [vmem:[%s2129 + $0xb4] sm:$0xf]
      %v7266 = vsel %vm2131, %v7101, %v7265
      %7267 = vst [vmem:[%s2129 + $0xb4] sm:$0xf] %v7266
      %7268 = vst.msk [vmem:[%s2129 + $0xb8] sm:$0xf] %vm2135, %v7110
      %v7269 = vld [vmem:[%s2129 + $0xbc] sm:$0x1]
      %v7270 = vsel %vm2138, %v7111, %v7269
      %7271 = vst [vmem:[%s2129 + $0xbc] sm:$0x1] %v7270
      %v7272 = vmul.f32 %v6680, %v1647
      %v7273 = vmul.f32 %v6681, %v1648
      %v7274 = vmul.f32 %v6682, %v1649
      %v7275 = vmul.f32 %v6683, %v1650
      %v7276 = vmul.f32 %v6684, %v1651
      %v7277 = vmul.f32 %v6685, %v1652
      %v7278 = vmul.f32 %v6686, %v1653
      %v7279 = vmul.f32 %v6687, %v1654
      %v7280 = vmul.f32 %v6688, %v1655
      %v7281 = vmul.f32 %v6689, %v1656
      %v7282 = vmul.f32 %v6690, %v1657
      %v7283 = vmul.f32 %v6691, %v1658
      %v7284 = vmul.f32 %v6692, %v1659
      %v7285 = vmul.f32 %v6693, %v1660
      %v7286 = vmul.f32 %v6694, %v1661
      %v7287 = vmul.f32 %v6695, %v1662
      %v7288 = vmul.f32 %v6696, %v1663
      %v7289 = vmul.f32 %v6697, %v1664
      %v7290 = vmul.f32 %v6698, %v1665
      %v7291 = vmul.f32 %v6699, %v1666
      %v7292 = vmul.f32 %v6700, %v1667
      %v7293 = vmul.f32 %v6701, %v1668
      %v7294 = vmul.f32 %v6702, %v1669
      %v7295 = vmul.f32 %v6703, %v1670
      %v7296 = vmul.f32 %v6704, %v1671
      %v7297 = vmul.f32 %v6705, %v1672
      %v7298 = vmul.f32 %v6706, %v1673
      %v7299 = vmul.f32 %v6707, %v1674
      %v7300 = vmul.f32 %v6708, %v1675
      %v7301 = vmul.f32 %v6709, %v1676
      %v7302 = vmul.f32 %v6710, %v1677
      %v7303 = vmul.f32 %v6711, %v1678
      %v7304 = vpack.c.bf16 %v7273, %v7272
      %v7305 = vpack.c.bf16 %v7275, %v7274
      %v7306 = vpack.c.bf16 %v7277, %v7276
      %v7307 = vpack.c.bf16 %v7279, %v7278
      %v7308 = vpack.c.bf16 %v7281, %v7280
      %v7309 = vpack.c.bf16 %v7283, %v7282
      %v7310 = vpack.c.bf16 %v7285, %v7284
      %v7311 = vpack.c.bf16 %v7287, %v7286
      %v7312 = vpack.c.bf16 %v7289, %v7288
      %v7313 = vpack.c.bf16 %v7291, %v7290
      %v7314 = vpack.c.bf16 %v7293, %v7292
      %v7315 = vpack.c.bf16 %v7295, %v7294
      %v7316 = vpack.c.bf16 %v7297, %v7296
      %v7317 = vpack.c.bf16 %v7299, %v7298
      %v7318 = vpack.c.bf16 %v7301, %v7300
      %v7319 = vpack.c.bf16 %v7303, %v7302
      %v7336 = vunpack.c.l.b16 %v7304
      %v7337 = vunpack.c.h.b16 %v7304
      %v7338 = vunpack.c.l.b16 %v7305
      %v7339 = vunpack.c.h.b16 %v7305
      %v7340 = vunpack.c.l.b16 %v7306
      %v7341 = vunpack.c.h.b16 %v7306
      %v7342 = vunpack.c.l.b16 %v7307
      %v7343 = vunpack.c.h.b16 %v7307
      %v7344 = vunpack.c.l.b16 %v7308
      %v7345 = vunpack.c.h.b16 %v7308
      %v7346 = vunpack.c.l.b16 %v7309
      %v7347 = vunpack.c.h.b16 %v7309
      %v7348 = vunpack.c.l.b16 %v7310
      %v7349 = vunpack.c.h.b16 %v7310
      %v7350 = vunpack.c.l.b16 %v7311
      %v7351 = vunpack.c.h.b16 %v7311
      %v7352 = vunpack.c.l.b16 %v7312
      %v7353 = vunpack.c.h.b16 %v7312
      %v7354 = vunpack.c.l.b16 %v7313
      %v7355 = vunpack.c.h.b16 %v7313
      %v7356 = vunpack.c.l.b16 %v7314
      %v7357 = vunpack.c.h.b16 %v7314
      %v7358 = vunpack.c.l.b16 %v7315
      %v7359 = vunpack.c.h.b16 %v7315
      %v7360 = vunpack.c.l.b16 %v7316
      %v7361 = vunpack.c.h.b16 %v7316
      %v7362 = vunpack.c.l.b16 %v7317
      %v7363 = vunpack.c.h.b16 %v7317
      %v7364 = vunpack.c.l.b16 %v7318
      %v7365 = vunpack.c.h.b16 %v7318
      %v7366 = vunpack.c.l.b16 %v7319
      %v7367 = vunpack.c.h.b16 %v7319
      %v7368 = vpack.c.b16 %v7336, %v7336
      %v7369 = vpack.c.b16 %v7337, %v7337
      %v7370 = vpack.c.b16 %v7338, %v7338
      %v7371 = vpack.c.b16 %v7339, %v7339
      %v7372 = vpack.c.b16 %v7340, %v7340
      %v7373 = vpack.c.b16 %v7341, %v7341
      %v7374 = vpack.c.b16 %v7342, %v7342
      %v7375 = vpack.c.b16 %v7343, %v7343
      %v7376 = vpack.c.b16 %v7344, %v7344
      %v7377 = vpack.c.b16 %v7345, %v7345
      %v7378 = vpack.c.b16 %v7346, %v7346
      %v7379 = vpack.c.b16 %v7347, %v7347
      %v7380 = vpack.c.b16 %v7348, %v7348
      %v7381 = vpack.c.b16 %v7349, %v7349
      %v7382 = vpack.c.b16 %v7350, %v7350
      %v7383 = vpack.c.b16 %v7351, %v7351
      %v7384 = vpack.c.b16 %v7352, %v7352
      %v7385 = vpack.c.b16 %v7353, %v7353
      %v7386 = vpack.c.b16 %v7354, %v7354
      %v7387 = vpack.c.b16 %v7355, %v7355
      %v7388 = vpack.c.b16 %v7356, %v7356
      %v7389 = vpack.c.b16 %v7357, %v7357
      %v7390 = vpack.c.b16 %v7358, %v7358
      %v7391 = vpack.c.b16 %v7359, %v7359
      %v7392 = vpack.c.b16 %v7360, %v7360
      %v7393 = vpack.c.b16 %v7361, %v7361
      %v7394 = vpack.c.b16 %v7362, %v7362
      %v7395 = vpack.c.b16 %v7363, %v7363
      %v7396 = vpack.c.b16 %v7364, %v7364
      %v7397 = vpack.c.b16 %v7365, %v7365
      %v7398 = vpack.c.b16 %v7366, %v7366
      %v7399 = vpack.c.b16 %v7367, %v7367
      %v7401 = vshrl.u32 %v7368, 16
      %v7403 = vrot.slane %v7401, 7
      %v7404 = vshll.u32 %v7368, 16
      %v7406 = vor.u32 %v7403, %v7404
      %v7407 = vrot.slane %v7403, 4
      %v7409 = vshrl.u32 %v7369, 16
      %v7411 = vrot.slane %v7409, 7
      %v7412 = vshll.u32 %v7369, 16
      %v7414 = vor.u32 %v7411, %v7412
      %v7415 = vsel %vm1808, %v7407, %v7414
      %v7416 = vrot.slane %v7411, 4
      %v7418 = vshrl.u32 %v7370, 16
      %v7420 = vrot.slane %v7418, 7
      %v7421 = vshll.u32 %v7370, 16
      %v7423 = vor.u32 %v7420, %v7421
      %v7424 = vrot.slane %v7420, 4
      %v7426 = vshrl.u32 %v7371, 16
      %v7428 = vrot.slane %v7426, 7
      %v7429 = vshll.u32 %v7371, 16
      %v7431 = vor.u32 %v7428, %v7429
      %v7432 = vsel %vm1808, %v7424, %v7431
      %v7433 = vrot.slane %v7428, 4
      %v7435 = vshrl.u32 %v7372, 16
      %v7437 = vrot.slane %v7435, 7
      %v7438 = vshll.u32 %v7372, 16
      %v7440 = vor.u32 %v7437, %v7438
      %v7441 = vrot.slane %v7437, 4
      %v7443 = vshrl.u32 %v7373, 16
      %v7445 = vrot.slane %v7443, 7
      %v7446 = vshll.u32 %v7373, 16
      %v7448 = vor.u32 %v7445, %v7446
      %v7449 = vsel %vm1808, %v7441, %v7448
      %v7450 = vrot.slane %v7445, 4
      %v7452 = vshrl.u32 %v7374, 16
      %v7454 = vrot.slane %v7452, 7
      %v7455 = vshll.u32 %v7374, 16
      %v7457 = vor.u32 %v7454, %v7455
      %v7458 = vrot.slane %v7454, 4
      %v7460 = vshrl.u32 %v7375, 16
      %v7462 = vrot.slane %v7460, 7
      %v7463 = vshll.u32 %v7375, 16
      %v7465 = vor.u32 %v7462, %v7463
      %v7466 = vsel %vm1808, %v7458, %v7465
      %v7467 = vrot.slane %v7462, 4
      %v7469 = vshrl.u32 %v7376, 16
      %v7471 = vrot.slane %v7469, 7
      %v7472 = vshll.u32 %v7376, 16
      %v7474 = vor.u32 %v7471, %v7472
      %v7475 = vrot.slane %v7471, 4
      %v7477 = vshrl.u32 %v7377, 16
      %v7479 = vrot.slane %v7477, 7
      %v7480 = vshll.u32 %v7377, 16
      %v7482 = vor.u32 %v7479, %v7480
      %v7483 = vsel %vm1808, %v7475, %v7482
      %v7484 = vrot.slane %v7479, 4
      %v7486 = vshrl.u32 %v7378, 16
      %v7488 = vrot.slane %v7486, 7
      %v7489 = vshll.u32 %v7378, 16
      %v7491 = vor.u32 %v7488, %v7489
      %v7492 = vrot.slane %v7488, 4
      %v7494 = vshrl.u32 %v7379, 16
      %v7496 = vrot.slane %v7494, 7
      %v7497 = vshll.u32 %v7379, 16
      %v7499 = vor.u32 %v7496, %v7497
      %v7500 = vsel %vm1808, %v7492, %v7499
      %v7501 = vrot.slane %v7496, 4
      %v7503 = vshrl.u32 %v7380, 16
      %v7505 = vrot.slane %v7503, 7
      %v7506 = vshll.u32 %v7380, 16
      %v7508 = vor.u32 %v7505, %v7506
      %v7509 = vrot.slane %v7505, 4
      %v7511 = vshrl.u32 %v7381, 16
      %v7513 = vrot.slane %v7511, 7
      %v7514 = vshll.u32 %v7381, 16
      %v7516 = vor.u32 %v7513, %v7514
      %v7517 = vsel %vm1808, %v7509, %v7516
      %v7518 = vrot.slane %v7513, 4
      %v7520 = vshrl.u32 %v7382, 16
      %v7522 = vrot.slane %v7520, 7
      %v7523 = vshll.u32 %v7382, 16
      %v7525 = vor.u32 %v7522, %v7523
      %v7526 = vrot.slane %v7522, 4
      %v7528 = vshrl.u32 %v7383, 16
      %v7530 = vrot.slane %v7528, 7
      %v7531 = vshll.u32 %v7383, 16
      %v7533 = vor.u32 %v7530, %v7531
      %v7534 = vsel %vm1808, %v7526, %v7533
      %v7535 = vrot.slane %v7530, 4
      %v7537 = vshrl.u32 %v7384, 16
      %v7539 = vrot.slane %v7537, 7
      %v7540 = vshll.u32 %v7384, 16
      %v7542 = vor.u32 %v7539, %v7540
      %v7543 = vrot.slane %v7539, 4
      %v7545 = vshrl.u32 %v7385, 16
      %v7547 = vrot.slane %v7545, 7
      %v7548 = vshll.u32 %v7385, 16
      %v7550 = vor.u32 %v7547, %v7548
      %v7551 = vsel %vm1808, %v7543, %v7550
      %v7552 = vrot.slane %v7547, 4
      %v7554 = vshrl.u32 %v7386, 16
      %v7556 = vrot.slane %v7554, 7
      %v7557 = vshll.u32 %v7386, 16
      %v7559 = vor.u32 %v7556, %v7557
      %v7560 = vrot.slane %v7556, 4
      %v7562 = vshrl.u32 %v7387, 16
      %v7564 = vrot.slane %v7562, 7
      %v7565 = vshll.u32 %v7387, 16
      %v7567 = vor.u32 %v7564, %v7565
      %v7568 = vsel %vm1808, %v7560, %v7567
      %v7569 = vrot.slane %v7564, 4
      %v7571 = vshrl.u32 %v7388, 16
      %v7573 = vrot.slane %v7571, 7
      %v7574 = vshll.u32 %v7388, 16
      %v7576 = vor.u32 %v7573, %v7574
      %v7577 = vrot.slane %v7573, 4
      %v7579 = vshrl.u32 %v7389, 16
      %v7581 = vrot.slane %v7579, 7
      %v7582 = vshll.u32 %v7389, 16
      %v7584 = vor.u32 %v7581, %v7582
      %v7585 = vsel %vm1808, %v7577, %v7584
      %v7586 = vrot.slane %v7581, 4
      %v7588 = vshrl.u32 %v7390, 16
      %v7590 = vrot.slane %v7588, 7
      %v7591 = vshll.u32 %v7390, 16
      %v7593 = vor.u32 %v7590, %v7591
      %v7594 = vrot.slane %v7590, 4
      %v7596 = vshrl.u32 %v7391, 16
      %v7598 = vrot.slane %v7596, 7
      %v7599 = vshll.u32 %v7391, 16
      %v7601 = vor.u32 %v7598, %v7599
      %v7602 = vsel %vm1808, %v7594, %v7601
      %v7603 = vrot.slane %v7598, 4
      %v7605 = vshrl.u32 %v7392, 16
      %v7607 = vrot.slane %v7605, 7
      %v7608 = vshll.u32 %v7392, 16
      %v7610 = vor.u32 %v7607, %v7608
      %v7611 = vrot.slane %v7607, 4
      %v7613 = vshrl.u32 %v7393, 16
      %v7615 = vrot.slane %v7613, 7
      %v7616 = vshll.u32 %v7393, 16
      %v7618 = vor.u32 %v7615, %v7616
      %v7619 = vsel %vm1808, %v7611, %v7618
      %v7620 = vrot.slane %v7615, 4
      %v7622 = vshrl.u32 %v7394, 16
      %v7624 = vrot.slane %v7622, 7
      %v7625 = vshll.u32 %v7394, 16
      %v7627 = vor.u32 %v7624, %v7625
      %v7628 = vrot.slane %v7624, 4
      %v7630 = vshrl.u32 %v7395, 16
      %v7632 = vrot.slane %v7630, 7
      %v7633 = vshll.u32 %v7395, 16
      %v7635 = vor.u32 %v7632, %v7633
      %v7636 = vsel %vm1808, %v7628, %v7635
      %v7637 = vrot.slane %v7632, 4
      %v7639 = vshrl.u32 %v7396, 16
      %v7641 = vrot.slane %v7639, 7
      %v7642 = vshll.u32 %v7396, 16
      %v7644 = vor.u32 %v7641, %v7642
      %v7645 = vrot.slane %v7641, 4
      %v7647 = vshrl.u32 %v7397, 16
      %v7649 = vrot.slane %v7647, 7
      %v7650 = vshll.u32 %v7397, 16
      %v7652 = vor.u32 %v7649, %v7650
      %v7653 = vsel %vm1808, %v7645, %v7652
      %v7654 = vrot.slane %v7649, 4
      %v7656 = vshrl.u32 %v7398, 16
      %v7658 = vrot.slane %v7656, 7
      %v7659 = vshll.u32 %v7398, 16
      %v7661 = vor.u32 %v7658, %v7659
      %v7662 = vrot.slane %v7658, 4
      %v7664 = vshrl.u32 %v7399, 16
      %v7666 = vrot.slane %v7664, 7
      %v7667 = vshll.u32 %v7399, 16
      %v7669 = vor.u32 %v7666, %v7667
      %v7670 = vsel %vm1808, %v7662, %v7669
      %v7671 = vrot.slane %v7666, 4
      %7672 = vrot.lane.b32.xlu0 %v7406, 16
      %v7673 = vpop.permute.xlu0 %7672
      %7674 = vrot.lane.b32.xlu0 %v7415, 16
      %v7675 = vpop.permute.xlu0 %7674
      %7676 = vrot.lane.b32.xlu0 %v7416, 16
      %v7677 = vpop.permute.xlu0 %7676
      %7678 = vrot.lane.b32.xlu0 %v7423, 16
      %v7679 = vpop.permute.xlu0 %7678
      %7680 = vrot.lane.b32.xlu0 %v7432, 16
      %v7681 = vpop.permute.xlu0 %7680
      %7682 = vrot.lane.b32.xlu0 %v7433, 16
      %v7683 = vpop.permute.xlu0 %7682
      %7684 = vrot.lane.b32.xlu0 %v7440, 16
      %v7685 = vpop.permute.xlu0 %7684
      %7686 = vrot.lane.b32.xlu0 %v7449, 16
      %v7687 = vpop.permute.xlu0 %7686
      %7688 = vrot.lane.b32.xlu0 %v7450, 16
      %v7689 = vpop.permute.xlu0 %7688
      %7690 = vrot.lane.b32.xlu0 %v7457, 16
      %v7691 = vpop.permute.xlu0 %7690
      %7692 = vrot.lane.b32.xlu0 %v7466, 16
      %v7693 = vpop.permute.xlu0 %7692
      %7694 = vrot.lane.b32.xlu0 %v7467, 16
      %v7695 = vpop.permute.xlu0 %7694
      %7696 = vrot.lane.b32.xlu0 %v7474, 16
      %v7697 = vpop.permute.xlu0 %7696
      %7698 = vrot.lane.b32.xlu0 %v7483, 16
      %v7699 = vpop.permute.xlu0 %7698
      %7700 = vrot.lane.b32.xlu0 %v7484, 16
      %v7701 = vpop.permute.xlu0 %7700
      %7702 = vrot.lane.b32.xlu0 %v7491, 16
      %v7703 = vpop.permute.xlu0 %7702
      %7704 = vrot.lane.b32.xlu0 %v7500, 16
      %v7705 = vpop.permute.xlu0 %7704
      %7706 = vrot.lane.b32.xlu0 %v7501, 16
      %v7707 = vpop.permute.xlu0 %7706
      %7708 = vrot.lane.b32.xlu0 %v7508, 16
      %v7709 = vpop.permute.xlu0 %7708
      %7710 = vrot.lane.b32.xlu0 %v7517, 16
      %v7711 = vpop.permute.xlu0 %7710
      %7712 = vrot.lane.b32.xlu0 %v7518, 16
      %v7713 = vpop.permute.xlu0 %7712
      %7714 = vrot.lane.b32.xlu0 %v7525, 16
      %v7715 = vpop.permute.xlu0 %7714
      %7716 = vrot.lane.b32.xlu0 %v7534, 16
      %v7717 = vpop.permute.xlu0 %7716
      %7718 = vrot.lane.b32.xlu0 %v7535, 16
      %v7719 = vpop.permute.xlu0 %7718
      %7720 = vrot.lane.b32.xlu0 %v7542, 16
      %v7721 = vpop.permute.xlu0 %7720
      %7722 = vrot.lane.b32.xlu0 %v7551, 16
      %v7723 = vpop.permute.xlu0 %7722
      %7724 = vrot.lane.b32.xlu0 %v7552, 16
      %v7725 = vpop.permute.xlu0 %7724
      %7726 = vrot.lane.b32.xlu0 %v7559, 16
      %v7727 = vpop.permute.xlu0 %7726
      %7728 = vrot.lane.b32.xlu0 %v7568, 16
      %v7729 = vpop.permute.xlu0 %7728
      %7730 = vrot.lane.b32.xlu0 %v7569, 16
      %v7731 = vpop.permute.xlu0 %7730
      %7732 = vrot.lane.b32.xlu0 %v7576, 16
      %v7733 = vpop.permute.xlu0 %7732
      %7734 = vrot.lane.b32.xlu0 %v7585, 16
      %v7735 = vpop.permute.xlu0 %7734
      %7736 = vrot.lane.b32.xlu0 %v7586, 16
      %v7737 = vpop.permute.xlu0 %7736
      %7738 = vrot.lane.b32.xlu0 %v7593, 16
      %v7739 = vpop.permute.xlu0 %7738
      %7740 = vrot.lane.b32.xlu0 %v7602, 16
      %v7741 = vpop.permute.xlu0 %7740
      %7742 = vrot.lane.b32.xlu0 %v7603, 16
      %v7743 = vpop.permute.xlu0 %7742
      %7744 = vrot.lane.b32.xlu0 %v7610, 16
      %v7745 = vpop.permute.xlu0 %7744
      %7746 = vrot.lane.b32.xlu0 %v7619, 16
      %v7747 = vpop.permute.xlu0 %7746
      %7748 = vrot.lane.b32.xlu0 %v7620, 16
      %v7749 = vpop.permute.xlu0 %7748
      %7750 = vrot.lane.b32.xlu0 %v7627, 16
      %v7751 = vpop.permute.xlu0 %7750
      %7752 = vrot.lane.b32.xlu0 %v7636, 16
      %v7753 = vpop.permute.xlu0 %7752
      %7754 = vrot.lane.b32.xlu0 %v7637, 16
      %v7755 = vpop.permute.xlu0 %7754
      %7756 = vrot.lane.b32.xlu0 %v7644, 16
      %v7757 = vpop.permute.xlu0 %7756
      %7758 = vrot.lane.b32.xlu0 %v7653, 16
      %v7759 = vpop.permute.xlu0 %7758
      %7760 = vrot.lane.b32.xlu0 %v7654, 16
      %v7761 = vpop.permute.xlu0 %7760
      %7762 = vrot.lane.b32.xlu0 %v7661, 16
      %v7763 = vpop.permute.xlu0 %7762
      %7764 = vrot.lane.b32.xlu0 %v7670, 16
      %v7765 = vpop.permute.xlu0 %7764
      %7766 = vrot.lane.b32.xlu0 %v7671, 16
      %v7767 = vpop.permute.xlu0 %7766
      %vm7816 = vcmask 257152
      %vm7817 = vmand %vm7816, %vm447
      %v7818 = vld [vmem:[%s2129] sm:$0xf]
      %v7819 = vsel %vm7817, %v7673, %v7818
      %7820 = vst [vmem:[%s2129] sm:$0xf] %v7819
      %vm7821 = vcmask 257152
      %7822 = vst.msk [vmem:[%s2129 + $0x4] sm:$0xf] %vm7821, %v7675
      %vm7823 = vcmask 254080
      %vm7824 = vmand %vm7823, %vm391
      %v7825 = vld [vmem:[%s2129 + $0x8] sm:$0x1]
      %v7826 = vsel %vm7824, %v7677, %v7825
      %7827 = vst [vmem:[%s2129 + $0x8] sm:$0x1] %v7826
      %v7828 = vld [vmem:[%s2129 + $0xc] sm:$0xf]
      %v7829 = vsel %vm7817, %v7679, %v7828
      %7830 = vst [vmem:[%s2129 + $0xc] sm:$0xf] %v7829
      %7831 = vst.msk [vmem:[%s2129 + $0x10] sm:$0xf] %vm7821, %v7681
      %v7832 = vld [vmem:[%s2129 + $0x14] sm:$0x1]
      %v7833 = vsel %vm7824, %v7683, %v7832
      %7834 = vst [vmem:[%s2129 + $0x14] sm:$0x1] %v7833
      %v7835 = vld [vmem:[%s2129 + $0x18] sm:$0xf]
      %v7836 = vsel %vm7817, %v7685, %v7835
      %7837 = vst [vmem:[%s2129 + $0x18] sm:$0xf] %v7836
      %7838 = vst.msk [vmem:[%s2129 + $0x1c] sm:$0xf] %vm7821, %v7687
      %v7839 = vld [vmem:[%s2129 + $0x20] sm:$0x1]
      %v7840 = vsel %vm7824, %v7689, %v7839
      %7841 = vst [vmem:[%s2129 + $0x20] sm:$0x1] %v7840
      %v7842 = vld [vmem:[%s2129 + $0x24] sm:$0xf]
      %v7843 = vsel %vm7817, %v7691, %v7842
      %7844 = vst [vmem:[%s2129 + $0x24] sm:$0xf] %v7843
      %7845 = vst.msk [vmem:[%s2129 + $0x28] sm:$0xf] %vm7821, %v7693
      %v7846 = vld [vmem:[%s2129 + $0x2c] sm:$0x1]
      %v7847 = vsel %vm7824, %v7695, %v7846
      %7848 = vst [vmem:[%s2129 + $0x2c] sm:$0x1] %v7847
      %v7849 = vld [vmem:[%s2129 + $0x30] sm:$0xf]
      %v7850 = vsel %vm7817, %v7697, %v7849
      %7851 = vst [vmem:[%s2129 + $0x30] sm:$0xf] %v7850
      %7852 = vst.msk [vmem:[%s2129 + $0x34] sm:$0xf] %vm7821, %v7699
      %v7853 = vld [vmem:[%s2129 + $0x38] sm:$0x1]
      %v7854 = vsel %vm7824, %v7701, %v7853
      %7855 = vst [vmem:[%s2129 + $0x38] sm:$0x1] %v7854
      %v7856 = vld [vmem:[%s2129 + $0x3c] sm:$0xf]
      %v7857 = vsel %vm7817, %v7703, %v7856
      %7858 = vst [vmem:[%s2129 + $0x3c] sm:$0xf] %v7857
      %7859 = vst.msk [vmem:[%s2129 + $0x40] sm:$0xf] %vm7821, %v7705
      %v7860 = vld [vmem:[%s2129 + $0x44] sm:$0x1]
      %v7861 = vsel %vm7824, %v7707, %v7860
      %7862 = vst [vmem:[%s2129 + $0x44] sm:$0x1] %v7861
      %v7863 = vld [vmem:[%s2129 + $0x48] sm:$0xf]
      %v7864 = vsel %vm7817, %v7709, %v7863
      %7865 = vst [vmem:[%s2129 + $0x48] sm:$0xf] %v7864
      %7866 = vst.msk [vmem:[%s2129 + $0x4c] sm:$0xf] %vm7821, %v7711
      %v7867 = vld [vmem:[%s2129 + $0x50] sm:$0x1]
      %v7868 = vsel %vm7824, %v7713, %v7867
      %7869 = vst [vmem:[%s2129 + $0x50] sm:$0x1] %v7868
      %v7870 = vld [vmem:[%s2129 + $0x54] sm:$0xf]
      %v7871 = vsel %vm7817, %v7715, %v7870
      %7872 = vst [vmem:[%s2129 + $0x54] sm:$0xf] %v7871
      %7873 = vst.msk [vmem:[%s2129 + $0x58] sm:$0xf] %vm7821, %v7717
      %v7874 = vld [vmem:[%s2129 + $0x5c] sm:$0x1]
      %v7875 = vsel %vm7824, %v7719, %v7874
      %7876 = vst [vmem:[%s2129 + $0x5c] sm:$0x1] %v7875
      %v7877 = vld [vmem:[%s2129 + $0x60] sm:$0xf]
      %v7878 = vsel %vm7817, %v7721, %v7877
      %7879 = vst [vmem:[%s2129 + $0x60] sm:$0xf] %v7878
      %7880 = vst.msk [vmem:[%s2129 + $0x64] sm:$0xf] %vm7821, %v7723
      %v7881 = vld [vmem:[%s2129 + $0x68] sm:$0x1]
      %v7882 = vsel %vm7824, %v7725, %v7881
      %7883 = vst [vmem:[%s2129 + $0x68] sm:$0x1] %v7882
      %v7884 = vld [vmem:[%s2129 + $0x6c] sm:$0xf]
      %v7885 = vsel %vm7817, %v7727, %v7884
      %7886 = vst [vmem:[%s2129 + $0x6c] sm:$0xf] %v7885
      %7887 = vst.msk [vmem:[%s2129 + $0x70] sm:$0xf] %vm7821, %v7729
      %v7888 = vld [vmem:[%s2129 + $0x74] sm:$0x1]
      %v7889 = vsel %vm7824, %v7731, %v7888
      %7890 = vst [vmem:[%s2129 + $0x74] sm:$0x1] %v7889
      %v7891 = vld [vmem:[%s2129 + $0x78] sm:$0xf]
      %v7892 = vsel %vm7817, %v7733, %v7891
      %7893 = vst [vmem:[%s2129 + $0x78] sm:$0xf] %v7892
      %7894 = vst.msk [vmem:[%s2129 + $0x7c] sm:$0xf] %vm7821, %v7735
      %v7895 = vld [vmem:[%s2129 + $0x80] sm:$0x1]
      %v7896 = vsel %vm7824, %v7737, %v7895
      %7897 = vst [vmem:[%s2129 + $0x80] sm:$0x1] %v7896
      %v7898 = vld [vmem:[%s2129 + $0x84] sm:$0xf]
      %v7899 = vsel %vm7817, %v7739, %v7898
      %7900 = vst [vmem:[%s2129 + $0x84] sm:$0xf] %v7899
      %7901 = vst.msk [vmem:[%s2129 + $0x88] sm:$0xf] %vm7821, %v7741
      %v7902 = vld [vmem:[%s2129 + $0x8c] sm:$0x1]
      %v7903 = vsel %vm7824, %v7743, %v7902
      %7904 = vst [vmem:[%s2129 + $0x8c] sm:$0x1] %v7903
      %v7905 = vld [vmem:[%s2129 + $0x90] sm:$0xf]
      %v7906 = vsel %vm7817, %v7745, %v7905
      %7907 = vst [vmem:[%s2129 + $0x90] sm:$0xf] %v7906
      %7908 = vst.msk [vmem:[%s2129 + $0x94] sm:$0xf] %vm7821, %v7747
      %v7909 = vld [vmem:[%s2129 + $0x98] sm:$0x1]
      %v7910 = vsel %vm7824, %v7749, %v7909
      %7911 = vst [vmem:[%s2129 + $0x98] sm:$0x1] %v7910
      %v7912 = vld [vmem:[%s2129 + $0x9c] sm:$0xf]
      %v7913 = vsel %vm7817, %v7751, %v7912
      %7914 = vst [vmem:[%s2129 + $0x9c] sm:$0xf] %v7913
      %7915 = vst.msk [vmem:[%s2129 + $0xa0] sm:$0xf] %vm7821, %v7753
      %v7916 = vld [vmem:[%s2129 + $0xa4] sm:$0x1]
      %v7917 = vsel %vm7824, %v7755, %v7916
      %7918 = vst [vmem:[%s2129 + $0xa4] sm:$0x1] %v7917
      %v7919 = vld [vmem:[%s2129 + $0xa8] sm:$0xf]
      %v7920 = vsel %vm7817, %v7757, %v7919
      %7921 = vst [vmem:[%s2129 + $0xa8] sm:$0xf] %v7920
      %7922 = vst.msk [vmem:[%s2129 + $0xac] sm:$0xf] %vm7821, %v7759
      %v7923 = vld [vmem:[%s2129 + $0xb0] sm:$0x1]
      %v7924 = vsel %vm7824, %v7761, %v7923
      %7925 = vst [vmem:[%s2129 + $0xb0] sm:$0x1] %v7924
      %v7926 = vld [vmem:[%s2129 + $0xb4] sm:$0xf]
      %v7927 = vsel %vm7817, %v7763, %v7926
      %7928 = vst [vmem:[%s2129 + $0xb4] sm:$0xf] %v7927
      %7929 = vst.msk [vmem:[%s2129 + $0xb8] sm:$0xf] %vm7821, %v7765
      %v7930 = vld [vmem:[%s2129 + $0xbc] sm:$0x1]
      %v7931 = vsel %vm7824, %v7767, %v7930
      %7932 = vst [vmem:[%s2129 + $0xbc] sm:$0x1] %v7931
      %v7933 = vld [vmem:[#allocation2] sm:$0xf]
      %v7934 = vld [vmem:[#allocation2 + $0x4] sm:$0xf]
      %v7935 = vld [vmem:[#allocation2 + $0x8] sm:$0x1]
      %v7936 = vld [vmem:[#allocation2 + $0xc] sm:$0xf]
      %v7937 = vld [vmem:[#allocation2 + $0x10] sm:$0xf]
      %v7938 = vld [vmem:[#allocation2 + $0x14] sm:$0x1]
      %v7939 = vld [vmem:[#allocation2 + $0x18] sm:$0xf]
      %v7940 = vld [vmem:[#allocation2 + $0x1c] sm:$0xf]
      %v7941 = vld [vmem:[#allocation2 + $0x20] sm:$0x1]
      %v7942 = vld [vmem:[#allocation2 + $0x24] sm:$0xf]
      %v7943 = vld [vmem:[#allocation2 + $0x28] sm:$0xf]
      %v7944 = vld [vmem:[#allocation2 + $0x2c] sm:$0x1]
      %v7945 = vld [vmem:[#allocation2 + $0x30] sm:$0xf]
      %v7946 = vld [vmem:[#allocation2 + $0x34] sm:$0xf]
      %v7947 = vld [vmem:[#allocation2 + $0x38] sm:$0x1]
      %v7948 = vld [vmem:[#allocation2 + $0x3c] sm:$0xf]
      %v7949 = vld [vmem:[#allocation2 + $0x40] sm:$0xf]
      %v7950 = vld [vmem:[#allocation2 + $0x44] sm:$0x1]
      %v7951 = vld [vmem:[#allocation2 + $0x48] sm:$0xf]
      %v7952 = vld [vmem:[#allocation2 + $0x4c] sm:$0xf]
      %v7953 = vld [vmem:[#allocation2 + $0x50] sm:$0x1]
      %v7954 = vld [vmem:[#allocation2 + $0x54] sm:$0xf]
      %v7955 = vld [vmem:[#allocation2 + $0x58] sm:$0xf]
      %v7956 = vld [vmem:[#allocation2 + $0x5c] sm:$0x1]
      %v7957 = vld [vmem:[#allocation2 + $0x60] sm:$0xf]
      %v7958 = vld [vmem:[#allocation2 + $0x64] sm:$0xf]
      %v7959 = vld [vmem:[#allocation2 + $0x68] sm:$0x1]
      %v7960 = vld [vmem:[#allocation2 + $0x6c] sm:$0xf]
      %v7961 = vld [vmem:[#allocation2 + $0x70] sm:$0xf]
      %v7962 = vld [vmem:[#allocation2 + $0x74] sm:$0x1]
      %v7963 = vld [vmem:[#allocation2 + $0x78] sm:$0xf]
      %v7964 = vld [vmem:[#allocation2 + $0x7c] sm:$0xf]
      %v7965 = vld [vmem:[#allocation2 + $0x80] sm:$0x1]
      %v7966 = vld [vmem:[#allocation2 + $0x84] sm:$0xf]
      %v7967 = vld [vmem:[#allocation2 + $0x88] sm:$0xf]
      %v7968 = vld [vmem:[#allocation2 + $0x8c] sm:$0x1]
      %v7969 = vld [vmem:[#allocation2 + $0x90] sm:$0xf]
      %v7970 = vld [vmem:[#allocation2 + $0x94] sm:$0xf]
      %v7971 = vld [vmem:[#allocation2 + $0x98] sm:$0x1]
      %v7972 = vld [vmem:[#allocation2 + $0x9c] sm:$0xf]
      %v7973 = vld [vmem:[#allocation2 + $0xa0] sm:$0xf]
      %v7974 = vld [vmem:[#allocation2 + $0xa4] sm:$0x1]
      %v7975 = vld [vmem:[#allocation2 + $0xa8] sm:$0xf]
      %v7976 = vld [vmem:[#allocation2 + $0xac] sm:$0xf]
      %v7977 = vld [vmem:[#allocation2 + $0xb0] sm:$0x1]
      %v7978 = vld [vmem:[#allocation2 + $0xb4] sm:$0xf]
      %v7979 = vld [vmem:[#allocation2 + $0xb8] sm:$0xf]
      %v7980 = vld [vmem:[#allocation2 + $0xbc] sm:$0x1]
      %v7981 = vld [vmem:[#allocation2 + $0xc0] sm:$0xf]
      %v7982 = vld [vmem:[#allocation2 + $0xc4] sm:$0xf]
      %v7983 = vld [vmem:[#allocation2 + $0xc8] sm:$0x1]
      %v7984 = vld [vmem:[#allocation2 + $0xcc] sm:$0xf]
      %v7985 = vld [vmem:[#allocation2 + $0xd0] sm:$0xf]
      %v7986 = vld [vmem:[#allocation2 + $0xd4] sm:$0x1]
      %v8019 = vunpack.c.l.b16 %v7933
      %v8020 = vunpack.c.l.b16 %v7934
      %v8021 = vunpack.c.l.b16 %v7936
      %v8022 = vunpack.c.l.b16 %v7937
      %v8023 = vunpack.c.l.b16 %v7939
      %v8024 = vunpack.c.l.b16 %v7940
      %v8025 = vunpack.c.l.b16 %v7942
      %v8026 = vunpack.c.l.b16 %v7943
      %v8027 = vunpack.c.l.b16 %v7945
      %v8028 = vunpack.c.l.b16 %v7946
      %v8029 = vunpack.c.l.b16 %v7948
      %v8030 = vunpack.c.l.b16 %v7949
      %v8031 = vunpack.c.l.b16 %v7951
      %v8032 = vunpack.c.l.b16 %v7952
      %v8033 = vunpack.c.l.b16 %v7954
      %v8034 = vunpack.c.l.b16 %v7955
      %v8035 = vunpack.c.l.b16 %v7957
      %v8036 = vunpack.c.l.b16 %v7958
      %v8037 = vunpack.c.l.b16 %v7960
      %v8038 = vunpack.c.l.b16 %v7961
      %v8039 = vunpack.c.l.b16 %v7963
      %v8040 = vunpack.c.l.b16 %v7964
      %v8041 = vunpack.c.l.b16 %v7966
      %v8042 = vunpack.c.l.b16 %v7967
      %v8043 = vunpack.c.l.b16 %v7969
      %v8044 = vunpack.c.l.b16 %v7970
      %v8045 = vunpack.c.l.b16 %v7972
      %v8046 = vunpack.c.l.b16 %v7973
      %v8047 = vunpack.c.l.b16 %v7975
      %v8048 = vunpack.c.l.b16 %v7976
      %v8049 = vunpack.c.l.b16 %v7978
      %v8050 = vunpack.c.l.b16 %v7979
      %v8051 = vpack.c.b16 %v8020, %v8019
      %v8052 = vpack.c.b16 %v8022, %v8021
      %v8053 = vpack.c.b16 %v8024, %v8023
      %v8054 = vpack.c.b16 %v8026, %v8025
      %v8055 = vpack.c.b16 %v8028, %v8027
      %v8056 = vpack.c.b16 %v8030, %v8029
      %v8057 = vpack.c.b16 %v8032, %v8031
      %v8058 = vpack.c.b16 %v8034, %v8033
      %v8059 = vpack.c.b16 %v8036, %v8035
      %v8060 = vpack.c.b16 %v8038, %v8037
      %v8061 = vpack.c.b16 %v8040, %v8039
      %v8062 = vpack.c.b16 %v8042, %v8041
      %v8063 = vpack.c.b16 %v8044, %v8043
      %v8064 = vpack.c.b16 %v8046, %v8045
      %v8065 = vpack.c.b16 %v8048, %v8047
      %v8066 = vpack.c.b16 %v8050, %v8049
      %vm8083 = vcmask 261120
      %8084 = vst.msk [vmem:[#allocation4] sm:$0xff] %vm8083, %v8051
      %8085 = vst.msk [vmem:[#allocation4 + $0x18] sm:$0xff] %vm8083, %v8052
      %8086 = vst.msk [vmem:[#allocation4 + $0x30] sm:$0xff] %vm8083, %v8053
      %8087 = vst.msk [vmem:[#allocation4 + $0x48] sm:$0xff] %vm8083, %v8054
      %8088 = vst.msk [vmem:[#allocation4 + $0x60] sm:$0xff] %vm8083, %v8055
      %8089 = vst.msk [vmem:[#allocation4 + $0x78] sm:$0xff] %vm8083, %v8056
      %8090 = vst.msk [vmem:[#allocation4 + $0x90] sm:$0xff] %vm8083, %v8057
      %8091 = vst.msk [vmem:[#allocation4 + $0xa8] sm:$0xff] %vm8083, %v8058
      %8092 = vst.msk [vmem:[#allocation4 + $0xc0] sm:$0xff] %vm8083, %v8059
      %8093 = vst.msk [vmem:[#allocation4 + $0xd8] sm:$0xff] %vm8083, %v8060
      %8094 = vst.msk [vmem:[#allocation4 + $0xf0] sm:$0xff] %vm8083, %v8061
      %8095 = vst.msk [vmem:[#allocation4 + $0x108] sm:$0xff] %vm8083, %v8062
      %8096 = vst.msk [vmem:[#allocation4 + $0x120] sm:$0xff] %vm8083, %v8063
      %8097 = vst.msk [vmem:[#allocation4 + $0x138] sm:$0xff] %vm8083, %v8064
      %8098 = vst.msk [vmem:[#allocation4 + $0x150] sm:$0xff] %vm8083, %v8065
      %8099 = vst.msk [vmem:[#allocation4 + $0x168] sm:$0xff] %vm8083, %v8066
      %v8101 = vshrl.u32 %v7933, 16
      %v8103 = vrot.slane %v8101, 4
      %v8104 = vshll.u32 %v7933, 16
      %v8106 = vrot.slane %v8104, 5
      %v8107 = vor.u32 %v8103, %v8106
      %v8108 = vrot.slane %v8107, 4
      %v8110 = vshll.u32 %v7934, 16
      %v8112 = vrot.slane %v8110, 5
      %v8113 = vsel %vm2416, %v8108, %v8112
      %v8114 = vshrl.u32 %v7934, 16
      %v8116 = vrot.slane %v8114, 4
      %v8117 = vor.u32 %v8116, %v8112
      %v8118 = vrot.slane %v8117, 4
      %v8120 = vshll.u32 %v7935, 16
      %v8122 = vrot.slane %v8120, 5
      %v8123 = vsel %vm2416, %v8118, %v8122
      %v8125 = vshrl.u32 %v7936, 16
      %v8127 = vrot.slane %v8125, 4
      %v8128 = vshll.u32 %v7936, 16
      %v8130 = vrot.slane %v8128, 5
      %v8131 = vor.u32 %v8127, %v8130
      %v8132 = vrot.slane %v8131, 4
      %v8134 = vshll.u32 %v7937, 16
      %v8136 = vrot.slane %v8134, 5
      %v8137 = vsel %vm2416, %v8132, %v8136
      %v8138 = vshrl.u32 %v7937, 16
      %v8140 = vrot.slane %v8138, 4
      %v8141 = vor.u32 %v8140, %v8136
      %v8142 = vrot.slane %v8141, 4
      %v8144 = vshll.u32 %v7938, 16
      %v8146 = vrot.slane %v8144, 5
      %v8147 = vsel %vm2416, %v8142, %v8146
      %v8149 = vshrl.u32 %v7939, 16
      %v8151 = vrot.slane %v8149, 4
      %v8152 = vshll.u32 %v7939, 16
      %v8154 = vrot.slane %v8152, 5
      %v8155 = vor.u32 %v8151, %v8154
      %v8156 = vrot.slane %v8155, 4
      %v8158 = vshll.u32 %v7940, 16
      %v8160 = vrot.slane %v8158, 5
      %v8161 = vsel %vm2416, %v8156, %v8160
      %v8162 = vshrl.u32 %v7940, 16
      %v8164 = vrot.slane %v8162, 4
      %v8165 = vor.u32 %v8164, %v8160
      %v8166 = vrot.slane %v8165, 4
      %v8168 = vshll.u32 %v7941, 16
      %v8170 = vrot.slane %v8168, 5
      %v8171 = vsel %vm2416, %v8166, %v8170
      %v8173 = vshrl.u32 %v7942, 16
      %v8175 = vrot.slane %v8173, 4
      %v8176 = vshll.u32 %v7942, 16
      %v8178 = vrot.slane %v8176, 5
      %v8179 = vor.u32 %v8175, %v8178
      %v8180 = vrot.slane %v8179, 4
      %v8182 = vshll.u32 %v7943, 16
      %v8184 = vrot.slane %v8182, 5
      %v8185 = vsel %vm2416, %v8180, %v8184
      %v8186 = vshrl.u32 %v7943, 16
      %v8188 = vrot.slane %v8186, 4
      %v8189 = vor.u32 %v8188, %v8184
      %v8190 = vrot.slane %v8189, 4
      %v8192 = vshll.u32 %v7944, 16
      %v8194 = vrot.slane %v8192, 5
      %v8195 = vsel %vm2416, %v8190, %v8194
      %v8197 = vshrl.u32 %v7945, 16
      %v8199 = vrot.slane %v8197, 4
      %v8200 = vshll.u32 %v7945, 16
      %v8202 = vrot.slane %v8200, 5
      %v8203 = vor.u32 %v8199, %v8202
      %v8204 = vrot.slane %v8203, 4
      %v8206 = vshll.u32 %v7946, 16
      %v8208 = vrot.slane %v8206, 5
      %v8209 = vsel %vm2416, %v8204, %v8208
      %v8210 = vshrl.u32 %v7946, 16
      %v8212 = vrot.slane %v8210, 4
      %v8213 = vor.u32 %v8212, %v8208
      %v8214 = vrot.slane %v8213, 4
      %v8216 = vshll.u32 %v7947, 16
      %v8218 = vrot.slane %v8216, 5
      %v8219 = vsel %vm2416, %v8214, %v8218
      %v8221 = vshrl.u32 %v7948, 16
      %v8223 = vrot.slane %v8221, 4
      %v8224 = vshll.u32 %v7948, 16
      %v8226 = vrot.slane %v8224, 5
      %v8227 = vor.u32 %v8223, %v8226
      %v8228 = vrot.slane %v8227, 4
      %v8230 = vshll.u32 %v7949, 16
      %v8232 = vrot.slane %v8230, 5
      %v8233 = vsel %vm2416, %v8228, %v8232
      %v8234 = vshrl.u32 %v7949, 16
      %v8236 = vrot.slane %v8234, 4
      %v8237 = vor.u32 %v8236, %v8232
      %v8238 = vrot.slane %v8237, 4
      %v8240 = vshll.u32 %v7950, 16
      %v8242 = vrot.slane %v8240, 5
      %v8243 = vsel %vm2416, %v8238, %v8242
      %v8245 = vshrl.u32 %v7951, 16
      %v8247 = vrot.slane %v8245, 4
      %v8248 = vshll.u32 %v7951, 16
      %v8250 = vrot.slane %v8248, 5
      %v8251 = vor.u32 %v8247, %v8250
      %v8252 = vrot.slane %v8251, 4
      %v8254 = vshll.u32 %v7952, 16
      %v8256 = vrot.slane %v8254, 5
      %v8257 = vsel %vm2416, %v8252, %v8256
      %v8258 = vshrl.u32 %v7952, 16
      %v8260 = vrot.slane %v8258, 4
      %v8261 = vor.u32 %v8260, %v8256
      %v8262 = vrot.slane %v8261, 4
      %v8264 = vshll.u32 %v7953, 16
      %v8266 = vrot.slane %v8264, 5
      %v8267 = vsel %vm2416, %v8262, %v8266
      %v8269 = vshrl.u32 %v7954, 16
      %v8271 = vrot.slane %v8269, 4
      %v8272 = vshll.u32 %v7954, 16
      %v8274 = vrot.slane %v8272, 5
      %v8275 = vor.u32 %v8271, %v8274
      %v8276 = vrot.slane %v8275, 4
      %v8278 = vshll.u32 %v7955, 16
      %v8280 = vrot.slane %v8278, 5
      %v8281 = vsel %vm2416, %v8276, %v8280
      %v8282 = vshrl.u32 %v7955, 16
      %v8284 = vrot.slane %v8282, 4
      %v8285 = vor.u32 %v8284, %v8280
      %v8286 = vrot.slane %v8285, 4
      %v8288 = vshll.u32 %v7956, 16
      %v8290 = vrot.slane %v8288, 5
      %v8291 = vsel %vm2416, %v8286, %v8290
      %v8293 = vshrl.u32 %v7957, 16
      %v8295 = vrot.slane %v8293, 4
      %v8296 = vshll.u32 %v7957, 16
      %v8298 = vrot.slane %v8296, 5
      %v8299 = vor.u32 %v8295, %v8298
      %v8300 = vrot.slane %v8299, 4
      %v8302 = vshll.u32 %v7958, 16
      %v8304 = vrot.slane %v8302, 5
      %v8305 = vsel %vm2416, %v8300, %v8304
      %v8306 = vshrl.u32 %v7958, 16
      %v8308 = vrot.slane %v8306, 4
      %v8309 = vor.u32 %v8308, %v8304
      %v8310 = vrot.slane %v8309, 4
      %v8312 = vshll.u32 %v7959, 16
      %v8314 = vrot.slane %v8312, 5
      %v8315 = vsel %vm2416, %v8310, %v8314
      %v8317 = vshrl.u32 %v7960, 16
      %v8319 = vrot.slane %v8317, 4
      %v8320 = vshll.u32 %v7960, 16
      %v8322 = vrot.slane %v8320, 5
      %v8323 = vor.u32 %v8319, %v8322
      %v8324 = vrot.slane %v8323, 4
      %v8326 = vshll.u32 %v7961, 16
      %v8328 = vrot.slane %v8326, 5
      %v8329 = vsel %vm2416, %v8324, %v8328
      %v8330 = vshrl.u32 %v7961, 16
      %v8332 = vrot.slane %v8330, 4
      %v8333 = vor.u32 %v8332, %v8328
      %v8334 = vrot.slane %v8333, 4
      %v8336 = vshll.u32 %v7962, 16
      %v8338 = vrot.slane %v8336, 5
      %v8339 = vsel %vm2416, %v8334, %v8338
      %v8341 = vshrl.u32 %v7963, 16
      %v8343 = vrot.slane %v8341, 4
      %v8344 = vshll.u32 %v7963, 16
      %v8346 = vrot.slane %v8344, 5
      %v8347 = vor.u32 %v8343, %v8346
      %v8348 = vrot.slane %v8347, 4
      %v8350 = vshll.u32 %v7964, 16
      %v8352 = vrot.slane %v8350, 5
      %v8353 = vsel %vm2416, %v8348, %v8352
      %v8354 = vshrl.u32 %v7964, 16
      %v8356 = vrot.slane %v8354, 4
      %v8357 = vor.u32 %v8356, %v8352
      %v8358 = vrot.slane %v8357, 4
      %v8360 = vshll.u32 %v7965, 16
      %v8362 = vrot.slane %v8360, 5
      %v8363 = vsel %vm2416, %v8358, %v8362
      %v8365 = vshrl.u32 %v7966, 16
      %v8367 = vrot.slane %v8365, 4
      %v8368 = vshll.u32 %v7966, 16
      %v8370 = vrot.slane %v8368, 5
      %v8371 = vor.u32 %v8367, %v8370
      %v8372 = vrot.slane %v8371, 4
      %v8374 = vshll.u32 %v7967, 16
      %v8376 = vrot.slane %v8374, 5
      %v8377 = vsel %vm2416, %v8372, %v8376
      %v8378 = vshrl.u32 %v7967, 16
      %v8380 = vrot.slane %v8378, 4
      %v8381 = vor.u32 %v8380, %v8376
      %v8382 = vrot.slane %v8381, 4
      %v8384 = vshll.u32 %v7968, 16
      %v8386 = vrot.slane %v8384, 5
      %v8387 = vsel %vm2416, %v8382, %v8386
      %v8389 = vshrl.u32 %v7969, 16
      %v8391 = vrot.slane %v8389, 4
      %v8392 = vshll.u32 %v7969, 16
      %v8394 = vrot.slane %v8392, 5
      %v8395 = vor.u32 %v8391, %v8394
      %v8396 = vrot.slane %v8395, 4
      %v8398 = vshll.u32 %v7970, 16
      %v8400 = vrot.slane %v8398, 5
      %v8401 = vsel %vm2416, %v8396, %v8400
      %v8402 = vshrl.u32 %v7970, 16
      %v8404 = vrot.slane %v8402, 4
      %v8405 = vor.u32 %v8404, %v8400
      %v8406 = vrot.slane %v8405, 4
      %v8408 = vshll.u32 %v7971, 16
      %v8410 = vrot.slane %v8408, 5
      %v8411 = vsel %vm2416, %v8406, %v8410
      %v8413 = vshrl.u32 %v7972, 16
      %v8415 = vrot.slane %v8413, 4
      %v8416 = vshll.u32 %v7972, 16
      %v8418 = vrot.slane %v8416, 5
      %v8419 = vor.u32 %v8415, %v8418
      %v8420 = vrot.slane %v8419, 4
      %v8422 = vshll.u32 %v7973, 16
      %v8424 = vrot.slane %v8422, 5
      %v8425 = vsel %vm2416, %v8420, %v8424
      %v8426 = vshrl.u32 %v7973, 16
      %v8428 = vrot.slane %v8426, 4
      %v8429 = vor.u32 %v8428, %v8424
      %v8430 = vrot.slane %v8429, 4
      %v8432 = vshll.u32 %v7974, 16
      %v8434 = vrot.slane %v8432, 5
      %v8435 = vsel %vm2416, %v8430, %v8434
      %v8437 = vshrl.u32 %v7975, 16
      %v8439 = vrot.slane %v8437, 4
      %v8440 = vshll.u32 %v7975, 16
      %v8442 = vrot.slane %v8440, 5
      %v8443 = vor.u32 %v8439, %v8442
      %v8444 = vrot.slane %v8443, 4
      %v8446 = vshll.u32 %v7976, 16
      %v8448 = vrot.slane %v8446, 5
      %v8449 = vsel %vm2416, %v8444, %v8448
      %v8450 = vshrl.u32 %v7976, 16
      %v8452 = vrot.slane %v8450, 4
      %v8453 = vor.u32 %v8452, %v8448
      %v8454 = vrot.slane %v8453, 4
      %v8456 = vshll.u32 %v7977, 16
      %v8458 = vrot.slane %v8456, 5
      %v8459 = vsel %vm2416, %v8454, %v8458
      %v8461 = vshrl.u32 %v7978, 16
      %v8463 = vrot.slane %v8461, 4
      %v8464 = vshll.u32 %v7978, 16
      %v8466 = vrot.slane %v8464, 5
      %v8467 = vor.u32 %v8463, %v8466
      %v8468 = vrot.slane %v8467, 4
      %v8470 = vshll.u32 %v7979, 16
      %v8472 = vrot.slane %v8470, 5
      %v8473 = vsel %vm2416, %v8468, %v8472
      %v8474 = vshrl.u32 %v7979, 16
      %v8476 = vrot.slane %v8474, 4
      %v8477 = vor.u32 %v8476, %v8472
      %v8478 = vrot.slane %v8477, 4
      %v8480 = vshll.u32 %v7980, 16
      %v8482 = vrot.slane %v8480, 5
      %v8483 = vsel %vm2416, %v8478, %v8482
      %v8484 = vunpack.c.l.b16 %v8113
      %v8485 = vunpack.c.l.b16 %v8123
      %v8486 = vunpack.c.l.b16 %v8137
      %v8487 = vunpack.c.l.b16 %v8147
      %v8488 = vunpack.c.l.b16 %v8161
      %v8489 = vunpack.c.l.b16 %v8171
      %v8490 = vunpack.c.l.b16 %v8185
      %v8491 = vunpack.c.l.b16 %v8195
      %v8492 = vunpack.c.l.b16 %v8209
      %v8493 = vunpack.c.l.b16 %v8219
      %v8494 = vunpack.c.l.b16 %v8233
      %v8495 = vunpack.c.l.b16 %v8243
      %v8496 = vunpack.c.l.b16 %v8257
      %v8497 = vunpack.c.l.b16 %v8267
      %v8498 = vunpack.c.l.b16 %v8281
      %v8499 = vunpack.c.l.b16 %v8291
      %v8500 = vunpack.c.l.b16 %v8305
      %v8501 = vunpack.c.l.b16 %v8315
      %v8502 = vunpack.c.l.b16 %v8329
      %v8503 = vunpack.c.l.b16 %v8339
      %v8504 = vunpack.c.l.b16 %v8353
      %v8505 = vunpack.c.l.b16 %v8363
      %v8506 = vunpack.c.l.b16 %v8377
      %v8507 = vunpack.c.l.b16 %v8387
      %v8508 = vunpack.c.l.b16 %v8401
      %v8509 = vunpack.c.l.b16 %v8411
      %v8510 = vunpack.c.l.b16 %v8425
      %v8511 = vunpack.c.l.b16 %v8435
      %v8512 = vunpack.c.l.b16 %v8449
      %v8513 = vunpack.c.l.b16 %v8459
      %v8514 = vunpack.c.l.b16 %v8473
      %v8515 = vunpack.c.l.b16 %v8483
      %v8516 = vpack.c.b16 %v8485, %v8484
      %v8517 = vpack.c.b16 %v8487, %v8486
      %v8518 = vpack.c.b16 %v8489, %v8488
      %v8519 = vpack.c.b16 %v8491, %v8490
      %v8520 = vpack.c.b16 %v8493, %v8492
      %v8521 = vpack.c.b16 %v8495, %v8494
      %v8522 = vpack.c.b16 %v8497, %v8496
      %v8523 = vpack.c.b16 %v8499, %v8498
      %v8524 = vpack.c.b16 %v8501, %v8500
      %v8525 = vpack.c.b16 %v8503, %v8502
      %v8526 = vpack.c.b16 %v8505, %v8504
      %v8527 = vpack.c.b16 %v8507, %v8506
      %v8528 = vpack.c.b16 %v8509, %v8508
      %v8529 = vpack.c.b16 %v8511, %v8510
      %v8530 = vpack.c.b16 %v8513, %v8512
      %v8531 = vpack.c.b16 %v8515, %v8514
      %8532 = vrot.lane.b32.xlu0 %v8516, 32
      %v8533 = vpop.permute.xlu0 %8532
      %8534 = vrot.lane.b32.xlu0 %v8517, 32
      %v8535 = vpop.permute.xlu0 %8534
      %8536 = vrot.lane.b32.xlu0 %v8518, 32
      %v8537 = vpop.permute.xlu0 %8536
      %8538 = vrot.lane.b32.xlu0 %v8519, 32
      %v8539 = vpop.permute.xlu0 %8538
      %8540 = vrot.lane.b32.xlu0 %v8520, 32
      %v8541 = vpop.permute.xlu0 %8540
      %8542 = vrot.lane.b32.xlu0 %v8521, 32
      %v8543 = vpop.permute.xlu0 %8542
      %8544 = vrot.lane.b32.xlu0 %v8522, 32
      %v8545 = vpop.permute.xlu0 %8544
      %8546 = vrot.lane.b32.xlu0 %v8523, 32
      %v8547 = vpop.permute.xlu0 %8546
      %8548 = vrot.lane.b32.xlu0 %v8524, 32
      %v8549 = vpop.permute.xlu0 %8548
      %8550 = vrot.lane.b32.xlu0 %v8525, 32
      %v8551 = vpop.permute.xlu0 %8550
      %8552 = vrot.lane.b32.xlu0 %v8526, 32
      %v8553 = vpop.permute.xlu0 %8552
      %8554 = vrot.lane.b32.xlu0 %v8527, 32
      %v8555 = vpop.permute.xlu0 %8554
      %8556 = vrot.lane.b32.xlu0 %v8528, 32
      %v8557 = vpop.permute.xlu0 %8556
      %8558 = vrot.lane.b32.xlu0 %v8529, 32
      %v8559 = vpop.permute.xlu0 %8558
      %8560 = vrot.lane.b32.xlu0 %v8530, 32
      %v8561 = vpop.permute.xlu0 %8560
      %8562 = vrot.lane.b32.xlu0 %v8531, 32
      %v8563 = vpop.permute.xlu0 %8562
      %vm8580 = vcmask 523520
      %8581 = vst.msk [vmem:[#allocation4] sm:$0xff] %vm8580, %v8533
      %8582 = vst.msk [vmem:[#allocation4 + $0x18] sm:$0xff] %vm8580, %v8535
      %8583 = vst.msk [vmem:[#allocation4 + $0x30] sm:$0xff] %vm8580, %v8537
      %8584 = vst.msk [vmem:[#allocation4 + $0x48] sm:$0xff] %vm8580, %v8539
      %8585 = vst.msk [vmem:[#allocation4 + $0x60] sm:$0xff] %vm8580, %v8541
      %8586 = vst.msk [vmem:[#allocation4 + $0x78] sm:$0xff] %vm8580, %v8543
      %8587 = vst.msk [vmem:[#allocation4 + $0x90] sm:$0xff] %vm8580, %v8545
      %8588 = vst.msk [vmem:[#allocation4 + $0xa8] sm:$0xff] %vm8580, %v8547
      %8589 = vst.msk [vmem:[#allocation4 + $0xc0] sm:$0xff] %vm8580, %v8549
      %8590 = vst.msk [vmem:[#allocation4 + $0xd8] sm:$0xff] %vm8580, %v8551
      %8591 = vst.msk [vmem:[#allocation4 + $0xf0] sm:$0xff] %vm8580, %v8553
      %8592 = vst.msk [vmem:[#allocation4 + $0x108] sm:$0xff] %vm8580, %v8555
      %8593 = vst.msk [vmem:[#allocation4 + $0x120] sm:$0xff] %vm8580, %v8557
      %8594 = vst.msk [vmem:[#allocation4 + $0x138] sm:$0xff] %vm8580, %v8559
      %8595 = vst.msk [vmem:[#allocation4 + $0x150] sm:$0xff] %vm8580, %v8561
      %8596 = vst.msk [vmem:[#allocation4 + $0x168] sm:$0xff] %vm8580, %v8563
      %v8613 = vrot.slane %v7933, 5
      %v8614 = vrot.slane %v8613, 4
      %v8615 = vrot.slane %v7934, 5
      %v8616 = vsel %vm2932, %v8614, %v8615
      %v8617 = vrot.slane %v8615, 4
      %v8618 = vrot.slane %v7935, 5
      %v8619 = vsel %vm2932, %v8617, %v8618
      %v8620 = vrot.slane %v7936, 5
      %v8621 = vrot.slane %v8620, 4
      %v8622 = vrot.slane %v7937, 5
      %v8623 = vsel %vm2932, %v8621, %v8622
      %v8624 = vrot.slane %v8622, 4
      %v8625 = vrot.slane %v7938, 5
      %v8626 = vsel %vm2932, %v8624, %v8625
      %v8627 = vrot.slane %v7939, 5
      %v8628 = vrot.slane %v8627, 4
      %v8629 = vrot.slane %v7940, 5
      %v8630 = vsel %vm2932, %v8628, %v8629
      %v8631 = vrot.slane %v8629, 4
      %v8632 = vrot.slane %v7941, 5
      %v8633 = vsel %vm2932, %v8631, %v8632
      %v8634 = vrot.slane %v7942, 5
      %v8635 = vrot.slane %v8634, 4
      %v8636 = vrot.slane %v7943, 5
      %v8637 = vsel %vm2932, %v8635, %v8636
      %v8638 = vrot.slane %v8636, 4
      %v8639 = vrot.slane %v7944, 5
      %v8640 = vsel %vm2932, %v8638, %v8639
      %v8641 = vrot.slane %v7945, 5
      %v8642 = vrot.slane %v8641, 4
      %v8643 = vrot.slane %v7946, 5
      %v8644 = vsel %vm2932, %v8642, %v8643
      %v8645 = vrot.slane %v8643, 4
      %v8646 = vrot.slane %v7947, 5
      %v8647 = vsel %vm2932, %v8645, %v8646
      %v8648 = vrot.slane %v7948, 5
      %v8649 = vrot.slane %v8648, 4
      %v8650 = vrot.slane %v7949, 5
      %v8651 = vsel %vm2932, %v8649, %v8650
      %v8652 = vrot.slane %v8650, 4
      %v8653 = vrot.slane %v7950, 5
      %v8654 = vsel %vm2932, %v8652, %v8653
      %v8655 = vrot.slane %v7951, 5
      %v8656 = vrot.slane %v8655, 4
      %v8657 = vrot.slane %v7952, 5
      %v8658 = vsel %vm2932, %v8656, %v8657
      %v8659 = vrot.slane %v8657, 4
      %v8660 = vrot.slane %v7953, 5
      %v8661 = vsel %vm2932, %v8659, %v8660
      %v8662 = vrot.slane %v7954, 5
      %v8663 = vrot.slane %v8662, 4
      %v8664 = vrot.slane %v7955, 5
      %v8665 = vsel %vm2932, %v8663, %v8664
      %v8666 = vrot.slane %v8664, 4
      %v8667 = vrot.slane %v7956, 5
      %v8668 = vsel %vm2932, %v8666, %v8667
      %v8669 = vrot.slane %v7957, 5
      %v8670 = vrot.slane %v8669, 4
      %v8671 = vrot.slane %v7958, 5
      %v8672 = vsel %vm2932, %v8670, %v8671
      %v8673 = vrot.slane %v8671, 4
      %v8674 = vrot.slane %v7959, 5
      %v8675 = vsel %vm2932, %v8673, %v8674
      %v8676 = vrot.slane %v7960, 5
      %v8677 = vrot.slane %v8676, 4
      %v8678 = vrot.slane %v7961, 5
      %v8679 = vsel %vm2932, %v8677, %v8678
      %v8680 = vrot.slane %v8678, 4
      %v8681 = vrot.slane %v7962, 5
      %v8682 = vsel %vm2932, %v8680, %v8681
      %v8683 = vrot.slane %v7963, 5
      %v8684 = vrot.slane %v8683, 4
      %v8685 = vrot.slane %v7964, 5
      %v8686 = vsel %vm2932, %v8684, %v8685
      %v8687 = vrot.slane %v8685, 4
      %v8688 = vrot.slane %v7965, 5
      %v8689 = vsel %vm2932, %v8687, %v8688
      %v8690 = vrot.slane %v7966, 5
      %v8691 = vrot.slane %v8690, 4
      %v8692 = vrot.slane %v7967, 5
      %v8693 = vsel %vm2932, %v8691, %v8692
      %v8694 = vrot.slane %v8692, 4
      %v8695 = vrot.slane %v7968, 5
      %v8696 = vsel %vm2932, %v8694, %v8695
      %v8697 = vrot.slane %v7969, 5
      %v8698 = vrot.slane %v8697, 4
      %v8699 = vrot.slane %v7970, 5
      %v8700 = vsel %vm2932, %v8698, %v8699
      %v8701 = vrot.slane %v8699, 4
      %v8702 = vrot.slane %v7971, 5
      %v8703 = vsel %vm2932, %v8701, %v8702
      %v8704 = vrot.slane %v7972, 5
      %v8705 = vrot.slane %v8704, 4
      %v8706 = vrot.slane %v7973, 5
      %v8707 = vsel %vm2932, %v8705, %v8706
      %v8708 = vrot.slane %v8706, 4
      %v8709 = vrot.slane %v7974, 5
      %v8710 = vsel %vm2932, %v8708, %v8709
      %v8711 = vrot.slane %v7975, 5
      %v8712 = vrot.slane %v8711, 4
      %v8713 = vrot.slane %v7976, 5
      %v8714 = vsel %vm2932, %v8712, %v8713
      %v8715 = vrot.slane %v8713, 4
      %v8716 = vrot.slane %v7977, 5
      %v8717 = vsel %vm2932, %v8715, %v8716
      %v8718 = vrot.slane %v7978, 5
      %v8719 = vrot.slane %v8718, 4
      %v8720 = vrot.slane %v7979, 5
      %v8721 = vsel %vm2932, %v8719, %v8720
      %v8722 = vrot.slane %v8720, 4
      %v8723 = vrot.slane %v7980, 5
      %v8724 = vsel %vm2932, %v8722, %v8723
      %v8725 = vunpack.c.l.b16 %v8616
      %v8726 = vunpack.c.l.b16 %v8619
      %v8727 = vunpack.c.l.b16 %v8623
      %v8728 = vunpack.c.l.b16 %v8626
      %v8729 = vunpack.c.l.b16 %v8630
      %v8730 = vunpack.c.l.b16 %v8633
      %v8731 = vunpack.c.l.b16 %v8637
      %v8732 = vunpack.c.l.b16 %v8640
      %v8733 = vunpack.c.l.b16 %v8644
      %v8734 = vunpack.c.l.b16 %v8647
      %v8735 = vunpack.c.l.b16 %v8651
      %v8736 = vunpack.c.l.b16 %v8654
      %v8737 = vunpack.c.l.b16 %v8658
      %v8738 = vunpack.c.l.b16 %v8661
      %v8739 = vunpack.c.l.b16 %v8665
      %v8740 = vunpack.c.l.b16 %v8668
      %v8741 = vunpack.c.l.b16 %v8672
      %v8742 = vunpack.c.l.b16 %v8675
      %v8743 = vunpack.c.l.b16 %v8679
      %v8744 = vunpack.c.l.b16 %v8682
      %v8745 = vunpack.c.l.b16 %v8686
      %v8746 = vunpack.c.l.b16 %v8689
      %v8747 = vunpack.c.l.b16 %v8693
      %v8748 = vunpack.c.l.b16 %v8696
      %v8749 = vunpack.c.l.b16 %v8700
      %v8750 = vunpack.c.l.b16 %v8703
      %v8751 = vunpack.c.l.b16 %v8707
      %v8752 = vunpack.c.l.b16 %v8710
      %v8753 = vunpack.c.l.b16 %v8714
      %v8754 = vunpack.c.l.b16 %v8717
      %v8755 = vunpack.c.l.b16 %v8721
      %v8756 = vunpack.c.l.b16 %v8724
      %v8757 = vpack.c.b16 %v8726, %v8725
      %v8758 = vpack.c.b16 %v8728, %v8727
      %v8759 = vpack.c.b16 %v8730, %v8729
      %v8760 = vpack.c.b16 %v8732, %v8731
      %v8761 = vpack.c.b16 %v8734, %v8733
      %v8762 = vpack.c.b16 %v8736, %v8735
      %v8763 = vpack.c.b16 %v8738, %v8737
      %v8764 = vpack.c.b16 %v8740, %v8739
      %v8765 = vpack.c.b16 %v8742, %v8741
      %v8766 = vpack.c.b16 %v8744, %v8743
      %v8767 = vpack.c.b16 %v8746, %v8745
      %v8768 = vpack.c.b16 %v8748, %v8747
      %v8769 = vpack.c.b16 %v8750, %v8749
      %v8770 = vpack.c.b16 %v8752, %v8751
      %v8771 = vpack.c.b16 %v8754, %v8753
      %v8772 = vpack.c.b16 %v8756, %v8755
      %8773 = vrot.lane.b32.xlu0 %v8757, 64
      %v8774 = vpop.permute.xlu0 %8773
      %8775 = vrot.lane.b32.xlu0 %v8758, 64
      %v8776 = vpop.permute.xlu0 %8775
      %8777 = vrot.lane.b32.xlu0 %v8759, 64
      %v8778 = vpop.permute.xlu0 %8777
      %8779 = vrot.lane.b32.xlu0 %v8760, 64
      %v8780 = vpop.permute.xlu0 %8779
      %8781 = vrot.lane.b32.xlu0 %v8761, 64
      %v8782 = vpop.permute.xlu0 %8781
      %8783 = vrot.lane.b32.xlu0 %v8762, 64
      %v8784 = vpop.permute.xlu0 %8783
      %8785 = vrot.lane.b32.xlu0 %v8763, 64
      %v8786 = vpop.permute.xlu0 %8785
      %8787 = vrot.lane.b32.xlu0 %v8764, 64
      %v8788 = vpop.permute.xlu0 %8787
      %8789 = vrot.lane.b32.xlu0 %v8765, 64
      %v8790 = vpop.permute.xlu0 %8789
      %8791 = vrot.lane.b32.xlu0 %v8766, 64
      %v8792 = vpop.permute.xlu0 %8791
      %8793 = vrot.lane.b32.xlu0 %v8767, 64
      %v8794 = vpop.permute.xlu0 %8793
      %8795 = vrot.lane.b32.xlu0 %v8768, 64
      %v8796 = vpop.permute.xlu0 %8795
      %8797 = vrot.lane.b32.xlu0 %v8769, 64
      %v8798 = vpop.permute.xlu0 %8797
      %8799 = vrot.lane.b32.xlu0 %v8770, 64
      %v8800 = vpop.permute.xlu0 %8799
      %8801 = vrot.lane.b32.xlu0 %v8771, 64
      %v8802 = vpop.permute.xlu0 %8801
      %8803 = vrot.lane.b32.xlu0 %v8772, 64
      %v8804 = vpop.permute.xlu0 %8803
      %vm8821 = vcmask 785920
      %8822 = vst.msk [vmem:[#allocation4] sm:$0xff] %vm8821, %v8774
      %8823 = vst.msk [vmem:[#allocation4 + $0x18] sm:$0xff] %vm8821, %v8776
      %8824 = vst.msk [vmem:[#allocation4 + $0x30] sm:$0xff] %vm8821, %v8778
      %8825 = vst.msk [vmem:[#allocation4 + $0x48] sm:$0xff] %vm8821, %v8780
      %8826 = vst.msk [vmem:[#allocation4 + $0x60] sm:$0xff] %vm8821, %v8782
      %8827 = vst.msk [vmem:[#allocation4 + $0x78] sm:$0xff] %vm8821, %v8784
      %8828 = vst.msk [vmem:[#allocation4 + $0x90] sm:$0xff] %vm8821, %v8786
      %8829 = vst.msk [vmem:[#allocation4 + $0xa8] sm:$0xff] %vm8821, %v8788
      %8830 = vst.msk [vmem:[#allocation4 + $0xc0] sm:$0xff] %vm8821, %v8790
      %8831 = vst.msk [vmem:[#allocation4 + $0xd8] sm:$0xff] %vm8821, %v8792
      %8832 = vst.msk [vmem:[#allocation4 + $0xf0] sm:$0xff] %vm8821, %v8794
      %8833 = vst.msk [vmem:[#allocation4 + $0x108] sm:$0xff] %vm8821, %v8796
      %8834 = vst.msk [vmem:[#allocation4 + $0x120] sm:$0xff] %vm8821, %v8798
      %8835 = vst.msk [vmem:[#allocation4 + $0x138] sm:$0xff] %vm8821, %v8800
      %8836 = vst.msk [vmem:[#allocation4 + $0x150] sm:$0xff] %vm8821, %v8802
      %8837 = vst.msk [vmem:[#allocation4 + $0x168] sm:$0xff] %vm8821, %v8804
      %v8840 = vunpack.c.l.b16 %v7981
      %v8841 = vunpack.c.l.b16 %v7982
      %v8842 = vpack.c.b16 %v8841, %v8840
      %8843 = vrot.lane.b32.xlu0 %v8052, 96
      %v8844 = vpop.permute.xlu0 %8843
      %8845 = vrot.lane.b32.xlu0 %v8053, 96
      %v8846 = vpop.permute.xlu0 %8845
      %8847 = vrot.lane.b32.xlu0 %v8054, 96
      %v8848 = vpop.permute.xlu0 %8847
      %8849 = vrot.lane.b32.xlu0 %v8055, 96
      %v8850 = vpop.permute.xlu0 %8849
      %8851 = vrot.lane.b32.xlu0 %v8056, 96
      %v8852 = vpop.permute.xlu0 %8851
      %8853 = vrot.lane.b32.xlu0 %v8057, 96
      %v8854 = vpop.permute.xlu0 %8853
      %8855 = vrot.lane.b32.xlu0 %v8058, 96
      %v8856 = vpop.permute.xlu0 %8855
      %8857 = vrot.lane.b32.xlu0 %v8059, 96
      %v8858 = vpop.permute.xlu0 %8857
      %8859 = vrot.lane.b32.xlu0 %v8060, 96
      %v8860 = vpop.permute.xlu0 %8859
      %8861 = vrot.lane.b32.xlu0 %v8061, 96
      %v8862 = vpop.permute.xlu0 %8861
      %8863 = vrot.lane.b32.xlu0 %v8062, 96
      %v8864 = vpop.permute.xlu0 %8863
      %8865 = vrot.lane.b32.xlu0 %v8063, 96
      %v8866 = vpop.permute.xlu0 %8865
      %8867 = vrot.lane.b32.xlu0 %v8064, 96
      %v8868 = vpop.permute.xlu0 %8867
      %8869 = vrot.lane.b32.xlu0 %v8065, 96
      %v8870 = vpop.permute.xlu0 %8869
      %8871 = vrot.lane.b32.xlu0 %v8066, 96
      %v8872 = vpop.permute.xlu0 %8871
      %8873 = vrot.lane.b32.xlu0 %v8842, 96
      %v8874 = vpop.permute.xlu0 %8873
      %vm8891 = vcmask 1048320
      %8892 = vst.msk [vmem:[#allocation4] sm:$0xff] %vm8891, %v8844
      %8893 = vst.msk [vmem:[#allocation4 + $0x18] sm:$0xff] %vm8891, %v8846
      %8894 = vst.msk [vmem:[#allocation4 + $0x30] sm:$0xff] %vm8891, %v8848
      %8895 = vst.msk [vmem:[#allocation4 + $0x48] sm:$0xff] %vm8891, %v8850
      %8896 = vst.msk [vmem:[#allocation4 + $0x60] sm:$0xff] %vm8891, %v8852
      %8897 = vst.msk [vmem:[#allocation4 + $0x78] sm:$0xff] %vm8891, %v8854
      %8898 = vst.msk [vmem:[#allocation4 + $0x90] sm:$0xff] %vm8891, %v8856
      %8899 = vst.msk [vmem:[#allocation4 + $0xa8] sm:$0xff] %vm8891, %v8858
      %8900 = vst.msk [vmem:[#allocation4 + $0xc0] sm:$0xff] %vm8891, %v8860
      %8901 = vst.msk [vmem:[#allocation4 + $0xd8] sm:$0xff] %vm8891, %v8862
      %8902 = vst.msk [vmem:[#allocation4 + $0xf0] sm:$0xff] %vm8891, %v8864
      %8903 = vst.msk [vmem:[#allocation4 + $0x108] sm:$0xff] %vm8891, %v8866
      %8904 = vst.msk [vmem:[#allocation4 + $0x120] sm:$0xff] %vm8891, %v8868
      %8905 = vst.msk [vmem:[#allocation4 + $0x138] sm:$0xff] %vm8891, %v8870
      %8906 = vst.msk [vmem:[#allocation4 + $0x150] sm:$0xff] %vm8891, %v8872
      %8907 = vst.msk [vmem:[#allocation4 + $0x168] sm:$0xff] %vm8891, %v8874
      %v8909 = vshrl.u32 %v7981, 16
      %v8911 = vrot.slane %v8909, 4
      %v8912 = vshll.u32 %v7981, 16
      %v8914 = vrot.slane %v8912, 5
      %v8915 = vor.u32 %v8911, %v8914
      %v8916 = vrot.slane %v8915, 4
      %v8918 = vshll.u32 %v7982, 16
      %v8920 = vrot.slane %v8918, 5
      %v8921 = vsel %vm2416, %v8916, %v8920
      %v8922 = vshrl.u32 %v7982, 16
      %v8924 = vrot.slane %v8922, 4
      %v8925 = vor.u32 %v8924, %v8920
      %v8926 = vrot.slane %v8925, 4
      %v8928 = vshll.u32 %v7983, 16
      %v8930 = vrot.slane %v8928, 5
      %v8931 = vsel %vm2416, %v8926, %v8930
      %v8932 = vunpack.c.l.b16 %v8921
      %v8933 = vunpack.c.l.b16 %v8931
      %v8934 = vpack.c.b16 %v8933, %v8932
      %8951 = vst.msk [vmem:[#allocation4 + $0x8] sm:$0xff] %vm8083, %v8517
      %8952 = vst.msk [vmem:[#allocation4 + $0x20] sm:$0xff] %vm8083, %v8518
      %8953 = vst.msk [vmem:[#allocation4 + $0x38] sm:$0xff] %vm8083, %v8519
      %8954 = vst.msk [vmem:[#allocation4 + $0x50] sm:$0xff] %vm8083, %v8520
      %8955 = vst.msk [vmem:[#allocation4 + $0x68] sm:$0xff] %vm8083, %v8521
      %8956 = vst.msk [vmem:[#allocation4 + $0x80] sm:$0xff] %vm8083, %v8522
      %8957 = vst.msk [vmem:[#allocation4 + $0x98] sm:$0xff] %vm8083, %v8523
      %8958 = vst.msk [vmem:[#allocation4 + $0xb0] sm:$0xff] %vm8083, %v8524
      %8959 = vst.msk [vmem:[#allocation4 + $0xc8] sm:$0xff] %vm8083, %v8525
      %8960 = vst.msk [vmem:[#allocation4 + $0xe0] sm:$0xff] %vm8083, %v8526
      %8961 = vst.msk [vmem:[#allocation4 + $0xf8] sm:$0xff] %vm8083, %v8527
      %8962 = vst.msk [vmem:[#allocation4 + $0x110] sm:$0xff] %vm8083, %v8528
      %8963 = vst.msk [vmem:[#allocation4 + $0x128] sm:$0xff] %vm8083, %v8529
      %8964 = vst.msk [vmem:[#allocation4 + $0x140] sm:$0xff] %vm8083, %v8530
      %8965 = vst.msk [vmem:[#allocation4 + $0x158] sm:$0xff] %vm8083, %v8531
      %8966 = vst.msk [vmem:[#allocation4 + $0x170] sm:$0xff] %vm8083, %v8934
      %v8968 = vrot.slane %v7981, 5
      %v8969 = vrot.slane %v8968, 4
      %v8970 = vrot.slane %v7982, 5
      %v8971 = vsel %vm2932, %v8969, %v8970
      %v8972 = vrot.slane %v8970, 4
      %v8973 = vrot.slane %v7983, 5
      %v8974 = vsel %vm2932, %v8972, %v8973
      %v8975 = vunpack.c.l.b16 %v8971
      %v8976 = vunpack.c.l.b16 %v8974
      %v8977 = vpack.c.b16 %v8976, %v8975
      %8978 = vrot.lane.b32.xlu0 %v8758, 32
      %v8979 = vpop.permute.xlu0 %8978
      %8980 = vrot.lane.b32.xlu0 %v8759, 32
      %v8981 = vpop.permute.xlu0 %8980
      %8982 = vrot.lane.b32.xlu0 %v8760, 32
      %v8983 = vpop.permute.xlu0 %8982
      %8984 = vrot.lane.b32.xlu0 %v8761, 32
      %v8985 = vpop.permute.xlu0 %8984
      %8986 = vrot.lane.b32.xlu0 %v8762, 32
      %v8987 = vpop.permute.xlu0 %8986
      %8988 = vrot.lane.b32.xlu0 %v8763, 32
      %v8989 = vpop.permute.xlu0 %8988
      %8990 = vrot.lane.b32.xlu0 %v8764, 32
      %v8991 = vpop.permute.xlu0 %8990
      %8992 = vrot.lane.b32.xlu0 %v8765, 32
      %v8993 = vpop.permute.xlu0 %8992
      %8994 = vrot.lane.b32.xlu0 %v8766, 32
      %v8995 = vpop.permute.xlu0 %8994
      %8996 = vrot.lane.b32.xlu0 %v8767, 32
      %v8997 = vpop.permute.xlu0 %8996
      %8998 = vrot.lane.b32.xlu0 %v8768, 32
      %v8999 = vpop.permute.xlu0 %8998
      %9000 = vrot.lane.b32.xlu0 %v8769, 32
      %v9001 = vpop.permute.xlu0 %9000
      %9002 = vrot.lane.b32.xlu0 %v8770, 32
      %v9003 = vpop.permute.xlu0 %9002
      %9004 = vrot.lane.b32.xlu0 %v8771, 32
      %v9005 = vpop.permute.xlu0 %9004
      %9006 = vrot.lane.b32.xlu0 %v8772, 32
      %v9007 = vpop.permute.xlu0 %9006
      %9008 = vrot.lane.b32.xlu0 %v8977, 32
      %v9009 = vpop.permute.xlu0 %9008
      %9026 = vst.msk [vmem:[#allocation4 + $0x8] sm:$0xff] %vm8580, %v8979
      %9027 = vst.msk [vmem:[#allocation4 + $0x20] sm:$0xff] %vm8580, %v8981
      %9028 = vst.msk [vmem:[#allocation4 + $0x38] sm:$0xff] %vm8580, %v8983
      %9029 = vst.msk [vmem:[#allocation4 + $0x50] sm:$0xff] %vm8580, %v8985
      %9030 = vst.msk [vmem:[#allocation4 + $0x68] sm:$0xff] %vm8580, %v8987
      %9031 = vst.msk [vmem:[#allocation4 + $0x80] sm:$0xff] %vm8580, %v8989
      %9032 = vst.msk [vmem:[#allocation4 + $0x98] sm:$0xff] %vm8580, %v8991
      %9033 = vst.msk [vmem:[#allocation4 + $0xb0] sm:$0xff] %vm8580, %v8993
      %9034 = vst.msk [vmem:[#allocation4 + $0xc8] sm:$0xff] %vm8580, %v8995
      %9035 = vst.msk [vmem:[#allocation4 + $0xe0] sm:$0xff] %vm8580, %v8997
      %9036 = vst.msk [vmem:[#allocation4 + $0xf8] sm:$0xff] %vm8580, %v8999
      %9037 = vst.msk [vmem:[#allocation4 + $0x110] sm:$0xff] %vm8580, %v9001
      %9038 = vst.msk [vmem:[#allocation4 + $0x128] sm:$0xff] %vm8580, %v9003
      %9039 = vst.msk [vmem:[#allocation4 + $0x140] sm:$0xff] %vm8580, %v9005
      %9040 = vst.msk [vmem:[#allocation4 + $0x158] sm:$0xff] %vm8580, %v9007
      %9041 = vst.msk [vmem:[#allocation4 + $0x170] sm:$0xff] %vm8580, %v9009
      %v9044 = vunpack.c.l.b16 %v7984
      %v9045 = vunpack.c.l.b16 %v7985
      %v9046 = vpack.c.b16 %v9045, %v9044
      %9047 = vrot.lane.b32.xlu0 %v8053, 64
      %v9048 = vpop.permute.xlu0 %9047
      %9049 = vrot.lane.b32.xlu0 %v8054, 64
      %v9050 = vpop.permute.xlu0 %9049
      %9051 = vrot.lane.b32.xlu0 %v8055, 64
      %v9052 = vpop.permute.xlu0 %9051
      %9053 = vrot.lane.b32.xlu0 %v8056, 64
      %v9054 = vpop.permute.xlu0 %9053
      %9055 = vrot.lane.b32.xlu0 %v8057, 64
      %v9056 = vpop.permute.xlu0 %9055
      %9057 = vrot.lane.b32.xlu0 %v8058, 64
      %v9058 = vpop.permute.xlu0 %9057
      %9059 = vrot.lane.b32.xlu0 %v8059, 64
      %v9060 = vpop.permute.xlu0 %9059
      %9061 = vrot.lane.b32.xlu0 %v8060, 64
      %v9062 = vpop.permute.xlu0 %9061
      %9063 = vrot.lane.b32.xlu0 %v8061, 64
      %v9064 = vpop.permute.xlu0 %9063
      %9065 = vrot.lane.b32.xlu0 %v8062, 64
      %v9066 = vpop.permute.xlu0 %9065
      %9067 = vrot.lane.b32.xlu0 %v8063, 64
      %v9068 = vpop.permute.xlu0 %9067
      %9069 = vrot.lane.b32.xlu0 %v8064, 64
      %v9070 = vpop.permute.xlu0 %9069
      %9071 = vrot.lane.b32.xlu0 %v8065, 64
      %v9072 = vpop.permute.xlu0 %9071
      %9073 = vrot.lane.b32.xlu0 %v8066, 64
      %v9074 = vpop.permute.xlu0 %9073
      %9075 = vrot.lane.b32.xlu0 %v8842, 64
      %v9076 = vpop.permute.xlu0 %9075
      %9077 = vrot.lane.b32.xlu0 %v9046, 64
      %v9078 = vpop.permute.xlu0 %9077
      %9095 = vst.msk [vmem:[#allocation4 + $0x8] sm:$0xff] %vm8821, %v9048
      %9096 = vst.msk [vmem:[#allocation4 + $0x20] sm:$0xff] %vm8821, %v9050
      %9097 = vst.msk [vmem:[#allocation4 + $0x38] sm:$0xff] %vm8821, %v9052
      %9098 = vst.msk [vmem:[#allocation4 + $0x50] sm:$0xff] %vm8821, %v9054
      %9099 = vst.msk [vmem:[#allocation4 + $0x68] sm:$0xff] %vm8821, %v9056
      %9100 = vst.msk [vmem:[#allocation4 + $0x80] sm:$0xff] %vm8821, %v9058
      %9101 = vst.msk [vmem:[#allocation4 + $0x98] sm:$0xff] %vm8821, %v9060
      %9102 = vst.msk [vmem:[#allocation4 + $0xb0] sm:$0xff] %vm8821, %v9062
      %9103 = vst.msk [vmem:[#allocation4 + $0xc8] sm:$0xff] %vm8821, %v9064
      %9104 = vst.msk [vmem:[#allocation4 + $0xe0] sm:$0xff] %vm8821, %v9066
      %9105 = vst.msk [vmem:[#allocation4 + $0xf8] sm:$0xff] %vm8821, %v9068
      %9106 = vst.msk [vmem:[#allocation4 + $0x110] sm:$0xff] %vm8821, %v9070
      %9107 = vst.msk [vmem:[#allocation4 + $0x128] sm:$0xff] %vm8821, %v9072
      %9108 = vst.msk [vmem:[#allocation4 + $0x140] sm:$0xff] %vm8821, %v9074
      %9109 = vst.msk [vmem:[#allocation4 + $0x158] sm:$0xff] %vm8821, %v9076
      %9110 = vst.msk [vmem:[#allocation4 + $0x170] sm:$0xff] %vm8821, %v9078
      %v9112 = vshrl.u32 %v7984, 16
      %v9114 = vrot.slane %v9112, 4
      %v9115 = vshll.u32 %v7984, 16
      %v9117 = vrot.slane %v9115, 5
      %v9118 = vor.u32 %v9114, %v9117
      %v9119 = vrot.slane %v9118, 4
      %v9121 = vshll.u32 %v7985, 16
      %v9123 = vrot.slane %v9121, 5
      %v9124 = vsel %vm2416, %v9119, %v9123
      %v9125 = vshrl.u32 %v7985, 16
      %v9127 = vrot.slane %v9125, 4
      %v9128 = vor.u32 %v9127, %v9123
      %v9129 = vrot.slane %v9128, 4
      %v9131 = vshll.u32 %v7986, 16
      %v9133 = vrot.slane %v9131, 5
      %v9134 = vsel %vm2416, %v9129, %v9133
      %v9135 = vunpack.c.l.b16 %v9124
      %v9136 = vunpack.c.l.b16 %v9134
      %v9137 = vpack.c.b16 %v9136, %v9135
      %9138 = vrot.lane.b32.xlu0 %v8518, 96
      %v9139 = vpop.permute.xlu0 %9138
      %9140 = vrot.lane.b32.xlu0 %v8519, 96
      %v9141 = vpop.permute.xlu0 %9140
      %9142 = vrot.lane.b32.xlu0 %v8520, 96
      %v9143 = vpop.permute.xlu0 %9142
      %9144 = vrot.lane.b32.xlu0 %v8521, 96
      %v9145 = vpop.permute.xlu0 %9144
      %9146 = vrot.lane.b32.xlu0 %v8522, 96
      %v9147 = vpop.permute.xlu0 %9146
      %9148 = vrot.lane.b32.xlu0 %v8523, 96
      %v9149 = vpop.permute.xlu0 %9148
      %9150 = vrot.lane.b32.xlu0 %v8524, 96
      %v9151 = vpop.permute.xlu0 %9150
      %9152 = vrot.lane.b32.xlu0 %v8525, 96
      %v9153 = vpop.permute.xlu0 %9152
      %9154 = vrot.lane.b32.xlu0 %v8526, 96
      %v9155 = vpop.permute.xlu0 %9154
      %9156 = vrot.lane.b32.xlu0 %v8527, 96
      %v9157 = vpop.permute.xlu0 %9156
      %9158 = vrot.lane.b32.xlu0 %v8528, 96
      %v9159 = vpop.permute.xlu0 %9158
      %9160 = vrot.lane.b32.xlu0 %v8529, 96
      %v9161 = vpop.permute.xlu0 %9160
      %9162 = vrot.lane.b32.xlu0 %v8530, 96
      %v9163 = vpop.permute.xlu0 %9162
      %9164 = vrot.lane.b32.xlu0 %v8531, 96
      %v9165 = vpop.permute.xlu0 %9164
      %9166 = vrot.lane.b32.xlu0 %v8934, 96
      %v9167 = vpop.permute.xlu0 %9166
      %9168 = vrot.lane.b32.xlu0 %v9137, 96
      %v9169 = vpop.permute.xlu0 %9168
      %9186 = vst.msk [vmem:[#allocation4 + $0x8] sm:$0xff] %vm8891, %v9139
      %9187 = vst.msk [vmem:[#allocation4 + $0x20] sm:$0xff] %vm8891, %v9141
      %9188 = vst.msk [vmem:[#allocation4 + $0x38] sm:$0xff] %vm8891, %v9143
      %9189 = vst.msk [vmem:[#allocation4 + $0x50] sm:$0xff] %vm8891, %v9145
      %9190 = vst.msk [vmem:[#allocation4 + $0x68] sm:$0xff] %vm8891, %v9147
      %9191 = vst.msk [vmem:[#allocation4 + $0x80] sm:$0xff] %vm8891, %v9149
      %9192 = vst.msk [vmem:[#allocation4 + $0x98] sm:$0xff] %vm8891, %v9151
      %9193 = vst.msk [vmem:[#allocation4 + $0xb0] sm:$0xff] %vm8891, %v9153
      %9194 = vst.msk [vmem:[#allocation4 + $0xc8] sm:$0xff] %vm8891, %v9155
      %9195 = vst.msk [vmem:[#allocation4 + $0xe0] sm:$0xff] %vm8891, %v9157
      %9196 = vst.msk [vmem:[#allocation4 + $0xf8] sm:$0xff] %vm8891, %v9159
      %9197 = vst.msk [vmem:[#allocation4 + $0x110] sm:$0xff] %vm8891, %v9161
      %9198 = vst.msk [vmem:[#allocation4 + $0x128] sm:$0xff] %vm8891, %v9163
      %9199 = vst.msk [vmem:[#allocation4 + $0x140] sm:$0xff] %vm8891, %v9165
      %9200 = vst.msk [vmem:[#allocation4 + $0x158] sm:$0xff] %vm8891, %v9167
      %9201 = vst.msk [vmem:[#allocation4 + $0x170] sm:$0xff] %vm8891, %v9169
      %v9203 = vrot.slane %v7984, 5
      %v9204 = vrot.slane %v9203, 4
      %v9205 = vrot.slane %v7985, 5
      %v9206 = vsel %vm2932, %v9204, %v9205
      %v9207 = vrot.slane %v9205, 4
      %v9208 = vrot.slane %v7986, 5
      %v9209 = vsel %vm2932, %v9207, %v9208
      %v9210 = vunpack.c.l.b16 %v9206
      %v9211 = vunpack.c.l.b16 %v9209
      %v9212 = vpack.c.b16 %v9211, %v9210
      %9229 = vst.msk [vmem:[#allocation4 + $0x10] sm:$0xff] %vm8083, %v8759
      %9230 = vst.msk [vmem:[#allocation4 + $0x28] sm:$0xff] %vm8083, %v8760
      %9231 = vst.msk [vmem:[#allocation4 + $0x40] sm:$0xff] %vm8083, %v8761
      %9232 = vst.msk [vmem:[#allocation4 + $0x58] sm:$0xff] %vm8083, %v8762
      %9233 = vst.msk [vmem:[#allocation4 + $0x70] sm:$0xff] %vm8083, %v8763
      %9234 = vst.msk [vmem:[#allocation4 + $0x88] sm:$0xff] %vm8083, %v8764
      %9235 = vst.msk [vmem:[#allocation4 + $0xa0] sm:$0xff] %vm8083, %v8765
      %9236 = vst.msk [vmem:[#allocation4 + $0xb8] sm:$0xff] %vm8083, %v8766
      %9237 = vst.msk [vmem:[#allocation4 + $0xd0] sm:$0xff] %vm8083, %v8767
      %9238 = vst.msk [vmem:[#allocation4 + $0xe8] sm:$0xff] %vm8083, %v8768
      %9239 = vst.msk [vmem:[#allocation4 + $0x100] sm:$0xff] %vm8083, %v8769
      %9240 = vst.msk [vmem:[#allocation4 + $0x118] sm:$0xff] %vm8083, %v8770
      %9241 = vst.msk [vmem:[#allocation4 + $0x130] sm:$0xff] %vm8083, %v8771
      %9242 = vst.msk [vmem:[#allocation4 + $0x148] sm:$0xff] %vm8083, %v8772
      %9243 = vst.msk [vmem:[#allocation4 + $0x160] sm:$0xff] %vm8083, %v8977
      %9244 = vst.msk [vmem:[#allocation4 + $0x178] sm:$0xff] %vm8083, %v9212
      %v9245 = vld [vmem:[#allocation4] sm:$0xff]
      %v9246 = vld [vmem:[#allocation4 + $0x8] sm:$0xff]
      %v9247 = vld [vmem:[#allocation4 + $0x10] sm:$0xff]
      %v9248 = vld [vmem:[#allocation4 + $0x18] sm:$0xff]
      %v9249 = vld [vmem:[#allocation4 + $0x20] sm:$0xff]
      %v9250 = vld [vmem:[#allocation4 + $0x28] sm:$0xff]
      %v9251 = vld [vmem:[#allocation4 + $0x30] sm:$0xff]
      %v9252 = vld [vmem:[#allocation4 + $0x38] sm:$0xff]
      %v9253 = vld [vmem:[#allocation4 + $0x40] sm:$0xff]
      %v9254 = vld [vmem:[#allocation4 + $0x48] sm:$0xff]
      %v9255 = vld [vmem:[#allocation4 + $0x50] sm:$0xff]
      %v9256 = vld [vmem:[#allocation4 + $0x58] sm:$0xff]
      %v9257 = vld [vmem:[#allocation4 + $0x60] sm:$0xff]
      %v9258 = vld [vmem:[#allocation4 + $0x68] sm:$0xff]
      %v9259 = vld [vmem:[#allocation4 + $0x70] sm:$0xff]
      %v9260 = vld [vmem:[#allocation4 + $0x78] sm:$0xff]
      %v9261 = vld [vmem:[#allocation4 + $0x80] sm:$0xff]
      %v9262 = vld [vmem:[#allocation4 + $0x88] sm:$0xff]
      %v9263 = vld [vmem:[#allocation4 + $0x90] sm:$0xff]
      %v9264 = vld [vmem:[#allocation4 + $0x98] sm:$0xff]
      %v9265 = vld [vmem:[#allocation4 + $0xa0] sm:$0xff]
      %v9266 = vld [vmem:[#allocation4 + $0xa8] sm:$0xff]
      %v9267 = vld [vmem:[#allocation4 + $0xb0] sm:$0xff]
      %v9268 = vld [vmem:[#allocation4 + $0xb8] sm:$0xff]
      %v9269 = vld [vmem:[#allocation4 + $0xc0] sm:$0xff]
      %v9270 = vld [vmem:[#allocation4 + $0xc8] sm:$0xff]
      %v9271 = vld [vmem:[#allocation4 + $0xd0] sm:$0xff]
      %v9272 = vld [vmem:[#allocation4 + $0xd8] sm:$0xff]
      %v9273 = vld [vmem:[#allocation4 + $0xe0] sm:$0xff]
      %v9274 = vld [vmem:[#allocation4 + $0xe8] sm:$0xff]
      %v9275 = vld [vmem:[#allocation4 + $0xf0] sm:$0xff]
      %v9276 = vld [vmem:[#allocation4 + $0xf8] sm:$0xff]
      %v9277 = vld [vmem:[#allocation4 + $0x100] sm:$0xff]
      %v9278 = vld [vmem:[#allocation4 + $0x108] sm:$0xff]
      %v9279 = vld [vmem:[#allocation4 + $0x110] sm:$0xff]
      %v9280 = vld [vmem:[#allocation4 + $0x118] sm:$0xff]
      %v9281 = vld [vmem:[#allocation4 + $0x120] sm:$0xff]
      %v9282 = vld [vmem:[#allocation4 + $0x128] sm:$0xff]
      %v9283 = vld [vmem:[#allocation4 + $0x130] sm:$0xff]
      %v9284 = vld [vmem:[#allocation4 + $0x138] sm:$0xff]
      %v9285 = vld [vmem:[#allocation4 + $0x140] sm:$0xff]
      %v9286 = vld [vmem:[#allocation4 + $0x148] sm:$0xff]
      %v9287 = vld [vmem:[#allocation4 + $0x150] sm:$0xff]
      %v9288 = vld [vmem:[#allocation4 + $0x158] sm:$0xff]
      %v9289 = vld [vmem:[#allocation4 + $0x160] sm:$0xff]
      %v9290 = vld [vmem:[#allocation4 + $0x168] sm:$0xff]
      %v9291 = vld [vmem:[#allocation4 + $0x170] sm:$0xff]
      %v9292 = vld [vmem:[#allocation4 + $0x178] sm:$0xff]
      %v9293 = vld [vmem:[%s8] sm:$0xf]
      %v9294 = vld [vmem:[%s8 + $0x4] sm:$0xf]
      %v9295 = vld [vmem:[%s8 + $0x8] sm:$0xf]
      %v9296 = vld [vmem:[%s8 + $0xc] sm:$0xf]
      %v9297 = vld [vmem:[%s8 + $0x10] sm:$0xf]
      %v9298 = vld [vmem:[%s8 + $0x14] sm:$0xf]
      %v9299 = vld [vmem:[%s8 + $0x18] sm:$0xf]
      %v9300 = vld [vmem:[%s8 + $0x1c] sm:$0xf]
      %v9301 = vld [vmem:[%s8 + $0x20] sm:$0xf]
      %v9302 = vld [vmem:[%s8 + $0x24] sm:$0xf]
      %v9303 = vld [vmem:[%s8 + $0x28] sm:$0xf]
      %v9304 = vld [vmem:[%s8 + $0x2c] sm:$0xf]
      %v9305 = vld [vmem:[%s8 + $0x30] sm:$0xf]
      %v9306 = vld [vmem:[%s8 + $0x34] sm:$0xf]
      %v9307 = vld [vmem:[%s8 + $0x38] sm:$0xf]
      %v9308 = vld [vmem:[%s8 + $0x3c] sm:$0xf]
      %v9309 = vld [vmem:[%s8 + $0x40] sm:$0xf]
      %v9310 = vld [vmem:[%s8 + $0x44] sm:$0xf]
      %v9311 = vld [vmem:[%s8 + $0x48] sm:$0xf]
      %v9312 = vld [vmem:[%s8 + $0x4c] sm:$0xf]
      %v9313 = vld [vmem:[%s8 + $0x50] sm:$0xf]
      %v9314 = vld [vmem:[%s8 + $0x54] sm:$0xf]
      %v9315 = vld [vmem:[%s8 + $0x58] sm:$0xf]
      %v9316 = vld [vmem:[%s8 + $0x5c] sm:$0xf]
      %v9317 = vld [vmem:[%s8 + $0x60] sm:$0xf]
      %v9318 = vld [vmem:[%s8 + $0x64] sm:$0xf]
      %v9319 = vld [vmem:[%s8 + $0x68] sm:$0xf]
      %v9320 = vld [vmem:[%s8 + $0x6c] sm:$0xf]
      %v9321 = vld [vmem:[%s8 + $0x70] sm:$0xf]
      %v9322 = vld [vmem:[%s8 + $0x74] sm:$0xf]
      %v9323 = vld [vmem:[%s8 + $0x78] sm:$0xf]
      %v9324 = vld [vmem:[%s8 + $0x7c] sm:$0xf]
      %v9325 = vld [vmem:[%s8 + $0x80] sm:$0xf]
      %v9326 = vld [vmem:[%s8 + $0x84] sm:$0xf]
      %v9327 = vld [vmem:[%s8 + $0x88] sm:$0xf]
      %v9328 = vld [vmem:[%s8 + $0x8c] sm:$0xf]
      %v9329 = vld [vmem:[%s9 + $0x7] sm:$0x1]
      %v9330 = vlaneseq
      %v9331 = vshrl.u32 %v9330, 7
      %v9332 = vsub.s32 0, %v9331
      %v9333 = vrot.slane %v9329, %v9332
      %v9370 = vunpack.c.l.b16 %v9293
      %v9371 = vunpack.c.l.b16 %v9294
      %v9372 = vunpack.c.l.b16 %v9295
      %v9373 = vunpack.c.l.b16 %v9296
      %v9374 = vunpack.c.l.b16 %v9297
      %v9375 = vunpack.c.l.b16 %v9298
      %v9376 = vunpack.c.l.b16 %v9299
      %v9377 = vunpack.c.l.b16 %v9300
      %v9378 = vunpack.c.l.b16 %v9301
      %v9379 = vunpack.c.l.b16 %v9302
      %v9380 = vunpack.c.l.b16 %v9303
      %v9381 = vunpack.c.l.b16 %v9304
      %v9382 = vunpack.c.l.b16 %v9305
      %v9383 = vunpack.c.l.b16 %v9306
      %v9384 = vunpack.c.l.b16 %v9307
      %v9385 = vunpack.c.l.b16 %v9308
      %v9386 = vunpack.c.l.b16 %v9309
      %v9387 = vunpack.c.l.b16 %v9310
      %v9388 = vunpack.c.l.b16 %v9311
      %v9389 = vunpack.c.l.b16 %v9312
      %v9390 = vunpack.c.l.b16 %v9313
      %v9391 = vunpack.c.l.b16 %v9314
      %v9392 = vunpack.c.l.b16 %v9315
      %v9393 = vunpack.c.l.b16 %v9316
      %v9394 = vunpack.c.l.b16 %v9317
      %v9395 = vunpack.c.l.b16 %v9318
      %v9396 = vunpack.c.l.b16 %v9319
      %v9397 = vunpack.c.l.b16 %v9320
      %v9398 = vunpack.c.l.b16 %v9321
      %v9399 = vunpack.c.l.b16 %v9322
      %v9400 = vunpack.c.l.b16 %v9323
      %v9401 = vunpack.c.l.b16 %v9324
      %v9402 = vunpack.c.l.b16 %v9325
      %v9403 = vunpack.c.l.b16 %v9326
      %v9404 = vunpack.c.l.b16 %v9327
      %v9405 = vunpack.c.l.b16 %v9328
      %v9406 = vpack.c.b16 %v9371, %v9370
      %v9407 = vpack.c.b16 %v9373, %v9372
      %v9408 = vpack.c.b16 %v9375, %v9374
      %v9409 = vpack.c.b16 %v9377, %v9376
      %v9410 = vpack.c.b16 %v9379, %v9378
      %v9411 = vpack.c.b16 %v9381, %v9380
      %v9412 = vpack.c.b16 %v9383, %v9382
      %v9413 = vpack.c.b16 %v9385, %v9384
      %v9414 = vpack.c.b16 %v9387, %v9386
      %v9415 = vpack.c.b16 %v9389, %v9388
      %v9416 = vpack.c.b16 %v9391, %v9390
      %v9417 = vpack.c.b16 %v9393, %v9392
      %v9418 = vpack.c.b16 %v9395, %v9394
      %v9419 = vpack.c.b16 %v9397, %v9396
      %v9420 = vpack.c.b16 %v9399, %v9398
      %v9421 = vpack.c.b16 %v9401, %v9400
      %v9422 = vpack.c.b16 %v9403, %v9402
      %v9423 = vpack.c.b16 %v9405, %v9404
      %v9443 = vsel %vm8083, %v9247, 0
      %v9446 = vsel %vm8083, %v9250, 0
      %v9449 = vsel %vm8083, %v9253, 0
      %v9452 = vsel %vm8083, %v9256, 0
      %v9455 = vsel %vm8083, %v9259, 0
      %v9458 = vsel %vm8083, %v9262, 0
      %v9461 = vsel %vm8083, %v9265, 0
      %v9464 = vsel %vm8083, %v9268, 0
      %v9467 = vsel %vm8083, %v9271, 0
      %v9470 = vsel %vm8083, %v9274, 0
      %v9473 = vsel %vm8083, %v9277, 0
      %v9476 = vsel %vm8083, %v9280, 0
      %v9479 = vsel %vm8083, %v9283, 0
      %v9482 = vsel %vm8083, %v9286, 0
      %v9485 = vsel %vm8083, %v9289, 0
      %v9488 = vsel %vm8083, %v9292, 0
      %9490 = vmatprep.subr.bf16.mxu0 0
      %9491 = vmatpush1.bf16.msra.mxu0 %v9406
      %9492 = vmatprep.subr.bf16.mxu0 0
      %9493 = vmatpush1.bf16.msra.mxu0 %v9407
      %9494 = vmatprep.subr.bf16.mxu0 0
      %9495 = vmatpush1.bf16.msra.mxu0 %v9408
      %9496 = vmatprep.subr.bf16.mxu0 0
      %9497 = vmatpush1.bf16.msra.mxu0 %v9409
      %9498 = vmatprep.subr.bf16.mxu0 0
      %9499 = vmatpush1.bf16.msra.mxu0 %v9410
      %9500 = vmatprep.subr.bf16.mxu0 0
      %9501 = vmatpush1.bf16.msra.mxu0 %v9411
      %9502 = vmatprep.subr.bf16.mxu0 0
      %9503 = vmatpush1.bf16.msra.mxu0 %v9412
      %9504 = vmatprep.subr.bf16.mxu0 0
      %9505 = vmatpush1.bf16.msra.mxu0 %v9413
      %9506 = vmatprep.subr.bf16.mxu0 0
      %9507 = vmatpush1.bf16.msra.mxu0 %v9414
      %9508 = vmatprep.subr.bf16.mxu0 0
      %9509 = vmatpush1.bf16.msra.mxu0 %v9415
      %9510 = vmatprep.subr.bf16.mxu0 0
      %9511 = vmatpush1.bf16.msra.mxu0 %v9416
      %9512 = vmatprep.subr.bf16.mxu0 0
      %9513 = vmatpush1.bf16.msra.mxu0 %v9417
      %9514 = vmatprep.subr.bf16.mxu0 0
      %9515 = vmatpush1.bf16.msra.mxu0 %v9418
      %9516 = vmatprep.subr.bf16.mxu0 0
      %9517 = vmatpush1.bf16.msra.mxu0 %v9419
      %9518 = vmatprep.subr.bf16.mxu0 0
      %9519 = vmatpush1.bf16.msra.mxu0 %v9420
      %9520 = vmatprep.subr.bf16.mxu0 0
      %9521 = vmatpush1.bf16.msra.mxu0 %v9421
      %9522 = vmatprep.mubr.bf16.mxu0 %v9246
      %9523 = vmatmul.mubr.bf16.gmra.mrb[0].mxu0 %v9245
      %v9524 = vpop.f32.mrb[0].mxu0
      %v9525 = vadd.f32 %v9333, %v9524
      %v9526 = vpop.f32.mrb[0].mxu0
      %v9527 = vpop.f32.mrb[0].mxu0
      %v9528 = vadd.f32 %v9333, %v9527
      %v9529 = vpop.f32.mrb[0].mxu0
      %9530 = vmatprep.mubr.bf16.mxu0 %v9249
      %9531 = vmatmul.mubr.bf16.gmra.mrb[0].mxu0 %v9248
      %v9532 = vpop.f32.mrb[0].mxu0
      %v9533 = vadd.f32 %v9333, %v9532
      %v9534 = vpop.f32.mrb[0].mxu0
      %v9535 = vpop.f32.mrb[0].mxu0
      %v9536 = vadd.f32 %v9333, %v9535
      %v9537 = vpop.f32.mrb[0].mxu0
      %9538 = vmatprep.mubr.bf16.mxu0 %v9252
      %9539 = vmatmul.mubr.bf16.gmra.mrb[0].mxu0 %v9251
      %v9540 = vpop.f32.mrb[0].mxu0
      %v9541 = vadd.f32 %v9333, %v9540
      %v9542 = vpop.f32.mrb[0].mxu0
      %v9543 = vpop.f32.mrb[0].mxu0
      %v9544 = vadd.f32 %v9333, %v9543
      %v9545 = vpop.f32.mrb[0].mxu0
      %9546 = vmatprep.mubr.bf16.mxu0 %v9255
      %9547 = vmatmul.mubr.bf16.gmra.mrb[0].mxu0 %v9254
      %v9548 = vpop.f32.mrb[0].mxu0
      %v9549 = vadd.f32 %v9333, %v9548
      %v9550 = vpop.f32.mrb[0].mxu0
      %v9551 = vpop.f32.mrb[0].mxu0
      %v9552 = vadd.f32 %v9333, %v9551
      %v9553 = vpop.f32.mrb[0].mxu0
      %9554 = vmatprep.mubr.bf16.mxu0 %v9258
      %9555 = vmatmul.mubr.bf16.gmra.mrb[0].mxu0 %v9257
      %v9556 = vpop.f32.mrb[0].mxu0
      %v9557 = vadd.f32 %v9333, %v9556
      %v9558 = vpop.f32.mrb[0].mxu0
      %v9559 = vpop.f32.mrb[0].mxu0
      %v9560 = vadd.f32 %v9333, %v9559
      %v9561 = vpop.f32.mrb[0].mxu0
      %9562 = vmatprep.mubr.bf16.mxu0 %v9261
      %9563 = vmatmul.mubr.bf16.gmra.mrb[0].mxu0 %v9260
      %v9564 = vpop.f32.mrb[0].mxu0
      %v9565 = vadd.f32 %v9333, %v9564
      %v9566 = vpop.f32.mrb[0].mxu0
      %v9567 = vpop.f32.mrb[0].mxu0
      %v9568 = vadd.f32 %v9333, %v9567
      %v9569 = vpop.f32.mrb[0].mxu0
      %9570 = vmatprep.mubr.bf16.mxu0 %v9264
      %9571 = vmatmul.mubr.bf16.gmra.mrb[0].mxu0 %v9263
      %v9572 = vpop.f32.mrb[0].mxu0
      %v9573 = vadd.f32 %v9333, %v9572
      %v9574 = vpop.f32.mrb[0].mxu0
      %v9575 = vpop.f32.mrb[0].mxu0
      %v9576 = vadd.f32 %v9333, %v9575
      %v9577 = vpop.f32.mrb[0].mxu0
      %9578 = vmatprep.mubr.bf16.mxu0 %v9267
      %9579 = vmatmul.mubr.bf16.gmra.mrb[0].mxu0 %v9266
      %v9580 = vpop.f32.mrb[0].mxu0
      %v9581 = vadd.f32 %v9333, %v9580
      %v9582 = vpop.f32.mrb[0].mxu0
      %v9583 = vpop.f32.mrb[0].mxu0
      %v9584 = vadd.f32 %v9333, %v9583
      %v9585 = vpop.f32.mrb[0].mxu0
      %9586 = vmatprep.mubr.bf16.mxu0 %v9270
      %9587 = vmatmul.mubr.bf16.gmra.mrb[0].mxu0 %v9269
      %v9588 = vpop.f32.mrb[0].mxu0
      %v9589 = vadd.f32 %v9333, %v9588
      %v9590 = vpop.f32.mrb[0].mxu0
      %v9591 = vpop.f32.mrb[0].mxu0
      %v9592 = vadd.f32 %v9333, %v9591
      %v9593 = vpop.f32.mrb[0].mxu0
      %9594 = vmatprep.mubr.bf16.mxu0 %v9273
      %9595 = vmatmul.mubr.bf16.gmra.mrb[0].mxu0 %v9272
      %v9596 = vpop.f32.mrb[0].mxu0
      %v9597 = vadd.f32 %v9333, %v9596
      %v9598 = vpop.f32.mrb[0].mxu0
      %v9599 = vpop.f32.mrb[0].mxu0
      %v9600 = vadd.f32 %v9333, %v9599
      %v9601 = vpop.f32.mrb[0].mxu0
      %9602 = vmatprep.mubr.bf16.mxu0 %v9276
      %9603 = vmatmul.mubr.bf16.gmra.mrb[0].mxu0 %v9275
      %v9604 = vpop.f32.mrb[0].mxu0
      %v9605 = vadd.f32 %v9333, %v9604
      %v9606 = vpop.f32.mrb[0].mxu0
      %v9607 = vpop.f32.mrb[0].mxu0
      %v9608 = vadd.f32 %v9333, %v9607
      %v9609 = vpop.f32.mrb[0].mxu0
      %9610 = vmatprep.mubr.bf16.mxu0 %v9279
      %9611 = vmatmul.mubr.bf16.gmra.mrb[0].mxu0 %v9278
      %v9612 = vpop.f32.mrb[0].mxu0
      %v9613 = vadd.f32 %v9333, %v9612
      %v9614 = vpop.f32.mrb[0].mxu0
      %v9615 = vpop.f32.mrb[0].mxu0
      %v9616 = vadd.f32 %v9333, %v9615
      %v9617 = vpop.f32.mrb[0].mxu0
      %9618 = vmatprep.mubr.bf16.mxu0 %v9282
      %9619 = vmatmul.mubr.bf16.gmra.mrb[0].mxu0 %v9281
      %v9620 = vpop.f32.mrb[0].mxu0
      %v9621 = vadd.f32 %v9333, %v9620
      %v9622 = vpop.f32.mrb[0].mxu0
      %v9623 = vpop.f32.mrb[0].mxu0
      %v9624 = vadd.f32 %v9333, %v9623
      %v9625 = vpop.f32.mrb[0].mxu0
      %9626 = vmatprep.mubr.bf16.mxu0 %v9285
      %9627 = vmatmul.mubr.bf16.gmra.mrb[0].mxu0 %v9284
      %v9628 = vpop.f32.mrb[0].mxu0
      %v9629 = vadd.f32 %v9333, %v9628
      %v9630 = vpop.f32.mrb[0].mxu0
      %v9631 = vpop.f32.mrb[0].mxu0
      %v9632 = vadd.f32 %v9333, %v9631
      %v9633 = vpop.f32.mrb[0].mxu0
      %9634 = vmatprep.mubr.bf16.mxu0 %v9288
      %9635 = vmatmul.mubr.bf16.gmra.mrb[0].mxu0 %v9287
      %v9636 = vpop.f32.mrb[0].mxu0
      %v9637 = vadd.f32 %v9333, %v9636
      %v9638 = vpop.f32.mrb[0].mxu0
      %v9639 = vpop.f32.mrb[0].mxu0
      %v9640 = vadd.f32 %v9333, %v9639
      %v9641 = vpop.f32.mrb[0].mxu0
      %9642 = vmatprep.mubr.bf16.mxu0 %v9291
      %9643 = vmatmul.mubr.bf16.gmra.mrb[0].mxu0 %v9290
      %v9644 = vpop.f32.mrb[0].mxu0
      %v9645 = vadd.f32 %v9333, %v9644
      %v9646 = vpop.f32.mrb[0].mxu0
      %v9647 = vpop.f32.mrb[0].mxu0
      %v9648 = vadd.f32 %v9333, %v9647
      %v9649 = vpop.f32.mrb[0].mxu0
      %9650 = vdwg.mxu0
      %9651 = vmatprep.subr.bf16.mxu0 0
      %9652 = vmatpush1.bf16.msra.mxu0 %v9422
      %9653 = vmatprep.subr.bf16.mxu0 0
      %9654 = vmatpush1.bf16.msra.mxu0 %v9423
      %9655 = vmatprep.subr.bf16.mxu0 0
      %9656 = vmatpush1.bf16.msra.mxu0 0
      %9657 = vmatprep.subr.bf16.mxu0 0
      %9658 = vmatpush1.bf16.msra.mxu0 0
      %9659 = vmatprep.subr.bf16.mxu0 0
      %9660 = vmatpush1.bf16.msra.mxu0 0
      %9661 = vmatprep.subr.bf16.mxu0 0
      %9662 = vmatpush1.bf16.msra.mxu0 0
      %9663 = vmatprep.subr.bf16.mxu0 0
      %9664 = vmatpush1.bf16.msra.mxu0 0
      %9665 = vmatprep.subr.bf16.mxu0 0
      %9666 = vmatpush1.bf16.msra.mxu0 0
      %9667 = vmatprep.subr.bf16.mxu0 0
      %9668 = vmatpush1.bf16.msra.mxu0 0
      %9669 = vmatprep.subr.bf16.mxu0 0
      %9670 = vmatpush1.bf16.msra.mxu0 0
      %9671 = vmatprep.subr.bf16.mxu0 0
      %9672 = vmatpush1.bf16.msra.mxu0 0
      %9673 = vmatprep.subr.bf16.mxu0 0
      %9674 = vmatpush1.bf16.msra.mxu0 0
      %9675 = vmatprep.subr.bf16.mxu0 0
      %9676 = vmatpush1.bf16.msra.mxu0 0
      %9677 = vmatprep.subr.bf16.mxu0 0
      %9678 = vmatpush1.bf16.msra.mxu0 0
      %9679 = vmatprep.subr.bf16.mxu0 0
      %9680 = vmatpush1.bf16.msra.mxu0 0
      %9681 = vmatprep.subr.bf16.mxu0 0
      %9682 = vmatpush1.bf16.msra.mxu0 0
      %9683 = vmatprep.mubr.bf16.mxu0 0
      %9684 = vmatmul.mubr.bf16.gmra.mrb[0].mxu0 %v9443
      %v9685 = vpop.f32.mrb[0].mxu0
      %v9686 = vadd.f32 %v9525, %v9685
      %v9687 = vpop.f32.mrb[0].mxu0
      %v9688 = vpop.f32.mrb[0].mxu0
      %v9689 = vadd.f32 %v9528, %v9688
      %v9690 = vpop.f32.mrb[0].mxu0
      %9691 = vmatprep.mubr.bf16.mxu0 0
      %9692 = vmatmul.mubr.bf16.gmra.mrb[0].mxu0 %v9446
      %v9693 = vpop.f32.mrb[0].mxu0
      %v9694 = vadd.f32 %v9533, %v9693
      %v9695 = vpop.f32.mrb[0].mxu0
      %v9696 = vpop.f32.mrb[0].mxu0
      %v9697 = vadd.f32 %v9536, %v9696
      %v9698 = vpop.f32.mrb[0].mxu0
      %9699 = vmatprep.mubr.bf16.mxu0 0
      %9700 = vmatmul.mubr.bf16.gmra.mrb[0].mxu0 %v9449
      %v9701 = vpop.f32.mrb[0].mxu0
      %v9702 = vadd.f32 %v9541, %v9701
      %v9703 = vpop.f32.mrb[0].mxu0
      %v9704 = vpop.f32.mrb[0].mxu0
      %v9705 = vadd.f32 %v9544, %v9704
      %v9706 = vpop.f32.mrb[0].mxu0
      %9707 = vmatprep.mubr.bf16.mxu0 0
      %9708 = vmatmul.mubr.bf16.gmra.mrb[0].mxu0 %v9452
      %v9709 = vpop.f32.mrb[0].mxu0
      %v9710 = vadd.f32 %v9549, %v9709
      %v9711 = vpop.f32.mrb[0].mxu0
      %v9712 = vpop.f32.mrb[0].mxu0
      %v9713 = vadd.f32 %v9552, %v9712
      %v9714 = vpop.f32.mrb[0].mxu0
      %9715 = vmatprep.mubr.bf16.mxu0 0
      %9716 = vmatmul.mubr.bf16.gmra.mrb[0].mxu0 %v9455
      %v9717 = vpop.f32.mrb[0].mxu0
      %v9718 = vadd.f32 %v9557, %v9717
      %v9719 = vpop.f32.mrb[0].mxu0
      %v9720 = vpop.f32.mrb[0].mxu0
      %v9721 = vadd.f32 %v9560, %v9720
      %v9722 = vpop.f32.mrb[0].mxu0
      %9723 = vmatprep.mubr.bf16.mxu0 0
      %9724 = vmatmul.mubr.bf16.gmra.mrb[0].mxu0 %v9458
      %v9725 = vpop.f32.mrb[0].mxu0
      %v9726 = vadd.f32 %v9565, %v9725
      %v9727 = vpop.f32.mrb[0].mxu0
      %v9728 = vpop.f32.mrb[0].mxu0
      %v9729 = vadd.f32 %v9568, %v9728
      %v9730 = vpop.f32.mrb[0].mxu0
      %9731 = vmatprep.mubr.bf16.mxu0 0
      %9732 = vmatmul.mubr.bf16.gmra.mrb[0].mxu0 %v9461
      %v9733 = vpop.f32.mrb[0].mxu0
      %v9734 = vadd.f32 %v9573, %v9733
      %v9735 = vpop.f32.mrb[0].mxu0
      %v9736 = vpop.f32.mrb[0].mxu0
      %v9737 = vadd.f32 %v9576, %v9736
      %v9738 = vpop.f32.mrb[0].mxu0
      %9739 = vmatprep.mubr.bf16.mxu0 0
      %9740 = vmatmul.mubr.bf16.gmra.mrb[0].mxu0 %v9464
      %v9741 = vpop.f32.mrb[0].mxu0
      %v9742 = vadd.f32 %v9581, %v9741
      %v9743 = vpop.f32.mrb[0].mxu0
      %v9744 = vpop.f32.mrb[0].mxu0
      %v9745 = vadd.f32 %v9584, %v9744
      %v9746 = vpop.f32.mrb[0].mxu0
      %9747 = vmatprep.mubr.bf16.mxu0 0
      %9748 = vmatmul.mubr.bf16.gmra.mrb[0].mxu0 %v9467
      %v9749 = vpop.f32.mrb[0].mxu0
      %v9750 = vadd.f32 %v9589, %v9749
      %v9751 = vpop.f32.mrb[0].mxu0
      %v9752 = vpop.f32.mrb[0].mxu0
      %v9753 = vadd.f32 %v9592, %v9752
      %v9754 = vpop.f32.mrb[0].mxu0
      %9755 = vmatprep.mubr.bf16.mxu0 0
      %9756 = vmatmul.mubr.bf16.gmra.mrb[0].mxu0 %v9470
      %v9757 = vpop.f32.mrb[0].mxu0
      %v9758 = vadd.f32 %v9597, %v9757
      %v9759 = vpop.f32.mrb[0].mxu0
      %v9760 = vpop.f32.mrb[0].mxu0
      %v9761 = vadd.f32 %v9600, %v9760
      %v9762 = vpop.f32.mrb[0].mxu0
      %9763 = vmatprep.mubr.bf16.mxu0 0
      %9764 = vmatmul.mubr.bf16.gmra.mrb[0].mxu0 %v9473
      %v9765 = vpop.f32.mrb[0].mxu0
      %v9766 = vadd.f32 %v9605, %v9765
      %v9767 = vpop.f32.mrb[0].mxu0
      %v9768 = vpop.f32.mrb[0].mxu0
      %v9769 = vadd.f32 %v9608, %v9768
      %v9770 = vpop.f32.mrb[0].mxu0
      %9771 = vmatprep.mubr.bf16.mxu0 0
      %9772 = vmatmul.mubr.bf16.gmra.mrb[0].mxu0 %v9476
      %v9773 = vpop.f32.mrb[0].mxu0
      %v9774 = vadd.f32 %v9613, %v9773
      %v9775 = vpop.f32.mrb[0].mxu0
      %v9776 = vpop.f32.mrb[0].mxu0
      %v9777 = vadd.f32 %v9616, %v9776
      %v9778 = vpop.f32.mrb[0].mxu0
      %9779 = vmatprep.mubr.bf16.mxu0 0
      %9780 = vmatmul.mubr.bf16.gmra.mrb[0].mxu0 %v9479
      %v9781 = vpop.f32.mrb[0].mxu0
      %v9782 = vadd.f32 %v9621, %v9781
      %v9783 = vpop.f32.mrb[0].mxu0
      %v9784 = vpop.f32.mrb[0].mxu0
      %v9785 = vadd.f32 %v9624, %v9784
      %v9786 = vpop.f32.mrb[0].mxu0
      %9787 = vmatprep.mubr.bf16.mxu0 0
      %9788 = vmatmul.mubr.bf16.gmra.mrb[0].mxu0 %v9482
      %v9789 = vpop.f32.mrb[0].mxu0
      %v9790 = vadd.f32 %v9629, %v9789
      %v9791 = vpop.f32.mrb[0].mxu0
      %v9792 = vpop.f32.mrb[0].mxu0
      %v9793 = vadd.f32 %v9632, %v9792
      %v9794 = vpop.f32.mrb[0].mxu0
      %9795 = vmatprep.mubr.bf16.mxu0 0
      %9796 = vmatmul.mubr.bf16.gmra.mrb[0].mxu0 %v9485
      %v9797 = vpop.f32.mrb[0].mxu0
      %v9798 = vadd.f32 %v9637, %v9797
      %v9799 = vpop.f32.mrb[0].mxu0
      %v9800 = vpop.f32.mrb[0].mxu0
      %v9801 = vadd.f32 %v9640, %v9800
      %v9802 = vpop.f32.mrb[0].mxu0
      %9803 = vmatprep.mubr.bf16.mxu0 0
      %9804 = vmatmul.mubr.bf16.gmra.mrb[0].mxu0 %v9488
      %v9805 = vpop.f32.mrb[0].mxu0
      %v9806 = vadd.f32 %v9645, %v9805
      %v9807 = vpop.f32.mrb[0].mxu0
      %v9808 = vpop.f32.mrb[0].mxu0
      %v9809 = vadd.f32 %v9648, %v9808
      %v9810 = vpop.f32.mrb[0].mxu0
      %9811 = vdwg.mxu0
      %vm9812 = vcmp.gt.f32.partialorder %v9686, 0.0
      %vm9813 = vcmp.gt.f32.partialorder %v9689, 0.0
      %vm9814 = vcmp.gt.f32.partialorder %v9694, 0.0
      %vm9815 = vcmp.gt.f32.partialorder %v9697, 0.0
      %vm9816 = vcmp.gt.f32.partialorder %v9702, 0.0
      %vm9817 = vcmp.gt.f32.partialorder %v9705, 0.0
      %vm9818 = vcmp.gt.f32.partialorder %v9710, 0.0
      %vm9819 = vcmp.gt.f32.partialorder %v9713, 0.0
      %vm9820 = vcmp.gt.f32.partialorder %v9718, 0.0
      %vm9821 = vcmp.gt.f32.partialorder %v9721, 0.0
      %vm9822 = vcmp.gt.f32.partialorder %v9726, 0.0
      %vm9823 = vcmp.gt.f32.partialorder %v9729, 0.0
      %vm9824 = vcmp.gt.f32.partialorder %v9734, 0.0
      %vm9825 = vcmp.gt.f32.partialorder %v9737, 0.0
      %vm9826 = vcmp.gt.f32.partialorder %v9742, 0.0
      %vm9827 = vcmp.gt.f32.partialorder %v9745, 0.0
      %vm9828 = vcmp.gt.f32.partialorder %v9750, 0.0
      %vm9829 = vcmp.gt.f32.partialorder %v9753, 0.0
      %vm9830 = vcmp.gt.f32.partialorder %v9758, 0.0
      %vm9831 = vcmp.gt.f32.partialorder %v9761, 0.0
      %vm9832 = vcmp.gt.f32.partialorder %v9766, 0.0
      %vm9833 = vcmp.gt.f32.partialorder %v9769, 0.0
      %vm9834 = vcmp.gt.f32.partialorder %v9774, 0.0
      %vm9835 = vcmp.gt.f32.partialorder %v9777, 0.0
      %vm9836 = vcmp.gt.f32.partialorder %v9782, 0.0
      %vm9837 = vcmp.gt.f32.partialorder %v9785, 0.0
      %vm9838 = vcmp.gt.f32.partialorder %v9790, 0.0
      %vm9839 = vcmp.gt.f32.partialorder %v9793, 0.0
      %vm9840 = vcmp.gt.f32.partialorder %v9798, 0.0
      %vm9841 = vcmp.gt.f32.partialorder %v9801, 0.0
      %vm9842 = vcmp.gt.f32.partialorder %v9806, 0.0
      %vm9843 = vcmp.gt.f32.partialorder %v9809, 0.0
      %v9844 = vld [vmem:[%s9 + $0x8] sm:$0x1]
      %v9845 = vlaneseq
      %v9846 = vshrl.u32 %v9845, 7
      %v9847 = vsub.s32 0, %v9846
      %v9848 = vrot.slane %v9844, %v9847
      %v9849 = vmul.f32 %v9848, %v9686
      %v9850 = vmul.f32 %v9848, %v9689
      %v9851 = vmul.f32 %v9848, %v9694
      %v9852 = vmul.f32 %v9848, %v9697
      %v9853 = vmul.f32 %v9848, %v9702
      %v9854 = vmul.f32 %v9848, %v9705
      %v9855 = vmul.f32 %v9848, %v9710
      %v9856 = vmul.f32 %v9848, %v9713
      %v9857 = vmul.f32 %v9848, %v9718
      %v9858 = vmul.f32 %v9848, %v9721
      %v9859 = vmul.f32 %v9848, %v9726
      %v9860 = vmul.f32 %v9848, %v9729
      %v9861 = vmul.f32 %v9848, %v9734
      %v9862 = vmul.f32 %v9848, %v9737
      %v9863 = vmul.f32 %v9848, %v9742
      %v9864 = vmul.f32 %v9848, %v9745
      %v9865 = vmul.f32 %v9848, %v9750
      %v9866 = vmul.f32 %v9848, %v9753
      %v9867 = vmul.f32 %v9848, %v9758
      %v9868 = vmul.f32 %v9848, %v9761
      %v9869 = vmul.f32 %v9848, %v9766
      %v9870 = vmul.f32 %v9848, %v9769
      %v9871 = vmul.f32 %v9848, %v9774
      %v9872 = vmul.f32 %v9848, %v9777
      %v9873 = vmul.f32 %v9848, %v9782
      %v9874 = vmul.f32 %v9848, %v9785
      %v9875 = vmul.f32 %v9848, %v9790
      %v9876 = vmul.f32 %v9848, %v9793
      %v9877 = vmul.f32 %v9848, %v9798
      %v9878 = vmul.f32 %v9848, %v9801
      %v9879 = vmul.f32 %v9848, %v9806
      %v9880 = vmul.f32 %v9848, %v9809
      %v9881 = vsel %vm9812, %v9686, %v9849
      %v9882 = vsel %vm9813, %v9689, %v9850
      %v9883 = vsel %vm9814, %v9694, %v9851
      %v9884 = vsel %vm9815, %v9697, %v9852
      %v9885 = vsel %vm9816, %v9702, %v9853
      %v9886 = vsel %vm9817, %v9705, %v9854
      %v9887 = vsel %vm9818, %v9710, %v9855
      %v9888 = vsel %vm9819, %v9713, %v9856
      %v9889 = vsel %vm9820, %v9718, %v9857
      %v9890 = vsel %vm9821, %v9721, %v9858
      %v9891 = vsel %vm9822, %v9726, %v9859
      %v9892 = vsel %vm9823, %v9729, %v9860
      %v9893 = vsel %vm9824, %v9734, %v9861
      %v9894 = vsel %vm9825, %v9737, %v9862
      %v9895 = vsel %vm9826, %v9742, %v9863
      %v9896 = vsel %vm9827, %v9745, %v9864
      %v9897 = vsel %vm9828, %v9750, %v9865
      %v9898 = vsel %vm9829, %v9753, %v9866
      %v9899 = vsel %vm9830, %v9758, %v9867
      %v9900 = vsel %vm9831, %v9761, %v9868
      %v9901 = vsel %vm9832, %v9766, %v9869
      %v9902 = vsel %vm9833, %v9769, %v9870
      %v9903 = vsel %vm9834, %v9774, %v9871
      %v9904 = vsel %vm9835, %v9777, %v9872
      %v9905 = vsel %vm9836, %v9782, %v9873
      %v9906 = vsel %vm9837, %v9785, %v9874
      %v9907 = vsel %vm9838, %v9790, %v9875
      %v9908 = vsel %vm9839, %v9793, %v9876
      %v9909 = vsel %vm9840, %v9798, %v9877
      %v9910 = vsel %vm9841, %v9801, %v9878
      %v9911 = vsel %vm9842, %v9806, %v9879
      %v9912 = vsel %vm9843, %v9809, %v9880
      %9913 = vxpose.xlu0.b32.start [1/16] %v9881, 128
      %9914 = vxpose.xlu0.b32.cont [2/16] %v9882, 128
      %9915 = vxpose.xlu0.b32.cont [3/16] %v9883, 128
      %9916 = vxpose.xlu0.b32.cont [4/16] %v9884, 128
      %9917 = vxpose.xlu0.b32.cont [5/16] %v9885, 128
      %9918 = vxpose.xlu0.b32.cont [6/16] %v9886, 128
      %9919 = vxpose.xlu0.b32.cont [7/16] %v9887, 128
      %9920 = vxpose.xlu0.b32.cont [8/16] %v9888, 128
      %9921 = vxpose.xlu0.b32.cont [9/16] %v9889, 128
      %9922 = vxpose.xlu0.b32.cont [10/16] %v9890, 128
      %9923 = vxpose.xlu0.b32.cont [11/16] %v9891, 128
      %9924 = vxpose.xlu0.b32.cont [12/16] %v9892, 128
      %9925 = vxpose.xlu0.b32.cont [13/16] %v9893, 128
      %9926 = vxpose.xlu0.b32.cont [14/16] %v9894, 128
      %9927 = vxpose.xlu0.b32.cont [15/16] %v9895, 128
      %9928 = vxpose.xlu0.b32.end [16/16] %v9896, 128
      %v9929 = vpop.trf.xlu0
      %v9930 = vpop.trf.xlu0
      %v9931 = vpop.trf.xlu0
      %v9932 = vpop.trf.xlu0
      %v9933 = vpop.trf.xlu0
      %v9934 = vpop.trf.xlu0
      %v9935 = vpop.trf.xlu0
      %v9936 = vpop.trf.xlu0
      %v9937 = vpop.trf.xlu0
      %v9938 = vpop.trf.xlu0
      %v9939 = vpop.trf.xlu0
      %v9940 = vpop.trf.xlu0
      %v9941 = vpop.trf.xlu0
      %v9942 = vpop.trf.xlu0
      %v9943 = vpop.trf.xlu0
      %v9944 = vpop.trf.xlu0
      %9945 = vxpose.xlu0.b32.start [1/16] %v9897, 128
      %9946 = vxpose.xlu0.b32.cont [2/16] %v9898, 128
      %9947 = vxpose.xlu0.b32.cont [3/16] %v9899, 128
      %9948 = vxpose.xlu0.b32.cont [4/16] %v9900, 128
      %9949 = vxpose.xlu0.b32.cont [5/16] %v9901, 128
      %9950 = vxpose.xlu0.b32.cont [6/16] %v9902, 128
      %9951 = vxpose.xlu0.b32.cont [7/16] %v9903, 128
      %9952 = vxpose.xlu0.b32.cont [8/16] %v9904, 128
      %9953 = vxpose.xlu0.b32.cont [9/16] %v9905, 128
      %9954 = vxpose.xlu0.b32.cont [10/16] %v9906, 128
      %9955 = vxpose.xlu0.b32.cont [11/16] %v9907, 128
      %9956 = vxpose.xlu0.b32.cont [12/16] %v9908, 128
      %9957 = vxpose.xlu0.b32.cont [13/16] %v9909, 128
      %9958 = vxpose.xlu0.b32.cont [14/16] %v9910, 128
      %9959 = vxpose.xlu0.b32.cont [15/16] %v9911, 128
      %9960 = vxpose.xlu0.b32.end [16/16] %v9912, 128
      %v9961 = vpop.trf.xlu0
      %v9962 = vpop.trf.xlu0
      %v9963 = vpop.trf.xlu0
      %v9964 = vpop.trf.xlu0
      %v9965 = vpop.trf.xlu0
      %v9966 = vpop.trf.xlu0
      %v9967 = vpop.trf.xlu0
      %v9968 = vpop.trf.xlu0
      %v9969 = vpop.trf.xlu0
      %v9970 = vpop.trf.xlu0
      %v9971 = vpop.trf.xlu0
      %v9972 = vpop.trf.xlu0
      %v9973 = vpop.trf.xlu0
      %v9974 = vpop.trf.xlu0
      %v9975 = vpop.trf.xlu0
      %v9976 = vpop.trf.xlu0
      %9977 = vst [vmem:[%s379] sm:$0xff] %v9929
      %9978 = vst [vmem:[%s379 + $0x8] sm:$0xff] %v9961
      %9979 = vst [vmem:[%s379 + $0x10] sm:$0xff] %v9930
      %9980 = vst [vmem:[%s379 + $0x18] sm:$0xff] %v9962
      %p9981 = scmp.lt.s32.totalorder %s21, 1
      %s9982 = scalar_select %p9981, %s21, 1
      %s9983 = smul.addr %s9982, 4
      %s9984 = smul.addr %s9983, 8
      %s9985 = scalar_lea.vmem %s10, %s9984
      // Predicated region
      $region61: #{global_feature_upsample.1} parent=59 // pred_check
        %p9986 = pneg %p259
      $region62: #{global_feature_upsample.1} parent=59 // pred_check_branch
        %9988 = sbr.rel (%p9986) target = $region64
      $region63: #{global_feature_upsample.1} parent=59 // pred_region
        _
      $region64: #{global_feature_upsample.1} parent=59 // pred_fallthru
        _
    $region60: #{global_feature_upsample.1} parent=5 // pred_fallthru
      _
    %p9989 = scmp.le.s32.totalorder 2, %s16
    // Predicated region
    $region65: #{global_feature_upsample.1} parent=5 // pred_check
      %p9990 = pneg %p9989
    $region66: #{global_feature_upsample.1} parent=5 // pred_check_branch
      %9992 = sbr.rel (%p9990) target = $region68
    $region67: #{global_feature_upsample.1} parent=5 // pred_region
      %s9993 = ssub.s32 %s16, 2
      // Predicated region
      $region69: #{global_feature_upsample.1} parent=67 // pred_check
        %p9994 = pneg %p265
      $region70: #{global_feature_upsample.1} parent=67 // pred_check_branch
        %9996 = sbr.rel (%p9994) target = $region72
      $region71: #{global_feature_upsample.1} parent=67 // pred_region
        %p9997 = scmp.lt.s32.totalorder %s22, 1
        %s9998 = scalar_select %p9997, %s22, 1
        %s9999 = smul.addr %s9998, 4
        %s10000 = smul.addr %s9999, 8
        %s10001 = scalar_lea.vmem %s10, %s10000
      $region72: #{global_feature_upsample.1} parent=67 // pred_fallthru
        _
    $region68: #{global_feature_upsample.1} parent=5 // pred_fallthru
      _
  $region6: #{global_feature_upsample.1} parent=0 // loop_footer
    %s20 = sadd.s32 1, %s16
  $region7: #{global_feature_upsample.1} parent=0 // loop_footer_branch
    %15 = sbr.rel target = $region3
  $region8: #{global_feature_upsample.1} parent=0 // loop_exit
    _

</llo_original>
